<compile_context>
chip_gen: v7x
topology: tpu7x:2x2x1
jax: 0.10.0
libtpu: 0.0.40
codegen_flags: <defaults>
</compile_context>

<pallas_src>
import functools

import jax
import jax.numpy as jnp
import numpy as np
from jax.experimental import pallas as pl
from jax.experimental.pallas import tpu as pltpu


# ----------------------------- Pallas kernels ------------------------------

def conv_block_kernel(x_ref, w1e_ref, w1o_ref, b1_ref, w2e_ref, w2o_ref,
                      b2_ref, o_ref, *, nb):
    """Fused conv1(3x3,pad=1)+ReLU+pool2 -> conv2(3x3)+ReLU+pool2 for NB images.

    x_ref  : (nb, 30, 30)   bf16  spatially padded inputs
    w1e/w1o: (3, 30, 448)   bf16  banded conv1 weights (even / odd out cols)
    b1     : (1, 448)       f32   conv1 bias tiled over the 14 pooled W cols
    w2e/w2o: (3, 448, 384)  bf16  banded conv2 weights (even / odd out cols)
    b2     : (1, 384)       f32   conv2 bias tiled over the 6 pooled W cols
    o_ref  : (nb, 6, 384)   bf16  pooled conv2 output, lanes = (w, cout)
    """
    x = x_ref[...]                                            # (nb, 30, 30)

    # ---- conv1: 3 banded matmuls per output parity, K=30, N=448 ------------
    ye = yo = None
    for dy in range(3):
        xs = x[:, dy:dy + 28, :].reshape(nb * 28, 30)
        de = jnp.dot(xs, w1e_ref[dy], preferred_element_type=jnp.float32)
        do = jnp.dot(xs, w1o_ref[dy], preferred_element_type=jnp.float32)
        ye = de if ye is None else ye + de
        yo = do if yo is None else yo + do
    # 2x2 max-pool: W via even/odd-column max, H via sublane-pair max.
    yw = jnp.maximum(ye, yo)                                  # (nb*28, 448)
    th = yw.reshape(nb * 14, 2, 448)
    p1 = jnp.maximum(th[:, 0, :], th[:, 1, :])                # (nb*14, 448)
    # Bias + ReLU commute with max, so apply them once on the pooled tensor.
    p1 = jnp.maximum(p1 + b1_ref[...], 0.0)
    p1 = p1.reshape(nb, 14, 448).astype(jnp.bfloat16)         # lanes = (w, cin)

    # ---- conv2: 3 banded matmuls per output parity, K=448, N=384 -----------
    ye2 = yo2 = None
    for dy in range(3):
        xs = p1[:, dy:dy + 12, :].reshape(nb * 12, 448)
        de = jnp.dot(xs, w2e_ref[dy], preferred_element_type=jnp.float32)
        do = jnp.dot(xs, w2o_ref[dy], preferred_element_type=jnp.float32)
        ye2 = de if ye2 is None else ye2 + de
        yo2 = do if yo2 is None else yo2 + do
    yw2 = jnp.maximum(ye2, yo2)                               # (nb*12, 384)
    th2 = yw2.reshape(nb * 6, 2, 384)
    p2 = jnp.maximum(th2[:, 0, :], th2[:, 1, :])              # (nb*6, 384)
    p2 = jnp.maximum(p2 + b2_ref[...], 0.0)

    # Lane-dense store: flatten order (h, w, cout) == NHWC flatten of conv2.
    o_ref[...] = p2.reshape(nb, 6, 384).astype(o_ref.dtype)


def fc_fused_kernel(x_ref, w1_ref, b1_ref, w2_ref, b2_ref, o_ref, h_ref,
                    *, n_j, tn):
    """fc1 tiled over (N, K) with fc2 fused into the final grid step.

    grid = (n_j, n_k): j tiles fc1's N (1024), k tiles the shared K (2304).
    h_ref: VMEM scratch (n_j, M, tn) f32 holding fc1's result per N tile.
    """
    j = pl.program_id(0)
    k = pl.program_id(1)

    part = jnp.dot(x_ref[...], w1_ref[...], preferred_element_type=jnp.float32)

    @pl.when(k == 0)
    def _init():
        h_ref[j] = part + b1_ref[...]

    @pl.when(k > 0)
    def _accumulate():
        h_ref[j] = h_ref[j] + part

    @pl.when((j == n_j - 1) & (k == pl.num_programs(1) - 1))
    def _fc2_finalize():
        acc = None
        for jj in range(n_j):                                  # static unroll
            d = jnp.dot(h_ref[jj].astype(jnp.bfloat16),
                        w2_ref[jj * tn:(jj + 1) * tn, :],
                        preferred_element_type=jnp.float32)
            acc = d if acc is None else acc + d
        o_ref[...] = acc + b2_ref[...]


# ------------------------------ Wrappers ------------------------------------

def conv_stage(x_pad, w1e, w1o, b1, w2e, w2o, b2, *, nb):
    """x_pad: (B, 30, 30) bf16 -> (B, 6, 384) bf16 pooled conv2 features."""
    B = x_pad.shape[0]
    assert B % nb == 0
    kernel = functools.partial(conv_block_kernel, nb=nb)
    return pl.pallas_call(
        kernel,
        out_shape=jax.ShapeDtypeStruct((B, 6, 384), jnp.bfloat16),
        grid=(B // nb,),
        in_specs=[
            pl.BlockSpec((nb, 30, 30), lambda bi: (bi, 0, 0)),
            pl.BlockSpec((3, 30, 448), lambda bi: (0, 0, 0)),
            pl.BlockSpec((3, 30, 448), lambda bi: (0, 0, 0)),
            pl.BlockSpec((1, 448), lambda bi: (0, 0)),
            pl.BlockSpec((3, 448, 384), lambda bi: (0, 0, 0)),
            pl.BlockSpec((3, 448, 384), lambda bi: (0, 0, 0)),
            pl.BlockSpec((1, 384), lambda bi: (0, 0)),
        ],
        out_specs=pl.BlockSpec((nb, 6, 384), lambda bi: (bi, 0, 0)),
        compiler_params=pltpu.CompilerParams(dimension_semantics=("parallel",)),
    )(x_pad, w1e, w1o, b1, w2e, w2o, b2)


def fc_stage(x, w1, b1, w2, b2, *, tn=512, tk=1152):
    """x: (M, 2304) bf16; fc1 (->1024) with fused fc2 (->128); returns (M, 128) f32."""
    M, K = x.shape
    _, N1 = w1.shape
    _, N2 = w2.shape
    assert M % 8 == 0 and N1 % tn == 0 and K % tk == 0
    n_j, n_k = N1 // tn, K // tk
    kernel = functools.partial(fc_fused_kernel, n_j=n_j, tn=tn)
    return pl.pallas_call(
        kernel,
        out_shape=jax.ShapeDtypeStruct((M, N2), jnp.float32),
        grid=(n_j, n_k),
        in_specs=[
            pl.BlockSpec((M, tk), lambda j, k: (0, k)),
            pl.BlockSpec((tk, tn), lambda j, k: (k, j)),
            pl.BlockSpec((1, tn), lambda j, k: (0, j)),
            pl.BlockSpec((N1, N2), lambda j, k: (0, 0)),
            pl.BlockSpec((1, N2), lambda j, k: (0, 0)),
        ],
        out_specs=pl.BlockSpec((M, N2), lambda j, k: (0, 0)),
        scratch_shapes=[pltpu.VMEM((n_j, M, tn), jnp.float32)],
        compiler_params=pltpu.CompilerParams(
            dimension_semantics=("arbitrary", "arbitrary")),
    )(x, w1, b1, w2, b2)


# ------------------------------ Parameters -----------------------------------

def _round_up(n, m):
    return (n + m - 1) // m * m


def _pick_nb(batch):
    """Images per conv grid block: <= 8, keep >= 2 blocks for v7x megacore."""
    for nb in (8, 4, 2):
        if batch % nb == 0 and batch // nb >= 2:
            return nb
    return 1


def _banded_conv_weights(w_conv, in_w, pooled_w):
    """Fold a 3x3 conv's dx taps into block-banded matrices (even/odd out cols).

    w_conv: (Cout, Cin, 3, 3) PyTorch-layout conv weight.
    Returns (we, wo), each (3, in_w*Cin, pooled_w*Cout) f32 with
      we[dy, win*Cin+cin, w2*Cout+co] = w_conv[co, cin, dy, win - 2*w2]
      wo[dy, win*Cin+cin, w2*Cout+co] = w_conv[co, cin, dy, win - (2*w2+1)]
    (zero outside the 3-wide band), so an H-row laid out as lanes (win*Cin+cin)
    matmul'd with we / wo gives the conv outputs at even / odd W positions.
    """
    w = np.asarray(w_conv, dtype=np.float32)
    cout, cin = w.shape[0], w.shape[1]
    we = np.zeros((3, in_w * cin, pooled_w * cout), np.float32)
    wo = np.zeros_like(we)
    for dy in range(3):
        for dx in range(3):
            blk = w[:, :, dy, dx].T                        # (Cin, Cout)
            for w2 in range(pooled_w):
                wi = 2 * w2 + dx                           # even output col 2*w2
                if wi < in_w:
                    we[dy, wi * cin:(wi + 1) * cin,
                       w2 * cout:(w2 + 1) * cout] = blk
                wi = 2 * w2 + 1 + dx                       # odd output col 2*w2+1
                if wi < in_w:
                    wo[dy, wi * cin:(wi + 1) * cin,
                       w2 * cout:(w2 + 1) * cout] = blk
    return we, wo


def init_params(key):
    ks = jax.random.split(key, 8)
    scale = 0.05
    # PyTorch-shaped parameters: conv1 (32,1,3,3), conv2 (64,32,3,3),
    #                            fc1 (1000, 2304), fc2 (10, 1000).
    w1_t = scale * jax.random.normal(ks[0], (32, 1, 3, 3), jnp.float32)
    b1 = scale * jax.random.normal(ks[1], (32,), jnp.float32)
    w2_t = scale * jax.random.normal(ks[2], (64, 32, 3, 3), jnp.float32)
    b2 = scale * jax.random.normal(ks[3], (64,), jnp.float32)
    wfc1_t = scale * jax.random.normal(ks[4], (1000, 64 * 6 * 6), jnp.float32)
    bfc1 = scale * jax.random.normal(ks[5], (1000,), jnp.float32)
    wfc2_t = scale * jax.random.normal(ks[6], (10, 1000), jnp.float32)
    bfc2 = scale * jax.random.normal(ks[7], (10,), jnp.float32)

    # Banded conv weights (built with numpy on host, stored as bf16).
    w1e, w1o = _banded_conv_weights(w1_t, in_w=30, pooled_w=14)   # (3,30,448)
    w2e, w2o = _banded_conv_weights(w2_t, in_w=14, pooled_w=6)    # (3,448,384)
    b1w = jnp.tile(b1, 14).reshape(1, 448)                        # lanes=(w2,co)
    b2w = jnp.tile(b2, 6).reshape(1, 384)

    # fc1: permute input columns from PyTorch NCHW-flatten (c*36 + h*6 + w) to
    # the (h*384 + w*64 + c) order produced by the conv stage's output layout.
    idx = jnp.arange(64 * 6 * 6)
    hh = idx // 384
    ww = (idx % 384) // 64
    cc = idx % 64
    perm = cc * 36 + hh * 6 + ww
    wfc1 = wfc1_t[:, perm].T                                      # (2304, 1000)

    # Zero-pad N to lane-dense multiples of 128 (semantics preserved).
    n1 = _round_up(1000, 128)                                     # 1024
    n2 = _round_up(10, 128)                                       # 128
    wfc1 = jnp.pad(wfc1, ((0, 0), (0, n1 - 1000)))                # (2304, 1024)
    bfc1_p = jnp.pad(bfc1, (0, n1 - 1000)).reshape(1, n1)
    wfc2 = jnp.pad(wfc2_t.T, ((0, n1 - 1000), (0, n2 - 10)))      # (1024, 128)
    bfc2_p = jnp.pad(bfc2, (0, n2 - 10)).reshape(1, n2)

    return {
        "w1e": jnp.asarray(w1e, jnp.bfloat16),
        "w1o": jnp.asarray(w1o, jnp.bfloat16),
        "b1": b1w.astype(jnp.float32),
        "w2e": jnp.asarray(w2e, jnp.bfloat16),
        "w2o": jnp.asarray(w2o, jnp.bfloat16),
        "b2": b2w.astype(jnp.float32),
        "wfc1": wfc1.astype(jnp.bfloat16),
        "bfc1": bfc1_p.astype(jnp.float32),
        "wfc2": wfc2.astype(jnp.bfloat16),
        "bfc2": bfc2_p.astype(jnp.float32),
    }


# ------------------------------ Forward --------------------------------------

@jax.jit
def cnn_forward(x_nchw, params):
    # x_nchw: (B, 1, 28, 28), matching the PyTorch module's expected input.
    B = x_nchw.shape[0]
    assert x_nchw.shape[1:] == (1, 28, 28)
    # NCHW -> (B, 28, 28) is a pure reshape (C == 1); pad spatially for conv1.
    x = x_nchw.reshape(B, 28, 28).astype(jnp.bfloat16)
    x = jnp.pad(x, ((0, 0), (1, 1), (1, 1)))                      # (B, 30, 30)

    # layer1 + layer2 fused -> (B, 6, 384) bf16, lanes = (w, cout).
    nb = _pick_nb(B)
    feats = conv_stage(x, params["w1e"], params["w1o"], params["b1"],
                       params["w2e"], params["w2o"], params["b2"], nb=nb)

    # Flatten (h, w, c) features and pad batch rows to 8 sublanes.
    h = feats.reshape(B, 64 * 6 * 6)
    mp = _round_up(B, 8)
    if mp > B:
        h = jnp.pad(h, ((0, mp - B), (0, 0)))

    # fc1 (2304 -> 1000, padded 1024) with fc2 (-> 10, padded 128) fused in.
    out = fc_stage(h, params["wfc1"], params["bfc1"],
                   params["wfc2"], params["bfc2"], tn=512, tk=1152)
    return out[:B, :10]


if __name__ == "__main__":
    key = jax.random.PRNGKey(0)
    k_x, k_p = jax.random.split(key)
    # Spatial size must be 28x28 for the 64*6*6 flatten to be consistent.
    x = jax.random.normal(k_x, (2, 1, 28, 28), jnp.float32)
    params = init_params(k_p)

    out = cnn_forward(x, params)
    out = jax.block_until_ready(out)
    assert out.shape == (2, 10) and out.dtype == jnp.float32
    print("KERNEL_OK")
</pallas_src>

<mosaic_0001>
module attributes {stable_mosaic.version = 11 : i64} {
  func.func @conv_block_kernel(%arg0: i32, %arg1: memref<1x30x30xbf16, #tpu.memory_space<vmem>>, %arg2: memref<3x30x448xbf16, #tpu.memory_space<vmem>>, %arg3: memref<3x30x448xbf16, #tpu.memory_space<vmem>>, %arg4: memref<1x448xf32, #tpu.memory_space<vmem>>, %arg5: memref<3x448x384xbf16, #tpu.memory_space<vmem>>, %arg6: memref<3x448x384xbf16, #tpu.memory_space<vmem>>, %arg7: memref<1x384xf32, #tpu.memory_space<vmem>>, %arg8: memref<1x6x384xbf16, #tpu.memory_space<vmem>>) attributes {dimension_semantics = [#tpu.dimension_semantics<parallel>], iteration_bounds = array<i64: 2>, scalar_prefetch = 0 : i64, scratch_operands = 0 : i64, tpu.core_type = #tpu.core_type<tc>, window_params = [{transform_indices = @transform_0, window_bounds = array<i64: 1, 30, 30>}, {pipeline_mode = #tpu.pipeline_mode<synchronous>, transform_indices = @transform_1, window_bounds = array<i64: 3, 30, 448>}, {pipeline_mode = #tpu.pipeline_mode<synchronous>, transform_indices = @transform_2, window_bounds = array<i64: 3, 30, 448>}, {pipeline_mode = #tpu.pipeline_mode<synchronous>, transform_indices = @transform_3, window_bounds = array<i64: 1, 448>}, {pipeline_mode = #tpu.pipeline_mode<synchronous>, transform_indices = @transform_4, window_bounds = array<i64: 3, 448, 384>}, {pipeline_mode = #tpu.pipeline_mode<synchronous>, transform_indices = @transform_5, window_bounds = array<i64: 3, 448, 384>}, {pipeline_mode = #tpu.pipeline_mode<synchronous>, transform_indices = @transform_6, window_bounds = array<i64: 1, 384>}, {transform_indices = @transform_7, window_bounds = array<i64: 1, 6, 384>}]} {
    %c0 = arith.constant 0 : index
    %c0_0 = arith.constant 0 : index
    %c0_1 = arith.constant 0 : index
    %0 = vector.load %arg1[%c0, %c0_0, %c0_1] : memref<1x30x30xbf16, #tpu.memory_space<vmem>>, vector<1x30x30xbf16>
    %1 = vector.extract_strided_slice %0 {offsets = [0, 0, 0], sizes = [1, 28, 30], strides = [1, 1, 1]} : vector<1x30x30xbf16> to vector<1x28x30xbf16>
    %2 = vector.shape_cast %1 : vector<1x28x30xbf16> to vector<28x30xbf16>
    %c0_2 = arith.constant 0 : index
    %c0_3 = arith.constant 0 : index
    %c0_4 = arith.constant 0 : index
    %3 = vector.load %arg2[%c0_2, %c0_3, %c0_4] : memref<3x30x448xbf16, #tpu.memory_space<vmem>>, vector<1x30x448xbf16>
    %4 = vector.shape_cast %3 : vector<1x30x448xbf16> to vector<30x448xbf16>
    %cst = arith.constant dense<0.000000e+00> : vector<28x448xf32>
    %5 = tpu.matmul %2, %4, %cst {dimension_numbers = #tpu.dot_dimension_numbers<[1], [0], [0], [1], [0, 0, 1, 1], [], []>} : vector<28x30xbf16>, vector<30x448xbf16>, vector<28x448xf32> -> vector<28x448xf32>
    %c0_5 = arith.constant 0 : index
    %c0_6 = arith.constant 0 : index
    %c0_7 = arith.constant 0 : index
    %6 = vector.load %arg3[%c0_5, %c0_6, %c0_7] : memref<3x30x448xbf16, #tpu.memory_space<vmem>>, vector<1x30x448xbf16>
    %7 = vector.shape_cast %6 : vector<1x30x448xbf16> to vector<30x448xbf16>
    %cst_8 = arith.constant dense<0.000000e+00> : vector<28x448xf32>
    %8 = tpu.matmul %2, %7, %cst_8 {dimension_numbers = #tpu.dot_dimension_numbers<[1], [0], [0], [1], [0, 0, 1, 1], [], []>} : vector<28x30xbf16>, vector<30x448xbf16>, vector<28x448xf32> -> vector<28x448xf32>
    %9 = vector.extract_strided_slice %0 {offsets = [0, 1, 0], sizes = [1, 28, 30], strides = [1, 1, 1]} : vector<1x30x30xbf16> to vector<1x28x30xbf16>
    %10 = vector.shape_cast %9 : vector<1x28x30xbf16> to vector<28x30xbf16>
    %c1 = arith.constant 1 : index
    %c0_9 = arith.constant 0 : index
    %c0_10 = arith.constant 0 : index
    %11 = vector.load %arg2[%c1, %c0_9, %c0_10] : memref<3x30x448xbf16, #tpu.memory_space<vmem>>, vector<1x30x448xbf16>
    %12 = vector.shape_cast %11 : vector<1x30x448xbf16> to vector<30x448xbf16>
    %cst_11 = arith.constant dense<0.000000e+00> : vector<28x448xf32>
    %13 = tpu.matmul %10, %12, %cst_11 {dimension_numbers = #tpu.dot_dimension_numbers<[1], [0], [0], [1], [0, 0, 1, 1], [], []>} : vector<28x30xbf16>, vector<30x448xbf16>, vector<28x448xf32> -> vector<28x448xf32>
    %c1_12 = arith.constant 1 : index
    %c0_13 = arith.constant 0 : index
    %c0_14 = arith.constant 0 : index
    %14 = vector.load %arg3[%c1_12, %c0_13, %c0_14] : memref<3x30x448xbf16, #tpu.memory_space<vmem>>, vector<1x30x448xbf16>
    %15 = vector.shape_cast %14 : vector<1x30x448xbf16> to vector<30x448xbf16>
    %cst_15 = arith.constant dense<0.000000e+00> : vector<28x448xf32>
    %16 = tpu.matmul %10, %15, %cst_15 {dimension_numbers = #tpu.dot_dimension_numbers<[1], [0], [0], [1], [0, 0, 1, 1], [], []>} : vector<28x30xbf16>, vector<30x448xbf16>, vector<28x448xf32> -> vector<28x448xf32>
    %17 = arith.addf %5, %13 : vector<28x448xf32>
    %18 = arith.addf %8, %16 : vector<28x448xf32>
    %19 = vector.extract_strided_slice %0 {offsets = [0, 2, 0], sizes = [1, 28, 30], strides = [1, 1, 1]} : vector<1x30x30xbf16> to vector<1x28x30xbf16>
    %20 = vector.shape_cast %19 : vector<1x28x30xbf16> to vector<28x30xbf16>
    %c2 = arith.constant 2 : index
    %c0_16 = arith.constant 0 : index
    %c0_17 = arith.constant 0 : index
    %21 = vector.load %arg2[%c2, %c0_16, %c0_17] : memref<3x30x448xbf16, #tpu.memory_space<vmem>>, vector<1x30x448xbf16>
    %22 = vector.shape_cast %21 : vector<1x30x448xbf16> to vector<30x448xbf16>
    %cst_18 = arith.constant dense<0.000000e+00> : vector<28x448xf32>
    %23 = tpu.matmul %20, %22, %cst_18 {dimension_numbers = #tpu.dot_dimension_numbers<[1], [0], [0], [1], [0, 0, 1, 1], [], []>} : vector<28x30xbf16>, vector<30x448xbf16>, vector<28x448xf32> -> vector<28x448xf32>
    %c2_19 = arith.constant 2 : index
    %c0_20 = arith.constant 0 : index
    %c0_21 = arith.constant 0 : index
    %24 = vector.load %arg3[%c2_19, %c0_20, %c0_21] : memref<3x30x448xbf16, #tpu.memory_space<vmem>>, vector<1x30x448xbf16>
    %25 = vector.shape_cast %24 : vector<1x30x448xbf16> to vector<30x448xbf16>
    %cst_22 = arith.constant dense<0.000000e+00> : vector<28x448xf32>
    %26 = tpu.matmul %20, %25, %cst_22 {dimension_numbers = #tpu.dot_dimension_numbers<[1], [0], [0], [1], [0, 0, 1, 1], [], []>} : vector<28x30xbf16>, vector<30x448xbf16>, vector<28x448xf32> -> vector<28x448xf32>
    %27 = arith.addf %17, %23 : vector<28x448xf32>
    %28 = arith.addf %18, %26 : vector<28x448xf32>
    %29 = arith.maximumf %27, %28 : vector<28x448xf32>
    %30 = vector.shape_cast %29 : vector<28x448xf32> to vector<14x2x448xf32>
    %31 = vector.extract_strided_slice %30 {offsets = [0, 0, 0], sizes = [14, 1, 448], strides = [1, 1, 1]} : vector<14x2x448xf32> to vector<14x1x448xf32>
    %32 = vector.shape_cast %31 : vector<14x1x448xf32> to vector<14x448xf32>
    %33 = vector.extract_strided_slice %30 {offsets = [0, 1, 0], sizes = [14, 1, 448], strides = [1, 1, 1]} : vector<14x2x448xf32> to vector<14x1x448xf32>
    %34 = vector.shape_cast %33 : vector<14x1x448xf32> to vector<14x448xf32>
    %35 = arith.maximumf %32, %34 : vector<14x448xf32>
    %c0_23 = arith.constant 0 : index
    %c0_24 = arith.constant 0 : index
    %36 = vector.load %arg4[%c0_23, %c0_24] : memref<1x448xf32, #tpu.memory_space<vmem>>, vector<1x448xf32>
    %37 = vector.broadcast %36 : vector<1x448xf32> to vector<14x448xf32>
    %38 = arith.addf %35, %37 : vector<14x448xf32>
    %cst_25 = arith.constant 0.000000e+00 : f32
    %39 = vector.broadcast %cst_25 : f32 to vector<14x448xf32>
    %40 = arith.maximumf %38, %39 : vector<14x448xf32>
    %41 = vector.shape_cast %40 : vector<14x448xf32> to vector<1x14x448xf32>
    %42 = arith.truncf %41 : vector<1x14x448xf32> to vector<1x14x448xbf16>
    %43 = vector.extract_strided_slice %42 {offsets = [0, 0, 0], sizes = [1, 12, 448], strides = [1, 1, 1]} : vector<1x14x448xbf16> to vector<1x12x448xbf16>
    %44 = vector.shape_cast %43 : vector<1x12x448xbf16> to vector<12x448xbf16>
    %c0_26 = arith.constant 0 : index
    %c0_27 = arith.constant 0 : index
    %c0_28 = arith.constant 0 : index
    %45 = vector.load %arg5[%c0_26, %c0_27, %c0_28] : memref<3x448x384xbf16, #tpu.memory_space<vmem>>, vector<1x448x384xbf16>
    %46 = vector.shape_cast %45 : vector<1x448x384xbf16> to vector<448x384xbf16>
    %cst_29 = arith.constant dense<0.000000e+00> : vector<12x384xf32>
    %47 = tpu.matmul %44, %46, %cst_29 {dimension_numbers = #tpu.dot_dimension_numbers<[1], [0], [0], [1], [0, 0, 1, 1], [], []>} : vector<12x448xbf16>, vector<448x384xbf16>, vector<12x384xf32> -> vector<12x384xf32>
    %c0_30 = arith.constant 0 : index
    %c0_31 = arith.constant 0 : index
    %c0_32 = arith.constant 0 : index
    %48 = vector.load %arg6[%c0_30, %c0_31, %c0_32] : memref<3x448x384xbf16, #tpu.memory_space<vmem>>, vector<1x448x384xbf16>
    %49 = vector.shape_cast %48 : vector<1x448x384xbf16> to vector<448x384xbf16>
    %cst_33 = arith.constant dense<0.000000e+00> : vector<12x384xf32>
    %50 = tpu.matmul %44, %49, %cst_33 {dimension_numbers = #tpu.dot_dimension_numbers<[1], [0], [0], [1], [0, 0, 1, 1], [], []>} : vector<12x448xbf16>, vector<448x384xbf16>, vector<12x384xf32> -> vector<12x384xf32>
    %51 = vector.extract_strided_slice %42 {offsets = [0, 1, 0], sizes = [1, 12, 448], strides = [1, 1, 1]} : vector<1x14x448xbf16> to vector<1x12x448xbf16>
    %52 = vector.shape_cast %51 : vector<1x12x448xbf16> to vector<12x448xbf16>
    %c1_34 = arith.constant 1 : index
    %c0_35 = arith.constant 0 : index
    %c0_36 = arith.constant 0 : index
    %53 = vector.load %arg5[%c1_34, %c0_35, %c0_36] : memref<3x448x384xbf16, #tpu.memory_space<vmem>>, vector<1x448x384xbf16>
    %54 = vector.shape_cast %53 : vector<1x448x384xbf16> to vector<448x384xbf16>
    %cst_37 = arith.constant dense<0.000000e+00> : vector<12x384xf32>
    %55 = tpu.matmul %52, %54, %cst_37 {dimension_numbers = #tpu.dot_dimension_numbers<[1], [0], [0], [1], [0, 0, 1, 1], [], []>} : vector<12x448xbf16>, vector<448x384xbf16>, vector<12x384xf32> -> vector<12x384xf32>
    %c1_38 = arith.constant 1 : index
    %c0_39 = arith.constant 0 : index
    %c0_40 = arith.constant 0 : index
    %56 = vector.load %arg6[%c1_38, %c0_39, %c0_40] : memref<3x448x384xbf16, #tpu.memory_space<vmem>>, vector<1x448x384xbf16>
    %57 = vector.shape_cast %56 : vector<1x448x384xbf16> to vector<448x384xbf16>
    %cst_41 = arith.constant dense<0.000000e+00> : vector<12x384xf32>
    %58 = tpu.matmul %52, %57, %cst_41 {dimension_numbers = #tpu.dot_dimension_numbers<[1], [0], [0], [1], [0, 0, 1, 1], [], []>} : vector<12x448xbf16>, vector<448x384xbf16>, vector<12x384xf32> -> vector<12x384xf32>
    %59 = arith.addf %47, %55 : vector<12x384xf32>
    %60 = arith.addf %50, %58 : vector<12x384xf32>
    %61 = vector.extract_strided_slice %42 {offsets = [0, 2, 0], sizes = [1, 12, 448], strides = [1, 1, 1]} : vector<1x14x448xbf16> to vector<1x12x448xbf16>
    %62 = vector.shape_cast %61 : vector<1x12x448xbf16> to vector<12x448xbf16>
    %c2_42 = arith.constant 2 : index
    %c0_43 = arith.constant 0 : index
    %c0_44 = arith.constant 0 : index
    %63 = vector.load %arg5[%c2_42, %c0_43, %c0_44] : memref<3x448x384xbf16, #tpu.memory_space<vmem>>, vector<1x448x384xbf16>
    %64 = vector.shape_cast %63 : vector<1x448x384xbf16> to vector<448x384xbf16>
    %cst_45 = arith.constant dense<0.000000e+00> : vector<12x384xf32>
    %65 = tpu.matmul %62, %64, %cst_45 {dimension_numbers = #tpu.dot_dimension_numbers<[1], [0], [0], [1], [0, 0, 1, 1], [], []>} : vector<12x448xbf16>, vector<448x384xbf16>, vector<12x384xf32> -> vector<12x384xf32>
    %c2_46 = arith.constant 2 : index
    %c0_47 = arith.constant 0 : index
    %c0_48 = arith.constant 0 : index
    %66 = vector.load %arg6[%c2_46, %c0_47, %c0_48] : memref<3x448x384xbf16, #tpu.memory_space<vmem>>, vector<1x448x384xbf16>
    %67 = vector.shape_cast %66 : vector<1x448x384xbf16> to vector<448x384xbf16>
    %cst_49 = arith.constant dense<0.000000e+00> : vector<12x384xf32>
    %68 = tpu.matmul %62, %67, %cst_49 {dimension_numbers = #tpu.dot_dimension_numbers<[1], [0], [0], [1], [0, 0, 1, 1], [], []>} : vector<12x448xbf16>, vector<448x384xbf16>, vector<12x384xf32> -> vector<12x384xf32>
    %69 = arith.addf %59, %65 : vector<12x384xf32>
    %70 = arith.addf %60, %68 : vector<12x384xf32>
    %71 = arith.maximumf %69, %70 : vector<12x384xf32>
    %72 = vector.shape_cast %71 : vector<12x384xf32> to vector<6x2x384xf32>
    %73 = vector.extract_strided_slice %72 {offsets = [0, 0, 0], sizes = [6, 1, 384], strides = [1, 1, 1]} : vector<6x2x384xf32> to vector<6x1x384xf32>
    %74 = vector.shape_cast %73 : vector<6x1x384xf32> to vector<6x384xf32>
    %75 = vector.extract_strided_slice %72 {offsets = [0, 1, 0], sizes = [6, 1, 384], strides = [1, 1, 1]} : vector<6x2x384xf32> to vector<6x1x384xf32>
    %76 = vector.shape_cast %75 : vector<6x1x384xf32> to vector<6x384xf32>
    %77 = arith.maximumf %74, %76 : vector<6x384xf32>
    %c0_50 = arith.constant 0 : index
    %c0_51 = arith.constant 0 : index
    %78 = vector.load %arg7[%c0_50, %c0_51] : memref<1x384xf32, #tpu.memory_space<vmem>>, vector<1x384xf32>
    %79 = vector.broadcast %78 : vector<1x384xf32> to vector<6x384xf32>
    %80 = arith.addf %77, %79 : vector<6x384xf32>
    %cst_52 = arith.constant 0.000000e+00 : f32
    %81 = vector.broadcast %cst_52 : f32 to vector<6x384xf32>
    %82 = arith.maximumf %80, %81 : vector<6x384xf32>
    %83 = vector.shape_cast %82 : vector<6x384xf32> to vector<1x6x384xf32>
    %84 = arith.truncf %83 : vector<1x6x384xf32> to vector<1x6x384xbf16>
    %c0_53 = arith.constant 0 : index
    %c0_54 = arith.constant 0 : index
    %c0_55 = arith.constant 0 : index
    %85 = vector.load %arg8[%c0_53, %c0_54, %c0_55] : memref<1x6x384xbf16, #tpu.memory_space<vmem>>, vector<1x6x384xbf16>
    tpu.vector_store %arg8[%c0_53, %c0_54, %c0_55], %84 {strides = array<i32>} : memref<1x6x384xbf16, #tpu.memory_space<vmem>>, vector<1x6x384xbf16>,
    return
  }
  func.func @transform_0(%arg0: i32) -> (i32, i32, i32) {
    %c0_i32 = arith.constant 0 : i32
    %c0_i32_0 = arith.constant 0 : i32
    %c0_i32_1 = arith.constant 0 : i32
    return %arg0, %c0_i32, %c0_i32_0 : i32, i32, i32
  }
  func.func @transform_1(%arg0: i32) -> (i32, i32, i32) {
    %c0_i32 = arith.constant 0 : i32
    %c0_i32_0 = arith.constant 0 : i32
    %c0_i32_1 = arith.constant 0 : i32
    %c0_i32_2 = arith.constant 0 : i32
    return %c0_i32, %c0_i32_0, %c0_i32_1 : i32, i32, i32
  }
  func.func @transform_2(%arg0: i32) -> (i32, i32, i32) {
    %c0_i32 = arith.constant 0 : i32
    %c0_i32_0 = arith.constant 0 : i32
    %c0_i32_1 = arith.constant 0 : i32
    %c0_i32_2 = arith.constant 0 : i32
    return %c0_i32, %c0_i32_0, %c0_i32_1 : i32, i32, i32
  }
  func.func @transform_3(%arg0: i32) -> (i32, i32) {
    %c0_i32 = arith.constant 0 : i32
    %c0_i32_0 = arith.constant 0 : i32
    %c0_i32_1 = arith.constant 0 : i32
    return %c0_i32, %c0_i32_0 : i32, i32
  }
  func.func @transform_4(%arg0: i32) -> (i32, i32, i32) {
    %c0_i32 = arith.constant 0 : i32
    %c0_i32_0 = arith.constant 0 : i32
    %c0_i32_1 = arith.constant 0 : i32
    %c0_i32_2 = arith.constant 0 : i32
    return %c0_i32, %c0_i32_0, %c0_i32_1 : i32, i32, i32
  }
  func.func @transform_5(%arg0: i32) -> (i32, i32, i32) {
    %c0_i32 = arith.constant 0 : i32
    %c0_i32_0 = arith.constant 0 : i32
    %c0_i32_1 = arith.constant 0 : i32
    %c0_i32_2 = arith.constant 0 : i32
    return %c0_i32, %c0_i32_0, %c0_i32_1 : i32, i32, i32
  }
  func.func @transform_6(%arg0: i32) -> (i32, i32) {
    %c0_i32 = arith.constant 0 : i32
    %c0_i32_0 = arith.constant 0 : i32
    %c0_i32_1 = arith.constant 0 : i32
    return %c0_i32, %c0_i32_0 : i32, i32
  }
  func.func @transform_7(%arg0: i32) -> (i32, i32, i32) {
    %c0_i32 = arith.constant 0 : i32
    %c0_i32_0 = arith.constant 0 : i32
    %c0_i32_1 = arith.constant 0 : i32
    return %arg0, %c0_i32, %c0_i32_0 : i32, i32, i32
  }
}

module attributes {stable_mosaic.version = 11 : i64} {
  func.func @fc_fused_kernel(%arg0: i32, %arg1: i32, %arg2: memref<8x1152xbf16, #tpu.memory_space<vmem>>, %arg3: memref<1152x512xbf16, #tpu.memory_space<vmem>>, %arg4: memref<1x512xf32, #tpu.memory_space<vmem>>, %arg5: memref<1024x128xbf16, #tpu.memory_space<vmem>>, %arg6: memref<1x128xf32, #tpu.memory_space<vmem>>, %arg7: memref<8x128xf32, #tpu.memory_space<vmem>>, %arg8: memref<2x8x512xf32, #tpu.memory_space<vmem>>) attributes {dimension_semantics = [#tpu.dimension_semantics<arbitrary>, #tpu.dimension_semantics<arbitrary>], iteration_bounds = array<i64: 2, 2>, scalar_prefetch = 0 : i64, scratch_operands = 1 : i64, tpu.core_type = #tpu.core_type<tc>, window_params = [{transform_indices = @transform_0, window_bounds = array<i64: 8, 1152>}, {transform_indices = @transform_1, window_bounds = array<i64: 1152, 512>}, {transform_indices = @transform_2, window_bounds = array<i64: 1, 512>}, {pipeline_mode = #tpu.pipeline_mode<synchronous>, transform_indices = @transform_3, window_bounds = array<i64: 1024, 128>}, {pipeline_mode = #tpu.pipeline_mode<synchronous>, transform_indices = @transform_4, window_bounds = array<i64: 1, 128>}, {pipeline_mode = #tpu.pipeline_mode<synchronous>, transform_indices = @transform_5, window_bounds = array<i64: 8, 128>}]} {
    %c0 = arith.constant 0 : index
    %c0_0 = arith.constant 0 : index
    %0 = vector.load %arg2[%c0, %c0_0] : memref<8x1152xbf16, #tpu.memory_space<vmem>>, vector<8x1152xbf16>
    %c0_1 = arith.constant 0 : index
    %c0_2 = arith.constant 0 : index
    %1 = vector.load %arg3[%c0_1, %c0_2] : memref<1152x512xbf16, #tpu.memory_space<vmem>>, vector<1152x512xbf16>
    %cst = arith.constant dense<0.000000e+00> : vector<8x512xf32>
    %2 = tpu.matmul %0, %1, %cst {dimension_numbers = #tpu.dot_dimension_numbers<[1], [0], [0], [1], [0, 0, 1, 1], [], []>} : vector<8x1152xbf16>, vector<1152x512xbf16>, vector<8x512xf32> -> vector<8x512xf32>
    %c0_i32 = arith.constant 0 : i32
    %3 = arith.cmpi eq, %arg1, %c0_i32 : i32
    %4 = arith.extui %3 : i1 to i32
    %c0_i32_3 = arith.constant 0 : i32
    %5 = arith.cmpi ne, %4, %c0_i32_3 : i32
    scf.if %5 {
      %c0_8 = arith.constant 0 : index
      %c0_9 = arith.constant 0 : index
      %14 = vector.load %arg4[%c0_8, %c0_9] : memref<1x512xf32, #tpu.memory_space<vmem>>, vector<1x512xf32>
      %15 = vector.broadcast %14 : vector<1x512xf32> to vector<8x512xf32>
      %16 = arith.addf %2, %15 : vector<8x512xf32>
      %17 = arith.index_cast %arg0 : i32 to index
      %c0_10 = arith.constant 0 : index
      %c0_11 = arith.constant 0 : index
      %18 = vector.load %arg8[%17, %c0_10, %c0_11] : memref<2x8x512xf32, #tpu.memory_space<vmem>>, vector<1x8x512xf32>
      %19 = vector.shape_cast %18 : vector<1x8x512xf32> to vector<8x512xf32>
      %20 = vector.shape_cast %16 : vector<8x512xf32> to vector<1x8x512xf32>
      tpu.vector_store %arg8[%17, %c0_10, %c0_11], %20 {strides = array<i32>} : memref<2x8x512xf32, #tpu.memory_space<vmem>>, vector<1x8x512xf32>,
    } else {
    }
    %c0_i32_4 = arith.constant 0 : i32
    %6 = arith.cmpi sgt, %arg1, %c0_i32_4 : i32
    %7 = arith.extui %6 : i1 to i32
    %c0_i32_5 = arith.constant 0 : i32
    %8 = arith.cmpi ne, %7, %c0_i32_5 : i32
    scf.if %8 {
      %14 = arith.index_cast %arg0 : i32 to index
      %c0_8 = arith.constant 0 : index
      %c0_9 = arith.constant 0 : index
      %15 = vector.load %arg8[%14, %c0_8, %c0_9] : memref<2x8x512xf32, #tpu.memory_space<vmem>>, vector<1x8x512xf32>
      %16 = vector.shape_cast %15 : vector<1x8x512xf32> to vector<8x512xf32>
      %17 = arith.addf %16, %2 : vector<8x512xf32>
      %18 = arith.index_cast %arg0 : i32 to index
      %c0_10 = arith.constant 0 : index
      %c0_11 = arith.constant 0 : index
      %19 = vector.load %arg8[%18, %c0_10, %c0_11] : memref<2x8x512xf32, #tpu.memory_space<vmem>>, vector<1x8x512xf32>
      %20 = vector.shape_cast %19 : vector<1x8x512xf32> to vector<8x512xf32>
      %21 = vector.shape_cast %17 : vector<8x512xf32> to vector<1x8x512xf32>
      tpu.vector_store %arg8[%18, %c0_10, %c0_11], %21 {strides = array<i32>} : memref<2x8x512xf32, #tpu.memory_space<vmem>>, vector<1x8x512xf32>,
    } else {
    }
    %c1_i32 = arith.constant 1 : i32
    %9 = arith.cmpi eq, %arg0, %c1_i32 : i32
    %c1_i32_6 = arith.constant 1 : i32
    %10 = arith.cmpi eq, %arg1, %c1_i32_6 : i32
    %11 = arith.andi %9, %10 : i1
    %12 = arith.extui %11 : i1 to i32
    %c0_i32_7 = arith.constant 0 : i32
    %13 = arith.cmpi ne, %12, %c0_i32_7 : i32
    scf.if %13 {
      %c0_8 = arith.constant 0 : index
      %c0_9 = arith.constant 0 : index
      %c0_10 = arith.constant 0 : index
      %14 = vector.load %arg8[%c0_8, %c0_9, %c0_10] : memref<2x8x512xf32, #tpu.memory_space<vmem>>, vector<1x8x512xf32>
      %15 = vector.shape_cast %14 : vector<1x8x512xf32> to vector<8x512xf32>
      %16 = arith.truncf %15 : vector<8x512xf32> to vector<8x512xbf16>
      %c0_11 = arith.constant 0 : index
      %c0_12 = arith.constant 0 : index
      %17 = vector.load %arg5[%c0_11, %c0_12] : memref<1024x128xbf16, #tpu.memory_space<vmem>>, vector<512x128xbf16>
      %cst_13 = arith.constant dense<0.000000e+00> : vector<8x128xf32>
      %18 = tpu.matmul %16, %17, %cst_13 {dimension_numbers = #tpu.dot_dimension_numbers<[1], [0], [0], [1], [0, 0, 1, 1], [], []>} : vector<8x512xbf16>, vector<512x128xbf16>, vector<8x128xf32> -> vector<8x128xf32>
      %c1 = arith.constant 1 : index
      %c0_14 = arith.constant 0 : index
      %c0_15 = arith.constant 0 : index
      %19 = vector.load %arg8[%c1, %c0_14, %c0_15] : memref<2x8x512xf32, #tpu.memory_space<vmem>>, vector<1x8x512xf32>
      %20 = vector.shape_cast %19 : vector<1x8x512xf32> to vector<8x512xf32>
      %21 = arith.truncf %20 : vector<8x512xf32> to vector<8x512xbf16>
      %c512 = arith.constant 512 : index
      %c0_16 = arith.constant 0 : index
      %22 = vector.load %arg5[%c512, %c0_16] : memref<1024x128xbf16, #tpu.memory_space<vmem>>, vector<512x128xbf16>
      %cst_17 = arith.constant dense<0.000000e+00> : vector<8x128xf32>
      %23 = tpu.matmul %21, %22, %cst_17 {dimension_numbers = #tpu.dot_dimension_numbers<[1], [0], [0], [1], [0, 0, 1, 1], [], []>} : vector<8x512xbf16>, vector<512x128xbf16>, vector<8x128xf32> -> vector<8x128xf32>
      %24 = arith.addf %18, %23 : vector<8x128xf32>
      %c0_18 = arith.constant 0 : index
      %c0_19 = arith.constant 0 : index
      %25 = vector.load %arg6[%c0_18, %c0_19] : memref<1x128xf32, #tpu.memory_space<vmem>>, vector<1x128xf32>
      %26 = vector.broadcast %25 : vector<1x128xf32> to vector<8x128xf32>
      %27 = arith.addf %24, %26 : vector<8x128xf32>
      %c0_20 = arith.constant 0 : index
      %c0_21 = arith.constant 0 : index
      %28 = vector.load %arg7[%c0_20, %c0_21] : memref<8x128xf32, #tpu.memory_space<vmem>>, vector<8x128xf32>
      tpu.vector_store %arg7[%c0_20, %c0_21], %27 {strides = array<i32>} : memref<8x128xf32, #tpu.memory_space<vmem>>, vector<8x128xf32>,
    } else {
    }
    return
  }
  func.func @transform_0(%arg0: i32, %arg1: i32) -> (i32, i32) {
    %c0_i32 = arith.constant 0 : i32
    %c0_i32_0 = arith.constant 0 : i32
    return %c0_i32, %arg1 : i32, i32
  }
  func.func @transform_1(%arg0: i32, %arg1: i32) -> (i32, i32) {
    %c0_i32 = arith.constant 0 : i32
    return %arg1, %arg0 : i32, i32
  }
  func.func @transform_2(%arg0: i32, %arg1: i32) -> (i32, i32) {
    %c0_i32 = arith.constant 0 : i32
    %c0_i32_0 = arith.constant 0 : i32
    return %c0_i32, %arg0 : i32, i32
  }
  func.func @transform_3(%arg0: i32, %arg1: i32) -> (i32, i32) {
    %c0_i32 = arith.constant 0 : i32
    %c0_i32_0 = arith.constant 0 : i32
    %c0_i32_1 = arith.constant 0 : i32
    return %c0_i32, %c0_i32_0 : i32, i32
  }
  func.func @transform_4(%arg0: i32, %arg1: i32) -> (i32, i32) {
    %c0_i32 = arith.constant 0 : i32
    %c0_i32_0 = arith.constant 0 : i32
    %c0_i32_1 = arith.constant 0 : i32
    return %c0_i32, %c0_i32_0 : i32, i32
  }
  func.func @transform_5(%arg0: i32, %arg1: i32) -> (i32, i32) {
    %c0_i32 = arith.constant 0 : i32
    %c0_i32_0 = arith.constant 0 : i32
    %c0_i32_1 = arith.constant 0 : i32
    return %c0_i32, %c0_i32_0 : i32, i32
  }
}

</mosaic_0001>

<llo_original>
// kernel: cnn_forward.3
$region0: #{cnn_forward.3}
  #allocation0 [shape = 'u32[]', space=smem, size = 0x4, offset = 0x4, fixed_abs, tag = 'smem constant byte address 0x4 - core index']
  #allocation1 [shape = 'u32[144,128]{1,0:T(1,128)}', space=vmem, size = 0x12000, scoped, tag = 'internal scratch']
  #allocation2 [shape = 'f32[2,8,512]{2,1,0:T(8,128)}', space=vmem, size = 0x8000, scoped, tag = 'scratch operand']
  %s0 = inlined_call_operand.vmem [shape: bf16[8,2304], index: 0, kind: input, shape index: {}]
  %s1 = inlined_call_operand.hbm [shape: bf16[2304,1024], index: 1, kind: input, shape index: {}]
  %s2 = inlined_call_operand.hbm [shape: f32[1,1024], index: 2, kind: input, shape index: {}]
  %s3 = inlined_call_operand.hbm [shape: bf16[1024,128], index: 3, kind: input, shape index: {}]
  %s4 = inlined_call_operand.hbm [shape: f32[1,128], index: 4, kind: input, shape index: {}]
  %s5 = inlined_call_operand.vmem [shape: f32[8,128], index: 5, kind: output, shape index: {}]
  %s6 = sld [smem:[#allocation0]]
  $region81: #{cnn_forward.3} parent=0
    _
  %s8 = ssub.s32 1, %s6
  %s9 = scalar_select 0, %s8, %s6
  $region1: #{cnn_forward.3} parent=0
    #allocation3 [shape = 'u8[2359296]{0}', space=vmem, size = 0x240000, scoped, tag = 'input window, operand 1']
    #allocation4 [shape = 's32[2]{0}', space=sflag, size = 0x8, scoped, tag = 'scoped memory for cnn_forward.3']
    #allocation5 [shape = 'u8[4096]{0}', space=vmem, size = 0x1000, scoped, tag = 'input window, operand 2']
    #allocation6 [shape = 's32[2]{0}', space=sflag, size = 0x8, scoped, tag = 'scoped memory for cnn_forward.3']
    #allocation7 [shape = 'u8[262144]{0}', space=vmem, size = 0x40000, scoped, tag = 'input window, operand 3, single buffered']
    #allocation8 [shape = 'u8[512]{0}', space=vmem, size = 0x400, scoped, tag = 'input window, operand 4, single buffered']
    #allocation9 [shape = 's32[1]{0}', space=sflag, size = 0x4, scoped, tag = 'scoped memory for cnn_forward.3']
    %10 = vsyncpa [#allocation4], 0
    %s11 = scalar_lea.sflag [#allocation4], 1
    %12 = vsyncpa %s11, 0
    %13 = vsyncpa [#allocation6], 0
    %s14 = scalar_lea.sflag [#allocation6], 1
    %15 = vsyncpa %s14, 0
    %16 = vsyncpa [#allocation9], 0
    loop: start=0, step=1, limit=6
    $region2: #{cnn_forward.3} parent=1 // loop_pre_header
      _
    $region3: #{cnn_forward.3} parent=1 // loop_header
      %s18 = sphi 0, %s22
      %p19 = scmp.ge.s32.totalorder %s18, 6
      %s25 = sphi 0, %s37
      %s26 = sphi 0, %s33
      %s27 = sphi 0, %s25
      %s28 = sphi 0, %s26
      %s29 = sphi 0, %s27
      %s30 = sphi 0, %s28
      %s40 = sphi 0, %s42
      %s43 = sphi 0, %s40
      %s44 = sphi 0, %s43
      %s60 = sphi 0, %s44
      %s68 = sphi 0, %s70
      %s71 = sphi 0, %s68
      %s72 = sphi 0, %s71
      %s88 = sphi 0, %s72
      %s94 = sphi 0, %s96
      %s97 = sphi 0, %s94
      %s98 = sphi 0, %s97
      %s114 = sphi 0, %s98
      %s118 = sphi 0, %s118
      %s120 = sphi 0, %s118
      %s121 = sphi 0, %s120
      %s135 = sphi 0, %s121
      %s139 = sphi 0, %s139
      %s141 = sphi 0, %s139
      %s142 = sphi 0, %s141
      %s156 = sphi 0, %s142
      %s160 = sphi 0, %s160
      %s162 = sphi 0, %s160
      %s163 = sphi 0, %s162
      %s177 = sphi 0, %s163
    $region4: #{cnn_forward.3} parent=1 // loop_header_branch
      %21 = sbr.rel (%p19) target = $region8
    $region5: #{cnn_forward.3} parent=1 // loop_body
      %s23 = ssub.s32 %s18, 1
      %s24 = ssub.s32 %s18, 2
      %s31 = sadd.s32 1, %s26
      %p32 = scmp.ge.s32.totalorder %s31, 2
      %s33 = scalar_select %p32, 0, %s31
      %s34 = sadd.s32 1, %s25
      %s35 = scalar_select %p32, %s34, %s25
      %p36 = scmp.ge.s32.totalorder %s35, 2
      %s37 = scalar_select %p36, 0, %s35
      %s38 = ssub.s32 %s26, %s33
      %p39 = scmp.eq.s32.totalorder %s38, 0
      %s41 = sadd.s32 %s40, 1
      %s42 = scalar_select %p39, %s40, %s41
      %p45 = pneg %p39
      %p46 = scmp.eq.s32.totalorder %s18, 3
      %p47 = por %p45, %p46
      %p48 = scmp.ne.s32.totalorder %s40, %s43
      %p49 = scmp.eq.s32.totalorder %s18, 0
      %p50 = por %p48, %p49
      %p51 = scmp.ne.s32.totalorder %s40, %s43
      %p52 = scmp.eq.s32.totalorder %s23, 3
      %p53 = por %p51, %p52
      %p54 = scmp.ne.s32.totalorder %s43, %s44
      %p55 = scmp.eq.s32.totalorder %s23, 0
      %p56 = por %p54, %p55
      %p57 = scmp.ne.s32.totalorder %s43, %s44
      %p58 = scmp.eq.s32.totalorder %s24, 3
      %p59 = por %p57, %p58
      %p61 = scmp.ne.s32.totalorder %s44, %s60
      %p62 = scmp.eq.s32.totalorder %s24, 0
      %p63 = por %p61, %p62
      %s64 = ssub.s32 %s26, %s33
      %s65 = ssub.s32 %s25, %s37
      %s66 = sor.u32 %s64, %s65
      %p67 = scmp.eq.s32.totalorder %s66, 0
      %s69 = sadd.s32 %s68, 1
      %s70 = scalar_select %p67, %s68, %s69
      %p73 = pneg %p67
      %p74 = scmp.eq.s32.totalorder %s18, 3
      %p75 = por %p73, %p74
      %p76 = scmp.ne.s32.totalorder %s68, %s71
      %p77 = scmp.eq.s32.totalorder %s18, 0
      %p78 = por %p76, %p77
      %p79 = scmp.ne.s32.totalorder %s68, %s71
      %p80 = scmp.eq.s32.totalorder %s23, 3
      %p81 = por %p79, %p80
      %p82 = scmp.ne.s32.totalorder %s71, %s72
      %p83 = scmp.eq.s32.totalorder %s23, 0
      %p84 = por %p82, %p83
      %p85 = scmp.ne.s32.totalorder %s71, %s72
      %p86 = scmp.eq.s32.totalorder %s24, 3
      %p87 = por %p85, %p86
      %p89 = scmp.ne.s32.totalorder %s72, %s88
      %p90 = scmp.eq.s32.totalorder %s24, 0
      %p91 = por %p89, %p90
      %s92 = ssub.s32 %s25, %s37
      %p93 = scmp.eq.s32.totalorder %s92, 0
      %s95 = sadd.s32 %s94, 1
      %s96 = scalar_select %p93, %s94, %s95
      %p99 = pneg %p93
      %p100 = scmp.eq.s32.totalorder %s18, 3
      %p101 = por %p99, %p100
      %p102 = scmp.ne.s32.totalorder %s94, %s97
      %p103 = scmp.eq.s32.totalorder %s18, 0
      %p104 = por %p102, %p103
      %p105 = scmp.ne.s32.totalorder %s94, %s97
      %p106 = scmp.eq.s32.totalorder %s23, 3
      %p107 = por %p105, %p106
      %p108 = scmp.ne.s32.totalorder %s97, %s98
      %p109 = scmp.eq.s32.totalorder %s23, 0
      %p110 = por %p108, %p109
      %p111 = scmp.ne.s32.totalorder %s97, %s98
      %p112 = scmp.eq.s32.totalorder %s24, 3
      %p113 = por %p111, %p112
      %p115 = scmp.ne.s32.totalorder %s98, %s114
      %p116 = scmp.eq.s32.totalorder %s24, 0
      %p117 = por %p115, %p116
      %s119 = sadd.s32 %s118, 1
      %p122 = scmp.eq.s32.totalorder %s18, 3
      %p123 = scmp.ne.s32.totalorder %s118, %s120
      %p124 = scmp.eq.s32.totalorder %s18, 0
      %p125 = por %p123, %p124
      %p126 = scmp.ne.s32.totalorder %s118, %s120
      %p127 = scmp.eq.s32.totalorder %s23, 3
      %p128 = por %p126, %p127
      %p129 = scmp.ne.s32.totalorder %s120, %s121
      %p130 = scmp.eq.s32.totalorder %s23, 0
      %p131 = por %p129, %p130
      %p132 = scmp.ne.s32.totalorder %s120, %s121
      %p133 = scmp.eq.s32.totalorder %s24, 3
      %p134 = por %p132, %p133
      %p136 = scmp.ne.s32.totalorder %s121, %s135
      %p137 = scmp.eq.s32.totalorder %s24, 0
      %p138 = por %p136, %p137
      %s140 = sadd.s32 %s139, 1
      %p143 = scmp.eq.s32.totalorder %s18, 3
      %p144 = scmp.ne.s32.totalorder %s139, %s141
      %p145 = scmp.eq.s32.totalorder %s18, 0
      %p146 = por %p144, %p145
      %p147 = scmp.ne.s32.totalorder %s139, %s141
      %p148 = scmp.eq.s32.totalorder %s23, 3
      %p149 = por %p147, %p148
      %p150 = scmp.ne.s32.totalorder %s141, %s142
      %p151 = scmp.eq.s32.totalorder %s23, 0
      %p152 = por %p150, %p151
      %p153 = scmp.ne.s32.totalorder %s141, %s142
      %p154 = scmp.eq.s32.totalorder %s24, 3
      %p155 = por %p153, %p154
      %p157 = scmp.ne.s32.totalorder %s142, %s156
      %p158 = scmp.eq.s32.totalorder %s24, 0
      %p159 = por %p157, %p158
      %s161 = sadd.s32 %s160, 1
      %p164 = scmp.eq.s32.totalorder %s18, 3
      %p165 = scmp.ne.s32.totalorder %s160, %s162
      %p166 = scmp.eq.s32.totalorder %s18, 0
      %p167 = por %p165, %p166
      %p168 = scmp.ne.s32.totalorder %s160, %s162
      %p169 = scmp.eq.s32.totalorder %s23, 3
      %p170 = por %p168, %p169
      %p171 = scmp.ne.s32.totalorder %s162, %s163
      %p172 = scmp.eq.s32.totalorder %s23, 0
      %p173 = por %p171, %p172
      %p174 = scmp.ne.s32.totalorder %s162, %s163
      %p175 = scmp.eq.s32.totalorder %s24, 3
      %p176 = por %p174, %p175
      %p178 = scmp.ne.s32.totalorder %s163, %s177
      %p179 = scmp.eq.s32.totalorder %s24, 0
      %p180 = por %p178, %p179
      %p181 = scmp.le.s32.totalorder 1, %s18
      %p182 = scmp.lt.s32.totalorder %s18, 5
      %p183 = pnand %p181, %p182
      %p184 = pneg %p183
      // Predicated region
      $region9: #{cnn_forward.3} parent=5 // pred_check
        _
      $region10: #{cnn_forward.3} parent=5 // pred_check_branch
        %186 = sbr.rel (%p183) target = $region12
      $region11: #{cnn_forward.3} parent=5 // pred_region
        %s187 = ssub.s32 %s18, 1
        // Predicated region
        $region13: #{cnn_forward.3} parent=11 // pred_check
          %p188 = pneg %p131
        $region14: #{cnn_forward.3} parent=11 // pred_check_branch
          %190 = sbr.rel (%p188) target = $region16
        $region15: #{cnn_forward.3} parent=11 // pred_region
          %s192 = ssub.s32 8192, 8192
          %193 = vsyncadd [#allocation6], %s192
          %s194 = sshll.u32 [#allocation7], 4
          %s195 = int_to_ptr.vmem [resolvable:$true] %s194
          %200 = dma.hbm_to_vmem [thread:$0]  %s3, 8192, %s195, [#allocation6], 64, 64, 4
        $region16: #{cnn_forward.3} parent=11 // pred_fallthru
          _
        // Predicated region
        $region17: #{cnn_forward.3} parent=11 // pred_check
          %p201 = pneg %p152
        $region18: #{cnn_forward.3} parent=11 // pred_check_branch
          %203 = sbr.rel (%p201) target = $region20
        $region19: #{cnn_forward.3} parent=11 // pred_region
          %s205 = ssub.s32 16, 16
          %206 = vsyncadd [#allocation9], %s205
          %s208 = sshll.u32 [#allocation8], 4
          %s209 = int_to_ptr.vmem [resolvable:$true] %s208
          %211 = dma.hbm_to_vmem [thread:$0]  %s4, 16, %s209, [#allocation9]
        $region20: #{cnn_forward.3} parent=11 // pred_fallthru
          _
      $region12: #{cnn_forward.3} parent=5 // pred_fallthru
        _
      %p212 = scmp.lt.s32.totalorder %s18, 4
      // Predicated region
      $region21: #{cnn_forward.3} parent=5 // pred_check
        %p213 = pneg %p212
      $region22: #{cnn_forward.3} parent=5 // pred_check_branch
        %215 = sbr.rel (%p213) target = $region24
      $region23: #{cnn_forward.3} parent=5 // pred_region
        // Predicated region
        $region25: #{cnn_forward.3} parent=23 // pred_check
          %p216 = pneg %p50
        $region26: #{cnn_forward.3} parent=23 // pred_check_branch
          %218 = sbr.rel (%p216) target = $region28
        $region27: #{cnn_forward.3} parent=23 // pred_region
          %s219 = smul.u32 9, %s26
          %p220 = scmp.lt.s32.totalorder %s219, 17
          %s221 = scalar_select %p220, %s219, 17
          %s222 = smul.addr %s221, 4
          %s223 = scalar_lea.vmem %s0, %s222
          %s224 = smul.u32 9, %s26
        $region28: #{cnn_forward.3} parent=23 // pred_fallthru
          _
        // Predicated region
        $region29: #{cnn_forward.3} parent=23 // pred_check
          %p225 = pneg %p78
        $region30: #{cnn_forward.3} parent=23 // pred_check_branch
          %227 = sbr.rel (%p225) target = $region32
        $region31: #{cnn_forward.3} parent=23 // pred_region
          %s228 = sand.u32 %s68, 1
          %s229 = scalar_lea.sflag [#allocation4], %s228
          %s230 = sand.u32 %s68, 1
          %s231 = smul.addr %s230, 2304
          %s232 = scalar_lea.vmem [#allocation3], %s231
          %s233 = smul.u32 144, %s26
          %s234 = smul.u32 4, %s25
          %s236 = ssub.s32 36864, 36864
          %237 = vsyncadd %s229, %s236
          %s238 = smul.addr %s233, 8
          %s239 = sadd.s32 %s234, %s238
          %s240 = smul.addr %s239, 64
          %s241 = scalar_lea.hbm %s1, %s240
          %s242 = sshll.u32 %s232, 4
          %s243 = int_to_ptr.vmem [resolvable:$true] %s242
          %248 = dma.hbm_to_vmem [thread:$0]  %s241, 36864, %s243, %s229, 512, 256, 16
        $region32: #{cnn_forward.3} parent=23 // pred_fallthru
          _
        // Predicated region
        $region33: #{cnn_forward.3} parent=23 // pred_check
          %p249 = pneg %p104
        $region34: #{cnn_forward.3} parent=23 // pred_check_branch
          %251 = sbr.rel (%p249) target = $region36
        $region35: #{cnn_forward.3} parent=23 // pred_region
          %s252 = sand.u32 %s18, 1
          %s253 = scalar_lea.sflag [#allocation6], %s252
          %s254 = sand.u32 %s94, 1
          %s255 = smul.addr %s254, 4
          %s256 = scalar_lea.vmem [#allocation5], %s255
          %s257 = smul.u32 4, %s25
          %s259 = ssub.s32 64, 64
          %260 = vsyncadd %s253, %s259
          %s261 = smul.addr %s257, 16
          %s262 = scalar_lea.hbm %s2, %s261
          %s264 = sshll.u32 %s256, 4
          %s265 = int_to_ptr.vmem [resolvable:$true] %s264
          %267 = dma.hbm_to_vmem [thread:$0]  %s262, 64, %s265, %s253
        $region36: #{cnn_forward.3} parent=23 // pred_fallthru
          _
      $region24: #{cnn_forward.3} parent=5 // pred_fallthru
        _
      %p268 = scmp.le.s32.totalorder 1, %s18
      %p269 = scmp.lt.s32.totalorder %s18, 5
      %p270 = pnand %p268, %p269
      %p271 = pneg %p270
      // Predicated region
      $region37: #{cnn_forward.3} parent=5 // pred_check
        _
      $region38: #{cnn_forward.3} parent=5 // pred_check_branch
        %273 = sbr.rel (%p270) target = $region40
      $region39: #{cnn_forward.3} parent=5 // pred_region
        %s274 = ssub.s32 %s18, 1
        %s275 = sand.u32 %s71, 1
        %s276 = scalar_lea.sflag [#allocation4], %s275
        %s277 = sand.u32 %s71, 1
        %s278 = smul.addr %s277, 2304
        %s279 = scalar_lea.vmem [#allocation3], %s278
        // Predicated region
        $region41: #{cnn_forward.3} parent=39 // pred_check
          %p280 = pneg %p84
        $region42: #{cnn_forward.3} parent=39 // pred_check_branch
          %282 = sbr.rel (%p280) target = $region44
        $region43: #{cnn_forward.3} parent=39 // pred_region
          %283 = dma.done %s276, 36864
        $region44: #{cnn_forward.3} parent=39 // pred_fallthru
          _
        %s284 = sand.u32 %s23, 1
        %s285 = scalar_lea.sflag [#allocation6], %s284
        %s286 = sand.u32 %s97, 1
        %s287 = smul.addr %s286, 4
        %s288 = scalar_lea.vmem [#allocation5], %s287
        // Predicated region
        $region45: #{cnn_forward.3} parent=39 // pred_check
          %p289 = pneg %p110
        $region46: #{cnn_forward.3} parent=39 // pred_check_branch
          %291 = sbr.rel (%p289) target = $region48
        $region47: #{cnn_forward.3} parent=39 // pred_region
          %292 = dma.done %s285, 64
        $region48: #{cnn_forward.3} parent=39 // pred_fallthru
          _
        // Predicated region
        $region49: #{cnn_forward.3} parent=39 // pred_check
          %p293 = pneg %p131
        $region50: #{cnn_forward.3} parent=39 // pred_check_branch
          %295 = sbr.rel (%p293) target = $region52
        $region51: #{cnn_forward.3} parent=39 // pred_region
          %296 = dma.done [#allocation6], 8192
        $region52: #{cnn_forward.3} parent=39 // pred_fallthru
          _
        // Predicated region
        $region53: #{cnn_forward.3} parent=39 // pred_check
          %p297 = pneg %p152
        $region54: #{cnn_forward.3} parent=39 // pred_check_branch
          %299 = sbr.rel (%p297) target = $region56
        $region55: #{cnn_forward.3} parent=39 // pred_region
          %300 = dma.done [#allocation9], 16
        $region56: #{cnn_forward.3} parent=39 // pred_fallthru
          _
        %s301 = smul.u32 9, %s28
        %p302 = scmp.lt.s32.totalorder %s301, 17
        %s303 = scalar_select %p302, %s301, 17
        %s304 = smul.addr %s303, 4
        %s305 = scalar_lea.vmem %s0, %s304
        %p306 = pneg %p56
        %p307 = pneg %p53
        %s308 = sand.u32 %s71, 1
        %s309 = scalar_lea.sflag [#allocation4], %s308
        %s310 = sand.u32 %s71, 1
        %s311 = smul.addr %s310, 2304
        %s312 = scalar_lea.vmem [#allocation3], %s311
        %p313 = pneg %p84
        %p314 = pneg %p81
        %s315 = sand.u32 %s23, 1
        %s316 = scalar_lea.sflag [#allocation6], %s315
        %s317 = sand.u32 %s97, 1
        %s318 = smul.addr %s317, 4
        %s319 = scalar_lea.vmem [#allocation5], %s318
        %p320 = pneg %p110
        %p321 = pneg %p107
        %p322 = pneg %p131
        %p323 = pneg %p128
        %p324 = pneg %p152
        %p325 = pneg %p149
        %p326 = pneg %p173
        %p327 = pneg %p170
        %s328 = smul.u32 9, %s28
        %p329 = scmp.lt.s32.totalorder %s328, 17
        %s330 = scalar_select %p329, %s328, 17
        %s331 = smul.addr %s330, 4
        %s332 = scalar_lea.vmem %s0, %s331
        %s333 = smul.u32 9, %s28
        %s334 = smul.u32 144, %s28
        %s335 = smul.u32 4, %s27
        %s336 = smul.u32 4, %s27
        %v338 = vld [vmem:[%s332] sm:$0xff]
        %v339 = vld [vmem:[%s332 + $0x8] sm:$0xff]
        %v340 = vld [vmem:[%s332 + $0x10] sm:$0xff]
        %v341 = vld [vmem:[%s332 + $0x18] sm:$0xff]
        %v342 = vld [vmem:[%s332 + $0x20] sm:$0xf]
        %v343 = vld [vmem:[%s279] sm:$0xff]
        %v344 = vld [vmem:[%s279 + $0x8] sm:$0xff]
        %v345 = vld [vmem:[%s279 + $0x10] sm:$0xff]
        %v346 = vld [vmem:[%s279 + $0x18] sm:$0xff]
        %v347 = vld [vmem:[%s279 + $0x20] sm:$0xff]
        %v348 = vld [vmem:[%s279 + $0x28] sm:$0xff]
        %v349 = vld [vmem:[%s279 + $0x30] sm:$0xff]
        %v350 = vld [vmem:[%s279 + $0x38] sm:$0xff]
        %v351 = vld [vmem:[%s279 + $0x40] sm:$0xff]
        %v352 = vld [vmem:[%s279 + $0x48] sm:$0xff]
        %v353 = vld [vmem:[%s279 + $0x50] sm:$0xff]
        %v354 = vld [vmem:[%s279 + $0x58] sm:$0xff]
        %v355 = vld [vmem:[%s279 + $0x60] sm:$0xff]
        %v356 = vld [vmem:[%s279 + $0x68] sm:$0xff]
        %v357 = vld [vmem:[%s279 + $0x70] sm:$0xff]
        %v358 = vld [vmem:[%s279 + $0x78] sm:$0xff]
        %v359 = vld [vmem:[%s279 + $0x80] sm:$0xff]
        %v360 = vld [vmem:[%s279 + $0x88] sm:$0xff]
        %v361 = vld [vmem:[%s279 + $0x90] sm:$0xff]
        %v362 = vld [vmem:[%s279 + $0x98] sm:$0xff]
        %v363 = vld [vmem:[%s279 + $0xa0] sm:$0xff]
        %v364 = vld [vmem:[%s279 + $0xa8] sm:$0xff]
        %v365 = vld [vmem:[%s279 + $0xb0] sm:$0xff]
        %v366 = vld [vmem:[%s279 + $0xb8] sm:$0xff]
        %v367 = vld [vmem:[%s279 + $0xc0] sm:$0xff]
        %v368 = vld [vmem:[%s279 + $0xc8] sm:$0xff]
        %v369 = vld [vmem:[%s279 + $0xd0] sm:$0xff]
        %v370 = vld [vmem:[%s279 + $0xd8] sm:$0xff]
        %v371 = vld [vmem:[%s279 + $0xe0] sm:$0xff]
        %v372 = vld [vmem:[%s279 + $0xe8] sm:$0xff]
        %v373 = vld [vmem:[%s279 + $0xf0] sm:$0xff]
        %v374 = vld [vmem:[%s279 + $0xf8] sm:$0xff]
        %v375 = vld [vmem:[%s279 + $0x100] sm:$0xff]
        %v376 = vld [vmem:[%s279 + $0x108] sm:$0xff]
        %v377 = vld [vmem:[%s279 + $0x110] sm:$0xff]
        %v378 = vld [vmem:[%s279 + $0x118] sm:$0xff]
        %v379 = vld [vmem:[%s279 + $0x120] sm:$0xff]
        %v380 = vld [vmem:[%s279 + $0x128] sm:$0xff]
        %v381 = vld [vmem:[%s279 + $0x130] sm:$0xff]
        %v382 = vld [vmem:[%s279 + $0x138] sm:$0xff]
        %v383 = vld [vmem:[%s279 + $0x140] sm:$0xff]
        %v384 = vld [vmem:[%s279 + $0x148] sm:$0xff]
        %v385 = vld [vmem:[%s279 + $0x150] sm:$0xff]
        %v386 = vld [vmem:[%s279 + $0x158] sm:$0xff]
        %v387 = vld [vmem:[%s279 + $0x160] sm:$0xff]
        %v388 = vld [vmem:[%s279 + $0x168] sm:$0xff]
        %v389 = vld [vmem:[%s279 + $0x170] sm:$0xff]
        %v390 = vld [vmem:[%s279 + $0x178] sm:$0xff]
        %v391 = vld [vmem:[%s279 + $0x180] sm:$0xff]
        %v392 = vld [vmem:[%s279 + $0x188] sm:$0xff]
        %v393 = vld [vmem:[%s279 + $0x190] sm:$0xff]
        %v394 = vld [vmem:[%s279 + $0x198] sm:$0xff]
        %v395 = vld [vmem:[%s279 + $0x1a0] sm:$0xff]
        %v396 = vld [vmem:[%s279 + $0x1a8] sm:$0xff]
        %v397 = vld [vmem:[%s279 + $0x1b0] sm:$0xff]
        %v398 = vld [vmem:[%s279 + $0x1b8] sm:$0xff]
        %v399 = vld [vmem:[%s279 + $0x1c0] sm:$0xff]
        %v400 = vld [vmem:[%s279 + $0x1c8] sm:$0xff]
        %v401 = vld [vmem:[%s279 + $0x1d0] sm:$0xff]
        %v402 = vld [vmem:[%s279 + $0x1d8] sm:$0xff]
        %v403 = vld [vmem:[%s279 + $0x1e0] sm:$0xff]
        %v404 = vld [vmem:[%s279 + $0x1e8] sm:$0xff]
        %v405 = vld [vmem:[%s279 + $0x1f0] sm:$0xff]
        %v406 = vld [vmem:[%s279 + $0x1f8] sm:$0xff]
        %v407 = vld [vmem:[%s279 + $0x200] sm:$0xff]
        %v408 = vld [vmem:[%s279 + $0x208] sm:$0xff]
        %v409 = vld [vmem:[%s279 + $0x210] sm:$0xff]
        %v410 = vld [vmem:[%s279 + $0x218] sm:$0xff]
        %v411 = vld [vmem:[%s279 + $0x220] sm:$0xff]
        %v412 = vld [vmem:[%s279 + $0x228] sm:$0xff]
        %v413 = vld [vmem:[%s279 + $0x230] sm:$0xff]
        %v414 = vld [vmem:[%s279 + $0x238] sm:$0xff]
        %v415 = vld [vmem:[%s279 + $0x240] sm:$0xff]
        %v416 = vld [vmem:[%s279 + $0x248] sm:$0xff]
        %v417 = vld [vmem:[%s279 + $0x250] sm:$0xff]
        %v418 = vld [vmem:[%s279 + $0x258] sm:$0xff]
        %v419 = vld [vmem:[%s279 + $0x260] sm:$0xff]
        %v420 = vld [vmem:[%s279 + $0x268] sm:$0xff]
        %v421 = vld [vmem:[%s279 + $0x270] sm:$0xff]
        %v422 = vld [vmem:[%s279 + $0x278] sm:$0xff]
        %v423 = vld [vmem:[%s279 + $0x280] sm:$0xff]
        %v424 = vld [vmem:[%s279 + $0x288] sm:$0xff]
        %v425 = vld [vmem:[%s279 + $0x290] sm:$0xff]
        %v426 = vld [vmem:[%s279 + $0x298] sm:$0xff]
        %v427 = vld [vmem:[%s279 + $0x2a0] sm:$0xff]
        %v428 = vld [vmem:[%s279 + $0x2a8] sm:$0xff]
        %v429 = vld [vmem:[%s279 + $0x2b0] sm:$0xff]
        %v430 = vld [vmem:[%s279 + $0x2b8] sm:$0xff]
        %v431 = vld [vmem:[%s279 + $0x2c0] sm:$0xff]
        %v432 = vld [vmem:[%s279 + $0x2c8] sm:$0xff]
        %v433 = vld [vmem:[%s279 + $0x2d0] sm:$0xff]
        %v434 = vld [vmem:[%s279 + $0x2d8] sm:$0xff]
        %v435 = vld [vmem:[%s279 + $0x2e0] sm:$0xff]
        %v436 = vld [vmem:[%s279 + $0x2e8] sm:$0xff]
        %v437 = vld [vmem:[%s279 + $0x2f0] sm:$0xff]
        %v438 = vld [vmem:[%s279 + $0x2f8] sm:$0xff]
        %v439 = vld [vmem:[%s279 + $0x300] sm:$0xff]
        %v440 = vld [vmem:[%s279 + $0x308] sm:$0xff]
        %v441 = vld [vmem:[%s279 + $0x310] sm:$0xff]
        %v442 = vld [vmem:[%s279 + $0x318] sm:$0xff]
        %v443 = vld [vmem:[%s279 + $0x320] sm:$0xff]
        %v444 = vld [vmem:[%s279 + $0x328] sm:$0xff]
        %v445 = vld [vmem:[%s279 + $0x330] sm:$0xff]
        %v446 = vld [vmem:[%s279 + $0x338] sm:$0xff]
        %v447 = vld [vmem:[%s279 + $0x340] sm:$0xff]
        %v448 = vld [vmem:[%s279 + $0x348] sm:$0xff]
        %v449 = vld [vmem:[%s279 + $0x350] sm:$0xff]
        %v450 = vld [vmem:[%s279 + $0x358] sm:$0xff]
        %v451 = vld [vmem:[%s279 + $0x360] sm:$0xff]
        %v452 = vld [vmem:[%s279 + $0x368] sm:$0xff]
        %v453 = vld [vmem:[%s279 + $0x370] sm:$0xff]
        %v454 = vld [vmem:[%s279 + $0x378] sm:$0xff]
        %v455 = vld [vmem:[%s279 + $0x380] sm:$0xff]
        %v456 = vld [vmem:[%s279 + $0x388] sm:$0xff]
        %v457 = vld [vmem:[%s279 + $0x390] sm:$0xff]
        %v458 = vld [vmem:[%s279 + $0x398] sm:$0xff]
        %v459 = vld [vmem:[%s279 + $0x3a0] sm:$0xff]
        %v460 = vld [vmem:[%s279 + $0x3a8] sm:$0xff]
        %v461 = vld [vmem:[%s279 + $0x3b0] sm:$0xff]
        %v462 = vld [vmem:[%s279 + $0x3b8] sm:$0xff]
        %v463 = vld [vmem:[%s279 + $0x3c0] sm:$0xff]
        %v464 = vld [vmem:[%s279 + $0x3c8] sm:$0xff]
        %v465 = vld [vmem:[%s279 + $0x3d0] sm:$0xff]
        %v466 = vld [vmem:[%s279 + $0x3d8] sm:$0xff]
        %v467 = vld [vmem:[%s279 + $0x3e0] sm:$0xff]
        %v468 = vld [vmem:[%s279 + $0x3e8] sm:$0xff]
        %v469 = vld [vmem:[%s279 + $0x3f0] sm:$0xff]
        %v470 = vld [vmem:[%s279 + $0x3f8] sm:$0xff]
        %v471 = vld [vmem:[%s279 + $0x400] sm:$0xff]
        %v472 = vld [vmem:[%s279 + $0x408] sm:$0xff]
        %v473 = vld [vmem:[%s279 + $0x410] sm:$0xff]
        %v474 = vld [vmem:[%s279 + $0x418] sm:$0xff]
        %v475 = vld [vmem:[%s279 + $0x420] sm:$0xff]
        %v476 = vld [vmem:[%s279 + $0x428] sm:$0xff]
        %v477 = vld [vmem:[%s279 + $0x430] sm:$0xff]
        %v478 = vld [vmem:[%s279 + $0x438] sm:$0xff]
        %v479 = vld [vmem:[%s279 + $0x440] sm:$0xff]
        %v480 = vld [vmem:[%s279 + $0x448] sm:$0xff]
        %v481 = vld [vmem:[%s279 + $0x450] sm:$0xff]
        %v482 = vld [vmem:[%s279 + $0x458] sm:$0xff]
        %v483 = vld [vmem:[%s279 + $0x460] sm:$0xff]
        %v484 = vld [vmem:[%s279 + $0x468] sm:$0xff]
        %v485 = vld [vmem:[%s279 + $0x470] sm:$0xff]
        %v486 = vld [vmem:[%s279 + $0x478] sm:$0xff]
        %v487 = vld [vmem:[%s279 + $0x480] sm:$0xff]
        %v488 = vld [vmem:[%s279 + $0x488] sm:$0xff]
        %v489 = vld [vmem:[%s279 + $0x490] sm:$0xff]
        %v490 = vld [vmem:[%s279 + $0x498] sm:$0xff]
        %v491 = vld [vmem:[%s279 + $0x4a0] sm:$0xff]
        %v492 = vld [vmem:[%s279 + $0x4a8] sm:$0xff]
        %v493 = vld [vmem:[%s279 + $0x4b0] sm:$0xff]
        %v494 = vld [vmem:[%s279 + $0x4b8] sm:$0xff]
        %v495 = vld [vmem:[%s279 + $0x4c0] sm:$0xff]
        %v496 = vld [vmem:[%s279 + $0x4c8] sm:$0xff]
        %v497 = vld [vmem:[%s279 + $0x4d0] sm:$0xff]
        %v498 = vld [vmem:[%s279 + $0x4d8] sm:$0xff]
        %v499 = vld [vmem:[%s279 + $0x4e0] sm:$0xff]
        %v500 = vld [vmem:[%s279 + $0x4e8] sm:$0xff]
        %v501 = vld [vmem:[%s279 + $0x4f0] sm:$0xff]
        %v502 = vld [vmem:[%s279 + $0x4f8] sm:$0xff]
        %v503 = vld [vmem:[%s279 + $0x500] sm:$0xff]
        %v504 = vld [vmem:[%s279 + $0x508] sm:$0xff]
        %v505 = vld [vmem:[%s279 + $0x510] sm:$0xff]
        %v506 = vld [vmem:[%s279 + $0x518] sm:$0xff]
        %v507 = vld [vmem:[%s279 + $0x520] sm:$0xff]
        %v508 = vld [vmem:[%s279 + $0x528] sm:$0xff]
        %v509 = vld [vmem:[%s279 + $0x530] sm:$0xff]
        %v510 = vld [vmem:[%s279 + $0x538] sm:$0xff]
        %v511 = vld [vmem:[%s279 + $0x540] sm:$0xff]
        %v512 = vld [vmem:[%s279 + $0x548] sm:$0xff]
        %v513 = vld [vmem:[%s279 + $0x550] sm:$0xff]
        %v514 = vld [vmem:[%s279 + $0x558] sm:$0xff]
        %v515 = vld [vmem:[%s279 + $0x560] sm:$0xff]
        %v516 = vld [vmem:[%s279 + $0x568] sm:$0xff]
        %v517 = vld [vmem:[%s279 + $0x570] sm:$0xff]
        %v518 = vld [vmem:[%s279 + $0x578] sm:$0xff]
        %v519 = vld [vmem:[%s279 + $0x580] sm:$0xff]
        %v520 = vld [vmem:[%s279 + $0x588] sm:$0xff]
        %v521 = vld [vmem:[%s279 + $0x590] sm:$0xff]
        %v522 = vld [vmem:[%s279 + $0x598] sm:$0xff]
        %v523 = vld [vmem:[%s279 + $0x5a0] sm:$0xff]
        %v524 = vld [vmem:[%s279 + $0x5a8] sm:$0xff]
        %v525 = vld [vmem:[%s279 + $0x5b0] sm:$0xff]
        %v526 = vld [vmem:[%s279 + $0x5b8] sm:$0xff]
        %v527 = vld [vmem:[%s279 + $0x5c0] sm:$0xff]
        %v528 = vld [vmem:[%s279 + $0x5c8] sm:$0xff]
        %v529 = vld [vmem:[%s279 + $0x5d0] sm:$0xff]
        %v530 = vld [vmem:[%s279 + $0x5d8] sm:$0xff]
        %v531 = vld [vmem:[%s279 + $0x5e0] sm:$0xff]
        %v532 = vld [vmem:[%s279 + $0x5e8] sm:$0xff]
        %v533 = vld [vmem:[%s279 + $0x5f0] sm:$0xff]
        %v534 = vld [vmem:[%s279 + $0x5f8] sm:$0xff]
        %v535 = vld [vmem:[%s279 + $0x600] sm:$0xff]
        %v536 = vld [vmem:[%s279 + $0x608] sm:$0xff]
        %v537 = vld [vmem:[%s279 + $0x610] sm:$0xff]
        %v538 = vld [vmem:[%s279 + $0x618] sm:$0xff]
        %v539 = vld [vmem:[%s279 + $0x620] sm:$0xff]
        %v540 = vld [vmem:[%s279 + $0x628] sm:$0xff]
        %v541 = vld [vmem:[%s279 + $0x630] sm:$0xff]
        %v542 = vld [vmem:[%s279 + $0x638] sm:$0xff]
        %v543 = vld [vmem:[%s279 + $0x640] sm:$0xff]
        %v544 = vld [vmem:[%s279 + $0x648] sm:$0xff]
        %v545 = vld [vmem:[%s279 + $0x650] sm:$0xff]
        %v546 = vld [vmem:[%s279 + $0x658] sm:$0xff]
        %v547 = vld [vmem:[%s279 + $0x660] sm:$0xff]
        %v548 = vld [vmem:[%s279 + $0x668] sm:$0xff]
        %v549 = vld [vmem:[%s279 + $0x670] sm:$0xff]
        %v550 = vld [vmem:[%s279 + $0x678] sm:$0xff]
        %v551 = vld [vmem:[%s279 + $0x680] sm:$0xff]
        %v552 = vld [vmem:[%s279 + $0x688] sm:$0xff]
        %v553 = vld [vmem:[%s279 + $0x690] sm:$0xff]
        %v554 = vld [vmem:[%s279 + $0x698] sm:$0xff]
        %v555 = vld [vmem:[%s279 + $0x6a0] sm:$0xff]
        %v556 = vld [vmem:[%s279 + $0x6a8] sm:$0xff]
        %v557 = vld [vmem:[%s279 + $0x6b0] sm:$0xff]
        %v558 = vld [vmem:[%s279 + $0x6b8] sm:$0xff]
        %v559 = vld [vmem:[%s279 + $0x6c0] sm:$0xff]
        %v560 = vld [vmem:[%s279 + $0x6c8] sm:$0xff]
        %v561 = vld [vmem:[%s279 + $0x6d0] sm:$0xff]
        %v562 = vld [vmem:[%s279 + $0x6d8] sm:$0xff]
        %v563 = vld [vmem:[%s279 + $0x6e0] sm:$0xff]
        %v564 = vld [vmem:[%s279 + $0x6e8] sm:$0xff]
        %v565 = vld [vmem:[%s279 + $0x6f0] sm:$0xff]
        %v566 = vld [vmem:[%s279 + $0x6f8] sm:$0xff]
        %v567 = vld [vmem:[%s279 + $0x700] sm:$0xff]
        %v568 = vld [vmem:[%s279 + $0x708] sm:$0xff]
        %v569 = vld [vmem:[%s279 + $0x710] sm:$0xff]
        %v570 = vld [vmem:[%s279 + $0x718] sm:$0xff]
        %v571 = vld [vmem:[%s279 + $0x720] sm:$0xff]
        %v572 = vld [vmem:[%s279 + $0x728] sm:$0xff]
        %v573 = vld [vmem:[%s279 + $0x730] sm:$0xff]
        %v574 = vld [vmem:[%s279 + $0x738] sm:$0xff]
        %v575 = vld [vmem:[%s279 + $0x740] sm:$0xff]
        %v576 = vld [vmem:[%s279 + $0x748] sm:$0xff]
        %v577 = vld [vmem:[%s279 + $0x750] sm:$0xff]
        %v578 = vld [vmem:[%s279 + $0x758] sm:$0xff]
        %v579 = vld [vmem:[%s279 + $0x760] sm:$0xff]
        %v580 = vld [vmem:[%s279 + $0x768] sm:$0xff]
        %v581 = vld [vmem:[%s279 + $0x770] sm:$0xff]
        %v582 = vld [vmem:[%s279 + $0x778] sm:$0xff]
        %v583 = vld [vmem:[%s279 + $0x780] sm:$0xff]
        %v584 = vld [vmem:[%s279 + $0x788] sm:$0xff]
        %v585 = vld [vmem:[%s279 + $0x790] sm:$0xff]
        %v586 = vld [vmem:[%s279 + $0x798] sm:$0xff]
        %v587 = vld [vmem:[%s279 + $0x7a0] sm:$0xff]
        %v588 = vld [vmem:[%s279 + $0x7a8] sm:$0xff]
        %v589 = vld [vmem:[%s279 + $0x7b0] sm:$0xff]
        %v590 = vld [vmem:[%s279 + $0x7b8] sm:$0xff]
        %v591 = vld [vmem:[%s279 + $0x7c0] sm:$0xff]
        %v592 = vld [vmem:[%s279 + $0x7c8] sm:$0xff]
        %v593 = vld [vmem:[%s279 + $0x7d0] sm:$0xff]
        %v594 = vld [vmem:[%s279 + $0x7d8] sm:$0xff]
        %v595 = vld [vmem:[%s279 + $0x7e0] sm:$0xff]
        %v596 = vld [vmem:[%s279 + $0x7e8] sm:$0xff]
        %v597 = vld [vmem:[%s279 + $0x7f0] sm:$0xff]
        %v598 = vld [vmem:[%s279 + $0x7f8] sm:$0xff]
        %v599 = vld [vmem:[%s279 + $0x800] sm:$0xff]
        %v600 = vld [vmem:[%s279 + $0x808] sm:$0xff]
        %v601 = vld [vmem:[%s279 + $0x810] sm:$0xff]
        %v602 = vld [vmem:[%s279 + $0x818] sm:$0xff]
        %v603 = vld [vmem:[%s279 + $0x820] sm:$0xff]
        %v604 = vld [vmem:[%s279 + $0x828] sm:$0xff]
        %v605 = vld [vmem:[%s279 + $0x830] sm:$0xff]
        %v606 = vld [vmem:[%s279 + $0x838] sm:$0xff]
        %v607 = vld [vmem:[%s279 + $0x840] sm:$0xff]
        %v608 = vld [vmem:[%s279 + $0x848] sm:$0xff]
        %v609 = vld [vmem:[%s279 + $0x850] sm:$0xff]
        %v610 = vld [vmem:[%s279 + $0x858] sm:$0xff]
        %v611 = vld [vmem:[%s279 + $0x860] sm:$0xff]
        %v612 = vld [vmem:[%s279 + $0x868] sm:$0xff]
        %v613 = vld [vmem:[%s279 + $0x870] sm:$0xff]
        %v614 = vld [vmem:[%s279 + $0x878] sm:$0xff]
        %v615 = vld [vmem:[%s279 + $0x880] sm:$0xff]
        %v616 = vld [vmem:[%s279 + $0x888] sm:$0xff]
        %v617 = vld [vmem:[%s279 + $0x890] sm:$0xff]
        %v618 = vld [vmem:[%s279 + $0x898] sm:$0xff]
        %v619 = vld [vmem:[%s279 + $0x8a0] sm:$0xff]
        %v620 = vld [vmem:[%s279 + $0x8a8] sm:$0xff]
        %v621 = vld [vmem:[%s279 + $0x8b0] sm:$0xff]
        %v622 = vld [vmem:[%s279 + $0x8b8] sm:$0xff]
        %v623 = vld [vmem:[%s279 + $0x8c0] sm:$0xff]
        %v624 = vld [vmem:[%s279 + $0x8c8] sm:$0xff]
        %v625 = vld [vmem:[%s279 + $0x8d0] sm:$0xff]
        %v626 = vld [vmem:[%s279 + $0x8d8] sm:$0xff]
        %v627 = vld [vmem:[%s279 + $0x8e0] sm:$0xff]
        %v628 = vld [vmem:[%s279 + $0x8e8] sm:$0xff]
        %v629 = vld [vmem:[%s279 + $0x8f0] sm:$0xff]
        %v630 = vld [vmem:[%s279 + $0x8f8] sm:$0xff]
        %v636 = vunpack.c.l.b16 %v338
        %v637 = vunpack.c.h.b16 %v338
        %v638 = vunpack.c.l.b16 %v339
        %v639 = vunpack.c.h.b16 %v339
        %v640 = vunpack.c.l.b16 %v340
        %v641 = vunpack.c.h.b16 %v340
        %v642 = vunpack.c.l.b16 %v341
        %v643 = vunpack.c.h.b16 %v341
        %v644 = vunpack.c.l.b16 %v342
        %v645 = vpack.c.b16 %v636, %v636
        %v646 = vpack.c.b16 %v637, %v637
        %v647 = vpack.c.b16 %v638, %v638
        %v648 = vpack.c.b16 %v639, %v639
        %v649 = vpack.c.b16 %v640, %v640
        %v650 = vpack.c.b16 %v641, %v641
        %v651 = vpack.c.b16 %v642, %v642
        %v652 = vpack.c.b16 %v643, %v643
        %v653 = vpack.c.b16 %v644, %v644
        %v951 = vunpack.c.l.b16 %v343
        %v952 = vunpack.c.h.b16 %v343
        %v953 = vunpack.c.l.b16 %v344
        %v954 = vunpack.c.h.b16 %v344
        %v955 = vunpack.c.l.b16 %v345
        %v956 = vunpack.c.h.b16 %v345
        %v957 = vunpack.c.l.b16 %v346
        %v958 = vunpack.c.h.b16 %v346
        %v959 = vunpack.c.l.b16 %v347
        %v960 = vunpack.c.h.b16 %v347
        %v961 = vunpack.c.l.b16 %v348
        %v962 = vunpack.c.h.b16 %v348
        %v963 = vunpack.c.l.b16 %v349
        %v964 = vunpack.c.h.b16 %v349
        %v965 = vunpack.c.l.b16 %v350
        %v966 = vunpack.c.h.b16 %v350
        %v967 = vunpack.c.l.b16 %v351
        %v968 = vunpack.c.h.b16 %v351
        %v969 = vunpack.c.l.b16 %v352
        %v970 = vunpack.c.h.b16 %v352
        %v971 = vunpack.c.l.b16 %v353
        %v972 = vunpack.c.h.b16 %v353
        %v973 = vunpack.c.l.b16 %v354
        %v974 = vunpack.c.h.b16 %v354
        %v975 = vunpack.c.l.b16 %v355
        %v976 = vunpack.c.h.b16 %v355
        %v977 = vunpack.c.l.b16 %v356
        %v978 = vunpack.c.h.b16 %v356
        %v979 = vunpack.c.l.b16 %v357
        %v980 = vunpack.c.h.b16 %v357
        %v981 = vunpack.c.l.b16 %v358
        %v982 = vunpack.c.h.b16 %v358
        %v983 = vunpack.c.l.b16 %v359
        %v984 = vunpack.c.h.b16 %v359
        %v985 = vunpack.c.l.b16 %v360
        %v986 = vunpack.c.h.b16 %v360
        %v987 = vunpack.c.l.b16 %v361
        %v988 = vunpack.c.h.b16 %v361
        %v989 = vunpack.c.l.b16 %v362
        %v990 = vunpack.c.h.b16 %v362
        %v991 = vunpack.c.l.b16 %v363
        %v992 = vunpack.c.h.b16 %v363
        %v993 = vunpack.c.l.b16 %v364
        %v994 = vunpack.c.h.b16 %v364
        %v995 = vunpack.c.l.b16 %v365
        %v996 = vunpack.c.h.b16 %v365
        %v997 = vunpack.c.l.b16 %v366
        %v998 = vunpack.c.h.b16 %v366
        %v999 = vunpack.c.l.b16 %v367
        %v1000 = vunpack.c.h.b16 %v367
        %v1001 = vunpack.c.l.b16 %v368
        %v1002 = vunpack.c.h.b16 %v368
        %v1003 = vunpack.c.l.b16 %v369
        %v1004 = vunpack.c.h.b16 %v369
        %v1005 = vunpack.c.l.b16 %v370
        %v1006 = vunpack.c.h.b16 %v370
        %v1007 = vunpack.c.l.b16 %v371
        %v1008 = vunpack.c.h.b16 %v371
        %v1009 = vunpack.c.l.b16 %v372
        %v1010 = vunpack.c.h.b16 %v372
        %v1011 = vunpack.c.l.b16 %v373
        %v1012 = vunpack.c.h.b16 %v373
        %v1013 = vunpack.c.l.b16 %v374
        %v1014 = vunpack.c.h.b16 %v374
        %v1015 = vunpack.c.l.b16 %v375
        %v1016 = vunpack.c.h.b16 %v375
        %v1017 = vunpack.c.l.b16 %v376
        %v1018 = vunpack.c.h.b16 %v376
        %v1019 = vunpack.c.l.b16 %v377
        %v1020 = vunpack.c.h.b16 %v377
        %v1021 = vunpack.c.l.b16 %v378
        %v1022 = vunpack.c.h.b16 %v378
        %v1023 = vunpack.c.l.b16 %v379
        %v1024 = vunpack.c.h.b16 %v379
        %v1025 = vunpack.c.l.b16 %v380
        %v1026 = vunpack.c.h.b16 %v380
        %v1027 = vunpack.c.l.b16 %v381
        %v1028 = vunpack.c.h.b16 %v381
        %v1029 = vunpack.c.l.b16 %v382
        %v1030 = vunpack.c.h.b16 %v382
        %v1031 = vunpack.c.l.b16 %v383
        %v1032 = vunpack.c.h.b16 %v383
        %v1033 = vunpack.c.l.b16 %v384
        %v1034 = vunpack.c.h.b16 %v384
        %v1035 = vunpack.c.l.b16 %v385
        %v1036 = vunpack.c.h.b16 %v385
        %v1037 = vunpack.c.l.b16 %v386
        %v1038 = vunpack.c.h.b16 %v386
        %v1039 = vunpack.c.l.b16 %v387
        %v1040 = vunpack.c.h.b16 %v387
        %v1041 = vunpack.c.l.b16 %v388
        %v1042 = vunpack.c.h.b16 %v388
        %v1043 = vunpack.c.l.b16 %v389
        %v1044 = vunpack.c.h.b16 %v389
        %v1045 = vunpack.c.l.b16 %v390
        %v1046 = vunpack.c.h.b16 %v390
        %v1047 = vunpack.c.l.b16 %v391
        %v1048 = vunpack.c.h.b16 %v391
        %v1049 = vunpack.c.l.b16 %v392
        %v1050 = vunpack.c.h.b16 %v392
        %v1051 = vunpack.c.l.b16 %v393
        %v1052 = vunpack.c.h.b16 %v393
        %v1053 = vunpack.c.l.b16 %v394
        %v1054 = vunpack.c.h.b16 %v394
        %v1055 = vunpack.c.l.b16 %v395
        %v1056 = vunpack.c.h.b16 %v395
        %v1057 = vunpack.c.l.b16 %v396
        %v1058 = vunpack.c.h.b16 %v396
        %v1059 = vunpack.c.l.b16 %v397
        %v1060 = vunpack.c.h.b16 %v397
        %v1061 = vunpack.c.l.b16 %v398
        %v1062 = vunpack.c.h.b16 %v398
        %v1063 = vunpack.c.l.b16 %v399
        %v1064 = vunpack.c.h.b16 %v399
        %v1065 = vunpack.c.l.b16 %v400
        %v1066 = vunpack.c.h.b16 %v400
        %v1067 = vunpack.c.l.b16 %v401
        %v1068 = vunpack.c.h.b16 %v401
        %v1069 = vunpack.c.l.b16 %v402
        %v1070 = vunpack.c.h.b16 %v402
        %v1071 = vunpack.c.l.b16 %v403
        %v1072 = vunpack.c.h.b16 %v403
        %v1073 = vunpack.c.l.b16 %v404
        %v1074 = vunpack.c.h.b16 %v404
        %v1075 = vunpack.c.l.b16 %v405
        %v1076 = vunpack.c.h.b16 %v405
        %v1077 = vunpack.c.l.b16 %v406
        %v1078 = vunpack.c.h.b16 %v406
        %v1079 = vunpack.c.l.b16 %v407
        %v1080 = vunpack.c.h.b16 %v407
        %v1081 = vunpack.c.l.b16 %v408
        %v1082 = vunpack.c.h.b16 %v408
        %v1083 = vunpack.c.l.b16 %v409
        %v1084 = vunpack.c.h.b16 %v409
        %v1085 = vunpack.c.l.b16 %v410
        %v1086 = vunpack.c.h.b16 %v410
        %v1087 = vunpack.c.l.b16 %v411
        %v1088 = vunpack.c.h.b16 %v411
        %v1089 = vunpack.c.l.b16 %v412
        %v1090 = vunpack.c.h.b16 %v412
        %v1091 = vunpack.c.l.b16 %v413
        %v1092 = vunpack.c.h.b16 %v413
        %v1093 = vunpack.c.l.b16 %v414
        %v1094 = vunpack.c.h.b16 %v414
        %v1095 = vunpack.c.l.b16 %v415
        %v1096 = vunpack.c.h.b16 %v415
        %v1097 = vunpack.c.l.b16 %v416
        %v1098 = vunpack.c.h.b16 %v416
        %v1099 = vunpack.c.l.b16 %v417
        %v1100 = vunpack.c.h.b16 %v417
        %v1101 = vunpack.c.l.b16 %v418
        %v1102 = vunpack.c.h.b16 %v418
        %v1103 = vunpack.c.l.b16 %v419
        %v1104 = vunpack.c.h.b16 %v419
        %v1105 = vunpack.c.l.b16 %v420
        %v1106 = vunpack.c.h.b16 %v420
        %v1107 = vunpack.c.l.b16 %v421
        %v1108 = vunpack.c.h.b16 %v421
        %v1109 = vunpack.c.l.b16 %v422
        %v1110 = vunpack.c.h.b16 %v422
        %v1111 = vunpack.c.l.b16 %v423
        %v1112 = vunpack.c.h.b16 %v423
        %v1113 = vunpack.c.l.b16 %v424
        %v1114 = vunpack.c.h.b16 %v424
        %v1115 = vunpack.c.l.b16 %v425
        %v1116 = vunpack.c.h.b16 %v425
        %v1117 = vunpack.c.l.b16 %v426
        %v1118 = vunpack.c.h.b16 %v426
        %v1119 = vunpack.c.l.b16 %v427
        %v1120 = vunpack.c.h.b16 %v427
        %v1121 = vunpack.c.l.b16 %v428
        %v1122 = vunpack.c.h.b16 %v428
        %v1123 = vunpack.c.l.b16 %v429
        %v1124 = vunpack.c.h.b16 %v429
        %v1125 = vunpack.c.l.b16 %v430
        %v1126 = vunpack.c.h.b16 %v430
        %v1127 = vunpack.c.l.b16 %v431
        %v1128 = vunpack.c.h.b16 %v431
        %v1129 = vunpack.c.l.b16 %v432
        %v1130 = vunpack.c.h.b16 %v432
        %v1131 = vunpack.c.l.b16 %v433
        %v1132 = vunpack.c.h.b16 %v433
        %v1133 = vunpack.c.l.b16 %v434
        %v1134 = vunpack.c.h.b16 %v434
        %v1135 = vunpack.c.l.b16 %v435
        %v1136 = vunpack.c.h.b16 %v435
        %v1137 = vunpack.c.l.b16 %v436
        %v1138 = vunpack.c.h.b16 %v436
        %v1139 = vunpack.c.l.b16 %v437
        %v1140 = vunpack.c.h.b16 %v437
        %v1141 = vunpack.c.l.b16 %v438
        %v1142 = vunpack.c.h.b16 %v438
        %v1143 = vunpack.c.l.b16 %v439
        %v1144 = vunpack.c.h.b16 %v439
        %v1145 = vunpack.c.l.b16 %v440
        %v1146 = vunpack.c.h.b16 %v440
        %v1147 = vunpack.c.l.b16 %v441
        %v1148 = vunpack.c.h.b16 %v441
        %v1149 = vunpack.c.l.b16 %v442
        %v1150 = vunpack.c.h.b16 %v442
        %v1151 = vunpack.c.l.b16 %v443
        %v1152 = vunpack.c.h.b16 %v443
        %v1153 = vunpack.c.l.b16 %v444
        %v1154 = vunpack.c.h.b16 %v444
        %v1155 = vunpack.c.l.b16 %v445
        %v1156 = vunpack.c.h.b16 %v445
        %v1157 = vunpack.c.l.b16 %v446
        %v1158 = vunpack.c.h.b16 %v446
        %v1159 = vunpack.c.l.b16 %v447
        %v1160 = vunpack.c.h.b16 %v447
        %v1161 = vunpack.c.l.b16 %v448
        %v1162 = vunpack.c.h.b16 %v448
        %v1163 = vunpack.c.l.b16 %v449
        %v1164 = vunpack.c.h.b16 %v449
        %v1165 = vunpack.c.l.b16 %v450
        %v1166 = vunpack.c.h.b16 %v450
        %v1167 = vunpack.c.l.b16 %v451
        %v1168 = vunpack.c.h.b16 %v451
        %v1169 = vunpack.c.l.b16 %v452
        %v1170 = vunpack.c.h.b16 %v452
        %v1171 = vunpack.c.l.b16 %v453
        %v1172 = vunpack.c.h.b16 %v453
        %v1173 = vunpack.c.l.b16 %v454
        %v1174 = vunpack.c.h.b16 %v454
        %v1175 = vunpack.c.l.b16 %v455
        %v1176 = vunpack.c.h.b16 %v455
        %v1177 = vunpack.c.l.b16 %v456
        %v1178 = vunpack.c.h.b16 %v456
        %v1179 = vunpack.c.l.b16 %v457
        %v1180 = vunpack.c.h.b16 %v457
        %v1181 = vunpack.c.l.b16 %v458
        %v1182 = vunpack.c.h.b16 %v458
        %v1183 = vunpack.c.l.b16 %v459
        %v1184 = vunpack.c.h.b16 %v459
        %v1185 = vunpack.c.l.b16 %v460
        %v1186 = vunpack.c.h.b16 %v460
        %v1187 = vunpack.c.l.b16 %v461
        %v1188 = vunpack.c.h.b16 %v461
        %v1189 = vunpack.c.l.b16 %v462
        %v1190 = vunpack.c.h.b16 %v462
        %v1191 = vunpack.c.l.b16 %v463
        %v1192 = vunpack.c.h.b16 %v463
        %v1193 = vunpack.c.l.b16 %v464
        %v1194 = vunpack.c.h.b16 %v464
        %v1195 = vunpack.c.l.b16 %v465
        %v1196 = vunpack.c.h.b16 %v465
        %v1197 = vunpack.c.l.b16 %v466
        %v1198 = vunpack.c.h.b16 %v466
        %v1199 = vunpack.c.l.b16 %v467
        %v1200 = vunpack.c.h.b16 %v467
        %v1201 = vunpack.c.l.b16 %v468
        %v1202 = vunpack.c.h.b16 %v468
        %v1203 = vunpack.c.l.b16 %v469
        %v1204 = vunpack.c.h.b16 %v469
        %v1205 = vunpack.c.l.b16 %v470
        %v1206 = vunpack.c.h.b16 %v470
        %v1207 = vunpack.c.l.b16 %v471
        %v1208 = vunpack.c.h.b16 %v471
        %v1209 = vunpack.c.l.b16 %v472
        %v1210 = vunpack.c.h.b16 %v472
        %v1211 = vunpack.c.l.b16 %v473
        %v1212 = vunpack.c.h.b16 %v473
        %v1213 = vunpack.c.l.b16 %v474
        %v1214 = vunpack.c.h.b16 %v474
        %v1215 = vunpack.c.l.b16 %v475
        %v1216 = vunpack.c.h.b16 %v475
        %v1217 = vunpack.c.l.b16 %v476
        %v1218 = vunpack.c.h.b16 %v476
        %v1219 = vunpack.c.l.b16 %v477
        %v1220 = vunpack.c.h.b16 %v477
        %v1221 = vunpack.c.l.b16 %v478
        %v1222 = vunpack.c.h.b16 %v478
        %v1223 = vunpack.c.l.b16 %v479
        %v1224 = vunpack.c.h.b16 %v479
        %v1225 = vunpack.c.l.b16 %v480
        %v1226 = vunpack.c.h.b16 %v480
        %v1227 = vunpack.c.l.b16 %v481
        %v1228 = vunpack.c.h.b16 %v481
        %v1229 = vunpack.c.l.b16 %v482
        %v1230 = vunpack.c.h.b16 %v482
        %v1231 = vunpack.c.l.b16 %v483
        %v1232 = vunpack.c.h.b16 %v483
        %v1233 = vunpack.c.l.b16 %v484
        %v1234 = vunpack.c.h.b16 %v484
        %v1235 = vunpack.c.l.b16 %v485
        %v1236 = vunpack.c.h.b16 %v485
        %v1237 = vunpack.c.l.b16 %v486
        %v1238 = vunpack.c.h.b16 %v486
        %v1239 = vunpack.c.l.b16 %v487
        %v1240 = vunpack.c.h.b16 %v487
        %v1241 = vunpack.c.l.b16 %v488
        %v1242 = vunpack.c.h.b16 %v488
        %v1243 = vunpack.c.l.b16 %v489
        %v1244 = vunpack.c.h.b16 %v489
        %v1245 = vunpack.c.l.b16 %v490
        %v1246 = vunpack.c.h.b16 %v490
        %v1247 = vunpack.c.l.b16 %v491
        %v1248 = vunpack.c.h.b16 %v491
        %v1249 = vunpack.c.l.b16 %v492
        %v1250 = vunpack.c.h.b16 %v492
        %v1251 = vunpack.c.l.b16 %v493
        %v1252 = vunpack.c.h.b16 %v493
        %v1253 = vunpack.c.l.b16 %v494
        %v1254 = vunpack.c.h.b16 %v494
        %v1255 = vunpack.c.l.b16 %v495
        %v1256 = vunpack.c.h.b16 %v495
        %v1257 = vunpack.c.l.b16 %v496
        %v1258 = vunpack.c.h.b16 %v496
        %v1259 = vunpack.c.l.b16 %v497
        %v1260 = vunpack.c.h.b16 %v497
        %v1261 = vunpack.c.l.b16 %v498
        %v1262 = vunpack.c.h.b16 %v498
        %v1263 = vunpack.c.l.b16 %v499
        %v1264 = vunpack.c.h.b16 %v499
        %v1265 = vunpack.c.l.b16 %v500
        %v1266 = vunpack.c.h.b16 %v500
        %v1267 = vunpack.c.l.b16 %v501
        %v1268 = vunpack.c.h.b16 %v501
        %v1269 = vunpack.c.l.b16 %v502
        %v1270 = vunpack.c.h.b16 %v502
        %v1271 = vunpack.c.l.b16 %v503
        %v1272 = vunpack.c.h.b16 %v503
        %v1273 = vunpack.c.l.b16 %v504
        %v1274 = vunpack.c.h.b16 %v504
        %v1275 = vunpack.c.l.b16 %v505
        %v1276 = vunpack.c.h.b16 %v505
        %v1277 = vunpack.c.l.b16 %v506
        %v1278 = vunpack.c.h.b16 %v506
        %v1279 = vunpack.c.l.b16 %v507
        %v1280 = vunpack.c.h.b16 %v507
        %v1281 = vunpack.c.l.b16 %v508
        %v1282 = vunpack.c.h.b16 %v508
        %v1283 = vunpack.c.l.b16 %v509
        %v1284 = vunpack.c.h.b16 %v509
        %v1285 = vunpack.c.l.b16 %v510
        %v1286 = vunpack.c.h.b16 %v510
        %v1287 = vunpack.c.l.b16 %v511
        %v1288 = vunpack.c.h.b16 %v511
        %v1289 = vunpack.c.l.b16 %v512
        %v1290 = vunpack.c.h.b16 %v512
        %v1291 = vunpack.c.l.b16 %v513
        %v1292 = vunpack.c.h.b16 %v513
        %v1293 = vunpack.c.l.b16 %v514
        %v1294 = vunpack.c.h.b16 %v514
        %v1295 = vunpack.c.l.b16 %v515
        %v1296 = vunpack.c.h.b16 %v515
        %v1297 = vunpack.c.l.b16 %v516
        %v1298 = vunpack.c.h.b16 %v516
        %v1299 = vunpack.c.l.b16 %v517
        %v1300 = vunpack.c.h.b16 %v517
        %v1301 = vunpack.c.l.b16 %v518
        %v1302 = vunpack.c.h.b16 %v518
        %v1303 = vunpack.c.l.b16 %v519
        %v1304 = vunpack.c.h.b16 %v519
        %v1305 = vunpack.c.l.b16 %v520
        %v1306 = vunpack.c.h.b16 %v520
        %v1307 = vunpack.c.l.b16 %v521
        %v1308 = vunpack.c.h.b16 %v521
        %v1309 = vunpack.c.l.b16 %v522
        %v1310 = vunpack.c.h.b16 %v522
        %v1311 = vunpack.c.l.b16 %v523
        %v1312 = vunpack.c.h.b16 %v523
        %v1313 = vunpack.c.l.b16 %v524
        %v1314 = vunpack.c.h.b16 %v524
        %v1315 = vunpack.c.l.b16 %v525
        %v1316 = vunpack.c.h.b16 %v525
        %v1317 = vunpack.c.l.b16 %v526
        %v1318 = vunpack.c.h.b16 %v526
        %v1319 = vunpack.c.l.b16 %v527
        %v1320 = vunpack.c.h.b16 %v527
        %v1321 = vunpack.c.l.b16 %v528
        %v1322 = vunpack.c.h.b16 %v528
        %v1323 = vunpack.c.l.b16 %v529
        %v1324 = vunpack.c.h.b16 %v529
        %v1325 = vunpack.c.l.b16 %v530
        %v1326 = vunpack.c.h.b16 %v530
        %v1327 = vunpack.c.l.b16 %v531
        %v1328 = vunpack.c.h.b16 %v531
        %v1329 = vunpack.c.l.b16 %v532
        %v1330 = vunpack.c.h.b16 %v532
        %v1331 = vunpack.c.l.b16 %v533
        %v1332 = vunpack.c.h.b16 %v533
        %v1333 = vunpack.c.l.b16 %v534
        %v1334 = vunpack.c.h.b16 %v534
        %v1335 = vunpack.c.l.b16 %v535
        %v1336 = vunpack.c.h.b16 %v535
        %v1337 = vunpack.c.l.b16 %v536
        %v1338 = vunpack.c.h.b16 %v536
        %v1339 = vunpack.c.l.b16 %v537
        %v1340 = vunpack.c.h.b16 %v537
        %v1341 = vunpack.c.l.b16 %v538
        %v1342 = vunpack.c.h.b16 %v538
        %v1343 = vunpack.c.l.b16 %v539
        %v1344 = vunpack.c.h.b16 %v539
        %v1345 = vunpack.c.l.b16 %v540
        %v1346 = vunpack.c.h.b16 %v540
        %v1347 = vunpack.c.l.b16 %v541
        %v1348 = vunpack.c.h.b16 %v541
        %v1349 = vunpack.c.l.b16 %v542
        %v1350 = vunpack.c.h.b16 %v542
        %v1351 = vunpack.c.l.b16 %v543
        %v1352 = vunpack.c.h.b16 %v543
        %v1353 = vunpack.c.l.b16 %v544
        %v1354 = vunpack.c.h.b16 %v544
        %v1355 = vunpack.c.l.b16 %v545
        %v1356 = vunpack.c.h.b16 %v545
        %v1357 = vunpack.c.l.b16 %v546
        %v1358 = vunpack.c.h.b16 %v546
        %v1359 = vunpack.c.l.b16 %v547
        %v1360 = vunpack.c.h.b16 %v547
        %v1361 = vunpack.c.l.b16 %v548
        %v1362 = vunpack.c.h.b16 %v548
        %v1363 = vunpack.c.l.b16 %v549
        %v1364 = vunpack.c.h.b16 %v549
        %v1365 = vunpack.c.l.b16 %v550
        %v1366 = vunpack.c.h.b16 %v550
        %v1367 = vunpack.c.l.b16 %v551
        %v1368 = vunpack.c.h.b16 %v551
        %v1369 = vunpack.c.l.b16 %v552
        %v1370 = vunpack.c.h.b16 %v552
        %v1371 = vunpack.c.l.b16 %v553
        %v1372 = vunpack.c.h.b16 %v553
        %v1373 = vunpack.c.l.b16 %v554
        %v1374 = vunpack.c.h.b16 %v554
        %v1375 = vunpack.c.l.b16 %v555
        %v1376 = vunpack.c.h.b16 %v555
        %v1377 = vunpack.c.l.b16 %v556
        %v1378 = vunpack.c.h.b16 %v556
        %v1379 = vunpack.c.l.b16 %v557
        %v1380 = vunpack.c.h.b16 %v557
        %v1381 = vunpack.c.l.b16 %v558
        %v1382 = vunpack.c.h.b16 %v558
        %v1383 = vunpack.c.l.b16 %v559
        %v1384 = vunpack.c.h.b16 %v559
        %v1385 = vunpack.c.l.b16 %v560
        %v1386 = vunpack.c.h.b16 %v560
        %v1387 = vunpack.c.l.b16 %v561
        %v1388 = vunpack.c.h.b16 %v561
        %v1389 = vunpack.c.l.b16 %v562
        %v1390 = vunpack.c.h.b16 %v562
        %v1391 = vunpack.c.l.b16 %v563
        %v1392 = vunpack.c.h.b16 %v563
        %v1393 = vunpack.c.l.b16 %v564
        %v1394 = vunpack.c.h.b16 %v564
        %v1395 = vunpack.c.l.b16 %v565
        %v1396 = vunpack.c.h.b16 %v565
        %v1397 = vunpack.c.l.b16 %v566
        %v1398 = vunpack.c.h.b16 %v566
        %v1399 = vunpack.c.l.b16 %v567
        %v1400 = vunpack.c.h.b16 %v567
        %v1401 = vunpack.c.l.b16 %v568
        %v1402 = vunpack.c.h.b16 %v568
        %v1403 = vunpack.c.l.b16 %v569
        %v1404 = vunpack.c.h.b16 %v569
        %v1405 = vunpack.c.l.b16 %v570
        %v1406 = vunpack.c.h.b16 %v570
        %v1407 = vunpack.c.l.b16 %v571
        %v1408 = vunpack.c.h.b16 %v571
        %v1409 = vunpack.c.l.b16 %v572
        %v1410 = vunpack.c.h.b16 %v572
        %v1411 = vunpack.c.l.b16 %v573
        %v1412 = vunpack.c.h.b16 %v573
        %v1413 = vunpack.c.l.b16 %v574
        %v1414 = vunpack.c.h.b16 %v574
        %v1415 = vunpack.c.l.b16 %v575
        %v1416 = vunpack.c.h.b16 %v575
        %v1417 = vunpack.c.l.b16 %v576
        %v1418 = vunpack.c.h.b16 %v576
        %v1419 = vunpack.c.l.b16 %v577
        %v1420 = vunpack.c.h.b16 %v577
        %v1421 = vunpack.c.l.b16 %v578
        %v1422 = vunpack.c.h.b16 %v578
        %v1423 = vunpack.c.l.b16 %v579
        %v1424 = vunpack.c.h.b16 %v579
        %v1425 = vunpack.c.l.b16 %v580
        %v1426 = vunpack.c.h.b16 %v580
        %v1427 = vunpack.c.l.b16 %v581
        %v1428 = vunpack.c.h.b16 %v581
        %v1429 = vunpack.c.l.b16 %v582
        %v1430 = vunpack.c.h.b16 %v582
        %v1431 = vunpack.c.l.b16 %v583
        %v1432 = vunpack.c.h.b16 %v583
        %v1433 = vunpack.c.l.b16 %v584
        %v1434 = vunpack.c.h.b16 %v584
        %v1435 = vunpack.c.l.b16 %v585
        %v1436 = vunpack.c.h.b16 %v585
        %v1437 = vunpack.c.l.b16 %v586
        %v1438 = vunpack.c.h.b16 %v586
        %v1439 = vunpack.c.l.b16 %v587
        %v1440 = vunpack.c.h.b16 %v587
        %v1441 = vunpack.c.l.b16 %v588
        %v1442 = vunpack.c.h.b16 %v588
        %v1443 = vunpack.c.l.b16 %v589
        %v1444 = vunpack.c.h.b16 %v589
        %v1445 = vunpack.c.l.b16 %v590
        %v1446 = vunpack.c.h.b16 %v590
        %v1447 = vunpack.c.l.b16 %v591
        %v1448 = vunpack.c.h.b16 %v591
        %v1449 = vunpack.c.l.b16 %v592
        %v1450 = vunpack.c.h.b16 %v592
        %v1451 = vunpack.c.l.b16 %v593
        %v1452 = vunpack.c.h.b16 %v593
        %v1453 = vunpack.c.l.b16 %v594
        %v1454 = vunpack.c.h.b16 %v594
        %v1455 = vunpack.c.l.b16 %v595
        %v1456 = vunpack.c.h.b16 %v595
        %v1457 = vunpack.c.l.b16 %v596
        %v1458 = vunpack.c.h.b16 %v596
        %v1459 = vunpack.c.l.b16 %v597
        %v1460 = vunpack.c.h.b16 %v597
        %v1461 = vunpack.c.l.b16 %v598
        %v1462 = vunpack.c.h.b16 %v598
        %v1463 = vunpack.c.l.b16 %v599
        %v1464 = vunpack.c.h.b16 %v599
        %v1465 = vunpack.c.l.b16 %v600
        %v1466 = vunpack.c.h.b16 %v600
        %v1467 = vunpack.c.l.b16 %v601
        %v1468 = vunpack.c.h.b16 %v601
        %v1469 = vunpack.c.l.b16 %v602
        %v1470 = vunpack.c.h.b16 %v602
        %v1471 = vunpack.c.l.b16 %v603
        %v1472 = vunpack.c.h.b16 %v603
        %v1473 = vunpack.c.l.b16 %v604
        %v1474 = vunpack.c.h.b16 %v604
        %v1475 = vunpack.c.l.b16 %v605
        %v1476 = vunpack.c.h.b16 %v605
        %v1477 = vunpack.c.l.b16 %v606
        %v1478 = vunpack.c.h.b16 %v606
        %v1479 = vunpack.c.l.b16 %v607
        %v1480 = vunpack.c.h.b16 %v607
        %v1481 = vunpack.c.l.b16 %v608
        %v1482 = vunpack.c.h.b16 %v608
        %v1483 = vunpack.c.l.b16 %v609
        %v1484 = vunpack.c.h.b16 %v609
        %v1485 = vunpack.c.l.b16 %v610
        %v1486 = vunpack.c.h.b16 %v610
        %v1487 = vunpack.c.l.b16 %v611
        %v1488 = vunpack.c.h.b16 %v611
        %v1489 = vunpack.c.l.b16 %v612
        %v1490 = vunpack.c.h.b16 %v612
        %v1491 = vunpack.c.l.b16 %v613
        %v1492 = vunpack.c.h.b16 %v613
        %v1493 = vunpack.c.l.b16 %v614
        %v1494 = vunpack.c.h.b16 %v614
        %v1495 = vunpack.c.l.b16 %v615
        %v1496 = vunpack.c.h.b16 %v615
        %v1497 = vunpack.c.l.b16 %v616
        %v1498 = vunpack.c.h.b16 %v616
        %v1499 = vunpack.c.l.b16 %v617
        %v1500 = vunpack.c.h.b16 %v617
        %v1501 = vunpack.c.l.b16 %v618
        %v1502 = vunpack.c.h.b16 %v618
        %v1503 = vunpack.c.l.b16 %v619
        %v1504 = vunpack.c.h.b16 %v619
        %v1505 = vunpack.c.l.b16 %v620
        %v1506 = vunpack.c.h.b16 %v620
        %v1507 = vunpack.c.l.b16 %v621
        %v1508 = vunpack.c.h.b16 %v621
        %v1509 = vunpack.c.l.b16 %v622
        %v1510 = vunpack.c.h.b16 %v622
        %v1511 = vunpack.c.l.b16 %v623
        %v1512 = vunpack.c.h.b16 %v623
        %v1513 = vunpack.c.l.b16 %v624
        %v1514 = vunpack.c.h.b16 %v624
        %v1515 = vunpack.c.l.b16 %v625
        %v1516 = vunpack.c.h.b16 %v625
        %v1517 = vunpack.c.l.b16 %v626
        %v1518 = vunpack.c.h.b16 %v626
        %v1519 = vunpack.c.l.b16 %v627
        %v1520 = vunpack.c.h.b16 %v627
        %v1521 = vunpack.c.l.b16 %v628
        %v1522 = vunpack.c.h.b16 %v628
        %v1523 = vunpack.c.l.b16 %v629
        %v1524 = vunpack.c.h.b16 %v629
        %v1525 = vunpack.c.l.b16 %v630
        %v1526 = vunpack.c.h.b16 %v630
        %v1527 = vpack.c.b16 %v955, %v951
        %v1528 = vpack.c.b16 %v956, %v952
        %v1529 = vpack.c.b16 %v957, %v953
        %v1530 = vpack.c.b16 %v958, %v954
        %v1531 = vpack.c.b16 %v963, %v959
        %v1532 = vpack.c.b16 %v964, %v960
        %v1533 = vpack.c.b16 %v965, %v961
        %v1534 = vpack.c.b16 %v966, %v962
        %v1535 = vpack.c.b16 %v971, %v967
        %v1536 = vpack.c.b16 %v972, %v968
        %v1537 = vpack.c.b16 %v973, %v969
        %v1538 = vpack.c.b16 %v974, %v970
        %v1539 = vpack.c.b16 %v979, %v975
        %v1540 = vpack.c.b16 %v980, %v976
        %v1541 = vpack.c.b16 %v981, %v977
        %v1542 = vpack.c.b16 %v982, %v978
        %v1543 = vpack.c.b16 %v987, %v983
        %v1544 = vpack.c.b16 %v988, %v984
        %v1545 = vpack.c.b16 %v989, %v985
        %v1546 = vpack.c.b16 %v990, %v986
        %v1547 = vpack.c.b16 %v995, %v991
        %v1548 = vpack.c.b16 %v996, %v992
        %v1549 = vpack.c.b16 %v997, %v993
        %v1550 = vpack.c.b16 %v998, %v994
        %v1551 = vpack.c.b16 %v1003, %v999
        %v1552 = vpack.c.b16 %v1004, %v1000
        %v1553 = vpack.c.b16 %v1005, %v1001
        %v1554 = vpack.c.b16 %v1006, %v1002
        %v1555 = vpack.c.b16 %v1011, %v1007
        %v1556 = vpack.c.b16 %v1012, %v1008
        %v1557 = vpack.c.b16 %v1013, %v1009
        %v1558 = vpack.c.b16 %v1014, %v1010
        %v1559 = vpack.c.b16 %v1019, %v1015
        %v1560 = vpack.c.b16 %v1020, %v1016
        %v1561 = vpack.c.b16 %v1021, %v1017
        %v1562 = vpack.c.b16 %v1022, %v1018
        %v1563 = vpack.c.b16 %v1027, %v1023
        %v1564 = vpack.c.b16 %v1028, %v1024
        %v1565 = vpack.c.b16 %v1029, %v1025
        %v1566 = vpack.c.b16 %v1030, %v1026
        %v1567 = vpack.c.b16 %v1035, %v1031
        %v1568 = vpack.c.b16 %v1036, %v1032
        %v1569 = vpack.c.b16 %v1037, %v1033
        %v1570 = vpack.c.b16 %v1038, %v1034
        %v1571 = vpack.c.b16 %v1043, %v1039
        %v1572 = vpack.c.b16 %v1044, %v1040
        %v1573 = vpack.c.b16 %v1045, %v1041
        %v1574 = vpack.c.b16 %v1046, %v1042
        %v1575 = vpack.c.b16 %v1051, %v1047
        %v1576 = vpack.c.b16 %v1052, %v1048
        %v1577 = vpack.c.b16 %v1053, %v1049
        %v1578 = vpack.c.b16 %v1054, %v1050
        %v1579 = vpack.c.b16 %v1059, %v1055
        %v1580 = vpack.c.b16 %v1060, %v1056
        %v1581 = vpack.c.b16 %v1061, %v1057
        %v1582 = vpack.c.b16 %v1062, %v1058
        %v1583 = vpack.c.b16 %v1067, %v1063
        %v1584 = vpack.c.b16 %v1068, %v1064
        %v1585 = vpack.c.b16 %v1069, %v1065
        %v1586 = vpack.c.b16 %v1070, %v1066
        %v1587 = vpack.c.b16 %v1075, %v1071
        %v1588 = vpack.c.b16 %v1076, %v1072
        %v1589 = vpack.c.b16 %v1077, %v1073
        %v1590 = vpack.c.b16 %v1078, %v1074
        %v1591 = vpack.c.b16 %v1083, %v1079
        %v1592 = vpack.c.b16 %v1084, %v1080
        %v1593 = vpack.c.b16 %v1085, %v1081
        %v1594 = vpack.c.b16 %v1086, %v1082
        %v1595 = vpack.c.b16 %v1091, %v1087
        %v1596 = vpack.c.b16 %v1092, %v1088
        %v1597 = vpack.c.b16 %v1093, %v1089
        %v1598 = vpack.c.b16 %v1094, %v1090
        %v1599 = vpack.c.b16 %v1099, %v1095
        %v1600 = vpack.c.b16 %v1100, %v1096
        %v1601 = vpack.c.b16 %v1101, %v1097
        %v1602 = vpack.c.b16 %v1102, %v1098
        %v1603 = vpack.c.b16 %v1107, %v1103
        %v1604 = vpack.c.b16 %v1108, %v1104
        %v1605 = vpack.c.b16 %v1109, %v1105
        %v1606 = vpack.c.b16 %v1110, %v1106
        %v1607 = vpack.c.b16 %v1115, %v1111
        %v1608 = vpack.c.b16 %v1116, %v1112
        %v1609 = vpack.c.b16 %v1117, %v1113
        %v1610 = vpack.c.b16 %v1118, %v1114
        %v1611 = vpack.c.b16 %v1123, %v1119
        %v1612 = vpack.c.b16 %v1124, %v1120
        %v1613 = vpack.c.b16 %v1125, %v1121
        %v1614 = vpack.c.b16 %v1126, %v1122
        %v1615 = vpack.c.b16 %v1131, %v1127
        %v1616 = vpack.c.b16 %v1132, %v1128
        %v1617 = vpack.c.b16 %v1133, %v1129
        %v1618 = vpack.c.b16 %v1134, %v1130
        %v1619 = vpack.c.b16 %v1139, %v1135
        %v1620 = vpack.c.b16 %v1140, %v1136
        %v1621 = vpack.c.b16 %v1141, %v1137
        %v1622 = vpack.c.b16 %v1142, %v1138
        %v1623 = vpack.c.b16 %v1147, %v1143
        %v1624 = vpack.c.b16 %v1148, %v1144
        %v1625 = vpack.c.b16 %v1149, %v1145
        %v1626 = vpack.c.b16 %v1150, %v1146
        %v1627 = vpack.c.b16 %v1155, %v1151
        %v1628 = vpack.c.b16 %v1156, %v1152
        %v1629 = vpack.c.b16 %v1157, %v1153
        %v1630 = vpack.c.b16 %v1158, %v1154
        %v1631 = vpack.c.b16 %v1163, %v1159
        %v1632 = vpack.c.b16 %v1164, %v1160
        %v1633 = vpack.c.b16 %v1165, %v1161
        %v1634 = vpack.c.b16 %v1166, %v1162
        %v1635 = vpack.c.b16 %v1171, %v1167
        %v1636 = vpack.c.b16 %v1172, %v1168
        %v1637 = vpack.c.b16 %v1173, %v1169
        %v1638 = vpack.c.b16 %v1174, %v1170
        %v1639 = vpack.c.b16 %v1179, %v1175
        %v1640 = vpack.c.b16 %v1180, %v1176
        %v1641 = vpack.c.b16 %v1181, %v1177
        %v1642 = vpack.c.b16 %v1182, %v1178
        %v1643 = vpack.c.b16 %v1187, %v1183
        %v1644 = vpack.c.b16 %v1188, %v1184
        %v1645 = vpack.c.b16 %v1189, %v1185
        %v1646 = vpack.c.b16 %v1190, %v1186
        %v1647 = vpack.c.b16 %v1195, %v1191
        %v1648 = vpack.c.b16 %v1196, %v1192
        %v1649 = vpack.c.b16 %v1197, %v1193
        %v1650 = vpack.c.b16 %v1198, %v1194
        %v1651 = vpack.c.b16 %v1203, %v1199
        %v1652 = vpack.c.b16 %v1204, %v1200
        %v1653 = vpack.c.b16 %v1205, %v1201
        %v1654 = vpack.c.b16 %v1206, %v1202
        %v1655 = vpack.c.b16 %v1211, %v1207
        %v1656 = vpack.c.b16 %v1212, %v1208
        %v1657 = vpack.c.b16 %v1213, %v1209
        %v1658 = vpack.c.b16 %v1214, %v1210
        %v1659 = vpack.c.b16 %v1219, %v1215
        %v1660 = vpack.c.b16 %v1220, %v1216
        %v1661 = vpack.c.b16 %v1221, %v1217
        %v1662 = vpack.c.b16 %v1222, %v1218
        %v1663 = vpack.c.b16 %v1227, %v1223
        %v1664 = vpack.c.b16 %v1228, %v1224
        %v1665 = vpack.c.b16 %v1229, %v1225
        %v1666 = vpack.c.b16 %v1230, %v1226
        %v1667 = vpack.c.b16 %v1235, %v1231
        %v1668 = vpack.c.b16 %v1236, %v1232
        %v1669 = vpack.c.b16 %v1237, %v1233
        %v1670 = vpack.c.b16 %v1238, %v1234
        %v1671 = vpack.c.b16 %v1243, %v1239
        %v1672 = vpack.c.b16 %v1244, %v1240
        %v1673 = vpack.c.b16 %v1245, %v1241
        %v1674 = vpack.c.b16 %v1246, %v1242
        %v1675 = vpack.c.b16 %v1251, %v1247
        %v1676 = vpack.c.b16 %v1252, %v1248
        %v1677 = vpack.c.b16 %v1253, %v1249
        %v1678 = vpack.c.b16 %v1254, %v1250
        %v1679 = vpack.c.b16 %v1259, %v1255
        %v1680 = vpack.c.b16 %v1260, %v1256
        %v1681 = vpack.c.b16 %v1261, %v1257
        %v1682 = vpack.c.b16 %v1262, %v1258
        %v1683 = vpack.c.b16 %v1267, %v1263
        %v1684 = vpack.c.b16 %v1268, %v1264
        %v1685 = vpack.c.b16 %v1269, %v1265
        %v1686 = vpack.c.b16 %v1270, %v1266
        %v1687 = vpack.c.b16 %v1275, %v1271
        %v1688 = vpack.c.b16 %v1276, %v1272
        %v1689 = vpack.c.b16 %v1277, %v1273
        %v1690 = vpack.c.b16 %v1278, %v1274
        %v1691 = vpack.c.b16 %v1283, %v1279
        %v1692 = vpack.c.b16 %v1284, %v1280
        %v1693 = vpack.c.b16 %v1285, %v1281
        %v1694 = vpack.c.b16 %v1286, %v1282
        %v1695 = vpack.c.b16 %v1291, %v1287
        %v1696 = vpack.c.b16 %v1292, %v1288
        %v1697 = vpack.c.b16 %v1293, %v1289
        %v1698 = vpack.c.b16 %v1294, %v1290
        %v1699 = vpack.c.b16 %v1299, %v1295
        %v1700 = vpack.c.b16 %v1300, %v1296
        %v1701 = vpack.c.b16 %v1301, %v1297
        %v1702 = vpack.c.b16 %v1302, %v1298
        %v1703 = vpack.c.b16 %v1307, %v1303
        %v1704 = vpack.c.b16 %v1308, %v1304
        %v1705 = vpack.c.b16 %v1309, %v1305
        %v1706 = vpack.c.b16 %v1310, %v1306
        %v1707 = vpack.c.b16 %v1315, %v1311
        %v1708 = vpack.c.b16 %v1316, %v1312
        %v1709 = vpack.c.b16 %v1317, %v1313
        %v1710 = vpack.c.b16 %v1318, %v1314
        %v1711 = vpack.c.b16 %v1323, %v1319
        %v1712 = vpack.c.b16 %v1324, %v1320
        %v1713 = vpack.c.b16 %v1325, %v1321
        %v1714 = vpack.c.b16 %v1326, %v1322
        %v1715 = vpack.c.b16 %v1331, %v1327
        %v1716 = vpack.c.b16 %v1332, %v1328
        %v1717 = vpack.c.b16 %v1333, %v1329
        %v1718 = vpack.c.b16 %v1334, %v1330
        %v1719 = vpack.c.b16 %v1339, %v1335
        %v1720 = vpack.c.b16 %v1340, %v1336
        %v1721 = vpack.c.b16 %v1341, %v1337
        %v1722 = vpack.c.b16 %v1342, %v1338
        %v1723 = vpack.c.b16 %v1347, %v1343
        %v1724 = vpack.c.b16 %v1348, %v1344
        %v1725 = vpack.c.b16 %v1349, %v1345
        %v1726 = vpack.c.b16 %v1350, %v1346
        %v1727 = vpack.c.b16 %v1355, %v1351
        %v1728 = vpack.c.b16 %v1356, %v1352
        %v1729 = vpack.c.b16 %v1357, %v1353
        %v1730 = vpack.c.b16 %v1358, %v1354
        %v1731 = vpack.c.b16 %v1363, %v1359
        %v1732 = vpack.c.b16 %v1364, %v1360
        %v1733 = vpack.c.b16 %v1365, %v1361
        %v1734 = vpack.c.b16 %v1366, %v1362
        %v1735 = vpack.c.b16 %v1371, %v1367
        %v1736 = vpack.c.b16 %v1372, %v1368
        %v1737 = vpack.c.b16 %v1373, %v1369
        %v1738 = vpack.c.b16 %v1374, %v1370
        %v1739 = vpack.c.b16 %v1379, %v1375
        %v1740 = vpack.c.b16 %v1380, %v1376
        %v1741 = vpack.c.b16 %v1381, %v1377
        %v1742 = vpack.c.b16 %v1382, %v1378
        %v1743 = vpack.c.b16 %v1387, %v1383
        %v1744 = vpack.c.b16 %v1388, %v1384
        %v1745 = vpack.c.b16 %v1389, %v1385
        %v1746 = vpack.c.b16 %v1390, %v1386
        %v1747 = vpack.c.b16 %v1395, %v1391
        %v1748 = vpack.c.b16 %v1396, %v1392
        %v1749 = vpack.c.b16 %v1397, %v1393
        %v1750 = vpack.c.b16 %v1398, %v1394
        %v1751 = vpack.c.b16 %v1403, %v1399
        %v1752 = vpack.c.b16 %v1404, %v1400
        %v1753 = vpack.c.b16 %v1405, %v1401
        %v1754 = vpack.c.b16 %v1406, %v1402
        %v1755 = vpack.c.b16 %v1411, %v1407
        %v1756 = vpack.c.b16 %v1412, %v1408
        %v1757 = vpack.c.b16 %v1413, %v1409
        %v1758 = vpack.c.b16 %v1414, %v1410
        %v1759 = vpack.c.b16 %v1419, %v1415
        %v1760 = vpack.c.b16 %v1420, %v1416
        %v1761 = vpack.c.b16 %v1421, %v1417
        %v1762 = vpack.c.b16 %v1422, %v1418
        %v1763 = vpack.c.b16 %v1427, %v1423
        %v1764 = vpack.c.b16 %v1428, %v1424
        %v1765 = vpack.c.b16 %v1429, %v1425
        %v1766 = vpack.c.b16 %v1430, %v1426
        %v1767 = vpack.c.b16 %v1435, %v1431
        %v1768 = vpack.c.b16 %v1436, %v1432
        %v1769 = vpack.c.b16 %v1437, %v1433
        %v1770 = vpack.c.b16 %v1438, %v1434
        %v1771 = vpack.c.b16 %v1443, %v1439
        %v1772 = vpack.c.b16 %v1444, %v1440
        %v1773 = vpack.c.b16 %v1445, %v1441
        %v1774 = vpack.c.b16 %v1446, %v1442
        %v1775 = vpack.c.b16 %v1451, %v1447
        %v1776 = vpack.c.b16 %v1452, %v1448
        %v1777 = vpack.c.b16 %v1453, %v1449
        %v1778 = vpack.c.b16 %v1454, %v1450
        %v1779 = vpack.c.b16 %v1459, %v1455
        %v1780 = vpack.c.b16 %v1460, %v1456
        %v1781 = vpack.c.b16 %v1461, %v1457
        %v1782 = vpack.c.b16 %v1462, %v1458
        %v1783 = vpack.c.b16 %v1467, %v1463
        %v1784 = vpack.c.b16 %v1468, %v1464
        %v1785 = vpack.c.b16 %v1469, %v1465
        %v1786 = vpack.c.b16 %v1470, %v1466
        %v1787 = vpack.c.b16 %v1475, %v1471
        %v1788 = vpack.c.b16 %v1476, %v1472
        %v1789 = vpack.c.b16 %v1477, %v1473
        %v1790 = vpack.c.b16 %v1478, %v1474
        %v1791 = vpack.c.b16 %v1483, %v1479
        %v1792 = vpack.c.b16 %v1484, %v1480
        %v1793 = vpack.c.b16 %v1485, %v1481
        %v1794 = vpack.c.b16 %v1486, %v1482
        %v1795 = vpack.c.b16 %v1491, %v1487
        %v1796 = vpack.c.b16 %v1492, %v1488
        %v1797 = vpack.c.b16 %v1493, %v1489
        %v1798 = vpack.c.b16 %v1494, %v1490
        %v1799 = vpack.c.b16 %v1499, %v1495
        %v1800 = vpack.c.b16 %v1500, %v1496
        %v1801 = vpack.c.b16 %v1501, %v1497
        %v1802 = vpack.c.b16 %v1502, %v1498
        %v1803 = vpack.c.b16 %v1507, %v1503
        %v1804 = vpack.c.b16 %v1508, %v1504
        %v1805 = vpack.c.b16 %v1509, %v1505
        %v1806 = vpack.c.b16 %v1510, %v1506
        %v1807 = vpack.c.b16 %v1515, %v1511
        %v1808 = vpack.c.b16 %v1516, %v1512
        %v1809 = vpack.c.b16 %v1517, %v1513
        %v1810 = vpack.c.b16 %v1518, %v1514
        %v1811 = vpack.c.b16 %v1523, %v1519
        %v1812 = vpack.c.b16 %v1524, %v1520
        %v1813 = vpack.c.b16 %v1525, %v1521
        %v1814 = vpack.c.b16 %v1526, %v1522
        %2103 = vmatprep.subr.bf16.mxu0 %v1528
        %2104 = vmatpush1.bf16.msra.mxu0 %v1527
        %2105 = vmatprep.subr.bf16.mxu0 %v1532
        %2106 = vmatpush1.bf16.msra.mxu0 %v1531
        %2107 = vmatprep.subr.bf16.mxu0 %v1536
        %2108 = vmatpush1.bf16.msra.mxu0 %v1535
        %2109 = vmatprep.subr.bf16.mxu0 %v1540
        %2110 = vmatpush1.bf16.msra.mxu0 %v1539
        %2111 = vmatprep.subr.bf16.mxu0 %v1544
        %2112 = vmatpush1.bf16.msra.mxu0 %v1543
        %2113 = vmatprep.subr.bf16.mxu0 %v1548
        %2114 = vmatpush1.bf16.msra.mxu0 %v1547
        %2115 = vmatprep.subr.bf16.mxu0 %v1552
        %2116 = vmatpush1.bf16.msra.mxu0 %v1551
        %2117 = vmatprep.subr.bf16.mxu0 %v1556
        %2118 = vmatpush1.bf16.msra.mxu0 %v1555
        %2119 = vmatprep.subr.bf16.mxu0 %v1560
        %2120 = vmatpush1.bf16.msra.mxu0 %v1559
        %2121 = vmatprep.subr.bf16.mxu0 %v1564
        %2122 = vmatpush1.bf16.msra.mxu0 %v1563
        %2123 = vmatprep.subr.bf16.mxu0 %v1568
        %2124 = vmatpush1.bf16.msra.mxu0 %v1567
        %2125 = vmatprep.subr.bf16.mxu0 %v1572
        %2126 = vmatpush1.bf16.msra.mxu0 %v1571
        %2127 = vmatprep.subr.bf16.mxu0 %v1576
        %2128 = vmatpush1.bf16.msra.mxu0 %v1575
        %2129 = vmatprep.subr.bf16.mxu0 %v1580
        %2130 = vmatpush1.bf16.msra.mxu0 %v1579
        %2131 = vmatprep.subr.bf16.mxu0 %v1584
        %2132 = vmatpush1.bf16.msra.mxu0 %v1583
        %2133 = vmatprep.subr.bf16.mxu0 %v1588
        %2134 = vmatpush1.bf16.msra.mxu0 %v1587
        %2135 = vmatprep.mubr.bf16.mxu0 %v646
        %2136 = vmatmul.mubr.bf16.gmra.mrb[0].mxu0 %v645
        %v2137 = vpop.f32.mrb[0].mxu0
        %v2138 = vadd.f32 0.0, %v2137
        %v2139 = vpop.f32.mrb[0].mxu0
        %v2140 = vadd.f32 0.0, %v2139
        %v2141 = vpop.f32.mrb[0].mxu0
        %v2142 = vpop.f32.mrb[0].mxu0
        %2143 = vdwg.mxu0
        %2144 = vmatprep.subr.bf16.mxu0 %v1592
        %2145 = vmatpush1.bf16.msra.mxu0 %v1591
        %2146 = vmatprep.subr.bf16.mxu0 %v1596
        %2147 = vmatpush1.bf16.msra.mxu0 %v1595
        %2148 = vmatprep.subr.bf16.mxu0 %v1600
        %2149 = vmatpush1.bf16.msra.mxu0 %v1599
        %2150 = vmatprep.subr.bf16.mxu0 %v1604
        %2151 = vmatpush1.bf16.msra.mxu0 %v1603
        %2152 = vmatprep.subr.bf16.mxu0 %v1608
        %2153 = vmatpush1.bf16.msra.mxu0 %v1607
        %2154 = vmatprep.subr.bf16.mxu0 %v1612
        %2155 = vmatpush1.bf16.msra.mxu0 %v1611
        %2156 = vmatprep.subr.bf16.mxu0 %v1616
        %2157 = vmatpush1.bf16.msra.mxu0 %v1615
        %2158 = vmatprep.subr.bf16.mxu0 %v1620
        %2159 = vmatpush1.bf16.msra.mxu0 %v1619
        %2160 = vmatprep.subr.bf16.mxu0 %v1624
        %2161 = vmatpush1.bf16.msra.mxu0 %v1623
        %2162 = vmatprep.subr.bf16.mxu0 %v1628
        %2163 = vmatpush1.bf16.msra.mxu0 %v1627
        %2164 = vmatprep.subr.bf16.mxu0 %v1632
        %2165 = vmatpush1.bf16.msra.mxu0 %v1631
        %2166 = vmatprep.subr.bf16.mxu0 %v1636
        %2167 = vmatpush1.bf16.msra.mxu0 %v1635
        %2168 = vmatprep.subr.bf16.mxu0 %v1640
        %2169 = vmatpush1.bf16.msra.mxu0 %v1639
        %2170 = vmatprep.subr.bf16.mxu0 %v1644
        %2171 = vmatpush1.bf16.msra.mxu0 %v1643
        %2172 = vmatprep.subr.bf16.mxu0 %v1648
        %2173 = vmatpush1.bf16.msra.mxu0 %v1647
        %2174 = vmatprep.subr.bf16.mxu0 %v1652
        %2175 = vmatpush1.bf16.msra.mxu0 %v1651
        %2176 = vmatprep.mubr.bf16.mxu0 %v648
        %2177 = vmatmul.mubr.bf16.gmra.mrb[0].mxu0 %v647
        %v2178 = vpop.f32.mrb[0].mxu0
        %v2179 = vadd.f32 %v2138, %v2178
        %v2180 = vpop.f32.mrb[0].mxu0
        %v2181 = vadd.f32 %v2140, %v2180
        %v2182 = vpop.f32.mrb[0].mxu0
        %v2183 = vpop.f32.mrb[0].mxu0
        %2184 = vdwg.mxu0
        %2185 = vmatprep.subr.bf16.mxu0 %v1656
        %2186 = vmatpush1.bf16.msra.mxu0 %v1655
        %2187 = vmatprep.subr.bf16.mxu0 %v1660
        %2188 = vmatpush1.bf16.msra.mxu0 %v1659
        %2189 = vmatprep.subr.bf16.mxu0 %v1664
        %2190 = vmatpush1.bf16.msra.mxu0 %v1663
        %2191 = vmatprep.subr.bf16.mxu0 %v1668
        %2192 = vmatpush1.bf16.msra.mxu0 %v1667
        %2193 = vmatprep.subr.bf16.mxu0 %v1672
        %2194 = vmatpush1.bf16.msra.mxu0 %v1671
        %2195 = vmatprep.subr.bf16.mxu0 %v1676
        %2196 = vmatpush1.bf16.msra.mxu0 %v1675
        %2197 = vmatprep.subr.bf16.mxu0 %v1680
        %2198 = vmatpush1.bf16.msra.mxu0 %v1679
        %2199 = vmatprep.subr.bf16.mxu0 %v1684
        %2200 = vmatpush1.bf16.msra.mxu0 %v1683
        %2201 = vmatprep.subr.bf16.mxu0 %v1688
        %2202 = vmatpush1.bf16.msra.mxu0 %v1687
        %2203 = vmatprep.subr.bf16.mxu0 %v1692
        %2204 = vmatpush1.bf16.msra.mxu0 %v1691
        %2205 = vmatprep.subr.bf16.mxu0 %v1696
        %2206 = vmatpush1.bf16.msra.mxu0 %v1695
        %2207 = vmatprep.subr.bf16.mxu0 %v1700
        %2208 = vmatpush1.bf16.msra.mxu0 %v1699
        %2209 = vmatprep.subr.bf16.mxu0 %v1704
        %2210 = vmatpush1.bf16.msra.mxu0 %v1703
        %2211 = vmatprep.subr.bf16.mxu0 %v1708
        %2212 = vmatpush1.bf16.msra.mxu0 %v1707
        %2213 = vmatprep.subr.bf16.mxu0 %v1712
        %2214 = vmatpush1.bf16.msra.mxu0 %v1711
        %2215 = vmatprep.subr.bf16.mxu0 %v1716
        %2216 = vmatpush1.bf16.msra.mxu0 %v1715
        %2217 = vmatprep.mubr.bf16.mxu0 %v650
        %2218 = vmatmul.mubr.bf16.gmra.mrb[0].mxu0 %v649
        %v2219 = vpop.f32.mrb[0].mxu0
        %v2220 = vadd.f32 %v2179, %v2219
        %v2221 = vpop.f32.mrb[0].mxu0
        %v2222 = vadd.f32 %v2181, %v2221
        %v2223 = vpop.f32.mrb[0].mxu0
        %v2224 = vpop.f32.mrb[0].mxu0
        %2225 = vdwg.mxu0
        %2226 = vmatprep.subr.bf16.mxu0 %v1720
        %2227 = vmatpush1.bf16.msra.mxu0 %v1719
        %2228 = vmatprep.subr.bf16.mxu0 %v1724
        %2229 = vmatpush1.bf16.msra.mxu0 %v1723
        %2230 = vmatprep.subr.bf16.mxu0 %v1728
        %2231 = vmatpush1.bf16.msra.mxu0 %v1727
        %2232 = vmatprep.subr.bf16.mxu0 %v1732
        %2233 = vmatpush1.bf16.msra.mxu0 %v1731
        %2234 = vmatprep.subr.bf16.mxu0 %v1736
        %2235 = vmatpush1.bf16.msra.mxu0 %v1735
        %2236 = vmatprep.subr.bf16.mxu0 %v1740
        %2237 = vmatpush1.bf16.msra.mxu0 %v1739
        %2238 = vmatprep.subr.bf16.mxu0 %v1744
        %2239 = vmatpush1.bf16.msra.mxu0 %v1743
        %2240 = vmatprep.subr.bf16.mxu0 %v1748
        %2241 = vmatpush1.bf16.msra.mxu0 %v1747
        %2242 = vmatprep.subr.bf16.mxu0 %v1752
        %2243 = vmatpush1.bf16.msra.mxu0 %v1751
        %2244 = vmatprep.subr.bf16.mxu0 %v1756
        %2245 = vmatpush1.bf16.msra.mxu0 %v1755
        %2246 = vmatprep.subr.bf16.mxu0 %v1760
        %2247 = vmatpush1.bf16.msra.mxu0 %v1759
        %2248 = vmatprep.subr.bf16.mxu0 %v1764
        %2249 = vmatpush1.bf16.msra.mxu0 %v1763
        %2250 = vmatprep.subr.bf16.mxu0 %v1768
        %2251 = vmatpush1.bf16.msra.mxu0 %v1767
        %2252 = vmatprep.subr.bf16.mxu0 %v1772
        %2253 = vmatpush1.bf16.msra.mxu0 %v1771
        %2254 = vmatprep.subr.bf16.mxu0 %v1776
        %2255 = vmatpush1.bf16.msra.mxu0 %v1775
        %2256 = vmatprep.subr.bf16.mxu0 %v1780
        %2257 = vmatpush1.bf16.msra.mxu0 %v1779
        %2258 = vmatprep.mubr.bf16.mxu0 %v652
        %2259 = vmatmul.mubr.bf16.gmra.mrb[0].mxu0 %v651
        %v2260 = vpop.f32.mrb[0].mxu0
        %v2261 = vadd.f32 %v2220, %v2260
        %v2262 = vpop.f32.mrb[0].mxu0
        %v2263 = vadd.f32 %v2222, %v2262
        %v2264 = vpop.f32.mrb[0].mxu0
        %v2265 = vpop.f32.mrb[0].mxu0
        %2266 = vdwg.mxu0
        %2267 = vmatprep.subr.bf16.mxu0 %v1784
        %2268 = vmatpush1.bf16.msra.mxu0 %v1783
        %2269 = vmatprep.subr.bf16.mxu0 %v1788
        %2270 = vmatpush1.bf16.msra.mxu0 %v1787
        %2271 = vmatprep.subr.bf16.mxu0 %v1792
        %2272 = vmatpush1.bf16.msra.mxu0 %v1791
        %2273 = vmatprep.subr.bf16.mxu0 %v1796
        %2274 = vmatpush1.bf16.msra.mxu0 %v1795
        %2275 = vmatprep.subr.bf16.mxu0 %v1800
        %2276 = vmatpush1.bf16.msra.mxu0 %v1799
        %2277 = vmatprep.subr.bf16.mxu0 %v1804
        %2278 = vmatpush1.bf16.msra.mxu0 %v1803
        %2279 = vmatprep.subr.bf16.mxu0 %v1808
        %2280 = vmatpush1.bf16.msra.mxu0 %v1807
        %2281 = vmatprep.subr.bf16.mxu0 %v1812
        %2282 = vmatpush1.bf16.msra.mxu0 %v1811
        %2283 = vmatprep.subr.bf16.mxu0 0
        %2284 = vmatpush1.bf16.msra.mxu0 0
        %2285 = vmatprep.subr.bf16.mxu0 0
        %2286 = vmatpush1.bf16.msra.mxu0 0
        %2287 = vmatprep.subr.bf16.mxu0 0
        %2288 = vmatpush1.bf16.msra.mxu0 0
        %2289 = vmatprep.subr.bf16.mxu0 0
        %2290 = vmatpush1.bf16.msra.mxu0 0
        %2291 = vmatprep.subr.bf16.mxu0 0
        %2292 = vmatpush1.bf16.msra.mxu0 0
        %2293 = vmatprep.subr.bf16.mxu0 0
        %2294 = vmatpush1.bf16.msra.mxu0 0
        %2295 = vmatprep.subr.bf16.mxu0 0
        %2296 = vmatpush1.bf16.msra.mxu0 0
        %2297 = vmatprep.subr.bf16.mxu0 0
        %2298 = vmatpush1.bf16.msra.mxu0 0
        %2299 = vmatprep.mubr.bf16.mxu0 0
        %2300 = vmatmul.mubr.bf16.gmra.mrb[0].mxu0 %v653
        %v2301 = vpop.f32.mrb[0].mxu0
        %v2302 = vadd.f32 %v2261, %v2301
        %v2303 = vpop.f32.mrb[0].mxu0
        %v2304 = vadd.f32 %v2263, %v2303
        %v2305 = vpop.f32.mrb[0].mxu0
        %v2306 = vpop.f32.mrb[0].mxu0
        %2307 = vdwg.mxu0
        %2308 = vmatprep.subr.bf16.mxu0 %v1530
        %2309 = vmatpush1.bf16.msra.mxu0 %v1529
        %2310 = vmatprep.subr.bf16.mxu0 %v1534
        %2311 = vmatpush1.bf16.msra.mxu0 %v1533
        %2312 = vmatprep.subr.bf16.mxu0 %v1538
        %2313 = vmatpush1.bf16.msra.mxu0 %v1537
        %2314 = vmatprep.subr.bf16.mxu0 %v1542
        %2315 = vmatpush1.bf16.msra.mxu0 %v1541
        %2316 = vmatprep.subr.bf16.mxu0 %v1546
        %2317 = vmatpush1.bf16.msra.mxu0 %v1545
        %2318 = vmatprep.subr.bf16.mxu0 %v1550
        %2319 = vmatpush1.bf16.msra.mxu0 %v1549
        %2320 = vmatprep.subr.bf16.mxu0 %v1554
        %2321 = vmatpush1.bf16.msra.mxu0 %v1553
        %2322 = vmatprep.subr.bf16.mxu0 %v1558
        %2323 = vmatpush1.bf16.msra.mxu0 %v1557
        %2324 = vmatprep.subr.bf16.mxu0 %v1562
        %2325 = vmatpush1.bf16.msra.mxu0 %v1561
        %2326 = vmatprep.subr.bf16.mxu0 %v1566
        %2327 = vmatpush1.bf16.msra.mxu0 %v1565
        %2328 = vmatprep.subr.bf16.mxu0 %v1570
        %2329 = vmatpush1.bf16.msra.mxu0 %v1569
        %2330 = vmatprep.subr.bf16.mxu0 %v1574
        %2331 = vmatpush1.bf16.msra.mxu0 %v1573
        %2332 = vmatprep.subr.bf16.mxu0 %v1578
        %2333 = vmatpush1.bf16.msra.mxu0 %v1577
        %2334 = vmatprep.subr.bf16.mxu0 %v1582
        %2335 = vmatpush1.bf16.msra.mxu0 %v1581
        %2336 = vmatprep.subr.bf16.mxu0 %v1586
        %2337 = vmatpush1.bf16.msra.mxu0 %v1585
        %2338 = vmatprep.subr.bf16.mxu0 %v1590
        %2339 = vmatpush1.bf16.msra.mxu0 %v1589
        %2340 = vmatprep.mubr.bf16.mxu0 %v646
        %2341 = vmatmul.mubr.bf16.gmra.mrb[0].mxu0 %v645
        %v2342 = vpop.f32.mrb[0].mxu0
        %v2343 = vadd.f32 0.0, %v2342
        %v2344 = vpop.f32.mrb[0].mxu0
        %v2345 = vadd.f32 0.0, %v2344
        %v2346 = vpop.f32.mrb[0].mxu0
        %v2347 = vpop.f32.mrb[0].mxu0
        %2348 = vdwg.mxu0
        %2349 = vmatprep.subr.bf16.mxu0 %v1594
        %2350 = vmatpush1.bf16.msra.mxu0 %v1593
        %2351 = vmatprep.subr.bf16.mxu0 %v1598
        %2352 = vmatpush1.bf16.msra.mxu0 %v1597
        %2353 = vmatprep.subr.bf16.mxu0 %v1602
        %2354 = vmatpush1.bf16.msra.mxu0 %v1601
        %2355 = vmatprep.subr.bf16.mxu0 %v1606
        %2356 = vmatpush1.bf16.msra.mxu0 %v1605
        %2357 = vmatprep.subr.bf16.mxu0 %v1610
        %2358 = vmatpush1.bf16.msra.mxu0 %v1609
        %2359 = vmatprep.subr.bf16.mxu0 %v1614
        %2360 = vmatpush1.bf16.msra.mxu0 %v1613
        %2361 = vmatprep.subr.bf16.mxu0 %v1618
        %2362 = vmatpush1.bf16.msra.mxu0 %v1617
        %2363 = vmatprep.subr.bf16.mxu0 %v1622
        %2364 = vmatpush1.bf16.msra.mxu0 %v1621
        %2365 = vmatprep.subr.bf16.mxu0 %v1626
        %2366 = vmatpush1.bf16.msra.mxu0 %v1625
        %2367 = vmatprep.subr.bf16.mxu0 %v1630
        %2368 = vmatpush1.bf16.msra.mxu0 %v1629
        %2369 = vmatprep.subr.bf16.mxu0 %v1634
        %2370 = vmatpush1.bf16.msra.mxu0 %v1633
        %2371 = vmatprep.subr.bf16.mxu0 %v1638
        %2372 = vmatpush1.bf16.msra.mxu0 %v1637
        %2373 = vmatprep.subr.bf16.mxu0 %v1642
        %2374 = vmatpush1.bf16.msra.mxu0 %v1641
        %2375 = vmatprep.subr.bf16.mxu0 %v1646
        %2376 = vmatpush1.bf16.msra.mxu0 %v1645
        %2377 = vmatprep.subr.bf16.mxu0 %v1650
        %2378 = vmatpush1.bf16.msra.mxu0 %v1649
        %2379 = vmatprep.subr.bf16.mxu0 %v1654
        %2380 = vmatpush1.bf16.msra.mxu0 %v1653
        %2381 = vmatprep.mubr.bf16.mxu0 %v648
        %2382 = vmatmul.mubr.bf16.gmra.mrb[0].mxu0 %v647
        %v2383 = vpop.f32.mrb[0].mxu0
        %v2384 = vadd.f32 %v2343, %v2383
        %v2385 = vpop.f32.mrb[0].mxu0
        %v2386 = vadd.f32 %v2345, %v2385
        %v2387 = vpop.f32.mrb[0].mxu0
        %v2388 = vpop.f32.mrb[0].mxu0
        %2389 = vdwg.mxu0
        %2390 = vmatprep.subr.bf16.mxu0 %v1658
        %2391 = vmatpush1.bf16.msra.mxu0 %v1657
        %2392 = vmatprep.subr.bf16.mxu0 %v1662
        %2393 = vmatpush1.bf16.msra.mxu0 %v1661
        %2394 = vmatprep.subr.bf16.mxu0 %v1666
        %2395 = vmatpush1.bf16.msra.mxu0 %v1665
        %2396 = vmatprep.subr.bf16.mxu0 %v1670
        %2397 = vmatpush1.bf16.msra.mxu0 %v1669
        %2398 = vmatprep.subr.bf16.mxu0 %v1674
        %2399 = vmatpush1.bf16.msra.mxu0 %v1673
        %2400 = vmatprep.subr.bf16.mxu0 %v1678
        %2401 = vmatpush1.bf16.msra.mxu0 %v1677
        %2402 = vmatprep.subr.bf16.mxu0 %v1682
        %2403 = vmatpush1.bf16.msra.mxu0 %v1681
        %2404 = vmatprep.subr.bf16.mxu0 %v1686
        %2405 = vmatpush1.bf16.msra.mxu0 %v1685
        %2406 = vmatprep.subr.bf16.mxu0 %v1690
        %2407 = vmatpush1.bf16.msra.mxu0 %v1689
        %2408 = vmatprep.subr.bf16.mxu0 %v1694
        %2409 = vmatpush1.bf16.msra.mxu0 %v1693
        %2410 = vmatprep.subr.bf16.mxu0 %v1698
        %2411 = vmatpush1.bf16.msra.mxu0 %v1697
        %2412 = vmatprep.subr.bf16.mxu0 %v1702
        %2413 = vmatpush1.bf16.msra.mxu0 %v1701
        %2414 = vmatprep.subr.bf16.mxu0 %v1706
        %2415 = vmatpush1.bf16.msra.mxu0 %v1705
        %2416 = vmatprep.subr.bf16.mxu0 %v1710
        %2417 = vmatpush1.bf16.msra.mxu0 %v1709
        %2418 = vmatprep.subr.bf16.mxu0 %v1714
        %2419 = vmatpush1.bf16.msra.mxu0 %v1713
        %2420 = vmatprep.subr.bf16.mxu0 %v1718
        %2421 = vmatpush1.bf16.msra.mxu0 %v1717
        %2422 = vmatprep.mubr.bf16.mxu0 %v650
        %2423 = vmatmul.mubr.bf16.gmra.mrb[0].mxu0 %v649
        %v2424 = vpop.f32.mrb[0].mxu0
        %v2425 = vadd.f32 %v2384, %v2424
        %v2426 = vpop.f32.mrb[0].mxu0
        %v2427 = vadd.f32 %v2386, %v2426
        %v2428 = vpop.f32.mrb[0].mxu0
        %v2429 = vpop.f32.mrb[0].mxu0
        %2430 = vdwg.mxu0
        %2431 = vmatprep.subr.bf16.mxu0 %v1722
        %2432 = vmatpush1.bf16.msra.mxu0 %v1721
        %2433 = vmatprep.subr.bf16.mxu0 %v1726
        %2434 = vmatpush1.bf16.msra.mxu0 %v1725
        %2435 = vmatprep.subr.bf16.mxu0 %v1730
        %2436 = vmatpush1.bf16.msra.mxu0 %v1729
        %2437 = vmatprep.subr.bf16.mxu0 %v1734
        %2438 = vmatpush1.bf16.msra.mxu0 %v1733
        %2439 = vmatprep.subr.bf16.mxu0 %v1738
        %2440 = vmatpush1.bf16.msra.mxu0 %v1737
        %2441 = vmatprep.subr.bf16.mxu0 %v1742
        %2442 = vmatpush1.bf16.msra.mxu0 %v1741
        %2443 = vmatprep.subr.bf16.mxu0 %v1746
        %2444 = vmatpush1.bf16.msra.mxu0 %v1745
        %2445 = vmatprep.subr.bf16.mxu0 %v1750
        %2446 = vmatpush1.bf16.msra.mxu0 %v1749
        %2447 = vmatprep.subr.bf16.mxu0 %v1754
        %2448 = vmatpush1.bf16.msra.mxu0 %v1753
        %2449 = vmatprep.subr.bf16.mxu0 %v1758
        %2450 = vmatpush1.bf16.msra.mxu0 %v1757
        %2451 = vmatprep.subr.bf16.mxu0 %v1762
        %2452 = vmatpush1.bf16.msra.mxu0 %v1761
        %2453 = vmatprep.subr.bf16.mxu0 %v1766
        %2454 = vmatpush1.bf16.msra.mxu0 %v1765
        %2455 = vmatprep.subr.bf16.mxu0 %v1770
        %2456 = vmatpush1.bf16.msra.mxu0 %v1769
        %2457 = vmatprep.subr.bf16.mxu0 %v1774
        %2458 = vmatpush1.bf16.msra.mxu0 %v1773
        %2459 = vmatprep.subr.bf16.mxu0 %v1778
        %2460 = vmatpush1.bf16.msra.mxu0 %v1777
        %2461 = vmatprep.subr.bf16.mxu0 %v1782
        %2462 = vmatpush1.bf16.msra.mxu0 %v1781
        %2463 = vmatprep.mubr.bf16.mxu0 %v652
        %2464 = vmatmul.mubr.bf16.gmra.mrb[0].mxu0 %v651
        %v2465 = vpop.f32.mrb[0].mxu0
        %v2466 = vadd.f32 %v2425, %v2465
        %v2467 = vpop.f32.mrb[0].mxu0
        %v2468 = vadd.f32 %v2427, %v2467
        %v2469 = vpop.f32.mrb[0].mxu0
        %v2470 = vpop.f32.mrb[0].mxu0
        %2471 = vdwg.mxu0
        %2472 = vmatprep.subr.bf16.mxu0 %v1786
        %2473 = vmatpush1.bf16.msra.mxu0 %v1785
        %2474 = vmatprep.subr.bf16.mxu0 %v1790
        %2475 = vmatpush1.bf16.msra.mxu0 %v1789
        %2476 = vmatprep.subr.bf16.mxu0 %v1794
        %2477 = vmatpush1.bf16.msra.mxu0 %v1793
        %2478 = vmatprep.subr.bf16.mxu0 %v1798
        %2479 = vmatpush1.bf16.msra.mxu0 %v1797
        %2480 = vmatprep.subr.bf16.mxu0 %v1802
        %2481 = vmatpush1.bf16.msra.mxu0 %v1801
        %2482 = vmatprep.subr.bf16.mxu0 %v1806
        %2483 = vmatpush1.bf16.msra.mxu0 %v1805
        %2484 = vmatprep.subr.bf16.mxu0 %v1810
        %2485 = vmatpush1.bf16.msra.mxu0 %v1809
        %2486 = vmatprep.subr.bf16.mxu0 %v1814
        %2487 = vmatpush1.bf16.msra.mxu0 %v1813
        %2488 = vmatprep.subr.bf16.mxu0 0
        %2489 = vmatpush1.bf16.msra.mxu0 0
        %2490 = vmatprep.subr.bf16.mxu0 0
        %2491 = vmatpush1.bf16.msra.mxu0 0
        %2492 = vmatprep.subr.bf16.mxu0 0
        %2493 = vmatpush1.bf16.msra.mxu0 0
        %2494 = vmatprep.subr.bf16.mxu0 0
        %2495 = vmatpush1.bf16.msra.mxu0 0
        %2496 = vmatprep.subr.bf16.mxu0 0
        %2497 = vmatpush1.bf16.msra.mxu0 0
        %2498 = vmatprep.subr.bf16.mxu0 0
        %2499 = vmatpush1.bf16.msra.mxu0 0
        %2500 = vmatprep.subr.bf16.mxu0 0
        %2501 = vmatpush1.bf16.msra.mxu0 0
        %2502 = vmatprep.subr.bf16.mxu0 0
        %2503 = vmatpush1.bf16.msra.mxu0 0
        %2504 = vmatprep.mubr.bf16.mxu0 0
        %2505 = vmatmul.mubr.bf16.gmra.mrb[0].mxu0 %v653
        %v2506 = vpop.f32.mrb[0].mxu0
        %v2507 = vadd.f32 %v2466, %v2506
        %v2508 = vpop.f32.mrb[0].mxu0
        %v2509 = vadd.f32 %v2468, %v2508
        %v2510 = vpop.f32.mrb[0].mxu0
        %v2511 = vpop.f32.mrb[0].mxu0
        %2512 = vdwg.mxu0
        %p2513 = scmp.eq.s32.totalorder %s28, 0
        // Predicated region
        $region57: #{cnn_forward.3} parent=39 // pred_check
          %p2514 = pneg %p2513
        $region58: #{cnn_forward.3} parent=39 // pred_check_branch
          %2516 = sbr.rel (%p2514) target = $region60
        $region59: #{cnn_forward.3} parent=39 // pred_region
          %v2517 = vld [vmem:[%s288] sm:$0xf]
          %v2519 = vlaneseq
          %v2520 = vshrl.u32 %v2519, 7
          %v2521 = vsub.s32 0, %v2520
          %v2522 = vrot.slane %v2517, %v2521
          %v2523 = vlaneseq
          %v2524 = vshrl.u32 %v2523, 7
          %v2525 = vsub.s32 1, %v2524
          %v2526 = vrot.slane %v2517, %v2525
          %v2527 = vlaneseq
          %v2528 = vshrl.u32 %v2527, 7
          %v2529 = vsub.s32 2, %v2528
          %v2530 = vrot.slane %v2517, %v2529
          %v2531 = vlaneseq
          %v2532 = vshrl.u32 %v2531, 7
          %v2533 = vsub.s32 3, %v2532
          %v2534 = vrot.slane %v2517, %v2533
          %v2539 = vadd.f32 %v2302, %v2522
          %v2540 = vadd.f32 %v2304, %v2526
          %v2541 = vadd.f32 %v2507, %v2530
          %v2542 = vadd.f32 %v2509, %v2534
          %s2543 = smul.u32 %s27, 4
          %s2544 = smul.addr %s2543, 8
          %s2545 = scalar_lea.vmem [#allocation2], %s2544
          %2546 = vst [vmem:[%s2545] sm:$0xff] %v2539
          %2547 = vst [vmem:[%s2545 + $0x8] sm:$0xff] %v2540
          %2548 = vst [vmem:[%s2545 + $0x10] sm:$0xff] %v2541
          %2549 = vst [vmem:[%s2545 + $0x18] sm:$0xff] %v2542
        $region60: #{cnn_forward.3} parent=39 // pred_fallthru
          _
        %p2550 = scmp.gt.s32.totalorder %s28, 0
        // Predicated region
        $region61: #{cnn_forward.3} parent=39 // pred_check
          %p2551 = pneg %p2550
        $region62: #{cnn_forward.3} parent=39 // pred_check_branch
          %2553 = sbr.rel (%p2551) target = $region64
        $region63: #{cnn_forward.3} parent=39 // pred_region
          %s2554 = smul.u32 %s27, 4
          %s2555 = smul.addr %s2554, 8
          %s2556 = scalar_lea.vmem [#allocation2], %s2555
          %v2557 = vld [vmem:[%s2556] sm:$0xff]
          %v2558 = vld [vmem:[%s2556 + $0x8] sm:$0xff]
          %v2559 = vld [vmem:[%s2556 + $0x10] sm:$0xff]
          %v2560 = vld [vmem:[%s2556 + $0x18] sm:$0xff]
          %v2561 = vadd.f32 %v2557, %v2302
          %v2562 = vadd.f32 %v2558, %v2304
          %v2563 = vadd.f32 %v2559, %v2507
          %v2564 = vadd.f32 %v2560, %v2509
          %2565 = vst [vmem:[%s2556] sm:$0xff] %v2561
          %2566 = vst [vmem:[%s2556 + $0x8] sm:$0xff] %v2562
          %2567 = vst [vmem:[%s2556 + $0x10] sm:$0xff] %v2563
          %2568 = vst [vmem:[%s2556 + $0x18] sm:$0xff] %v2564
        $region64: #{cnn_forward.3} parent=39 // pred_fallthru
          _
        %p2569 = scmp.eq.s32.totalorder %s27, 1
        %p2570 = scmp.eq.s32.totalorder %s28, 1
        %p2571 = pnand %p2569, %p2570
        %p2572 = pneg %p2571
        // Predicated region
        $region65: #{cnn_forward.3} parent=39 // pred_check
          _
        $region66: #{cnn_forward.3} parent=39 // pred_check_branch
          %2574 = sbr.rel (%p2571) target = $region68
        $region67: #{cnn_forward.3} parent=39 // pred_region
          %v2575 = vld [vmem:[#allocation2] sm:$0xff]
          %v2576 = vld [vmem:[#allocation2 + $0x8] sm:$0xff]
          %v2577 = vld [vmem:[#allocation2 + $0x10] sm:$0xff]
          %v2578 = vld [vmem:[#allocation2 + $0x18] sm:$0xff]
          %v2579 = vpack.c.bf16 %v2575, %v2575
          %v2580 = vpack.c.bf16 %v2576, %v2576
          %v2581 = vpack.c.bf16 %v2577, %v2577
          %v2582 = vpack.c.bf16 %v2578, %v2578
          %v2583 = vld [vmem:[#allocation7] sm:$0xf]
          %v2584 = vld [vmem:[#allocation7 + $0x4] sm:$0xf]
          %v2585 = vld [vmem:[#allocation7 + $0x8] sm:$0xf]
          %v2586 = vld [vmem:[#allocation7 + $0xc] sm:$0xf]
          %v2587 = vld [vmem:[#allocation7 + $0x10] sm:$0xf]
          %v2588 = vld [vmem:[#allocation7 + $0x14] sm:$0xf]
          %v2589 = vld [vmem:[#allocation7 + $0x18] sm:$0xf]
          %v2590 = vld [vmem:[#allocation7 + $0x1c] sm:$0xf]
          %v2591 = vld [vmem:[#allocation7 + $0x20] sm:$0xf]
          %v2592 = vld [vmem:[#allocation7 + $0x24] sm:$0xf]
          %v2593 = vld [vmem:[#allocation7 + $0x28] sm:$0xf]
          %v2594 = vld [vmem:[#allocation7 + $0x2c] sm:$0xf]
          %v2595 = vld [vmem:[#allocation7 + $0x30] sm:$0xf]
          %v2596 = vld [vmem:[#allocation7 + $0x34] sm:$0xf]
          %v2597 = vld [vmem:[#allocation7 + $0x38] sm:$0xf]
          %v2598 = vld [vmem:[#allocation7 + $0x3c] sm:$0xf]
          %v2599 = vld [vmem:[#allocation7 + $0x40] sm:$0xf]
          %v2600 = vld [vmem:[#allocation7 + $0x44] sm:$0xf]
          %v2601 = vld [vmem:[#allocation7 + $0x48] sm:$0xf]
          %v2602 = vld [vmem:[#allocation7 + $0x4c] sm:$0xf]
          %v2603 = vld [vmem:[#allocation7 + $0x50] sm:$0xf]
          %v2604 = vld [vmem:[#allocation7 + $0x54] sm:$0xf]
          %v2605 = vld [vmem:[#allocation7 + $0x58] sm:$0xf]
          %v2606 = vld [vmem:[#allocation7 + $0x5c] sm:$0xf]
          %v2607 = vld [vmem:[#allocation7 + $0x60] sm:$0xf]
          %v2608 = vld [vmem:[#allocation7 + $0x64] sm:$0xf]
          %v2609 = vld [vmem:[#allocation7 + $0x68] sm:$0xf]
          %v2610 = vld [vmem:[#allocation7 + $0x6c] sm:$0xf]
          %v2611 = vld [vmem:[#allocation7 + $0x70] sm:$0xf]
          %v2612 = vld [vmem:[#allocation7 + $0x74] sm:$0xf]
          %v2613 = vld [vmem:[#allocation7 + $0x78] sm:$0xf]
          %v2614 = vld [vmem:[#allocation7 + $0x7c] sm:$0xf]
          %v2615 = vld [vmem:[#allocation7 + $0x80] sm:$0xf]
          %v2616 = vld [vmem:[#allocation7 + $0x84] sm:$0xf]
          %v2617 = vld [vmem:[#allocation7 + $0x88] sm:$0xf]
          %v2618 = vld [vmem:[#allocation7 + $0x8c] sm:$0xf]
          %v2619 = vld [vmem:[#allocation7 + $0x90] sm:$0xf]
          %v2620 = vld [vmem:[#allocation7 + $0x94] sm:$0xf]
          %v2621 = vld [vmem:[#allocation7 + $0x98] sm:$0xf]
          %v2622 = vld [vmem:[#allocation7 + $0x9c] sm:$0xf]
          %v2623 = vld [vmem:[#allocation7 + $0xa0] sm:$0xf]
          %v2624 = vld [vmem:[#allocation7 + $0xa4] sm:$0xf]
          %v2625 = vld [vmem:[#allocation7 + $0xa8] sm:$0xf]
          %v2626 = vld [vmem:[#allocation7 + $0xac] sm:$0xf]
          %v2627 = vld [vmem:[#allocation7 + $0xb0] sm:$0xf]
          %v2628 = vld [vmem:[#allocation7 + $0xb4] sm:$0xf]
          %v2629 = vld [vmem:[#allocation7 + $0xb8] sm:$0xf]
          %v2630 = vld [vmem:[#allocation7 + $0xbc] sm:$0xf]
          %v2631 = vld [vmem:[#allocation7 + $0xc0] sm:$0xf]
          %v2632 = vld [vmem:[#allocation7 + $0xc4] sm:$0xf]
          %v2633 = vld [vmem:[#allocation7 + $0xc8] sm:$0xf]
          %v2634 = vld [vmem:[#allocation7 + $0xcc] sm:$0xf]
          %v2635 = vld [vmem:[#allocation7 + $0xd0] sm:$0xf]
          %v2636 = vld [vmem:[#allocation7 + $0xd4] sm:$0xf]
          %v2637 = vld [vmem:[#allocation7 + $0xd8] sm:$0xf]
          %v2638 = vld [vmem:[#allocation7 + $0xdc] sm:$0xf]
          %v2639 = vld [vmem:[#allocation7 + $0xe0] sm:$0xf]
          %v2640 = vld [vmem:[#allocation7 + $0xe4] sm:$0xf]
          %v2641 = vld [vmem:[#allocation7 + $0xe8] sm:$0xf]
          %v2642 = vld [vmem:[#allocation7 + $0xec] sm:$0xf]
          %v2643 = vld [vmem:[#allocation7 + $0xf0] sm:$0xf]
          %v2644 = vld [vmem:[#allocation7 + $0xf4] sm:$0xf]
          %v2645 = vld [vmem:[#allocation7 + $0xf8] sm:$0xf]
          %v2646 = vld [vmem:[#allocation7 + $0xfc] sm:$0xf]
          %s2647 = scalar_lea.vmem [#allocation2], 32
          %v2648 = vld [vmem:[%s2647] sm:$0xff]
          %v2649 = vld [vmem:[%s2647 + $0x8] sm:$0xff]
          %v2650 = vld [vmem:[%s2647 + $0x10] sm:$0xff]
          %v2651 = vld [vmem:[%s2647 + $0x18] sm:$0xff]
          %v2652 = vpack.c.bf16 %v2648, %v2648
          %v2653 = vpack.c.bf16 %v2649, %v2649
          %v2654 = vpack.c.bf16 %v2650, %v2650
          %v2655 = vpack.c.bf16 %v2651, %v2651
          %v2656 = vld [vmem:[#allocation7 + $0x100] sm:$0xf]
          %v2657 = vld [vmem:[#allocation7 + $0x104] sm:$0xf]
          %v2658 = vld [vmem:[#allocation7 + $0x108] sm:$0xf]
          %v2659 = vld [vmem:[#allocation7 + $0x10c] sm:$0xf]
          %v2660 = vld [vmem:[#allocation7 + $0x110] sm:$0xf]
          %v2661 = vld [vmem:[#allocation7 + $0x114] sm:$0xf]
          %v2662 = vld [vmem:[#allocation7 + $0x118] sm:$0xf]
          %v2663 = vld [vmem:[#allocation7 + $0x11c] sm:$0xf]
          %v2664 = vld [vmem:[#allocation7 + $0x120] sm:$0xf]
          %v2665 = vld [vmem:[#allocation7 + $0x124] sm:$0xf]
          %v2666 = vld [vmem:[#allocation7 + $0x128] sm:$0xf]
          %v2667 = vld [vmem:[#allocation7 + $0x12c] sm:$0xf]
          %v2668 = vld [vmem:[#allocation7 + $0x130] sm:$0xf]
          %v2669 = vld [vmem:[#allocation7 + $0x134] sm:$0xf]
          %v2670 = vld [vmem:[#allocation7 + $0x138] sm:$0xf]
          %v2671 = vld [vmem:[#allocation7 + $0x13c] sm:$0xf]
          %v2672 = vld [vmem:[#allocation7 + $0x140] sm:$0xf]
          %v2673 = vld [vmem:[#allocation7 + $0x144] sm:$0xf]
          %v2674 = vld [vmem:[#allocation7 + $0x148] sm:$0xf]
          %v2675 = vld [vmem:[#allocation7 + $0x14c] sm:$0xf]
          %v2676 = vld [vmem:[#allocation7 + $0x150] sm:$0xf]
          %v2677 = vld [vmem:[#allocation7 + $0x154] sm:$0xf]
          %v2678 = vld [vmem:[#allocation7 + $0x158] sm:$0xf]
          %v2679 = vld [vmem:[#allocation7 + $0x15c] sm:$0xf]
          %v2680 = vld [vmem:[#allocation7 + $0x160] sm:$0xf]
          %v2681 = vld [vmem:[#allocation7 + $0x164] sm:$0xf]
          %v2682 = vld [vmem:[#allocation7 + $0x168] sm:$0xf]
          %v2683 = vld [vmem:[#allocation7 + $0x16c] sm:$0xf]
          %v2684 = vld [vmem:[#allocation7 + $0x170] sm:$0xf]
          %v2685 = vld [vmem:[#allocation7 + $0x174] sm:$0xf]
          %v2686 = vld [vmem:[#allocation7 + $0x178] sm:$0xf]
          %v2687 = vld [vmem:[#allocation7 + $0x17c] sm:$0xf]
          %v2688 = vld [vmem:[#allocation7 + $0x180] sm:$0xf]
          %v2689 = vld [vmem:[#allocation7 + $0x184] sm:$0xf]
          %v2690 = vld [vmem:[#allocation7 + $0x188] sm:$0xf]
          %v2691 = vld [vmem:[#allocation7 + $0x18c] sm:$0xf]
          %v2692 = vld [vmem:[#allocation7 + $0x190] sm:$0xf]
          %v2693 = vld [vmem:[#allocation7 + $0x194] sm:$0xf]
          %v2694 = vld [vmem:[#allocation7 + $0x198] sm:$0xf]
          %v2695 = vld [vmem:[#allocation7 + $0x19c] sm:$0xf]
          %v2696 = vld [vmem:[#allocation7 + $0x1a0] sm:$0xf]
          %v2697 = vld [vmem:[#allocation7 + $0x1a4] sm:$0xf]
          %v2698 = vld [vmem:[#allocation7 + $0x1a8] sm:$0xf]
          %v2699 = vld [vmem:[#allocation7 + $0x1ac] sm:$0xf]
          %v2700 = vld [vmem:[#allocation7 + $0x1b0] sm:$0xf]
          %v2701 = vld [vmem:[#allocation7 + $0x1b4] sm:$0xf]
          %v2702 = vld [vmem:[#allocation7 + $0x1b8] sm:$0xf]
          %v2703 = vld [vmem:[#allocation7 + $0x1bc] sm:$0xf]
          %v2704 = vld [vmem:[#allocation7 + $0x1c0] sm:$0xf]
          %v2705 = vld [vmem:[#allocation7 + $0x1c4] sm:$0xf]
          %v2706 = vld [vmem:[#allocation7 + $0x1c8] sm:$0xf]
          %v2707 = vld [vmem:[#allocation7 + $0x1cc] sm:$0xf]
          %v2708 = vld [vmem:[#allocation7 + $0x1d0] sm:$0xf]
          %v2709 = vld [vmem:[#allocation7 + $0x1d4] sm:$0xf]
          %v2710 = vld [vmem:[#allocation7 + $0x1d8] sm:$0xf]
          %v2711 = vld [vmem:[#allocation7 + $0x1dc] sm:$0xf]
          %v2712 = vld [vmem:[#allocation7 + $0x1e0] sm:$0xf]
          %v2713 = vld [vmem:[#allocation7 + $0x1e4] sm:$0xf]
          %v2714 = vld [vmem:[#allocation7 + $0x1e8] sm:$0xf]
          %v2715 = vld [vmem:[#allocation7 + $0x1ec] sm:$0xf]
          %v2716 = vld [vmem:[#allocation7 + $0x1f0] sm:$0xf]
          %v2717 = vld [vmem:[#allocation7 + $0x1f4] sm:$0xf]
          %v2718 = vld [vmem:[#allocation7 + $0x1f8] sm:$0xf]
          %v2719 = vld [vmem:[#allocation7 + $0x1fc] sm:$0xf]
          %v2784 = vunpack.c.l.b16 %v2656
          %v2785 = vunpack.c.l.b16 %v2657
          %v2786 = vunpack.c.l.b16 %v2658
          %v2787 = vunpack.c.l.b16 %v2659
          %v2788 = vunpack.c.l.b16 %v2660
          %v2789 = vunpack.c.l.b16 %v2661
          %v2790 = vunpack.c.l.b16 %v2662
          %v2791 = vunpack.c.l.b16 %v2663
          %v2792 = vunpack.c.l.b16 %v2664
          %v2793 = vunpack.c.l.b16 %v2665
          %v2794 = vunpack.c.l.b16 %v2666
          %v2795 = vunpack.c.l.b16 %v2667
          %v2796 = vunpack.c.l.b16 %v2668
          %v2797 = vunpack.c.l.b16 %v2669
          %v2798 = vunpack.c.l.b16 %v2670
          %v2799 = vunpack.c.l.b16 %v2671
          %v2800 = vunpack.c.l.b16 %v2672
          %v2801 = vunpack.c.l.b16 %v2673
          %v2802 = vunpack.c.l.b16 %v2674
          %v2803 = vunpack.c.l.b16 %v2675
          %v2804 = vunpack.c.l.b16 %v2676
          %v2805 = vunpack.c.l.b16 %v2677
          %v2806 = vunpack.c.l.b16 %v2678
          %v2807 = vunpack.c.l.b16 %v2679
          %v2808 = vunpack.c.l.b16 %v2680
          %v2809 = vunpack.c.l.b16 %v2681
          %v2810 = vunpack.c.l.b16 %v2682
          %v2811 = vunpack.c.l.b16 %v2683
          %v2812 = vunpack.c.l.b16 %v2684
          %v2813 = vunpack.c.l.b16 %v2685
          %v2814 = vunpack.c.l.b16 %v2686
          %v2815 = vunpack.c.l.b16 %v2687
          %v2816 = vunpack.c.l.b16 %v2688
          %v2817 = vunpack.c.l.b16 %v2689
          %v2818 = vunpack.c.l.b16 %v2690
          %v2819 = vunpack.c.l.b16 %v2691
          %v2820 = vunpack.c.l.b16 %v2692
          %v2821 = vunpack.c.l.b16 %v2693
          %v2822 = vunpack.c.l.b16 %v2694
          %v2823 = vunpack.c.l.b16 %v2695
          %v2824 = vunpack.c.l.b16 %v2696
          %v2825 = vunpack.c.l.b16 %v2697
          %v2826 = vunpack.c.l.b16 %v2698
          %v2827 = vunpack.c.l.b16 %v2699
          %v2828 = vunpack.c.l.b16 %v2700
          %v2829 = vunpack.c.l.b16 %v2701
          %v2830 = vunpack.c.l.b16 %v2702
          %v2831 = vunpack.c.l.b16 %v2703
          %v2832 = vunpack.c.l.b16 %v2704
          %v2833 = vunpack.c.l.b16 %v2705
          %v2834 = vunpack.c.l.b16 %v2706
          %v2835 = vunpack.c.l.b16 %v2707
          %v2836 = vunpack.c.l.b16 %v2708
          %v2837 = vunpack.c.l.b16 %v2709
          %v2838 = vunpack.c.l.b16 %v2710
          %v2839 = vunpack.c.l.b16 %v2711
          %v2840 = vunpack.c.l.b16 %v2712
          %v2841 = vunpack.c.l.b16 %v2713
          %v2842 = vunpack.c.l.b16 %v2714
          %v2843 = vunpack.c.l.b16 %v2715
          %v2844 = vunpack.c.l.b16 %v2716
          %v2845 = vunpack.c.l.b16 %v2717
          %v2846 = vunpack.c.l.b16 %v2718
          %v2847 = vunpack.c.l.b16 %v2719
          %v2848 = vpack.c.b16 %v2785, %v2784
          %v2849 = vpack.c.b16 %v2787, %v2786
          %v2850 = vpack.c.b16 %v2789, %v2788
          %v2851 = vpack.c.b16 %v2791, %v2790
          %v2852 = vpack.c.b16 %v2793, %v2792
          %v2853 = vpack.c.b16 %v2795, %v2794
          %v2854 = vpack.c.b16 %v2797, %v2796
          %v2855 = vpack.c.b16 %v2799, %v2798
          %v2856 = vpack.c.b16 %v2801, %v2800
          %v2857 = vpack.c.b16 %v2803, %v2802
          %v2858 = vpack.c.b16 %v2805, %v2804
          %v2859 = vpack.c.b16 %v2807, %v2806
          %v2860 = vpack.c.b16 %v2809, %v2808
          %v2861 = vpack.c.b16 %v2811, %v2810
          %v2862 = vpack.c.b16 %v2813, %v2812
          %v2863 = vpack.c.b16 %v2815, %v2814
          %v2864 = vpack.c.b16 %v2817, %v2816
          %v2865 = vpack.c.b16 %v2819, %v2818
          %v2866 = vpack.c.b16 %v2821, %v2820
          %v2867 = vpack.c.b16 %v2823, %v2822
          %v2868 = vpack.c.b16 %v2825, %v2824
          %v2869 = vpack.c.b16 %v2827, %v2826
          %v2870 = vpack.c.b16 %v2829, %v2828
          %v2871 = vpack.c.b16 %v2831, %v2830
          %v2872 = vpack.c.b16 %v2833, %v2832
          %v2873 = vpack.c.b16 %v2835, %v2834
          %v2874 = vpack.c.b16 %v2837, %v2836
          %v2875 = vpack.c.b16 %v2839, %v2838
          %v2876 = vpack.c.b16 %v2841, %v2840
          %v2877 = vpack.c.b16 %v2843, %v2842
          %v2878 = vpack.c.b16 %v2845, %v2844
          %v2879 = vpack.c.b16 %v2847, %v2846
          %2912 = vmatprep.subr.bf16.mxu0 0
          %2913 = vmatpush1.bf16.msra.mxu0 %v2848
          %2914 = vmatprep.subr.bf16.mxu0 0
          %2915 = vmatpush1.bf16.msra.mxu0 %v2849
          %2916 = vmatprep.subr.bf16.mxu0 0
          %2917 = vmatpush1.bf16.msra.mxu0 %v2850
          %2918 = vmatprep.subr.bf16.mxu0 0
          %2919 = vmatpush1.bf16.msra.mxu0 %v2851
          %2920 = vmatprep.subr.bf16.mxu0 0
          %2921 = vmatpush1.bf16.msra.mxu0 %v2852
          %2922 = vmatprep.subr.bf16.mxu0 0
          %2923 = vmatpush1.bf16.msra.mxu0 %v2853
          %2924 = vmatprep.subr.bf16.mxu0 0
          %2925 = vmatpush1.bf16.msra.mxu0 %v2854
          %2926 = vmatprep.subr.bf16.mxu0 0
          %2927 = vmatpush1.bf16.msra.mxu0 %v2855
          %2928 = vmatprep.subr.bf16.mxu0 0
          %2929 = vmatpush1.bf16.msra.mxu0 %v2856
          %2930 = vmatprep.subr.bf16.mxu0 0
          %2931 = vmatpush1.bf16.msra.mxu0 %v2857
          %2932 = vmatprep.subr.bf16.mxu0 0
          %2933 = vmatpush1.bf16.msra.mxu0 %v2858
          %2934 = vmatprep.subr.bf16.mxu0 0
          %2935 = vmatpush1.bf16.msra.mxu0 %v2859
          %2936 = vmatprep.subr.bf16.mxu0 0
          %2937 = vmatpush1.bf16.msra.mxu0 %v2860
          %2938 = vmatprep.subr.bf16.mxu0 0
          %2939 = vmatpush1.bf16.msra.mxu0 %v2861
          %2940 = vmatprep.subr.bf16.mxu0 0
          %2941 = vmatpush1.bf16.msra.mxu0 %v2862
          %2942 = vmatprep.subr.bf16.mxu0 0
          %2943 = vmatpush1.bf16.msra.mxu0 %v2863
          %2944 = vmatprep.mubr.bf16.mxu0 %v2653
          %2945 = vmatmul.mubr.bf16.gmra.mrb[0].mxu0 %v2652
          %v2946 = vpop.f32.mrb[0].mxu0
          %v2947 = vadd.f32 0.0, %v2946
          %v2948 = vpop.f32.mrb[0].mxu0
          %v2949 = vpop.f32.mrb[0].mxu0
          %v2950 = vpop.f32.mrb[0].mxu0
          %2951 = vdwg.mxu0
          %2952 = vmatprep.subr.bf16.mxu0 0
          %2953 = vmatpush1.bf16.msra.mxu0 %v2864
          %2954 = vmatprep.subr.bf16.mxu0 0
          %2955 = vmatpush1.bf16.msra.mxu0 %v2865
          %2956 = vmatprep.subr.bf16.mxu0 0
          %2957 = vmatpush1.bf16.msra.mxu0 %v2866
          %2958 = vmatprep.subr.bf16.mxu0 0
          %2959 = vmatpush1.bf16.msra.mxu0 %v2867
          %2960 = vmatprep.subr.bf16.mxu0 0
          %2961 = vmatpush1.bf16.msra.mxu0 %v2868
          %2962 = vmatprep.subr.bf16.mxu0 0
          %2963 = vmatpush1.bf16.msra.mxu0 %v2869
          %2964 = vmatprep.subr.bf16.mxu0 0
          %2965 = vmatpush1.bf16.msra.mxu0 %v2870
          %2966 = vmatprep.subr.bf16.mxu0 0
          %2967 = vmatpush1.bf16.msra.mxu0 %v2871
          %2968 = vmatprep.subr.bf16.mxu0 0
          %2969 = vmatpush1.bf16.msra.mxu0 %v2872
          %2970 = vmatprep.subr.bf16.mxu0 0
          %2971 = vmatpush1.bf16.msra.mxu0 %v2873
          %2972 = vmatprep.subr.bf16.mxu0 0
          %2973 = vmatpush1.bf16.msra.mxu0 %v2874
          %2974 = vmatprep.subr.bf16.mxu0 0
          %2975 = vmatpush1.bf16.msra.mxu0 %v2875
          %2976 = vmatprep.subr.bf16.mxu0 0
          %2977 = vmatpush1.bf16.msra.mxu0 %v2876
          %2978 = vmatprep.subr.bf16.mxu0 0
          %2979 = vmatpush1.bf16.msra.mxu0 %v2877
          %2980 = vmatprep.subr.bf16.mxu0 0
          %2981 = vmatpush1.bf16.msra.mxu0 %v2878
          %2982 = vmatprep.subr.bf16.mxu0 0
          %2983 = vmatpush1.bf16.msra.mxu0 %v2879
          %2984 = vmatprep.mubr.bf16.mxu0 %v2655
          %2985 = vmatmul.mubr.bf16.gmra.mrb[0].mxu0 %v2654
          %v2986 = vpop.f32.mrb[0].mxu0
          %v2987 = vadd.f32 %v2947, %v2986
          %v2988 = vpop.f32.mrb[0].mxu0
          %v2989 = vpop.f32.mrb[0].mxu0
          %v2990 = vpop.f32.mrb[0].mxu0
          %2991 = vdwg.mxu0
          %v3056 = vunpack.c.l.b16 %v2583
          %v3057 = vunpack.c.l.b16 %v2584
          %v3058 = vunpack.c.l.b16 %v2585
          %v3059 = vunpack.c.l.b16 %v2586
          %v3060 = vunpack.c.l.b16 %v2587
          %v3061 = vunpack.c.l.b16 %v2588
          %v3062 = vunpack.c.l.b16 %v2589
          %v3063 = vunpack.c.l.b16 %v2590
          %v3064 = vunpack.c.l.b16 %v2591
          %v3065 = vunpack.c.l.b16 %v2592
          %v3066 = vunpack.c.l.b16 %v2593
          %v3067 = vunpack.c.l.b16 %v2594
          %v3068 = vunpack.c.l.b16 %v2595
          %v3069 = vunpack.c.l.b16 %v2596
          %v3070 = vunpack.c.l.b16 %v2597
          %v3071 = vunpack.c.l.b16 %v2598
          %v3072 = vunpack.c.l.b16 %v2599
          %v3073 = vunpack.c.l.b16 %v2600
          %v3074 = vunpack.c.l.b16 %v2601
          %v3075 = vunpack.c.l.b16 %v2602
          %v3076 = vunpack.c.l.b16 %v2603
          %v3077 = vunpack.c.l.b16 %v2604
          %v3078 = vunpack.c.l.b16 %v2605
          %v3079 = vunpack.c.l.b16 %v2606
          %v3080 = vunpack.c.l.b16 %v2607
          %v3081 = vunpack.c.l.b16 %v2608
          %v3082 = vunpack.c.l.b16 %v2609
          %v3083 = vunpack.c.l.b16 %v2610
          %v3084 = vunpack.c.l.b16 %v2611
          %v3085 = vunpack.c.l.b16 %v2612
          %v3086 = vunpack.c.l.b16 %v2613
          %v3087 = vunpack.c.l.b16 %v2614
          %v3088 = vunpack.c.l.b16 %v2615
          %v3089 = vunpack.c.l.b16 %v2616
          %v3090 = vunpack.c.l.b16 %v2617
          %v3091 = vunpack.c.l.b16 %v2618
          %v3092 = vunpack.c.l.b16 %v2619
          %v3093 = vunpack.c.l.b16 %v2620
          %v3094 = vunpack.c.l.b16 %v2621
          %v3095 = vunpack.c.l.b16 %v2622
          %v3096 = vunpack.c.l.b16 %v2623
          %v3097 = vunpack.c.l.b16 %v2624
          %v3098 = vunpack.c.l.b16 %v2625
          %v3099 = vunpack.c.l.b16 %v2626
          %v3100 = vunpack.c.l.b16 %v2627
          %v3101 = vunpack.c.l.b16 %v2628
          %v3102 = vunpack.c.l.b16 %v2629
          %v3103 = vunpack.c.l.b16 %v2630
          %v3104 = vunpack.c.l.b16 %v2631
          %v3105 = vunpack.c.l.b16 %v2632
          %v3106 = vunpack.c.l.b16 %v2633
          %v3107 = vunpack.c.l.b16 %v2634
          %v3108 = vunpack.c.l.b16 %v2635
          %v3109 = vunpack.c.l.b16 %v2636
          %v3110 = vunpack.c.l.b16 %v2637
          %v3111 = vunpack.c.l.b16 %v2638
          %v3112 = vunpack.c.l.b16 %v2639
          %v3113 = vunpack.c.l.b16 %v2640
          %v3114 = vunpack.c.l.b16 %v2641
          %v3115 = vunpack.c.l.b16 %v2642
          %v3116 = vunpack.c.l.b16 %v2643
          %v3117 = vunpack.c.l.b16 %v2644
          %v3118 = vunpack.c.l.b16 %v2645
          %v3119 = vunpack.c.l.b16 %v2646
          %v3120 = vpack.c.b16 %v3057, %v3056
          %v3121 = vpack.c.b16 %v3059, %v3058
          %v3122 = vpack.c.b16 %v3061, %v3060
          %v3123 = vpack.c.b16 %v3063, %v3062
          %v3124 = vpack.c.b16 %v3065, %v3064
          %v3125 = vpack.c.b16 %v3067, %v3066
          %v3126 = vpack.c.b16 %v3069, %v3068
          %v3127 = vpack.c.b16 %v3071, %v3070
          %v3128 = vpack.c.b16 %v3073, %v3072
          %v3129 = vpack.c.b16 %v3075, %v3074
          %v3130 = vpack.c.b16 %v3077, %v3076
          %v3131 = vpack.c.b16 %v3079, %v3078
          %v3132 = vpack.c.b16 %v3081, %v3080
          %v3133 = vpack.c.b16 %v3083, %v3082
          %v3134 = vpack.c.b16 %v3085, %v3084
          %v3135 = vpack.c.b16 %v3087, %v3086
          %v3136 = vpack.c.b16 %v3089, %v3088
          %v3137 = vpack.c.b16 %v3091, %v3090
          %v3138 = vpack.c.b16 %v3093, %v3092
          %v3139 = vpack.c.b16 %v3095, %v3094
          %v3140 = vpack.c.b16 %v3097, %v3096
          %v3141 = vpack.c.b16 %v3099, %v3098
          %v3142 = vpack.c.b16 %v3101, %v3100
          %v3143 = vpack.c.b16 %v3103, %v3102
          %v3144 = vpack.c.b16 %v3105, %v3104
          %v3145 = vpack.c.b16 %v3107, %v3106
          %v3146 = vpack.c.b16 %v3109, %v3108
          %v3147 = vpack.c.b16 %v3111, %v3110
          %v3148 = vpack.c.b16 %v3113, %v3112
          %v3149 = vpack.c.b16 %v3115, %v3114
          %v3150 = vpack.c.b16 %v3117, %v3116
          %v3151 = vpack.c.b16 %v3119, %v3118
          %3184 = vmatprep.subr.bf16.mxu0 0
          %3185 = vmatpush1.bf16.msra.mxu0 %v3120
          %3186 = vmatprep.subr.bf16.mxu0 0
          %3187 = vmatpush1.bf16.msra.mxu0 %v3121
          %3188 = vmatprep.subr.bf16.mxu0 0
          %3189 = vmatpush1.bf16.msra.mxu0 %v3122
          %3190 = vmatprep.subr.bf16.mxu0 0
          %3191 = vmatpush1.bf16.msra.mxu0 %v3123
          %3192 = vmatprep.subr.bf16.mxu0 0
          %3193 = vmatpush1.bf16.msra.mxu0 %v3124
          %3194 = vmatprep.subr.bf16.mxu0 0
          %3195 = vmatpush1.bf16.msra.mxu0 %v3125
          %3196 = vmatprep.subr.bf16.mxu0 0
          %3197 = vmatpush1.bf16.msra.mxu0 %v3126
          %3198 = vmatprep.subr.bf16.mxu0 0
          %3199 = vmatpush1.bf16.msra.mxu0 %v3127
          %3200 = vmatprep.subr.bf16.mxu0 0
          %3201 = vmatpush1.bf16.msra.mxu0 %v3128
          %3202 = vmatprep.subr.bf16.mxu0 0
          %3203 = vmatpush1.bf16.msra.mxu0 %v3129
          %3204 = vmatprep.subr.bf16.mxu0 0
          %3205 = vmatpush1.bf16.msra.mxu0 %v3130
          %3206 = vmatprep.subr.bf16.mxu0 0
          %3207 = vmatpush1.bf16.msra.mxu0 %v3131
          %3208 = vmatprep.subr.bf16.mxu0 0
          %3209 = vmatpush1.bf16.msra.mxu0 %v3132
          %3210 = vmatprep.subr.bf16.mxu0 0
          %3211 = vmatpush1.bf16.msra.mxu0 %v3133
          %3212 = vmatprep.subr.bf16.mxu0 0
          %3213 = vmatpush1.bf16.msra.mxu0 %v3134
          %3214 = vmatprep.subr.bf16.mxu0 0
          %3215 = vmatpush1.bf16.msra.mxu0 %v3135
          %3216 = vmatprep.mubr.bf16.mxu0 %v2580
          %3217 = vmatmul.mubr.bf16.gmra.mrb[0].mxu0 %v2579
          %v3218 = vpop.f32.mrb[0].mxu0
          %v3219 = vadd.f32 %v2987, %v3218
          %v3220 = vpop.f32.mrb[0].mxu0
          %v3221 = vpop.f32.mrb[0].mxu0
          %v3222 = vpop.f32.mrb[0].mxu0
          %3223 = vdwg.mxu0
          %3224 = vmatprep.subr.bf16.mxu0 0
          %3225 = vmatpush1.bf16.msra.mxu0 %v3136
          %3226 = vmatprep.subr.bf16.mxu0 0
          %3227 = vmatpush1.bf16.msra.mxu0 %v3137
          %3228 = vmatprep.subr.bf16.mxu0 0
          %3229 = vmatpush1.bf16.msra.mxu0 %v3138
          %3230 = vmatprep.subr.bf16.mxu0 0
          %3231 = vmatpush1.bf16.msra.mxu0 %v3139
          %3232 = vmatprep.subr.bf16.mxu0 0
          %3233 = vmatpush1.bf16.msra.mxu0 %v3140
          %3234 = vmatprep.subr.bf16.mxu0 0
          %3235 = vmatpush1.bf16.msra.mxu0 %v3141
          %3236 = vmatprep.subr.bf16.mxu0 0
          %3237 = vmatpush1.bf16.msra.mxu0 %v3142
          %3238 = vmatprep.subr.bf16.mxu0 0
          %3239 = vmatpush1.bf16.msra.mxu0 %v3143
          %3240 = vmatprep.subr.bf16.mxu0 0
          %3241 = vmatpush1.bf16.msra.mxu0 %v3144
          %3242 = vmatprep.subr.bf16.mxu0 0
          %3243 = vmatpush1.bf16.msra.mxu0 %v3145
          %3244 = vmatprep.subr.bf16.mxu0 0
          %3245 = vmatpush1.bf16.msra.mxu0 %v3146
          %3246 = vmatprep.subr.bf16.mxu0 0
          %3247 = vmatpush1.bf16.msra.mxu0 %v3147
          %3248 = vmatprep.subr.bf16.mxu0 0
          %3249 = vmatpush1.bf16.msra.mxu0 %v3148
          %3250 = vmatprep.subr.bf16.mxu0 0
          %3251 = vmatpush1.bf16.msra.mxu0 %v3149
          %3252 = vmatprep.subr.bf16.mxu0 0
          %3253 = vmatpush1.bf16.msra.mxu0 %v3150
          %3254 = vmatprep.subr.bf16.mxu0 0
          %3255 = vmatpush1.bf16.msra.mxu0 %v3151
          %3256 = vmatprep.mubr.bf16.mxu0 %v2582
          %3257 = vmatmul.mubr.bf16.gmra.mrb[0].mxu0 %v2581
          %v3258 = vpop.f32.mrb[0].mxu0
          %v3259 = vadd.f32 %v3219, %v3258
          %v3260 = vpop.f32.mrb[0].mxu0
          %v3261 = vpop.f32.mrb[0].mxu0
          %v3262 = vpop.f32.mrb[0].mxu0
          %3263 = vdwg.mxu0
          %v3264 = vld [vmem:[#allocation8] sm:$0x1]
          %v3266 = vlaneseq
          %v3267 = vshrl.u32 %v3266, 7
          %v3268 = vsub.s32 0, %v3267
          %v3269 = vrot.slane %v3264, %v3268
          %v3271 = vadd.f32 %v3259, %v3269
          %3272 = vst [vmem:[%s5] sm:$0xff] %v3271
        $region68: #{cnn_forward.3} parent=39 // pred_fallthru
          _
        // Predicated region
        $region69: #{cnn_forward.3} parent=39 // pred_check
          %p3273 = pneg %p170
        $region70: #{cnn_forward.3} parent=39 // pred_check_branch
          %3275 = sbr.rel (%p3273) target = $region72
        $region71: #{cnn_forward.3} parent=39 // pred_region
          _
        $region72: #{cnn_forward.3} parent=39 // pred_fallthru
          _
        // Predicated region
        $region73: #{cnn_forward.3} parent=39 // pred_check
          %p3276 = pneg %p170
        $region74: #{cnn_forward.3} parent=39 // pred_check_branch
          %3278 = sbr.rel (%p3276) target = $region76
        $region75: #{cnn_forward.3} parent=39 // pred_region
          _
        $region76: #{cnn_forward.3} parent=39 // pred_fallthru
          _
      $region40: #{cnn_forward.3} parent=5 // pred_fallthru
        _
      %p3279 = scmp.le.s32.totalorder 2, %s18
      // Predicated region
      $region77: #{cnn_forward.3} parent=5 // pred_check
        %p3280 = pneg %p3279
      $region78: #{cnn_forward.3} parent=5 // pred_check_branch
        %3282 = sbr.rel (%p3280) target = $region80
      $region79: #{cnn_forward.3} parent=5 // pred_region
        %s3283 = ssub.s32 %s18, 2
      $region80: #{cnn_forward.3} parent=5 // pred_fallthru
        _
    $region6: #{cnn_forward.3} parent=1 // loop_footer
      %s22 = sadd.s32 1, %s18
    $region7: #{cnn_forward.3} parent=1 // loop_footer_branch
      %17 = sbr.rel target = $region3
    $region8: #{cnn_forward.3} parent=1 // loop_exit
      _
    %3284 = vsyncpa [#allocation4], 1
    %s3285 = scalar_lea.sflag [#allocation4], 1
    %3286 = vsyncpa %s3285, 1
    %3287 = vsyncpa [#allocation6], 1
    %s3288 = scalar_lea.sflag [#allocation6], 1
    %3289 = vsyncpa %s3288, 1
    %3290 = vsyncpa [#allocation9], 1

// kernel: cnn_forward.2
$region0: #{cnn_forward.2}
  #allocation0 [shape = 'u32[]', space=smem, size = 0x4, offset = 0x4, fixed_abs, tag = 'smem constant byte address 0x4 - core index']
  #allocation1 [shape = 'u32[144,128]{1,0:T(1,128)}', space=vmem, size = 0x12000, scoped, tag = 'internal scratch']
  %s0 = inlined_call_operand.vmem [shape: bf16[2,30,30], index: 0, kind: input, shape index: {}]
  %s1 = inlined_call_operand.hbm [shape: bf16[3,30,448], index: 1, kind: input, shape index: {}]
  %s2 = inlined_call_operand.hbm [shape: bf16[3,30,448], index: 2, kind: input, shape index: {}]
  %s3 = inlined_call_operand.hbm [shape: f32[1,448], index: 3, kind: input, shape index: {}]
  %s4 = inlined_call_operand.hbm [shape: bf16[3,448,384], index: 4, kind: input, shape index: {}]
  %s5 = inlined_call_operand.hbm [shape: bf16[3,448,384], index: 5, kind: input, shape index: {}]
  %s6 = inlined_call_operand.hbm [shape: f32[1,384], index: 6, kind: input, shape index: {}]
  %s7 = inlined_call_operand.vmem [shape: bf16[2,6,384], index: 7, kind: output, shape index: {}]
  %s8 = sld [smem:[#allocation0]]
  $region85: #{cnn_forward.2} parent=0
    _
  %s10 = ssub.s32 1, %s8
  %s11 = scalar_select 0, %s10, %s8
  $region1: #{cnn_forward.2} parent=0
    #allocation2 [shape = 'u8[98304]{0}', space=vmem, size = 0x18000, scoped, tag = 'input window, operand 1, single buffered']
    #allocation3 [shape = 's32[2]{0}', space=sflag, size = 0x8, scoped, tag = 'scoped memory for cnn_forward.2']
    #allocation4 [shape = 'u8[98304]{0}', space=vmem, size = 0x18000, scoped, tag = 'input window, operand 2, single buffered']
    #allocation5 [shape = 's32[1]{0}', space=sflag, size = 0x4, scoped, tag = 'scoped memory for cnn_forward.2']
    #allocation6 [shape = 'u8[2048]{0}', space=vmem, size = 0x800, scoped, tag = 'input window, operand 3, single buffered']
    #allocation7 [shape = 'u8[1032192]{0}', space=vmem, size = 0xfc000, scoped, tag = 'input window, operand 4, single buffered']
    #allocation8 [shape = 's32[1]{0}', space=sflag, size = 0x4, scoped, tag = 'scoped memory for cnn_forward.2']
    #allocation9 [shape = 'u8[1032192]{0}', space=vmem, size = 0xfc000, scoped, tag = 'input window, operand 5, single buffered']
    #allocation10 [shape = 'u8[1536]{0}', space=vmem, size = 0x800, scoped, tag = 'input window, operand 6, single buffered']
    #allocation11 [shape = 's32[1]{0}', space=sflag, size = 0x4, scoped, tag = 'scoped memory for cnn_forward.2']
    %12 = vsyncpa [#allocation3], 0
    %13 = vsyncpa [#allocation5], 0
    %14 = vsyncpa [#allocation8], 0
    %15 = vsyncpa [#allocation11], 0
    loop: start=0, step=1, limit=4
    $region2: #{cnn_forward.2} parent=1 // loop_pre_header
      _
    $region3: #{cnn_forward.2} parent=1 // loop_header
      %s17 = sphi 0, %s21
      %p18 = scmp.ge.s32.totalorder %s17, 4
      %s27 = sphi 0, %s29
      %s30 = sphi 0, %s27
      %s31 = sphi 0, %s30
      %s47 = sphi 0, %s31
      %s51 = sphi 0, %s51
      %s53 = sphi 0, %s51
      %s54 = sphi 0, %s53
      %s68 = sphi 0, %s54
      %s72 = sphi 0, %s72
      %s74 = sphi 0, %s72
      %s75 = sphi 0, %s74
      %s89 = sphi 0, %s75
      %s93 = sphi 0, %s93
      %s95 = sphi 0, %s93
      %s96 = sphi 0, %s95
      %s110 = sphi 0, %s96
      %s114 = sphi 0, %s114
      %s116 = sphi 0, %s114
      %s117 = sphi 0, %s116
      %s131 = sphi 0, %s117
      %s135 = sphi 0, %s135
      %s137 = sphi 0, %s135
      %s138 = sphi 0, %s137
      %s152 = sphi 0, %s138
      %s156 = sphi 0, %s156
      %s158 = sphi 0, %s156
      %s159 = sphi 0, %s158
      %s173 = sphi 0, %s159
      %s179 = sphi 0, %s181
      %s182 = sphi 0, %s179
      %s183 = sphi 0, %s182
      %s199 = sphi 0, %s183
    $region4: #{cnn_forward.2} parent=1 // loop_header_branch
      %20 = sbr.rel (%p18) target = $region8
    $region5: #{cnn_forward.2} parent=1 // loop_body
      %s22 = ssub.s32 %s17, 1
      %s23 = ssub.s32 %s17, 2
      %s24 = sadd.s32 %s17, 1
      %s25 = ssub.s32 %s17, %s24
      %p26 = scmp.eq.s32.totalorder %s25, 0
      %s28 = sadd.s32 %s27, 1
      %s29 = scalar_select %p26, %s27, %s28
      %p32 = pneg %p26
      %p33 = scmp.eq.s32.totalorder %s17, 1
      %p34 = por %p32, %p33
      %p35 = scmp.ne.s32.totalorder %s27, %s30
      %p36 = scmp.eq.s32.totalorder %s17, 0
      %p37 = por %p35, %p36
      %p38 = scmp.ne.s32.totalorder %s27, %s30
      %p39 = scmp.eq.s32.totalorder %s22, 1
      %p40 = por %p38, %p39
      %p41 = scmp.ne.s32.totalorder %s30, %s31
      %p42 = scmp.eq.s32.totalorder %s22, 0
      %p43 = por %p41, %p42
      %p44 = scmp.ne.s32.totalorder %s30, %s31
      %p45 = scmp.eq.s32.totalorder %s23, 1
      %p46 = por %p44, %p45
      %p48 = scmp.ne.s32.totalorder %s31, %s47
      %p49 = scmp.eq.s32.totalorder %s23, 0
      %p50 = por %p48, %p49
      %s52 = sadd.s32 %s51, 1
      %p55 = scmp.eq.s32.totalorder %s17, 1
      %p56 = scmp.ne.s32.totalorder %s51, %s53
      %p57 = scmp.eq.s32.totalorder %s17, 0
      %p58 = por %p56, %p57
      %p59 = scmp.ne.s32.totalorder %s51, %s53
      %p60 = scmp.eq.s32.totalorder %s22, 1
      %p61 = por %p59, %p60
      %p62 = scmp.ne.s32.totalorder %s53, %s54
      %p63 = scmp.eq.s32.totalorder %s22, 0
      %p64 = por %p62, %p63
      %p65 = scmp.ne.s32.totalorder %s53, %s54
      %p66 = scmp.eq.s32.totalorder %s23, 1
      %p67 = por %p65, %p66
      %p69 = scmp.ne.s32.totalorder %s54, %s68
      %p70 = scmp.eq.s32.totalorder %s23, 0
      %p71 = por %p69, %p70
      %s73 = sadd.s32 %s72, 1
      %p76 = scmp.eq.s32.totalorder %s17, 1
      %p77 = scmp.ne.s32.totalorder %s72, %s74
      %p78 = scmp.eq.s32.totalorder %s17, 0
      %p79 = por %p77, %p78
      %p80 = scmp.ne.s32.totalorder %s72, %s74
      %p81 = scmp.eq.s32.totalorder %s22, 1
      %p82 = por %p80, %p81
      %p83 = scmp.ne.s32.totalorder %s74, %s75
      %p84 = scmp.eq.s32.totalorder %s22, 0
      %p85 = por %p83, %p84
      %p86 = scmp.ne.s32.totalorder %s74, %s75
      %p87 = scmp.eq.s32.totalorder %s23, 1
      %p88 = por %p86, %p87
      %p90 = scmp.ne.s32.totalorder %s75, %s89
      %p91 = scmp.eq.s32.totalorder %s23, 0
      %p92 = por %p90, %p91
      %s94 = sadd.s32 %s93, 1
      %p97 = scmp.eq.s32.totalorder %s17, 1
      %p98 = scmp.ne.s32.totalorder %s93, %s95
      %p99 = scmp.eq.s32.totalorder %s17, 0
      %p100 = por %p98, %p99
      %p101 = scmp.ne.s32.totalorder %s93, %s95
      %p102 = scmp.eq.s32.totalorder %s22, 1
      %p103 = por %p101, %p102
      %p104 = scmp.ne.s32.totalorder %s95, %s96
      %p105 = scmp.eq.s32.totalorder %s22, 0
      %p106 = por %p104, %p105
      %p107 = scmp.ne.s32.totalorder %s95, %s96
      %p108 = scmp.eq.s32.totalorder %s23, 1
      %p109 = por %p107, %p108
      %p111 = scmp.ne.s32.totalorder %s96, %s110
      %p112 = scmp.eq.s32.totalorder %s23, 0
      %p113 = por %p111, %p112
      %s115 = sadd.s32 %s114, 1
      %p118 = scmp.eq.s32.totalorder %s17, 1
      %p119 = scmp.ne.s32.totalorder %s114, %s116
      %p120 = scmp.eq.s32.totalorder %s17, 0
      %p121 = por %p119, %p120
      %p122 = scmp.ne.s32.totalorder %s114, %s116
      %p123 = scmp.eq.s32.totalorder %s22, 1
      %p124 = por %p122, %p123
      %p125 = scmp.ne.s32.totalorder %s116, %s117
      %p126 = scmp.eq.s32.totalorder %s22, 0
      %p127 = por %p125, %p126
      %p128 = scmp.ne.s32.totalorder %s116, %s117
      %p129 = scmp.eq.s32.totalorder %s23, 1
      %p130 = por %p128, %p129
      %p132 = scmp.ne.s32.totalorder %s117, %s131
      %p133 = scmp.eq.s32.totalorder %s23, 0
      %p134 = por %p132, %p133
      %s136 = sadd.s32 %s135, 1
      %p139 = scmp.eq.s32.totalorder %s17, 1
      %p140 = scmp.ne.s32.totalorder %s135, %s137
      %p141 = scmp.eq.s32.totalorder %s17, 0
      %p142 = por %p140, %p141
      %p143 = scmp.ne.s32.totalorder %s135, %s137
      %p144 = scmp.eq.s32.totalorder %s22, 1
      %p145 = por %p143, %p144
      %p146 = scmp.ne.s32.totalorder %s137, %s138
      %p147 = scmp.eq.s32.totalorder %s22, 0
      %p148 = por %p146, %p147
      %p149 = scmp.ne.s32.totalorder %s137, %s138
      %p150 = scmp.eq.s32.totalorder %s23, 1
      %p151 = por %p149, %p150
      %p153 = scmp.ne.s32.totalorder %s138, %s152
      %p154 = scmp.eq.s32.totalorder %s23, 0
      %p155 = por %p153, %p154
      %s157 = sadd.s32 %s156, 1
      %p160 = scmp.eq.s32.totalorder %s17, 1
      %p161 = scmp.ne.s32.totalorder %s156, %s158
      %p162 = scmp.eq.s32.totalorder %s17, 0
      %p163 = por %p161, %p162
      %p164 = scmp.ne.s32.totalorder %s156, %s158
      %p165 = scmp.eq.s32.totalorder %s22, 1
      %p166 = por %p164, %p165
      %p167 = scmp.ne.s32.totalorder %s158, %s159
      %p168 = scmp.eq.s32.totalorder %s22, 0
      %p169 = por %p167, %p168
      %p170 = scmp.ne.s32.totalorder %s158, %s159
      %p171 = scmp.eq.s32.totalorder %s23, 1
      %p172 = por %p170, %p171
      %p174 = scmp.ne.s32.totalorder %s159, %s173
      %p175 = scmp.eq.s32.totalorder %s23, 0
      %p176 = por %p174, %p175
      %s177 = ssub.s32 %s17, %s24
      %p178 = scmp.eq.s32.totalorder %s177, 0
      %s180 = sadd.s32 %s179, 1
      %s181 = scalar_select %p178, %s179, %s180
      %p184 = pneg %p178
      %p185 = scmp.eq.s32.totalorder %s17, 1
      %p186 = por %p184, %p185
      %p187 = scmp.ne.s32.totalorder %s179, %s182
      %p188 = scmp.eq.s32.totalorder %s17, 0
      %p189 = por %p187, %p188
      %p190 = scmp.ne.s32.totalorder %s179, %s182
      %p191 = scmp.eq.s32.totalorder %s22, 1
      %p192 = por %p190, %p191
      %p193 = scmp.ne.s32.totalorder %s182, %s183
      %p194 = scmp.eq.s32.totalorder %s22, 0
      %p195 = por %p193, %p194
      %p196 = scmp.ne.s32.totalorder %s182, %s183
      %p197 = scmp.eq.s32.totalorder %s23, 1
      %p198 = por %p196, %p197
      %p200 = scmp.ne.s32.totalorder %s183, %s199
      %p201 = scmp.eq.s32.totalorder %s23, 0
      %p202 = por %p200, %p201
      %p203 = scmp.le.s32.totalorder 1, %s17
      %p204 = scmp.lt.s32.totalorder %s17, 3
      %p205 = pnand %p203, %p204
      %p206 = pneg %p205
      // Predicated region
      $region9: #{cnn_forward.2} parent=5 // pred_check
        _
      $region10: #{cnn_forward.2} parent=5 // pred_check_branch
        %208 = sbr.rel (%p205) target = $region12
      $region11: #{cnn_forward.2} parent=5 // pred_region
        %s209 = ssub.s32 %s17, 1
        // Predicated region
        $region13: #{cnn_forward.2} parent=11 // pred_check
          %p210 = pneg %p64
        $region14: #{cnn_forward.2} parent=11 // pred_check_branch
          %212 = sbr.rel (%p210) target = $region16
        $region15: #{cnn_forward.2} parent=11 // pred_region
          %s214 = ssub.s32 3072, 3072
          %215 = vsyncadd [#allocation3], %s214
          %s216 = sshll.u32 [#allocation2], 4
          %s217 = int_to_ptr.vmem [resolvable:$true] %s216
          %222 = dma.hbm_to_vmem [thread:$0]  %s1, 3072, %s217, [#allocation3], 256, 256, 16
        $region16: #{cnn_forward.2} parent=11 // pred_fallthru
          _
        // Predicated region
        $region17: #{cnn_forward.2} parent=11 // pred_check
          %p223 = pneg %p85
        $region18: #{cnn_forward.2} parent=11 // pred_check_branch
          %225 = sbr.rel (%p223) target = $region20
        $region19: #{cnn_forward.2} parent=11 // pred_region
          %s227 = ssub.s32 3072, 3072
          %228 = vsyncadd [#allocation5], %s227
          %s229 = sshll.u32 [#allocation4], 4
          %s230 = int_to_ptr.vmem [resolvable:$true] %s229
          %235 = dma.hbm_to_vmem [thread:$0]  %s2, 3072, %s230, [#allocation5], 256, 256, 16
        $region20: #{cnn_forward.2} parent=11 // pred_fallthru
          _
        // Predicated region
        $region21: #{cnn_forward.2} parent=11 // pred_check
          %p236 = pneg %p106
        $region22: #{cnn_forward.2} parent=11 // pred_check_branch
          %238 = sbr.rel (%p236) target = $region24
        $region23: #{cnn_forward.2} parent=11 // pred_region
          %s240 = ssub.s32 64, 64
          %241 = vsyncadd [#allocation5], %s240
          %s243 = sshll.u32 [#allocation6], 4
          %s244 = int_to_ptr.vmem [resolvable:$true] %s243
          %246 = dma.hbm_to_vmem [thread:$0]  %s3, 64, %s244, [#allocation5]
        $region24: #{cnn_forward.2} parent=11 // pred_fallthru
          _
        // Predicated region
        $region25: #{cnn_forward.2} parent=11 // pred_check
          %p247 = pneg %p127
        $region26: #{cnn_forward.2} parent=11 // pred_check_branch
          %249 = sbr.rel (%p247) target = $region28
        $region27: #{cnn_forward.2} parent=11 // pred_region
          %s251 = ssub.s32 32256, 32256
          %252 = vsyncadd [#allocation8], %s251
          %s253 = sshll.u32 [#allocation7], 4
          %s254 = int_to_ptr.vmem [resolvable:$true] %s253
          %259 = dma.hbm_to_vmem [thread:$0]  %s4, 32256, %s254, [#allocation8], 192, 192, 12
        $region28: #{cnn_forward.2} parent=11 // pred_fallthru
          _
        // Predicated region
        $region29: #{cnn_forward.2} parent=11 // pred_check
          %p260 = pneg %p148
        $region30: #{cnn_forward.2} parent=11 // pred_check_branch
          %262 = sbr.rel (%p260) target = $region32
        $region31: #{cnn_forward.2} parent=11 // pred_region
          %s264 = ssub.s32 32256, 32256
          %265 = vsyncadd [#allocation8], %s264
          %s266 = sshll.u32 [#allocation9], 4
          %s267 = int_to_ptr.vmem [resolvable:$true] %s266
          %272 = dma.hbm_to_vmem [thread:$0]  %s5, 32256, %s267, [#allocation8], 192, 192, 12
        $region32: #{cnn_forward.2} parent=11 // pred_fallthru
          _
        // Predicated region
        $region33: #{cnn_forward.2} parent=11 // pred_check
          %p273 = pneg %p169
        $region34: #{cnn_forward.2} parent=11 // pred_check_branch
          %275 = sbr.rel (%p273) target = $region36
        $region35: #{cnn_forward.2} parent=11 // pred_region
          %s277 = ssub.s32 48, 48
          %278 = vsyncadd [#allocation11], %s277
          %s280 = sshll.u32 [#allocation10], 4
          %s281 = int_to_ptr.vmem [resolvable:$true] %s280
          %283 = dma.hbm_to_vmem [thread:$0]  %s6, 48, %s281, [#allocation11]
        $region36: #{cnn_forward.2} parent=11 // pred_fallthru
          _
      $region12: #{cnn_forward.2} parent=5 // pred_fallthru
        _
      %p284 = scmp.lt.s32.totalorder %s17, 2
      // Predicated region
      $region37: #{cnn_forward.2} parent=5 // pred_check
        %p285 = pneg %p284
      $region38: #{cnn_forward.2} parent=5 // pred_check_branch
        %287 = sbr.rel (%p285) target = $region40
      $region39: #{cnn_forward.2} parent=5 // pred_region
        // Predicated region
        $region41: #{cnn_forward.2} parent=39 // pred_check
          %p288 = pneg %p37
        $region42: #{cnn_forward.2} parent=39 // pred_check_branch
          %290 = sbr.rel (%p288) target = $region44
        $region43: #{cnn_forward.2} parent=39 // pred_region
          %p291 = scmp.lt.s32.totalorder %s17, 1
          %s292 = scalar_select %p291, %s17, 1
          %s293 = smul.addr %s292, 4
          %s294 = smul.addr %s293, 4
          %s295 = scalar_lea.vmem %s0, %s294
        $region44: #{cnn_forward.2} parent=39 // pred_fallthru
          _
      $region40: #{cnn_forward.2} parent=5 // pred_fallthru
        _
      %p296 = scmp.le.s32.totalorder 1, %s17
      %p297 = scmp.lt.s32.totalorder %s17, 3
      %p298 = pnand %p296, %p297
      %p299 = pneg %p298
      // Predicated region
      $region45: #{cnn_forward.2} parent=5 // pred_check
        _
      $region46: #{cnn_forward.2} parent=5 // pred_check_branch
        %301 = sbr.rel (%p298) target = $region48
      $region47: #{cnn_forward.2} parent=5 // pred_region
        %s302 = ssub.s32 %s17, 1
        // Predicated region
        $region49: #{cnn_forward.2} parent=47 // pred_check
          %p303 = pneg %p64
        $region50: #{cnn_forward.2} parent=47 // pred_check_branch
          %305 = sbr.rel (%p303) target = $region52
        $region51: #{cnn_forward.2} parent=47 // pred_region
          %306 = dma.done [#allocation3], 3072
        $region52: #{cnn_forward.2} parent=47 // pred_fallthru
          _
        // Predicated region
        $region53: #{cnn_forward.2} parent=47 // pred_check
          %p307 = pneg %p85
        $region54: #{cnn_forward.2} parent=47 // pred_check_branch
          %309 = sbr.rel (%p307) target = $region56
        $region55: #{cnn_forward.2} parent=47 // pred_region
          %310 = dma.done [#allocation5], 3072
        $region56: #{cnn_forward.2} parent=47 // pred_fallthru
          _
        // Predicated region
        $region57: #{cnn_forward.2} parent=47 // pred_check
          %p311 = pneg %p106
        $region58: #{cnn_forward.2} parent=47 // pred_check_branch
          %313 = sbr.rel (%p311) target = $region60
        $region59: #{cnn_forward.2} parent=47 // pred_region
          %314 = dma.done [#allocation5], 64
        $region60: #{cnn_forward.2} parent=47 // pred_fallthru
          _
        // Predicated region
        $region61: #{cnn_forward.2} parent=47 // pred_check
          %p315 = pneg %p127
        $region62: #{cnn_forward.2} parent=47 // pred_check_branch
          %317 = sbr.rel (%p315) target = $region64
        $region63: #{cnn_forward.2} parent=47 // pred_region
          %318 = dma.done [#allocation8], 32256
        $region64: #{cnn_forward.2} parent=47 // pred_fallthru
          _
        // Predicated region
        $region65: #{cnn_forward.2} parent=47 // pred_check
          %p319 = pneg %p148
        $region66: #{cnn_forward.2} parent=47 // pred_check_branch
          %321 = sbr.rel (%p319) target = $region68
        $region67: #{cnn_forward.2} parent=47 // pred_region
          %322 = dma.done [#allocation8], 32256
        $region68: #{cnn_forward.2} parent=47 // pred_fallthru
          _
        // Predicated region
        $region69: #{cnn_forward.2} parent=47 // pred_check
          %p323 = pneg %p169
        $region70: #{cnn_forward.2} parent=47 // pred_check_branch
          %325 = sbr.rel (%p323) target = $region72
        $region71: #{cnn_forward.2} parent=47 // pred_region
          %326 = dma.done [#allocation11], 48
        $region72: #{cnn_forward.2} parent=47 // pred_fallthru
          _
        %p327 = scmp.lt.s32.totalorder %s22, 1
        %s328 = scalar_select %p327, %s22, 1
        %s329 = smul.addr %s328, 4
        %s330 = smul.addr %s329, 4
        %s331 = scalar_lea.vmem %s0, %s330
        %p332 = pneg %p43
        %p333 = pneg %p40
        %p334 = pneg %p64
        %p335 = pneg %p61
        %p336 = pneg %p85
        %p337 = pneg %p82
        %p338 = pneg %p106
        %p339 = pneg %p103
        %p340 = pneg %p127
        %p341 = pneg %p124
        %p342 = pneg %p148
        %p343 = pneg %p145
        %p344 = pneg %p169
        %p345 = pneg %p166
        %p346 = pneg %p195
        %p347 = pneg %p192
        %p348 = scmp.lt.s32.totalorder %s22, 1
        %s349 = scalar_select %p348, %s22, 1
        %s350 = smul.addr %s349, 3
        %s351 = smul.addr %s350, 4
        %s352 = scalar_lea.vmem %s7, %s351
        %p353 = scmp.lt.s32.totalorder %s22, 1
        %s354 = scalar_select %p353, %s22, 1
        %s355 = smul.addr %s354, 4
        %s356 = smul.addr %s355, 4
        %s357 = scalar_lea.vmem %s0, %s356
        %p358 = scmp.lt.s32.totalorder %s22, 1
        %s359 = scalar_select %p358, %s22, 1
        %s360 = smul.addr %s359, 3
        %s361 = smul.addr %s360, 4
        %s362 = scalar_lea.vmem %s7, %s361
        %v364 = vld [vmem:[%s357] sm:$0xf]
        %v365 = vld [vmem:[%s357 + $0x4] sm:$0xf]
        %v366 = vld [vmem:[%s357 + $0x8] sm:$0xf]
        %v367 = vld [vmem:[%s357 + $0xc] sm:$0x7]
        %v368 = vld [vmem:[#allocation2] sm:$0xff]
        %v369 = vld [vmem:[#allocation2 + $0x8] sm:$0xff]
        %v370 = vld [vmem:[#allocation2 + $0x10] sm:$0xff]
        %v371 = vld [vmem:[#allocation2 + $0x18] sm:$0xff]
        %v372 = vld [vmem:[#allocation2 + $0x20] sm:$0xff]
        %v373 = vld [vmem:[#allocation2 + $0x28] sm:$0xff]
        %v374 = vld [vmem:[#allocation2 + $0x30] sm:$0x77]
        %v375 = vld [vmem:[#allocation2 + $0x38] sm:$0x77]
        %v376 = vld [vmem:[#allocation4] sm:$0xff]
        %v377 = vld [vmem:[#allocation4 + $0x8] sm:$0xff]
        %v378 = vld [vmem:[#allocation4 + $0x10] sm:$0xff]
        %v379 = vld [vmem:[#allocation4 + $0x18] sm:$0xff]
        %v380 = vld [vmem:[#allocation4 + $0x20] sm:$0xff]
        %v381 = vld [vmem:[#allocation4 + $0x28] sm:$0xff]
        %v382 = vld [vmem:[#allocation4 + $0x30] sm:$0x77]
        %v383 = vld [vmem:[#allocation4 + $0x38] sm:$0x77]
        %s384 = scalar_lea.vmem [#allocation2], 64
        %v385 = vld [vmem:[%s384] sm:$0xff]
        %v386 = vld [vmem:[%s384 + $0x8] sm:$0xff]
        %v387 = vld [vmem:[%s384 + $0x10] sm:$0xff]
        %v388 = vld [vmem:[%s384 + $0x18] sm:$0xff]
        %v389 = vld [vmem:[%s384 + $0x20] sm:$0xff]
        %v390 = vld [vmem:[%s384 + $0x28] sm:$0xff]
        %v391 = vld [vmem:[%s384 + $0x30] sm:$0x77]
        %v392 = vld [vmem:[%s384 + $0x38] sm:$0x77]
        %v397 = vunpack.c.l.b16 %v364
        %v398 = vunpack.c.l.b16 %v365
        %v399 = vunpack.c.l.b16 %v366
        %v400 = vunpack.c.l.b16 %v367
        %v401 = vpack.c.b16 %v398, %v397
        %v402 = vpack.c.b16 %v400, %v399
        %vm403 = vsmask.f32 7424
        %v405 = vshrl.u32 %v401, 16
        %v407 = vshll.u32 %v401, 16
        %v409 = vrot.slane %v407, 1
        %v410 = vor.u32 %v405, %v409
        %v412 = vshll.u32 %v402, 16
        %v414 = vrot.slane %v412, 1
        %v415 = vsel %vm403, %v410, %v414
        %v416 = vshrl.u32 %v402, 16
        %v418 = vor.u32 %v416, %v414
        %v427 = vunpack.c.l.b16 %v385
        %v428 = vunpack.c.h.b16 %v385
        %v429 = vunpack.c.l.b16 %v386
        %v430 = vunpack.c.h.b16 %v386
        %v431 = vunpack.c.l.b16 %v387
        %v432 = vunpack.c.h.b16 %v387
        %v433 = vunpack.c.l.b16 %v388
        %v434 = vunpack.c.h.b16 %v388
        %v435 = vunpack.c.l.b16 %v389
        %v436 = vunpack.c.h.b16 %v389
        %v437 = vunpack.c.l.b16 %v390
        %v438 = vunpack.c.h.b16 %v390
        %v439 = vunpack.c.l.b16 %v391
        %v440 = vunpack.c.h.b16 %v391
        %v441 = vunpack.c.l.b16 %v392
        %v442 = vunpack.c.h.b16 %v392
        %v443 = vpack.c.b16 %v431, %v427
        %v444 = vpack.c.b16 %v432, %v428
        %v445 = vpack.c.b16 %v433, %v429
        %v446 = vpack.c.b16 %v434, %v430
        %v447 = vpack.c.b16 %v439, %v435
        %v448 = vpack.c.b16 %v440, %v436
        %v449 = vpack.c.b16 %v441, %v437
        %v450 = vpack.c.b16 %v442, %v438
        %vm455 = vcmask 244736
        %v457 = vsel %vm455, %v415, 0
        %v460 = vsel %vm455, %v418, 0
        %vm462 = vcmask 1046528
        %v464 = vsel %vm462, %v447, 0
        %v467 = vsel %vm462, %v448, 0
        %v470 = vsel %vm462, %v449, 0
        %v473 = vsel %vm462, %v450, 0
        %475 = vmatprep.subr.bf16.mxu0 %v444
        %476 = vmatpush1.bf16.msra.mxu0 %v443
        %477 = vmatprep.subr.bf16.mxu0 %v467
        %478 = vmatpush1.bf16.msra.mxu0 %v464
        %479 = vmatprep.subr.bf16.mxu0 0
        %480 = vmatpush1.bf16.msra.mxu0 0
        %481 = vmatprep.subr.bf16.mxu0 0
        %482 = vmatpush1.bf16.msra.mxu0 0
        %483 = vmatprep.subr.bf16.mxu0 0
        %484 = vmatpush1.bf16.msra.mxu0 0
        %485 = vmatprep.subr.bf16.mxu0 0
        %486 = vmatpush1.bf16.msra.mxu0 0
        %487 = vmatprep.subr.bf16.mxu0 0
        %488 = vmatpush1.bf16.msra.mxu0 0
        %489 = vmatprep.subr.bf16.mxu0 0
        %490 = vmatpush1.bf16.msra.mxu0 0
        %491 = vmatprep.subr.bf16.mxu0 0
        %492 = vmatpush1.bf16.msra.mxu0 0
        %493 = vmatprep.subr.bf16.mxu0 0
        %494 = vmatpush1.bf16.msra.mxu0 0
        %495 = vmatprep.subr.bf16.mxu0 0
        %496 = vmatpush1.bf16.msra.mxu0 0
        %497 = vmatprep.subr.bf16.mxu0 0
        %498 = vmatpush1.bf16.msra.mxu0 0
        %499 = vmatprep.subr.bf16.mxu0 0
        %500 = vmatpush1.bf16.msra.mxu0 0
        %501 = vmatprep.subr.bf16.mxu0 0
        %502 = vmatpush1.bf16.msra.mxu0 0
        %503 = vmatprep.subr.bf16.mxu0 0
        %504 = vmatpush1.bf16.msra.mxu0 0
        %505 = vmatprep.subr.bf16.mxu0 0
        %506 = vmatpush1.bf16.msra.mxu0 0
        %507 = vmatprep.mubr.bf16.mxu0 0
        %508 = vmatmul.mubr.bf16.gmra.mrb[0].mxu0 %v457
        %v509 = vpop.f32.mrb[0].mxu0
        %v510 = vadd.f32 0.0, %v509
        %v511 = vpop.f32.mrb[0].mxu0
        %v512 = vadd.f32 0.0, %v511
        %v513 = vpop.f32.mrb[0].mxu0
        %v514 = vadd.f32 0.0, %v513
        %v515 = vpop.f32.mrb[0].mxu0
        %v516 = vadd.f32 0.0, %v515
        %517 = vmatprep.mubr.bf16.mxu0 0
        %518 = vmatmul.mubr.bf16.gmra.mrb[0].mxu0 %v460
        %v519 = vpop.f32.mrb[0].mxu0
        %v520 = vadd.f32 0.0, %v519
        %v521 = vpop.f32.mrb[0].mxu0
        %v522 = vadd.f32 0.0, %v521
        %v523 = vpop.f32.mrb[0].mxu0
        %v524 = vadd.f32 0.0, %v523
        %v525 = vpop.f32.mrb[0].mxu0
        %v526 = vadd.f32 0.0, %v525
        %527 = vdwg.mxu0
        %528 = vmatprep.subr.bf16.mxu0 %v446
        %529 = vmatpush1.bf16.msra.mxu0 %v445
        %530 = vmatprep.subr.bf16.mxu0 %v473
        %531 = vmatpush1.bf16.msra.mxu0 %v470
        %532 = vmatprep.subr.bf16.mxu0 0
        %533 = vmatpush1.bf16.msra.mxu0 0
        %534 = vmatprep.subr.bf16.mxu0 0
        %535 = vmatpush1.bf16.msra.mxu0 0
        %536 = vmatprep.subr.bf16.mxu0 0
        %537 = vmatpush1.bf16.msra.mxu0 0
        %538 = vmatprep.subr.bf16.mxu0 0
        %539 = vmatpush1.bf16.msra.mxu0 0
        %540 = vmatprep.subr.bf16.mxu0 0
        %541 = vmatpush1.bf16.msra.mxu0 0
        %542 = vmatprep.subr.bf16.mxu0 0
        %543 = vmatpush1.bf16.msra.mxu0 0
        %544 = vmatprep.subr.bf16.mxu0 0
        %545 = vmatpush1.bf16.msra.mxu0 0
        %546 = vmatprep.subr.bf16.mxu0 0
        %547 = vmatpush1.bf16.msra.mxu0 0
        %548 = vmatprep.subr.bf16.mxu0 0
        %549 = vmatpush1.bf16.msra.mxu0 0
        %550 = vmatprep.subr.bf16.mxu0 0
        %551 = vmatpush1.bf16.msra.mxu0 0
        %552 = vmatprep.subr.bf16.mxu0 0
        %553 = vmatpush1.bf16.msra.mxu0 0
        %554 = vmatprep.subr.bf16.mxu0 0
        %555 = vmatpush1.bf16.msra.mxu0 0
        %556 = vmatprep.subr.bf16.mxu0 0
        %557 = vmatpush1.bf16.msra.mxu0 0
        %558 = vmatprep.subr.bf16.mxu0 0
        %559 = vmatpush1.bf16.msra.mxu0 0
        %560 = vmatprep.mubr.bf16.mxu0 0
        %561 = vmatmul.mubr.bf16.gmra.mrb[0].mxu0 %v457
        %v562 = vpop.f32.mrb[0].mxu0
        %v563 = vadd.f32 0.0, %v562
        %v564 = vpop.f32.mrb[0].mxu0
        %v565 = vadd.f32 0.0, %v564
        %v566 = vpop.f32.mrb[0].mxu0
        %v567 = vadd.f32 0.0, %v566
        %v568 = vpop.f32.mrb[0].mxu0
        %v569 = vadd.f32 0.0, %v568
        %570 = vmatprep.mubr.bf16.mxu0 0
        %571 = vmatmul.mubr.bf16.gmra.mrb[0].mxu0 %v460
        %v572 = vpop.f32.mrb[0].mxu0
        %v573 = vadd.f32 0.0, %v572
        %v574 = vpop.f32.mrb[0].mxu0
        %v575 = vadd.f32 0.0, %v574
        %v576 = vpop.f32.mrb[0].mxu0
        %v577 = vadd.f32 0.0, %v576
        %v578 = vpop.f32.mrb[0].mxu0
        %v579 = vadd.f32 0.0, %v578
        %580 = vdwg.mxu0
        %s581 = scalar_lea.vmem [#allocation4], 64
        %v582 = vld [vmem:[%s581] sm:$0xff]
        %v583 = vld [vmem:[%s581 + $0x8] sm:$0xff]
        %v584 = vld [vmem:[%s581 + $0x10] sm:$0xff]
        %v585 = vld [vmem:[%s581 + $0x18] sm:$0xff]
        %v586 = vld [vmem:[%s581 + $0x20] sm:$0xff]
        %v587 = vld [vmem:[%s581 + $0x28] sm:$0xff]
        %v588 = vld [vmem:[%s581 + $0x30] sm:$0x77]
        %v589 = vld [vmem:[%s581 + $0x38] sm:$0x77]
        %v598 = vunpack.c.l.b16 %v582
        %v599 = vunpack.c.h.b16 %v582
        %v600 = vunpack.c.l.b16 %v583
        %v601 = vunpack.c.h.b16 %v583
        %v602 = vunpack.c.l.b16 %v584
        %v603 = vunpack.c.h.b16 %v584
        %v604 = vunpack.c.l.b16 %v585
        %v605 = vunpack.c.h.b16 %v585
        %v606 = vunpack.c.l.b16 %v586
        %v607 = vunpack.c.h.b16 %v586
        %v608 = vunpack.c.l.b16 %v587
        %v609 = vunpack.c.h.b16 %v587
        %v610 = vunpack.c.l.b16 %v588
        %v611 = vunpack.c.h.b16 %v588
        %v612 = vunpack.c.l.b16 %v589
        %v613 = vunpack.c.h.b16 %v589
        %v614 = vpack.c.b16 %v602, %v598
        %v615 = vpack.c.b16 %v603, %v599
        %v616 = vpack.c.b16 %v604, %v600
        %v617 = vpack.c.b16 %v605, %v601
        %v618 = vpack.c.b16 %v610, %v606
        %v619 = vpack.c.b16 %v611, %v607
        %v620 = vpack.c.b16 %v612, %v608
        %v621 = vpack.c.b16 %v613, %v609
        %v627 = vsel %vm462, %v618, 0
        %v630 = vsel %vm462, %v619, 0
        %v633 = vsel %vm462, %v620, 0
        %v636 = vsel %vm462, %v621, 0
        %638 = vmatprep.subr.bf16.mxu0 %v615
        %639 = vmatpush1.bf16.msra.mxu0 %v614
        %640 = vmatprep.subr.bf16.mxu0 %v630
        %641 = vmatpush1.bf16.msra.mxu0 %v627
        %642 = vmatprep.subr.bf16.mxu0 0
        %643 = vmatpush1.bf16.msra.mxu0 0
        %644 = vmatprep.subr.bf16.mxu0 0
        %645 = vmatpush1.bf16.msra.mxu0 0
        %646 = vmatprep.subr.bf16.mxu0 0
        %647 = vmatpush1.bf16.msra.mxu0 0
        %648 = vmatprep.subr.bf16.mxu0 0
        %649 = vmatpush1.bf16.msra.mxu0 0
        %650 = vmatprep.subr.bf16.mxu0 0
        %651 = vmatpush1.bf16.msra.mxu0 0
        %652 = vmatprep.subr.bf16.mxu0 0
        %653 = vmatpush1.bf16.msra.mxu0 0
        %654 = vmatprep.subr.bf16.mxu0 0
        %655 = vmatpush1.bf16.msra.mxu0 0
        %656 = vmatprep.subr.bf16.mxu0 0
        %657 = vmatpush1.bf16.msra.mxu0 0
        %658 = vmatprep.subr.bf16.mxu0 0
        %659 = vmatpush1.bf16.msra.mxu0 0
        %660 = vmatprep.subr.bf16.mxu0 0
        %661 = vmatpush1.bf16.msra.mxu0 0
        %662 = vmatprep.subr.bf16.mxu0 0
        %663 = vmatpush1.bf16.msra.mxu0 0
        %664 = vmatprep.subr.bf16.mxu0 0
        %665 = vmatpush1.bf16.msra.mxu0 0
        %666 = vmatprep.subr.bf16.mxu0 0
        %667 = vmatpush1.bf16.msra.mxu0 0
        %668 = vmatprep.subr.bf16.mxu0 0
        %669 = vmatpush1.bf16.msra.mxu0 0
        %670 = vmatprep.mubr.bf16.mxu0 0
        %671 = vmatmul.mubr.bf16.gmra.mrb[0].mxu0 %v457
        %v672 = vpop.f32.mrb[0].mxu0
        %v673 = vadd.f32 0.0, %v672
        %v674 = vpop.f32.mrb[0].mxu0
        %v675 = vadd.f32 0.0, %v674
        %v676 = vpop.f32.mrb[0].mxu0
        %v677 = vadd.f32 0.0, %v676
        %v678 = vpop.f32.mrb[0].mxu0
        %v679 = vadd.f32 0.0, %v678
        %680 = vmatprep.mubr.bf16.mxu0 0
        %681 = vmatmul.mubr.bf16.gmra.mrb[0].mxu0 %v460
        %v682 = vpop.f32.mrb[0].mxu0
        %v683 = vadd.f32 0.0, %v682
        %v684 = vpop.f32.mrb[0].mxu0
        %v685 = vadd.f32 0.0, %v684
        %v686 = vpop.f32.mrb[0].mxu0
        %v687 = vadd.f32 0.0, %v686
        %v688 = vpop.f32.mrb[0].mxu0
        %v689 = vadd.f32 0.0, %v688
        %690 = vdwg.mxu0
        %691 = vmatprep.subr.bf16.mxu0 %v617
        %692 = vmatpush1.bf16.msra.mxu0 %v616
        %693 = vmatprep.subr.bf16.mxu0 %v636
        %694 = vmatpush1.bf16.msra.mxu0 %v633
        %695 = vmatprep.subr.bf16.mxu0 0
        %696 = vmatpush1.bf16.msra.mxu0 0
        %697 = vmatprep.subr.bf16.mxu0 0
        %698 = vmatpush1.bf16.msra.mxu0 0
        %699 = vmatprep.subr.bf16.mxu0 0
        %700 = vmatpush1.bf16.msra.mxu0 0
        %701 = vmatprep.subr.bf16.mxu0 0
        %702 = vmatpush1.bf16.msra.mxu0 0
        %703 = vmatprep.subr.bf16.mxu0 0
        %704 = vmatpush1.bf16.msra.mxu0 0
        %705 = vmatprep.subr.bf16.mxu0 0
        %706 = vmatpush1.bf16.msra.mxu0 0
        %707 = vmatprep.subr.bf16.mxu0 0
        %708 = vmatpush1.bf16.msra.mxu0 0
        %709 = vmatprep.subr.bf16.mxu0 0
        %710 = vmatpush1.bf16.msra.mxu0 0
        %711 = vmatprep.subr.bf16.mxu0 0
        %712 = vmatpush1.bf16.msra.mxu0 0
        %713 = vmatprep.subr.bf16.mxu0 0
        %714 = vmatpush1.bf16.msra.mxu0 0
        %715 = vmatprep.subr.bf16.mxu0 0
        %716 = vmatpush1.bf16.msra.mxu0 0
        %717 = vmatprep.subr.bf16.mxu0 0
        %718 = vmatpush1.bf16.msra.mxu0 0
        %719 = vmatprep.subr.bf16.mxu0 0
        %720 = vmatpush1.bf16.msra.mxu0 0
        %721 = vmatprep.subr.bf16.mxu0 0
        %722 = vmatpush1.bf16.msra.mxu0 0
        %723 = vmatprep.mubr.bf16.mxu0 0
        %724 = vmatmul.mubr.bf16.gmra.mrb[0].mxu0 %v457
        %v725 = vpop.f32.mrb[0].mxu0
        %v726 = vadd.f32 0.0, %v725
        %v727 = vpop.f32.mrb[0].mxu0
        %v728 = vadd.f32 0.0, %v727
        %v729 = vpop.f32.mrb[0].mxu0
        %v730 = vadd.f32 0.0, %v729
        %v731 = vpop.f32.mrb[0].mxu0
        %v732 = vadd.f32 0.0, %v731
        %733 = vmatprep.mubr.bf16.mxu0 0
        %734 = vmatmul.mubr.bf16.gmra.mrb[0].mxu0 %v460
        %v735 = vpop.f32.mrb[0].mxu0
        %v736 = vadd.f32 0.0, %v735
        %v737 = vpop.f32.mrb[0].mxu0
        %v738 = vadd.f32 0.0, %v737
        %v739 = vpop.f32.mrb[0].mxu0
        %v740 = vadd.f32 0.0, %v739
        %v741 = vpop.f32.mrb[0].mxu0
        %v742 = vadd.f32 0.0, %v741
        %743 = vdwg.mxu0
        %v752 = vunpack.c.l.b16 %v368
        %v753 = vunpack.c.h.b16 %v368
        %v754 = vunpack.c.l.b16 %v369
        %v755 = vunpack.c.h.b16 %v369
        %v756 = vunpack.c.l.b16 %v370
        %v757 = vunpack.c.h.b16 %v370
        %v758 = vunpack.c.l.b16 %v371
        %v759 = vunpack.c.h.b16 %v371
        %v760 = vunpack.c.l.b16 %v372
        %v761 = vunpack.c.h.b16 %v372
        %v762 = vunpack.c.l.b16 %v373
        %v763 = vunpack.c.h.b16 %v373
        %v764 = vunpack.c.l.b16 %v374
        %v765 = vunpack.c.h.b16 %v374
        %v766 = vunpack.c.l.b16 %v375
        %v767 = vunpack.c.h.b16 %v375
        %v768 = vpack.c.b16 %v756, %v752
        %v769 = vpack.c.b16 %v757, %v753
        %v770 = vpack.c.b16 %v758, %v754
        %v771 = vpack.c.b16 %v759, %v755
        %v772 = vpack.c.b16 %v764, %v760
        %v773 = vpack.c.b16 %v765, %v761
        %v774 = vpack.c.b16 %v766, %v762
        %v775 = vpack.c.b16 %v767, %v763
        %v780 = vsel %vm455, %v401, 0
        %v782 = vsel %vm455, %v402, 0
        %v785 = vsel %vm462, %v772, 0
        %v788 = vsel %vm462, %v773, 0
        %v791 = vsel %vm462, %v774, 0
        %v794 = vsel %vm462, %v775, 0
        %796 = vmatprep.subr.bf16.mxu0 %v769
        %797 = vmatpush1.bf16.msra.mxu0 %v768
        %798 = vmatprep.subr.bf16.mxu0 %v788
        %799 = vmatpush1.bf16.msra.mxu0 %v785
        %800 = vmatprep.subr.bf16.mxu0 0
        %801 = vmatpush1.bf16.msra.mxu0 0
        %802 = vmatprep.subr.bf16.mxu0 0
        %803 = vmatpush1.bf16.msra.mxu0 0
        %804 = vmatprep.subr.bf16.mxu0 0
        %805 = vmatpush1.bf16.msra.mxu0 0
        %806 = vmatprep.subr.bf16.mxu0 0
        %807 = vmatpush1.bf16.msra.mxu0 0
        %808 = vmatprep.subr.bf16.mxu0 0
        %809 = vmatpush1.bf16.msra.mxu0 0
        %810 = vmatprep.subr.bf16.mxu0 0
        %811 = vmatpush1.bf16.msra.mxu0 0
        %812 = vmatprep.subr.bf16.mxu0 0
        %813 = vmatpush1.bf16.msra.mxu0 0
        %814 = vmatprep.subr.bf16.mxu0 0
        %815 = vmatpush1.bf16.msra.mxu0 0
        %816 = vmatprep.subr.bf16.mxu0 0
        %817 = vmatpush1.bf16.msra.mxu0 0
        %818 = vmatprep.subr.bf16.mxu0 0
        %819 = vmatpush1.bf16.msra.mxu0 0
        %820 = vmatprep.subr.bf16.mxu0 0
        %821 = vmatpush1.bf16.msra.mxu0 0
        %822 = vmatprep.subr.bf16.mxu0 0
        %823 = vmatpush1.bf16.msra.mxu0 0
        %824 = vmatprep.subr.bf16.mxu0 0
        %825 = vmatpush1.bf16.msra.mxu0 0
        %826 = vmatprep.subr.bf16.mxu0 0
        %827 = vmatpush1.bf16.msra.mxu0 0
        %828 = vmatprep.mubr.bf16.mxu0 0
        %829 = vmatmul.mubr.bf16.gmra.mrb[0].mxu0 %v780
        %v830 = vpop.f32.mrb[0].mxu0
        %v831 = vadd.f32 %v510, %v830
        %v832 = vpop.f32.mrb[0].mxu0
        %v833 = vadd.f32 %v512, %v832
        %v834 = vpop.f32.mrb[0].mxu0
        %v835 = vadd.f32 %v514, %v834
        %v836 = vpop.f32.mrb[0].mxu0
        %v837 = vadd.f32 %v516, %v836
        %838 = vmatprep.mubr.bf16.mxu0 0
        %839 = vmatmul.mubr.bf16.gmra.mrb[0].mxu0 %v782
        %v840 = vpop.f32.mrb[0].mxu0
        %v841 = vadd.f32 %v520, %v840
        %v842 = vpop.f32.mrb[0].mxu0
        %v843 = vadd.f32 %v522, %v842
        %v844 = vpop.f32.mrb[0].mxu0
        %v845 = vadd.f32 %v524, %v844
        %v846 = vpop.f32.mrb[0].mxu0
        %v847 = vadd.f32 %v526, %v846
        %848 = vdwg.mxu0
        %849 = vmatprep.subr.bf16.mxu0 %v771
        %850 = vmatpush1.bf16.msra.mxu0 %v770
        %851 = vmatprep.subr.bf16.mxu0 %v794
        %852 = vmatpush1.bf16.msra.mxu0 %v791
        %853 = vmatprep.subr.bf16.mxu0 0
        %854 = vmatpush1.bf16.msra.mxu0 0
        %855 = vmatprep.subr.bf16.mxu0 0
        %856 = vmatpush1.bf16.msra.mxu0 0
        %857 = vmatprep.subr.bf16.mxu0 0
        %858 = vmatpush1.bf16.msra.mxu0 0
        %859 = vmatprep.subr.bf16.mxu0 0
        %860 = vmatpush1.bf16.msra.mxu0 0
        %861 = vmatprep.subr.bf16.mxu0 0
        %862 = vmatpush1.bf16.msra.mxu0 0
        %863 = vmatprep.subr.bf16.mxu0 0
        %864 = vmatpush1.bf16.msra.mxu0 0
        %865 = vmatprep.subr.bf16.mxu0 0
        %866 = vmatpush1.bf16.msra.mxu0 0
        %867 = vmatprep.subr.bf16.mxu0 0
        %868 = vmatpush1.bf16.msra.mxu0 0
        %869 = vmatprep.subr.bf16.mxu0 0
        %870 = vmatpush1.bf16.msra.mxu0 0
        %871 = vmatprep.subr.bf16.mxu0 0
        %872 = vmatpush1.bf16.msra.mxu0 0
        %873 = vmatprep.subr.bf16.mxu0 0
        %874 = vmatpush1.bf16.msra.mxu0 0
        %875 = vmatprep.subr.bf16.mxu0 0
        %876 = vmatpush1.bf16.msra.mxu0 0
        %877 = vmatprep.subr.bf16.mxu0 0
        %878 = vmatpush1.bf16.msra.mxu0 0
        %879 = vmatprep.subr.bf16.mxu0 0
        %880 = vmatpush1.bf16.msra.mxu0 0
        %881 = vmatprep.mubr.bf16.mxu0 0
        %882 = vmatmul.mubr.bf16.gmra.mrb[0].mxu0 %v780
        %v883 = vpop.f32.mrb[0].mxu0
        %v884 = vadd.f32 %v563, %v883
        %v885 = vpop.f32.mrb[0].mxu0
        %v886 = vadd.f32 %v565, %v885
        %v887 = vpop.f32.mrb[0].mxu0
        %v888 = vadd.f32 %v567, %v887
        %v889 = vpop.f32.mrb[0].mxu0
        %v890 = vadd.f32 %v569, %v889
        %891 = vmatprep.mubr.bf16.mxu0 0
        %892 = vmatmul.mubr.bf16.gmra.mrb[0].mxu0 %v782
        %v893 = vpop.f32.mrb[0].mxu0
        %v894 = vadd.f32 %v573, %v893
        %v895 = vpop.f32.mrb[0].mxu0
        %v896 = vadd.f32 %v575, %v895
        %v897 = vpop.f32.mrb[0].mxu0
        %v898 = vadd.f32 %v577, %v897
        %v899 = vpop.f32.mrb[0].mxu0
        %v900 = vadd.f32 %v579, %v899
        %901 = vdwg.mxu0
        %v910 = vunpack.c.l.b16 %v376
        %v911 = vunpack.c.h.b16 %v376
        %v912 = vunpack.c.l.b16 %v377
        %v913 = vunpack.c.h.b16 %v377
        %v914 = vunpack.c.l.b16 %v378
        %v915 = vunpack.c.h.b16 %v378
        %v916 = vunpack.c.l.b16 %v379
        %v917 = vunpack.c.h.b16 %v379
        %v918 = vunpack.c.l.b16 %v380
        %v919 = vunpack.c.h.b16 %v380
        %v920 = vunpack.c.l.b16 %v381
        %v921 = vunpack.c.h.b16 %v381
        %v922 = vunpack.c.l.b16 %v382
        %v923 = vunpack.c.h.b16 %v382
        %v924 = vunpack.c.l.b16 %v383
        %v925 = vunpack.c.h.b16 %v383
        %v926 = vpack.c.b16 %v914, %v910
        %v927 = vpack.c.b16 %v915, %v911
        %v928 = vpack.c.b16 %v916, %v912
        %v929 = vpack.c.b16 %v917, %v913
        %v930 = vpack.c.b16 %v922, %v918
        %v931 = vpack.c.b16 %v923, %v919
        %v932 = vpack.c.b16 %v924, %v920
        %v933 = vpack.c.b16 %v925, %v921
        %v939 = vsel %vm462, %v930, 0
        %v942 = vsel %vm462, %v931, 0
        %v945 = vsel %vm462, %v932, 0
        %v948 = vsel %vm462, %v933, 0
        %950 = vmatprep.subr.bf16.mxu0 %v927
        %951 = vmatpush1.bf16.msra.mxu0 %v926
        %952 = vmatprep.subr.bf16.mxu0 %v942
        %953 = vmatpush1.bf16.msra.mxu0 %v939
        %954 = vmatprep.subr.bf16.mxu0 0
        %955 = vmatpush1.bf16.msra.mxu0 0
        %956 = vmatprep.subr.bf16.mxu0 0
        %957 = vmatpush1.bf16.msra.mxu0 0
        %958 = vmatprep.subr.bf16.mxu0 0
        %959 = vmatpush1.bf16.msra.mxu0 0
        %960 = vmatprep.subr.bf16.mxu0 0
        %961 = vmatpush1.bf16.msra.mxu0 0
        %962 = vmatprep.subr.bf16.mxu0 0
        %963 = vmatpush1.bf16.msra.mxu0 0
        %964 = vmatprep.subr.bf16.mxu0 0
        %965 = vmatpush1.bf16.msra.mxu0 0
        %966 = vmatprep.subr.bf16.mxu0 0
        %967 = vmatpush1.bf16.msra.mxu0 0
        %968 = vmatprep.subr.bf16.mxu0 0
        %969 = vmatpush1.bf16.msra.mxu0 0
        %970 = vmatprep.subr.bf16.mxu0 0
        %971 = vmatpush1.bf16.msra.mxu0 0
        %972 = vmatprep.subr.bf16.mxu0 0
        %973 = vmatpush1.bf16.msra.mxu0 0
        %974 = vmatprep.subr.bf16.mxu0 0
        %975 = vmatpush1.bf16.msra.mxu0 0
        %976 = vmatprep.subr.bf16.mxu0 0
        %977 = vmatpush1.bf16.msra.mxu0 0
        %978 = vmatprep.subr.bf16.mxu0 0
        %979 = vmatpush1.bf16.msra.mxu0 0
        %980 = vmatprep.subr.bf16.mxu0 0
        %981 = vmatpush1.bf16.msra.mxu0 0
        %982 = vmatprep.mubr.bf16.mxu0 0
        %983 = vmatmul.mubr.bf16.gmra.mrb[0].mxu0 %v780
        %v984 = vpop.f32.mrb[0].mxu0
        %v985 = vadd.f32 %v673, %v984
        %v986 = vpop.f32.mrb[0].mxu0
        %v987 = vadd.f32 %v675, %v986
        %v988 = vpop.f32.mrb[0].mxu0
        %v989 = vadd.f32 %v677, %v988
        %v990 = vpop.f32.mrb[0].mxu0
        %v991 = vadd.f32 %v679, %v990
        %992 = vmatprep.mubr.bf16.mxu0 0
        %993 = vmatmul.mubr.bf16.gmra.mrb[0].mxu0 %v782
        %v994 = vpop.f32.mrb[0].mxu0
        %v995 = vadd.f32 %v683, %v994
        %v996 = vpop.f32.mrb[0].mxu0
        %v997 = vadd.f32 %v685, %v996
        %v998 = vpop.f32.mrb[0].mxu0
        %v999 = vadd.f32 %v687, %v998
        %v1000 = vpop.f32.mrb[0].mxu0
        %v1001 = vadd.f32 %v689, %v1000
        %1002 = vdwg.mxu0
        %1003 = vmatprep.subr.bf16.mxu0 %v929
        %1004 = vmatpush1.bf16.msra.mxu0 %v928
        %1005 = vmatprep.subr.bf16.mxu0 %v948
        %1006 = vmatpush1.bf16.msra.mxu0 %v945
        %1007 = vmatprep.subr.bf16.mxu0 0
        %1008 = vmatpush1.bf16.msra.mxu0 0
        %1009 = vmatprep.subr.bf16.mxu0 0
        %1010 = vmatpush1.bf16.msra.mxu0 0
        %1011 = vmatprep.subr.bf16.mxu0 0
        %1012 = vmatpush1.bf16.msra.mxu0 0
        %1013 = vmatprep.subr.bf16.mxu0 0
        %1014 = vmatpush1.bf16.msra.mxu0 0
        %1015 = vmatprep.subr.bf16.mxu0 0
        %1016 = vmatpush1.bf16.msra.mxu0 0
        %1017 = vmatprep.subr.bf16.mxu0 0
        %1018 = vmatpush1.bf16.msra.mxu0 0
        %1019 = vmatprep.subr.bf16.mxu0 0
        %1020 = vmatpush1.bf16.msra.mxu0 0
        %1021 = vmatprep.subr.bf16.mxu0 0
        %1022 = vmatpush1.bf16.msra.mxu0 0
        %1023 = vmatprep.subr.bf16.mxu0 0
        %1024 = vmatpush1.bf16.msra.mxu0 0
        %1025 = vmatprep.subr.bf16.mxu0 0
        %1026 = vmatpush1.bf16.msra.mxu0 0
        %1027 = vmatprep.subr.bf16.mxu0 0
        %1028 = vmatpush1.bf16.msra.mxu0 0
        %1029 = vmatprep.subr.bf16.mxu0 0
        %1030 = vmatpush1.bf16.msra.mxu0 0
        %1031 = vmatprep.subr.bf16.mxu0 0
        %1032 = vmatpush1.bf16.msra.mxu0 0
        %1033 = vmatprep.subr.bf16.mxu0 0
        %1034 = vmatpush1.bf16.msra.mxu0 0
        %1035 = vmatprep.mubr.bf16.mxu0 0
        %1036 = vmatmul.mubr.bf16.gmra.mrb[0].mxu0 %v780
        %v1037 = vpop.f32.mrb[0].mxu0
        %v1038 = vadd.f32 %v726, %v1037
        %v1039 = vpop.f32.mrb[0].mxu0
        %v1040 = vadd.f32 %v728, %v1039
        %v1041 = vpop.f32.mrb[0].mxu0
        %v1042 = vadd.f32 %v730, %v1041
        %v1043 = vpop.f32.mrb[0].mxu0
        %v1044 = vadd.f32 %v732, %v1043
        %1045 = vmatprep.mubr.bf16.mxu0 0
        %1046 = vmatmul.mubr.bf16.gmra.mrb[0].mxu0 %v782
        %v1047 = vpop.f32.mrb[0].mxu0
        %v1048 = vadd.f32 %v736, %v1047
        %v1049 = vpop.f32.mrb[0].mxu0
        %v1050 = vadd.f32 %v738, %v1049
        %v1051 = vpop.f32.mrb[0].mxu0
        %v1052 = vadd.f32 %v740, %v1051
        %v1053 = vpop.f32.mrb[0].mxu0
        %v1054 = vadd.f32 %v742, %v1053
        %1055 = vdwg.mxu0
        %s1056 = scalar_lea.vmem [#allocation2], 128
        %v1057 = vld [vmem:[%s1056] sm:$0xff]
        %v1058 = vld [vmem:[%s1056 + $0x8] sm:$0xff]
        %v1059 = vld [vmem:[%s1056 + $0x10] sm:$0xff]
        %v1060 = vld [vmem:[%s1056 + $0x18] sm:$0xff]
        %v1061 = vld [vmem:[%s1056 + $0x20] sm:$0xff]
        %v1062 = vld [vmem:[%s1056 + $0x28] sm:$0xff]
        %v1063 = vld [vmem:[%s1056 + $0x30] sm:$0x77]
        %v1064 = vld [vmem:[%s1056 + $0x38] sm:$0x77]
        %vm1065 = vcmask 1046528
        %v1066 = vrot.slane %v401, 1
        %v1067 = vrot.slane %v402, 1
        %v1068 = vsel %vm1065, %v1066, %v1067
        %v1077 = vunpack.c.l.b16 %v1057
        %v1078 = vunpack.c.h.b16 %v1057
        %v1079 = vunpack.c.l.b16 %v1058
        %v1080 = vunpack.c.h.b16 %v1058
        %v1081 = vunpack.c.l.b16 %v1059
        %v1082 = vunpack.c.h.b16 %v1059
        %v1083 = vunpack.c.l.b16 %v1060
        %v1084 = vunpack.c.h.b16 %v1060
        %v1085 = vunpack.c.l.b16 %v1061
        %v1086 = vunpack.c.h.b16 %v1061
        %v1087 = vunpack.c.l.b16 %v1062
        %v1088 = vunpack.c.h.b16 %v1062
        %v1089 = vunpack.c.l.b16 %v1063
        %v1090 = vunpack.c.h.b16 %v1063
        %v1091 = vunpack.c.l.b16 %v1064
        %v1092 = vunpack.c.h.b16 %v1064
        %v1093 = vpack.c.b16 %v1081, %v1077
        %v1094 = vpack.c.b16 %v1082, %v1078
        %v1095 = vpack.c.b16 %v1083, %v1079
        %v1096 = vpack.c.b16 %v1084, %v1080
        %v1097 = vpack.c.b16 %v1089, %v1085
        %v1098 = vpack.c.b16 %v1090, %v1086
        %v1099 = vpack.c.b16 %v1091, %v1087
        %v1100 = vpack.c.b16 %v1092, %v1088
        %v1106 = vsel %vm455, %v1068, 0
        %v1109 = vsel %vm455, %v1067, 0
        %v1112 = vsel %vm462, %v1097, 0
        %v1115 = vsel %vm462, %v1098, 0
        %v1118 = vsel %vm462, %v1099, 0
        %v1121 = vsel %vm462, %v1100, 0
        %1123 = vmatprep.subr.bf16.mxu0 %v1094
        %1124 = vmatpush1.bf16.msra.mxu0 %v1093
        %1125 = vmatprep.subr.bf16.mxu0 %v1115
        %1126 = vmatpush1.bf16.msra.mxu0 %v1112
        %1127 = vmatprep.subr.bf16.mxu0 0
        %1128 = vmatpush1.bf16.msra.mxu0 0
        %1129 = vmatprep.subr.bf16.mxu0 0
        %1130 = vmatpush1.bf16.msra.mxu0 0
        %1131 = vmatprep.subr.bf16.mxu0 0
        %1132 = vmatpush1.bf16.msra.mxu0 0
        %1133 = vmatprep.subr.bf16.mxu0 0
        %1134 = vmatpush1.bf16.msra.mxu0 0
        %1135 = vmatprep.subr.bf16.mxu0 0
        %1136 = vmatpush1.bf16.msra.mxu0 0
        %1137 = vmatprep.subr.bf16.mxu0 0
        %1138 = vmatpush1.bf16.msra.mxu0 0
        %1139 = vmatprep.subr.bf16.mxu0 0
        %1140 = vmatpush1.bf16.msra.mxu0 0
        %1141 = vmatprep.subr.bf16.mxu0 0
        %1142 = vmatpush1.bf16.msra.mxu0 0
        %1143 = vmatprep.subr.bf16.mxu0 0
        %1144 = vmatpush1.bf16.msra.mxu0 0
        %1145 = vmatprep.subr.bf16.mxu0 0
        %1146 = vmatpush1.bf16.msra.mxu0 0
        %1147 = vmatprep.subr.bf16.mxu0 0
        %1148 = vmatpush1.bf16.msra.mxu0 0
        %1149 = vmatprep.subr.bf16.mxu0 0
        %1150 = vmatpush1.bf16.msra.mxu0 0
        %1151 = vmatprep.subr.bf16.mxu0 0
        %1152 = vmatpush1.bf16.msra.mxu0 0
        %1153 = vmatprep.subr.bf16.mxu0 0
        %1154 = vmatpush1.bf16.msra.mxu0 0
        %1155 = vmatprep.mubr.bf16.mxu0 0
        %1156 = vmatmul.mubr.bf16.gmra.mrb[0].mxu0 %v1106
        %v1157 = vpop.f32.mrb[0].mxu0
        %v1158 = vadd.f32 0.0, %v1157
        %v1159 = vpop.f32.mrb[0].mxu0
        %v1160 = vadd.f32 0.0, %v1159
        %v1161 = vpop.f32.mrb[0].mxu0
        %v1162 = vadd.f32 0.0, %v1161
        %v1163 = vpop.f32.mrb[0].mxu0
        %v1164 = vadd.f32 0.0, %v1163
        %1165 = vmatprep.mubr.bf16.mxu0 0
        %1166 = vmatmul.mubr.bf16.gmra.mrb[0].mxu0 %v1109
        %v1167 = vpop.f32.mrb[0].mxu0
        %v1168 = vadd.f32 0.0, %v1167
        %v1169 = vpop.f32.mrb[0].mxu0
        %v1170 = vadd.f32 0.0, %v1169
        %v1171 = vpop.f32.mrb[0].mxu0
        %v1172 = vadd.f32 0.0, %v1171
        %v1173 = vpop.f32.mrb[0].mxu0
        %v1174 = vadd.f32 0.0, %v1173
        %1175 = vdwg.mxu0
        %1176 = vmatprep.subr.bf16.mxu0 %v1096
        %1177 = vmatpush1.bf16.msra.mxu0 %v1095
        %1178 = vmatprep.subr.bf16.mxu0 %v1121
        %1179 = vmatpush1.bf16.msra.mxu0 %v1118
        %1180 = vmatprep.subr.bf16.mxu0 0
        %1181 = vmatpush1.bf16.msra.mxu0 0
        %1182 = vmatprep.subr.bf16.mxu0 0
        %1183 = vmatpush1.bf16.msra.mxu0 0
        %1184 = vmatprep.subr.bf16.mxu0 0
        %1185 = vmatpush1.bf16.msra.mxu0 0
        %1186 = vmatprep.subr.bf16.mxu0 0
        %1187 = vmatpush1.bf16.msra.mxu0 0
        %1188 = vmatprep.subr.bf16.mxu0 0
        %1189 = vmatpush1.bf16.msra.mxu0 0
        %1190 = vmatprep.subr.bf16.mxu0 0
        %1191 = vmatpush1.bf16.msra.mxu0 0
        %1192 = vmatprep.subr.bf16.mxu0 0
        %1193 = vmatpush1.bf16.msra.mxu0 0
        %1194 = vmatprep.subr.bf16.mxu0 0
        %1195 = vmatpush1.bf16.msra.mxu0 0
        %1196 = vmatprep.subr.bf16.mxu0 0
        %1197 = vmatpush1.bf16.msra.mxu0 0
        %1198 = vmatprep.subr.bf16.mxu0 0
        %1199 = vmatpush1.bf16.msra.mxu0 0
        %1200 = vmatprep.subr.bf16.mxu0 0
        %1201 = vmatpush1.bf16.msra.mxu0 0
        %1202 = vmatprep.subr.bf16.mxu0 0
        %1203 = vmatpush1.bf16.msra.mxu0 0
        %1204 = vmatprep.subr.bf16.mxu0 0
        %1205 = vmatpush1.bf16.msra.mxu0 0
        %1206 = vmatprep.subr.bf16.mxu0 0
        %1207 = vmatpush1.bf16.msra.mxu0 0
        %1208 = vmatprep.mubr.bf16.mxu0 0
        %1209 = vmatmul.mubr.bf16.gmra.mrb[0].mxu0 %v1106
        %v1210 = vpop.f32.mrb[0].mxu0
        %v1211 = vadd.f32 0.0, %v1210
        %v1212 = vpop.f32.mrb[0].mxu0
        %v1213 = vadd.f32 0.0, %v1212
        %v1214 = vpop.f32.mrb[0].mxu0
        %v1215 = vadd.f32 0.0, %v1214
        %v1216 = vpop.f32.mrb[0].mxu0
        %v1217 = vadd.f32 0.0, %v1216
        %1218 = vmatprep.mubr.bf16.mxu0 0
        %1219 = vmatmul.mubr.bf16.gmra.mrb[0].mxu0 %v1109
        %v1220 = vpop.f32.mrb[0].mxu0
        %v1221 = vadd.f32 0.0, %v1220
        %v1222 = vpop.f32.mrb[0].mxu0
        %v1223 = vadd.f32 0.0, %v1222
        %v1224 = vpop.f32.mrb[0].mxu0
        %v1225 = vadd.f32 0.0, %v1224
        %v1226 = vpop.f32.mrb[0].mxu0
        %v1227 = vadd.f32 0.0, %v1226
        %1228 = vdwg.mxu0
        %s1229 = scalar_lea.vmem [#allocation4], 128
        %v1230 = vld [vmem:[%s1229] sm:$0xff]
        %v1231 = vld [vmem:[%s1229 + $0x8] sm:$0xff]
        %v1232 = vld [vmem:[%s1229 + $0x10] sm:$0xff]
        %v1233 = vld [vmem:[%s1229 + $0x18] sm:$0xff]
        %v1234 = vld [vmem:[%s1229 + $0x20] sm:$0xff]
        %v1235 = vld [vmem:[%s1229 + $0x28] sm:$0xff]
        %v1236 = vld [vmem:[%s1229 + $0x30] sm:$0x77]
        %v1237 = vld [vmem:[%s1229 + $0x38] sm:$0x77]
        %v1246 = vunpack.c.l.b16 %v1230
        %v1247 = vunpack.c.h.b16 %v1230
        %v1248 = vunpack.c.l.b16 %v1231
        %v1249 = vunpack.c.h.b16 %v1231
        %v1250 = vunpack.c.l.b16 %v1232
        %v1251 = vunpack.c.h.b16 %v1232
        %v1252 = vunpack.c.l.b16 %v1233
        %v1253 = vunpack.c.h.b16 %v1233
        %v1254 = vunpack.c.l.b16 %v1234
        %v1255 = vunpack.c.h.b16 %v1234
        %v1256 = vunpack.c.l.b16 %v1235
        %v1257 = vunpack.c.h.b16 %v1235
        %v1258 = vunpack.c.l.b16 %v1236
        %v1259 = vunpack.c.h.b16 %v1236
        %v1260 = vunpack.c.l.b16 %v1237
        %v1261 = vunpack.c.h.b16 %v1237
        %v1262 = vpack.c.b16 %v1250, %v1246
        %v1263 = vpack.c.b16 %v1251, %v1247
        %v1264 = vpack.c.b16 %v1252, %v1248
        %v1265 = vpack.c.b16 %v1253, %v1249
        %v1266 = vpack.c.b16 %v1258, %v1254
        %v1267 = vpack.c.b16 %v1259, %v1255
        %v1268 = vpack.c.b16 %v1260, %v1256
        %v1269 = vpack.c.b16 %v1261, %v1257
        %v1275 = vsel %vm462, %v1266, 0
        %v1278 = vsel %vm462, %v1267, 0
        %v1281 = vsel %vm462, %v1268, 0
        %v1284 = vsel %vm462, %v1269, 0
        %1286 = vmatprep.subr.bf16.mxu0 %v1263
        %1287 = vmatpush1.bf16.msra.mxu0 %v1262
        %1288 = vmatprep.subr.bf16.mxu0 %v1278
        %1289 = vmatpush1.bf16.msra.mxu0 %v1275
        %1290 = vmatprep.subr.bf16.mxu0 0
        %1291 = vmatpush1.bf16.msra.mxu0 0
        %1292 = vmatprep.subr.bf16.mxu0 0
        %1293 = vmatpush1.bf16.msra.mxu0 0
        %1294 = vmatprep.subr.bf16.mxu0 0
        %1295 = vmatpush1.bf16.msra.mxu0 0
        %1296 = vmatprep.subr.bf16.mxu0 0
        %1297 = vmatpush1.bf16.msra.mxu0 0
        %1298 = vmatprep.subr.bf16.mxu0 0
        %1299 = vmatpush1.bf16.msra.mxu0 0
        %1300 = vmatprep.subr.bf16.mxu0 0
        %1301 = vmatpush1.bf16.msra.mxu0 0
        %1302 = vmatprep.subr.bf16.mxu0 0
        %1303 = vmatpush1.bf16.msra.mxu0 0
        %1304 = vmatprep.subr.bf16.mxu0 0
        %1305 = vmatpush1.bf16.msra.mxu0 0
        %1306 = vmatprep.subr.bf16.mxu0 0
        %1307 = vmatpush1.bf16.msra.mxu0 0
        %1308 = vmatprep.subr.bf16.mxu0 0
        %1309 = vmatpush1.bf16.msra.mxu0 0
        %1310 = vmatprep.subr.bf16.mxu0 0
        %1311 = vmatpush1.bf16.msra.mxu0 0
        %1312 = vmatprep.subr.bf16.mxu0 0
        %1313 = vmatpush1.bf16.msra.mxu0 0
        %1314 = vmatprep.subr.bf16.mxu0 0
        %1315 = vmatpush1.bf16.msra.mxu0 0
        %1316 = vmatprep.subr.bf16.mxu0 0
        %1317 = vmatpush1.bf16.msra.mxu0 0
        %1318 = vmatprep.mubr.bf16.mxu0 0
        %1319 = vmatmul.mubr.bf16.gmra.mrb[0].mxu0 %v1106
        %v1320 = vpop.f32.mrb[0].mxu0
        %v1321 = vadd.f32 0.0, %v1320
        %v1322 = vpop.f32.mrb[0].mxu0
        %v1323 = vadd.f32 0.0, %v1322
        %v1324 = vpop.f32.mrb[0].mxu0
        %v1325 = vadd.f32 0.0, %v1324
        %v1326 = vpop.f32.mrb[0].mxu0
        %v1327 = vadd.f32 0.0, %v1326
        %1328 = vmatprep.mubr.bf16.mxu0 0
        %1329 = vmatmul.mubr.bf16.gmra.mrb[0].mxu0 %v1109
        %v1330 = vpop.f32.mrb[0].mxu0
        %v1331 = vadd.f32 0.0, %v1330
        %v1332 = vpop.f32.mrb[0].mxu0
        %v1333 = vadd.f32 0.0, %v1332
        %v1334 = vpop.f32.mrb[0].mxu0
        %v1335 = vadd.f32 0.0, %v1334
        %v1336 = vpop.f32.mrb[0].mxu0
        %v1337 = vadd.f32 0.0, %v1336
        %1338 = vdwg.mxu0
        %1339 = vmatprep.subr.bf16.mxu0 %v1265
        %1340 = vmatpush1.bf16.msra.mxu0 %v1264
        %1341 = vmatprep.subr.bf16.mxu0 %v1284
        %1342 = vmatpush1.bf16.msra.mxu0 %v1281
        %1343 = vmatprep.subr.bf16.mxu0 0
        %1344 = vmatpush1.bf16.msra.mxu0 0
        %1345 = vmatprep.subr.bf16.mxu0 0
        %1346 = vmatpush1.bf16.msra.mxu0 0
        %1347 = vmatprep.subr.bf16.mxu0 0
        %1348 = vmatpush1.bf16.msra.mxu0 0
        %1349 = vmatprep.subr.bf16.mxu0 0
        %1350 = vmatpush1.bf16.msra.mxu0 0
        %1351 = vmatprep.subr.bf16.mxu0 0
        %1352 = vmatpush1.bf16.msra.mxu0 0
        %1353 = vmatprep.subr.bf16.mxu0 0
        %1354 = vmatpush1.bf16.msra.mxu0 0
        %1355 = vmatprep.subr.bf16.mxu0 0
        %1356 = vmatpush1.bf16.msra.mxu0 0
        %1357 = vmatprep.subr.bf16.mxu0 0
        %1358 = vmatpush1.bf16.msra.mxu0 0
        %1359 = vmatprep.subr.bf16.mxu0 0
        %1360 = vmatpush1.bf16.msra.mxu0 0
        %1361 = vmatprep.subr.bf16.mxu0 0
        %1362 = vmatpush1.bf16.msra.mxu0 0
        %1363 = vmatprep.subr.bf16.mxu0 0
        %1364 = vmatpush1.bf16.msra.mxu0 0
        %1365 = vmatprep.subr.bf16.mxu0 0
        %1366 = vmatpush1.bf16.msra.mxu0 0
        %1367 = vmatprep.subr.bf16.mxu0 0
        %1368 = vmatpush1.bf16.msra.mxu0 0
        %1369 = vmatprep.subr.bf16.mxu0 0
        %1370 = vmatpush1.bf16.msra.mxu0 0
        %1371 = vmatprep.mubr.bf16.mxu0 0
        %1372 = vmatmul.mubr.bf16.gmra.mrb[0].mxu0 %v1106
        %v1373 = vpop.f32.mrb[0].mxu0
        %v1374 = vadd.f32 0.0, %v1373
        %v1375 = vpop.f32.mrb[0].mxu0
        %v1376 = vadd.f32 0.0, %v1375
        %v1377 = vpop.f32.mrb[0].mxu0
        %v1378 = vadd.f32 0.0, %v1377
        %v1379 = vpop.f32.mrb[0].mxu0
        %v1380 = vadd.f32 0.0, %v1379
        %1381 = vmatprep.mubr.bf16.mxu0 0
        %1382 = vmatmul.mubr.bf16.gmra.mrb[0].mxu0 %v1109
        %v1383 = vpop.f32.mrb[0].mxu0
        %v1384 = vadd.f32 0.0, %v1383
        %v1385 = vpop.f32.mrb[0].mxu0
        %v1386 = vadd.f32 0.0, %v1385
        %v1387 = vpop.f32.mrb[0].mxu0
        %v1388 = vadd.f32 0.0, %v1387
        %v1389 = vpop.f32.mrb[0].mxu0
        %v1390 = vadd.f32 0.0, %v1389
        %1391 = vdwg.mxu0
        %v1392 = vadd.f32 %v831, %v1158
        %v1393 = vadd.f32 %v833, %v1160
        %v1394 = vadd.f32 %v884, %v1211
        %v1395 = vadd.f32 %v886, %v1213
        %v1396 = vadd.f32 %v835, %v1162
        %v1397 = vadd.f32 %v837, %v1164
        %v1398 = vadd.f32 %v888, %v1215
        %v1399 = vadd.f32 %v890, %v1217
        %v1400 = vadd.f32 %v841, %v1168
        %v1401 = vadd.f32 %v843, %v1170
        %v1402 = vadd.f32 %v894, %v1221
        %v1403 = vadd.f32 %v896, %v1223
        %v1404 = vadd.f32 %v845, %v1172
        %v1405 = vadd.f32 %v847, %v1174
        %v1406 = vadd.f32 %v898, %v1225
        %v1407 = vadd.f32 %v900, %v1227
        %v1408 = vadd.f32 %v985, %v1321
        %v1409 = vadd.f32 %v987, %v1323
        %v1410 = vadd.f32 %v1038, %v1374
        %v1411 = vadd.f32 %v1040, %v1376
        %v1412 = vadd.f32 %v989, %v1325
        %v1413 = vadd.f32 %v991, %v1327
        %v1414 = vadd.f32 %v1042, %v1378
        %v1415 = vadd.f32 %v1044, %v1380
        %v1416 = vadd.f32 %v995, %v1331
        %v1417 = vadd.f32 %v997, %v1333
        %v1418 = vadd.f32 %v1048, %v1384
        %v1419 = vadd.f32 %v1050, %v1386
        %v1420 = vadd.f32 %v999, %v1335
        %v1421 = vadd.f32 %v1001, %v1337
        %v1422 = vadd.f32 %v1052, %v1388
        %v1423 = vadd.f32 %v1054, %v1390
        %v1424 = vmax.f32 %v1392, %v1408
        %v1425 = vmax.f32 %v1393, %v1409
        %v1426 = vmax.f32 %v1394, %v1410
        %v1427 = vmax.f32 %v1395, %v1411
        %v1428 = vmax.f32 %v1396, %v1412
        %v1429 = vmax.f32 %v1397, %v1413
        %v1430 = vmax.f32 %v1398, %v1414
        %v1431 = vmax.f32 %v1399, %v1415
        %v1432 = vmax.f32 %v1400, %v1416
        %v1433 = vmax.f32 %v1401, %v1417
        %v1434 = vmax.f32 %v1402, %v1418
        %v1435 = vmax.f32 %v1403, %v1419
        %v1436 = vmax.f32 %v1404, %v1420
        %v1437 = vmax.f32 %v1405, %v1421
        %v1438 = vmax.f32 %v1406, %v1422
        %v1439 = vmax.f32 %v1407, %v1423
        %v1456 = vcombine.low %v1424, %v1425
        %v1457 = vcombine.high %v1424, %v1425
        %v1458 = vcombine.low %v1426, %v1427
        %v1459 = vcombine.high %v1426, %v1427
        %v1461 = vunpack.c.l.s4 1983009808
        %v1462 = vunpack.c.0.s8 %v1461
        %v1463 = vlaneseq
        %v1464 = vshrl.u32 %v1463, 7
        %v1465 = vsub.s32 %v1462, %v1464
        %v1466 = vrot.slane %v1456, %v1465
        %v1468 = vunpack.c.l.s4 1983009808
        %v1469 = vunpack.c.0.s8 %v1468
        %v1470 = vlaneseq
        %v1471 = vshrl.u32 %v1470, 7
        %v1472 = vsub.s32 %v1469, %v1471
        %v1473 = vrot.slane %v1457, %v1472
        %v1475 = vunpack.c.l.s4 1983009808
        %v1476 = vunpack.c.0.s8 %v1475
        %v1477 = vlaneseq
        %v1478 = vshrl.u32 %v1477, 7
        %v1479 = vsub.s32 %v1476, %v1478
        %v1480 = vrot.slane %v1458, %v1479
        %v1482 = vunpack.c.l.s4 1983009808
        %v1483 = vunpack.c.0.s8 %v1482
        %v1484 = vlaneseq
        %v1485 = vshrl.u32 %v1484, 7
        %v1486 = vsub.s32 %v1483, %v1485
        %v1487 = vrot.slane %v1459, %v1486
        %v1488 = vcombine.low %v1466, %v1480
        %v1489 = vcombine.high %v1466, %v1480
        %v1490 = vcombine.low %v1473, %v1487
        %v1491 = vcombine.high %v1473, %v1487
        %v1492 = vcombine.low %v1428, %v1429
        %v1493 = vcombine.high %v1428, %v1429
        %v1494 = vcombine.low %v1430, %v1431
        %v1495 = vcombine.high %v1430, %v1431
        %v1497 = vunpack.c.l.s4 1983009808
        %v1498 = vunpack.c.0.s8 %v1497
        %v1499 = vlaneseq
        %v1500 = vshrl.u32 %v1499, 7
        %v1501 = vsub.s32 %v1498, %v1500
        %v1502 = vrot.slane %v1492, %v1501
        %v1504 = vunpack.c.l.s4 1983009808
        %v1505 = vunpack.c.0.s8 %v1504
        %v1506 = vlaneseq
        %v1507 = vshrl.u32 %v1506, 7
        %v1508 = vsub.s32 %v1505, %v1507
        %v1509 = vrot.slane %v1493, %v1508
        %v1511 = vunpack.c.l.s4 1983009808
        %v1512 = vunpack.c.0.s8 %v1511
        %v1513 = vlaneseq
        %v1514 = vshrl.u32 %v1513, 7
        %v1515 = vsub.s32 %v1512, %v1514
        %v1516 = vrot.slane %v1494, %v1515
        %v1518 = vunpack.c.l.s4 1983009808
        %v1519 = vunpack.c.0.s8 %v1518
        %v1520 = vlaneseq
        %v1521 = vshrl.u32 %v1520, 7
        %v1522 = vsub.s32 %v1519, %v1521
        %v1523 = vrot.slane %v1495, %v1522
        %v1524 = vcombine.low %v1502, %v1516
        %v1525 = vcombine.high %v1502, %v1516
        %v1526 = vcombine.low %v1509, %v1523
        %v1527 = vcombine.high %v1509, %v1523
        %v1528 = vcombine.low %v1432, %v1433
        %v1529 = vcombine.high %v1432, %v1433
        %v1530 = vcombine.low %v1434, %v1435
        %v1531 = vcombine.high %v1434, %v1435
        %v1533 = vunpack.c.l.s4 1983009808
        %v1534 = vunpack.c.0.s8 %v1533
        %v1535 = vlaneseq
        %v1536 = vshrl.u32 %v1535, 7
        %v1537 = vsub.s32 %v1534, %v1536
        %v1538 = vrot.slane %v1528, %v1537
        %v1540 = vunpack.c.l.s4 1983009808
        %v1541 = vunpack.c.0.s8 %v1540
        %v1542 = vlaneseq
        %v1543 = vshrl.u32 %v1542, 7
        %v1544 = vsub.s32 %v1541, %v1543
        %v1545 = vrot.slane %v1529, %v1544
        %v1547 = vunpack.c.l.s4 1983009808
        %v1548 = vunpack.c.0.s8 %v1547
        %v1549 = vlaneseq
        %v1550 = vshrl.u32 %v1549, 7
        %v1551 = vsub.s32 %v1548, %v1550
        %v1552 = vrot.slane %v1530, %v1551
        %v1554 = vunpack.c.l.s4 1983009808
        %v1555 = vunpack.c.0.s8 %v1554
        %v1556 = vlaneseq
        %v1557 = vshrl.u32 %v1556, 7
        %v1558 = vsub.s32 %v1555, %v1557
        %v1559 = vrot.slane %v1531, %v1558
        %v1560 = vcombine.low %v1538, %v1552
        %v1561 = vcombine.high %v1538, %v1552
        %v1562 = vcombine.low %v1545, %v1559
        %v1563 = vcombine.high %v1545, %v1559
        %v1564 = vcombine.low %v1436, %v1437
        %v1565 = vcombine.low %v1438, %v1439
        %v1567 = vunpack.c.l.s4 1983009808
        %v1568 = vunpack.c.0.s8 %v1567
        %v1569 = vlaneseq
        %v1570 = vshrl.u32 %v1569, 7
        %v1571 = vsub.s32 %v1568, %v1570
        %v1572 = vrot.slane %v1564, %v1571
        %v1574 = vunpack.c.l.s4 1983009808
        %v1575 = vunpack.c.0.s8 %v1574
        %v1576 = vlaneseq
        %v1577 = vshrl.u32 %v1576, 7
        %v1578 = vsub.s32 %v1575, %v1577
        %v1579 = vrot.slane %v1565, %v1578
        %v1580 = vcombine.low %v1572, %v1579
        %v1581 = vcombine.high %v1572, %v1579
        %v1596 = vrot.slane %v1488, 7
        %v1597 = vrot.slane %v1596, 2
        %v1598 = vrot.slane %v1489, 7
        %v1599 = vrot.slane %v1598, 2
        %v1600 = vrot.slane %v1490, 7
        %v1601 = vrot.slane %v1600, 2
        %v1602 = vrot.slane %v1491, 7
        %v1603 = vrot.slane %v1602, 2
        %v1604 = vrot.slane %v1524, 7
        %v1605 = vrot.slane %v1604, 2
        %v1606 = vrot.slane %v1525, 7
        %v1607 = vrot.slane %v1606, 2
        %v1608 = vrot.slane %v1526, 7
        %v1609 = vrot.slane %v1608, 2
        %v1610 = vrot.slane %v1527, 7
        %v1611 = vrot.slane %v1610, 2
        %v1612 = vrot.slane %v1560, 7
        %v1613 = vrot.slane %v1612, 2
        %v1614 = vrot.slane %v1561, 7
        %v1615 = vrot.slane %v1614, 2
        %v1616 = vrot.slane %v1562, 7
        %v1617 = vrot.slane %v1616, 2
        %v1618 = vrot.slane %v1563, 7
        %v1619 = vrot.slane %v1618, 2
        %v1620 = vrot.slane %v1580, 7
        %v1621 = vrot.slane %v1620, 2
        %v1622 = vrot.slane %v1581, 7
        %v1623 = vrot.slane %v1622, 2
        %v1638 = vmax.f32 %v1488, %v1597
        %v1639 = vmax.f32 %v1489, %v1599
        %v1640 = vmax.f32 %v1490, %v1601
        %v1641 = vmax.f32 %v1491, %v1603
        %v1642 = vmax.f32 %v1524, %v1605
        %v1643 = vmax.f32 %v1525, %v1607
        %v1644 = vmax.f32 %v1526, %v1609
        %v1645 = vmax.f32 %v1527, %v1611
        %v1646 = vmax.f32 %v1560, %v1613
        %v1647 = vmax.f32 %v1561, %v1615
        %v1648 = vmax.f32 %v1562, %v1617
        %v1649 = vmax.f32 %v1563, %v1619
        %v1650 = vmax.f32 %v1580, %v1621
        %v1651 = vmax.f32 %v1581, %v1623
        %v1652 = vld [vmem:[#allocation6] sm:$0xf]
        %v1654 = vlaneseq
        %v1655 = vshrl.u32 %v1654, 7
        %v1656 = vsub.s32 0, %v1655
        %v1657 = vrot.slane %v1652, %v1656
        %v1658 = vlaneseq
        %v1659 = vshrl.u32 %v1658, 7
        %v1660 = vsub.s32 1, %v1659
        %v1661 = vrot.slane %v1652, %v1660
        %v1662 = vlaneseq
        %v1663 = vshrl.u32 %v1662, 7
        %v1664 = vsub.s32 2, %v1663
        %v1665 = vrot.slane %v1652, %v1664
        %v1666 = vlaneseq
        %v1667 = vshrl.u32 %v1666, 7
        %v1668 = vsub.s32 3, %v1667
        %v1669 = vrot.slane %v1652, %v1668
        %v1670 = vcombine.low %v1657, %v1661
        %v1671 = vcombine.high %v1657, %v1661
        %v1672 = vcombine.low %v1665, %v1669
        %v1673 = vcombine.high %v1665, %v1669
        %v1675 = vunpack.c.l.s4 1983009808
        %v1676 = vunpack.c.0.s8 %v1675
        %v1677 = vlaneseq
        %v1678 = vshrl.u32 %v1677, 7
        %v1679 = vsub.s32 %v1676, %v1678
        %v1680 = vrot.slane %v1670, %v1679
        %v1682 = vunpack.c.l.s4 1983009808
        %v1683 = vunpack.c.0.s8 %v1682
        %v1684 = vlaneseq
        %v1685 = vshrl.u32 %v1684, 7
        %v1686 = vsub.s32 %v1683, %v1685
        %v1687 = vrot.slane %v1671, %v1686
        %v1689 = vunpack.c.l.s4 1983009808
        %v1690 = vunpack.c.0.s8 %v1689
        %v1691 = vlaneseq
        %v1692 = vshrl.u32 %v1691, 7
        %v1693 = vsub.s32 %v1690, %v1692
        %v1694 = vrot.slane %v1672, %v1693
        %v1696 = vunpack.c.l.s4 1983009808
        %v1697 = vunpack.c.0.s8 %v1696
        %v1698 = vlaneseq
        %v1699 = vshrl.u32 %v1698, 7
        %v1700 = vsub.s32 %v1697, %v1699
        %v1701 = vrot.slane %v1673, %v1700
        %v1702 = vcombine.low %v1680, %v1694
        %v1703 = vcombine.high %v1680, %v1694
        %v1704 = vcombine.low %v1687, %v1701
        %v1705 = vcombine.high %v1687, %v1701
        %v1706 = vrot.slane %v1702, 1
        %v1707 = vrot.slane %v1703, 1
        %v1708 = vrot.slane %v1704, 1
        %v1709 = vrot.slane %v1705, 1
        %v1718 = vadd.f32 %v1638, %v1702
        %v1719 = vadd.f32 %v1639, %v1706
        %v1720 = vadd.f32 %v1640, %v1703
        %v1721 = vadd.f32 %v1641, %v1707
        %v1722 = vadd.f32 %v1642, %v1704
        %v1723 = vadd.f32 %v1643, %v1708
        %v1724 = vadd.f32 %v1644, %v1705
        %v1725 = vadd.f32 %v1645, %v1709
        %v1726 = vadd.f32 %v1646, %v1702
        %v1727 = vadd.f32 %v1647, %v1706
        %v1728 = vadd.f32 %v1648, %v1703
        %v1729 = vadd.f32 %v1649, %v1707
        %v1730 = vadd.f32 %v1650, %v1704
        %v1731 = vadd.f32 %v1651, %v1708
        %v1732 = vmax.f32 %v1718, 0.0
        %v1733 = vmax.f32 %v1719, 0.0
        %v1734 = vmax.f32 %v1720, 0.0
        %v1735 = vmax.f32 %v1721, 0.0
        %v1736 = vmax.f32 %v1722, 0.0
        %v1737 = vmax.f32 %v1723, 0.0
        %v1738 = vmax.f32 %v1724, 0.0
        %v1739 = vmax.f32 %v1725, 0.0
        %v1740 = vmax.f32 %v1726, 0.0
        %v1741 = vmax.f32 %v1727, 0.0
        %v1742 = vmax.f32 %v1728, 0.0
        %v1743 = vmax.f32 %v1729, 0.0
        %v1744 = vmax.f32 %v1730, 0.0
        %v1745 = vmax.f32 %v1731, 0.0
        %v1760 = vlaneseq
        %v1761 = vshrl.u32 %v1760, 7
        %v1762 = vsub.s32 0, %v1761
        %v1763 = vrot.slane %v1732, %v1762
        %v1764 = vlaneseq
        %v1765 = vshrl.u32 %v1764, 7
        %v1766 = vsub.s32 2, %v1765
        %v1767 = vrot.slane %v1732, %v1766
        %v1768 = vlaneseq
        %v1769 = vshrl.u32 %v1768, 7
        %v1770 = vsub.s32 4, %v1769
        %v1771 = vrot.slane %v1732, %v1770
        %v1772 = vlaneseq
        %v1773 = vshrl.u32 %v1772, 7
        %v1774 = vsub.s32 6, %v1773
        %v1775 = vrot.slane %v1732, %v1774
        %v1776 = vlaneseq
        %v1777 = vshrl.u32 %v1776, 7
        %v1778 = vsub.s32 0, %v1777
        %v1779 = vrot.slane %v1733, %v1778
        %v1780 = vlaneseq
        %v1781 = vshrl.u32 %v1780, 7
        %v1782 = vsub.s32 2, %v1781
        %v1783 = vrot.slane %v1733, %v1782
        %v1784 = vlaneseq
        %v1785 = vshrl.u32 %v1784, 7
        %v1786 = vsub.s32 4, %v1785
        %v1787 = vrot.slane %v1733, %v1786
        %v1788 = vlaneseq
        %v1789 = vshrl.u32 %v1788, 7
        %v1790 = vsub.s32 6, %v1789
        %v1791 = vrot.slane %v1733, %v1790
        %v1792 = vlaneseq
        %v1793 = vshrl.u32 %v1792, 7
        %v1794 = vsub.s32 0, %v1793
        %v1795 = vrot.slane %v1734, %v1794
        %v1796 = vlaneseq
        %v1797 = vshrl.u32 %v1796, 7
        %v1798 = vsub.s32 2, %v1797
        %v1799 = vrot.slane %v1734, %v1798
        %v1800 = vlaneseq
        %v1801 = vshrl.u32 %v1800, 7
        %v1802 = vsub.s32 4, %v1801
        %v1803 = vrot.slane %v1734, %v1802
        %v1804 = vlaneseq
        %v1805 = vshrl.u32 %v1804, 7
        %v1806 = vsub.s32 6, %v1805
        %v1807 = vrot.slane %v1734, %v1806
        %v1808 = vlaneseq
        %v1809 = vshrl.u32 %v1808, 7
        %v1810 = vsub.s32 0, %v1809
        %v1811 = vrot.slane %v1735, %v1810
        %v1812 = vlaneseq
        %v1813 = vshrl.u32 %v1812, 7
        %v1814 = vsub.s32 2, %v1813
        %v1815 = vrot.slane %v1735, %v1814
        %v1816 = vlaneseq
        %v1817 = vshrl.u32 %v1816, 7
        %v1818 = vsub.s32 4, %v1817
        %v1819 = vrot.slane %v1735, %v1818
        %v1820 = vlaneseq
        %v1821 = vshrl.u32 %v1820, 7
        %v1822 = vsub.s32 6, %v1821
        %v1823 = vrot.slane %v1735, %v1822
        %v1824 = vlaneseq
        %v1825 = vshrl.u32 %v1824, 7
        %v1826 = vsub.s32 0, %v1825
        %v1827 = vrot.slane %v1736, %v1826
        %v1828 = vlaneseq
        %v1829 = vshrl.u32 %v1828, 7
        %v1830 = vsub.s32 2, %v1829
        %v1831 = vrot.slane %v1736, %v1830
        %v1832 = vlaneseq
        %v1833 = vshrl.u32 %v1832, 7
        %v1834 = vsub.s32 4, %v1833
        %v1835 = vrot.slane %v1736, %v1834
        %v1836 = vlaneseq
        %v1837 = vshrl.u32 %v1836, 7
        %v1838 = vsub.s32 6, %v1837
        %v1839 = vrot.slane %v1736, %v1838
        %v1840 = vlaneseq
        %v1841 = vshrl.u32 %v1840, 7
        %v1842 = vsub.s32 0, %v1841
        %v1843 = vrot.slane %v1737, %v1842
        %v1844 = vlaneseq
        %v1845 = vshrl.u32 %v1844, 7
        %v1846 = vsub.s32 2, %v1845
        %v1847 = vrot.slane %v1737, %v1846
        %v1848 = vlaneseq
        %v1849 = vshrl.u32 %v1848, 7
        %v1850 = vsub.s32 4, %v1849
        %v1851 = vrot.slane %v1737, %v1850
        %v1852 = vlaneseq
        %v1853 = vshrl.u32 %v1852, 7
        %v1854 = vsub.s32 6, %v1853
        %v1855 = vrot.slane %v1737, %v1854
        %v1856 = vlaneseq
        %v1857 = vshrl.u32 %v1856, 7
        %v1858 = vsub.s32 0, %v1857
        %v1859 = vrot.slane %v1738, %v1858
        %v1860 = vlaneseq
        %v1861 = vshrl.u32 %v1860, 7
        %v1862 = vsub.s32 2, %v1861
        %v1863 = vrot.slane %v1738, %v1862
        %v1864 = vlaneseq
        %v1865 = vshrl.u32 %v1864, 7
        %v1866 = vsub.s32 4, %v1865
        %v1867 = vrot.slane %v1738, %v1866
        %v1868 = vlaneseq
        %v1869 = vshrl.u32 %v1868, 7
        %v1870 = vsub.s32 6, %v1869
        %v1871 = vrot.slane %v1738, %v1870
        %v1872 = vlaneseq
        %v1873 = vshrl.u32 %v1872, 7
        %v1874 = vsub.s32 0, %v1873
        %v1875 = vrot.slane %v1739, %v1874
        %v1876 = vlaneseq
        %v1877 = vshrl.u32 %v1876, 7
        %v1878 = vsub.s32 2, %v1877
        %v1879 = vrot.slane %v1739, %v1878
        %v1880 = vlaneseq
        %v1881 = vshrl.u32 %v1880, 7
        %v1882 = vsub.s32 4, %v1881
        %v1883 = vrot.slane %v1739, %v1882
        %v1884 = vlaneseq
        %v1885 = vshrl.u32 %v1884, 7
        %v1886 = vsub.s32 6, %v1885
        %v1887 = vrot.slane %v1739, %v1886
        %v1888 = vlaneseq
        %v1889 = vshrl.u32 %v1888, 7
        %v1890 = vsub.s32 0, %v1889
        %v1891 = vrot.slane %v1740, %v1890
        %v1892 = vlaneseq
        %v1893 = vshrl.u32 %v1892, 7
        %v1894 = vsub.s32 2, %v1893
        %v1895 = vrot.slane %v1740, %v1894
        %v1896 = vlaneseq
        %v1897 = vshrl.u32 %v1896, 7
        %v1898 = vsub.s32 4, %v1897
        %v1899 = vrot.slane %v1740, %v1898
        %v1900 = vlaneseq
        %v1901 = vshrl.u32 %v1900, 7
        %v1902 = vsub.s32 6, %v1901
        %v1903 = vrot.slane %v1740, %v1902
        %v1904 = vlaneseq
        %v1905 = vshrl.u32 %v1904, 7
        %v1906 = vsub.s32 0, %v1905
        %v1907 = vrot.slane %v1741, %v1906
        %v1908 = vlaneseq
        %v1909 = vshrl.u32 %v1908, 7
        %v1910 = vsub.s32 2, %v1909
        %v1911 = vrot.slane %v1741, %v1910
        %v1912 = vlaneseq
        %v1913 = vshrl.u32 %v1912, 7
        %v1914 = vsub.s32 4, %v1913
        %v1915 = vrot.slane %v1741, %v1914
        %v1916 = vlaneseq
        %v1917 = vshrl.u32 %v1916, 7
        %v1918 = vsub.s32 6, %v1917
        %v1919 = vrot.slane %v1741, %v1918
        %v1920 = vlaneseq
        %v1921 = vshrl.u32 %v1920, 7
        %v1922 = vsub.s32 0, %v1921
        %v1923 = vrot.slane %v1742, %v1922
        %v1924 = vlaneseq
        %v1925 = vshrl.u32 %v1924, 7
        %v1926 = vsub.s32 2, %v1925
        %v1927 = vrot.slane %v1742, %v1926
        %v1928 = vlaneseq
        %v1929 = vshrl.u32 %v1928, 7
        %v1930 = vsub.s32 4, %v1929
        %v1931 = vrot.slane %v1742, %v1930
        %v1932 = vlaneseq
        %v1933 = vshrl.u32 %v1932, 7
        %v1934 = vsub.s32 6, %v1933
        %v1935 = vrot.slane %v1742, %v1934
        %v1936 = vlaneseq
        %v1937 = vshrl.u32 %v1936, 7
        %v1938 = vsub.s32 0, %v1937
        %v1939 = vrot.slane %v1743, %v1938
        %v1940 = vlaneseq
        %v1941 = vshrl.u32 %v1940, 7
        %v1942 = vsub.s32 2, %v1941
        %v1943 = vrot.slane %v1743, %v1942
        %v1944 = vlaneseq
        %v1945 = vshrl.u32 %v1944, 7
        %v1946 = vsub.s32 4, %v1945
        %v1947 = vrot.slane %v1743, %v1946
        %v1948 = vlaneseq
        %v1949 = vshrl.u32 %v1948, 7
        %v1950 = vsub.s32 6, %v1949
        %v1951 = vrot.slane %v1743, %v1950
        %v1952 = vlaneseq
        %v1953 = vshrl.u32 %v1952, 7
        %v1954 = vsub.s32 0, %v1953
        %v1955 = vrot.slane %v1744, %v1954
        %v1956 = vlaneseq
        %v1957 = vshrl.u32 %v1956, 7
        %v1958 = vsub.s32 2, %v1957
        %v1959 = vrot.slane %v1744, %v1958
        %v1960 = vlaneseq
        %v1961 = vshrl.u32 %v1960, 7
        %v1962 = vsub.s32 4, %v1961
        %v1963 = vrot.slane %v1744, %v1962
        %v1964 = vlaneseq
        %v1965 = vshrl.u32 %v1964, 7
        %v1966 = vsub.s32 6, %v1965
        %v1967 = vrot.slane %v1744, %v1966
        %v1968 = vlaneseq
        %v1969 = vshrl.u32 %v1968, 7
        %v1970 = vsub.s32 0, %v1969
        %v1971 = vrot.slane %v1745, %v1970
        %v1972 = vlaneseq
        %v1973 = vshrl.u32 %v1972, 7
        %v1974 = vsub.s32 2, %v1973
        %v1975 = vrot.slane %v1745, %v1974
        %v1976 = vlaneseq
        %v1977 = vshrl.u32 %v1976, 7
        %v1978 = vsub.s32 4, %v1977
        %v1979 = vrot.slane %v1745, %v1978
        %v1980 = vlaneseq
        %v1981 = vshrl.u32 %v1980, 7
        %v1982 = vsub.s32 6, %v1981
        %v1983 = vrot.slane %v1745, %v1982
        %v2040 = vpack.c.bf16 %v1763, %v1763
        %v2041 = vpack.c.bf16 %v1767, %v1767
        %v2042 = vpack.c.bf16 %v1771, %v1771
        %v2043 = vpack.c.bf16 %v1775, %v1775
        %v2044 = vpack.c.bf16 %v1779, %v1779
        %v2045 = vpack.c.bf16 %v1783, %v1783
        %v2046 = vpack.c.bf16 %v1787, %v1787
        %v2047 = vpack.c.bf16 %v1791, %v1791
        %v2048 = vpack.c.bf16 %v1795, %v1795
        %v2049 = vpack.c.bf16 %v1799, %v1799
        %v2050 = vpack.c.bf16 %v1803, %v1803
        %v2051 = vpack.c.bf16 %v1807, %v1807
        %v2052 = vpack.c.bf16 %v1811, %v1811
        %v2053 = vpack.c.bf16 %v1815, %v1815
        %v2054 = vpack.c.bf16 %v1819, %v1819
        %v2055 = vpack.c.bf16 %v1823, %v1823
        %v2056 = vpack.c.bf16 %v1827, %v1827
        %v2057 = vpack.c.bf16 %v1831, %v1831
        %v2058 = vpack.c.bf16 %v1835, %v1835
        %v2059 = vpack.c.bf16 %v1839, %v1839
        %v2060 = vpack.c.bf16 %v1843, %v1843
        %v2061 = vpack.c.bf16 %v1847, %v1847
        %v2062 = vpack.c.bf16 %v1851, %v1851
        %v2063 = vpack.c.bf16 %v1855, %v1855
        %v2064 = vpack.c.bf16 %v1859, %v1859
        %v2065 = vpack.c.bf16 %v1863, %v1863
        %v2066 = vpack.c.bf16 %v1867, %v1867
        %v2067 = vpack.c.bf16 %v1871, %v1871
        %v2068 = vpack.c.bf16 %v1875, %v1875
        %v2069 = vpack.c.bf16 %v1879, %v1879
        %v2070 = vpack.c.bf16 %v1883, %v1883
        %v2071 = vpack.c.bf16 %v1887, %v1887
        %v2072 = vpack.c.bf16 %v1891, %v1891
        %v2073 = vpack.c.bf16 %v1895, %v1895
        %v2074 = vpack.c.bf16 %v1899, %v1899
        %v2075 = vpack.c.bf16 %v1903, %v1903
        %v2076 = vpack.c.bf16 %v1907, %v1907
        %v2077 = vpack.c.bf16 %v1911, %v1911
        %v2078 = vpack.c.bf16 %v1915, %v1915
        %v2079 = vpack.c.bf16 %v1919, %v1919
        %v2080 = vpack.c.bf16 %v1923, %v1923
        %v2081 = vpack.c.bf16 %v1927, %v1927
        %v2082 = vpack.c.bf16 %v1931, %v1931
        %v2083 = vpack.c.bf16 %v1935, %v1935
        %v2084 = vpack.c.bf16 %v1939, %v1939
        %v2085 = vpack.c.bf16 %v1943, %v1943
        %v2086 = vpack.c.bf16 %v1947, %v1947
        %v2087 = vpack.c.bf16 %v1951, %v1951
        %v2088 = vpack.c.bf16 %v1955, %v1955
        %v2089 = vpack.c.bf16 %v1959, %v1959
        %v2090 = vpack.c.bf16 %v1963, %v1963
        %v2091 = vpack.c.bf16 %v1967, %v1967
        %v2092 = vpack.c.bf16 %v1971, %v1971
        %v2093 = vpack.c.bf16 %v1975, %v1975
        %v2094 = vpack.c.bf16 %v1979, %v1979
        %v2095 = vpack.c.bf16 %v1983, %v1983
        %v2096 = vld [vmem:[#allocation7] sm:$0xff]
        %v2097 = vld [vmem:[#allocation7 + $0x8] sm:$0xf]
        %v2098 = vld [vmem:[#allocation7 + $0xc] sm:$0xff]
        %v2099 = vld [vmem:[#allocation7 + $0x14] sm:$0xf]
        %v2100 = vld [vmem:[#allocation7 + $0x18] sm:$0xff]
        %v2101 = vld [vmem:[#allocation7 + $0x20] sm:$0xf]
        %v2102 = vld [vmem:[#allocation7 + $0x24] sm:$0xff]
        %v2103 = vld [vmem:[#allocation7 + $0x2c] sm:$0xf]
        %v2104 = vld [vmem:[#allocation7 + $0x30] sm:$0xff]
        %v2105 = vld [vmem:[#allocation7 + $0x38] sm:$0xf]
        %v2106 = vld [vmem:[#allocation7 + $0x3c] sm:$0xff]
        %v2107 = vld [vmem:[#allocation7 + $0x44] sm:$0xf]
        %v2108 = vld [vmem:[#allocation7 + $0x48] sm:$0xff]
        %v2109 = vld [vmem:[#allocation7 + $0x50] sm:$0xf]
        %v2110 = vld [vmem:[#allocation7 + $0x54] sm:$0xff]
        %v2111 = vld [vmem:[#allocation7 + $0x5c] sm:$0xf]
        %v2112 = vld [vmem:[#allocation7 + $0x60] sm:$0xff]
        %v2113 = vld [vmem:[#allocation7 + $0x68] sm:$0xf]
        %v2114 = vld [vmem:[#allocation7 + $0x6c] sm:$0xff]
        %v2115 = vld [vmem:[#allocation7 + $0x74] sm:$0xf]
        %v2116 = vld [vmem:[#allocation7 + $0x78] sm:$0xff]
        %v2117 = vld [vmem:[#allocation7 + $0x80] sm:$0xf]
        %v2118 = vld [vmem:[#allocation7 + $0x84] sm:$0xff]
        %v2119 = vld [vmem:[#allocation7 + $0x8c] sm:$0xf]
        %v2120 = vld [vmem:[#allocation7 + $0x90] sm:$0xff]
        %v2121 = vld [vmem:[#allocation7 + $0x98] sm:$0xf]
        %v2122 = vld [vmem:[#allocation7 + $0x9c] sm:$0xff]
        %v2123 = vld [vmem:[#allocation7 + $0xa4] sm:$0xf]
        %v2124 = vld [vmem:[#allocation7 + $0xa8] sm:$0xff]
        %v2125 = vld [vmem:[#allocation7 + $0xb0] sm:$0xf]
        %v2126 = vld [vmem:[#allocation7 + $0xb4] sm:$0xff]
        %v2127 = vld [vmem:[#allocation7 + $0xbc] sm:$0xf]
        %v2128 = vld [vmem:[#allocation7 + $0xc0] sm:$0xff]
        %v2129 = vld [vmem:[#allocation7 + $0xc8] sm:$0xf]
        %v2130 = vld [vmem:[#allocation7 + $0xcc] sm:$0xff]
        %v2131 = vld [vmem:[#allocation7 + $0xd4] sm:$0xf]
        %v2132 = vld [vmem:[#allocation7 + $0xd8] sm:$0xff]
        %v2133 = vld [vmem:[#allocation7 + $0xe0] sm:$0xf]
        %v2134 = vld [vmem:[#allocation7 + $0xe4] sm:$0xff]
        %v2135 = vld [vmem:[#allocation7 + $0xec] sm:$0xf]
        %v2136 = vld [vmem:[#allocation7 + $0xf0] sm:$0xff]
        %v2137 = vld [vmem:[#allocation7 + $0xf8] sm:$0xf]
        %v2138 = vld [vmem:[#allocation7 + $0xfc] sm:$0xff]
        %v2139 = vld [vmem:[#allocation7 + $0x104] sm:$0xf]
        %v2140 = vld [vmem:[#allocation7 + $0x108] sm:$0xff]
        %v2141 = vld [vmem:[#allocation7 + $0x110] sm:$0xf]
        %v2142 = vld [vmem:[#allocation7 + $0x114] sm:$0xff]
        %v2143 = vld [vmem:[#allocation7 + $0x11c] sm:$0xf]
        %v2144 = vld [vmem:[#allocation7 + $0x120] sm:$0xff]
        %v2145 = vld [vmem:[#allocation7 + $0x128] sm:$0xf]
        %v2146 = vld [vmem:[#allocation7 + $0x12c] sm:$0xff]
        %v2147 = vld [vmem:[#allocation7 + $0x134] sm:$0xf]
        %v2148 = vld [vmem:[#allocation7 + $0x138] sm:$0xff]
        %v2149 = vld [vmem:[#allocation7 + $0x140] sm:$0xf]
        %v2150 = vld [vmem:[#allocation7 + $0x144] sm:$0xff]
        %v2151 = vld [vmem:[#allocation7 + $0x14c] sm:$0xf]
        %v2152 = vld [vmem:[#allocation7 + $0x150] sm:$0xff]
        %v2153 = vld [vmem:[#allocation7 + $0x158] sm:$0xf]
        %v2154 = vld [vmem:[#allocation7 + $0x15c] sm:$0xff]
        %v2155 = vld [vmem:[#allocation7 + $0x164] sm:$0xf]
        %v2156 = vld [vmem:[#allocation7 + $0x168] sm:$0xff]
        %v2157 = vld [vmem:[#allocation7 + $0x170] sm:$0xf]
        %v2158 = vld [vmem:[#allocation7 + $0x174] sm:$0xff]
        %v2159 = vld [vmem:[#allocation7 + $0x17c] sm:$0xf]
        %v2160 = vld [vmem:[#allocation7 + $0x180] sm:$0xff]
        %v2161 = vld [vmem:[#allocation7 + $0x188] sm:$0xf]
        %v2162 = vld [vmem:[#allocation7 + $0x18c] sm:$0xff]
        %v2163 = vld [vmem:[#allocation7 + $0x194] sm:$0xf]
        %v2164 = vld [vmem:[#allocation7 + $0x198] sm:$0xff]
        %v2165 = vld [vmem:[#allocation7 + $0x1a0] sm:$0xf]
        %v2166 = vld [vmem:[#allocation7 + $0x1a4] sm:$0xff]
        %v2167 = vld [vmem:[#allocation7 + $0x1ac] sm:$0xf]
        %v2168 = vld [vmem:[#allocation7 + $0x1b0] sm:$0xff]
        %v2169 = vld [vmem:[#allocation7 + $0x1b8] sm:$0xf]
        %v2170 = vld [vmem:[#allocation7 + $0x1bc] sm:$0xff]
        %v2171 = vld [vmem:[#allocation7 + $0x1c4] sm:$0xf]
        %v2172 = vld [vmem:[#allocation7 + $0x1c8] sm:$0xff]
        %v2173 = vld [vmem:[#allocation7 + $0x1d0] sm:$0xf]
        %v2174 = vld [vmem:[#allocation7 + $0x1d4] sm:$0xff]
        %v2175 = vld [vmem:[#allocation7 + $0x1dc] sm:$0xf]
        %v2176 = vld [vmem:[#allocation7 + $0x1e0] sm:$0xff]
        %v2177 = vld [vmem:[#allocation7 + $0x1e8] sm:$0xf]
        %v2178 = vld [vmem:[#allocation7 + $0x1ec] sm:$0xff]
        %v2179 = vld [vmem:[#allocation7 + $0x1f4] sm:$0xf]
        %v2180 = vld [vmem:[#allocation7 + $0x1f8] sm:$0xff]
        %v2181 = vld [vmem:[#allocation7 + $0x200] sm:$0xf]
        %v2182 = vld [vmem:[#allocation7 + $0x204] sm:$0xff]
        %v2183 = vld [vmem:[#allocation7 + $0x20c] sm:$0xf]
        %v2184 = vld [vmem:[#allocation7 + $0x210] sm:$0xff]
        %v2185 = vld [vmem:[#allocation7 + $0x218] sm:$0xf]
        %v2186 = vld [vmem:[#allocation7 + $0x21c] sm:$0xff]
        %v2187 = vld [vmem:[#allocation7 + $0x224] sm:$0xf]
        %v2188 = vld [vmem:[#allocation7 + $0x228] sm:$0xff]
        %v2189 = vld [vmem:[#allocation7 + $0x230] sm:$0xf]
        %v2190 = vld [vmem:[#allocation7 + $0x234] sm:$0xff]
        %v2191 = vld [vmem:[#allocation7 + $0x23c] sm:$0xf]
        %v2192 = vld [vmem:[#allocation7 + $0x240] sm:$0xff]
        %v2193 = vld [vmem:[#allocation7 + $0x248] sm:$0xf]
        %v2194 = vld [vmem:[#allocation7 + $0x24c] sm:$0xff]
        %v2195 = vld [vmem:[#allocation7 + $0x254] sm:$0xf]
        %v2196 = vld [vmem:[#allocation7 + $0x258] sm:$0xff]
        %v2197 = vld [vmem:[#allocation7 + $0x260] sm:$0xf]
        %v2198 = vld [vmem:[#allocation7 + $0x264] sm:$0xff]
        %v2199 = vld [vmem:[#allocation7 + $0x26c] sm:$0xf]
        %v2200 = vld [vmem:[#allocation7 + $0x270] sm:$0xff]
        %v2201 = vld [vmem:[#allocation7 + $0x278] sm:$0xf]
        %v2202 = vld [vmem:[#allocation7 + $0x27c] sm:$0xff]
        %v2203 = vld [vmem:[#allocation7 + $0x284] sm:$0xf]
        %v2204 = vld [vmem:[#allocation7 + $0x288] sm:$0xff]
        %v2205 = vld [vmem:[#allocation7 + $0x290] sm:$0xf]
        %v2206 = vld [vmem:[#allocation7 + $0x294] sm:$0xff]
        %v2207 = vld [vmem:[#allocation7 + $0x29c] sm:$0xf]
        %v2208 = vld [vmem:[#allocation9] sm:$0xff]
        %v2209 = vld [vmem:[#allocation9 + $0x8] sm:$0xf]
        %v2210 = vld [vmem:[#allocation9 + $0xc] sm:$0xff]
        %v2211 = vld [vmem:[#allocation9 + $0x14] sm:$0xf]
        %v2212 = vld [vmem:[#allocation9 + $0x18] sm:$0xff]
        %v2213 = vld [vmem:[#allocation9 + $0x20] sm:$0xf]
        %v2214 = vld [vmem:[#allocation9 + $0x24] sm:$0xff]
        %v2215 = vld [vmem:[#allocation9 + $0x2c] sm:$0xf]
        %v2216 = vld [vmem:[#allocation9 + $0x30] sm:$0xff]
        %v2217 = vld [vmem:[#allocation9 + $0x38] sm:$0xf]
        %v2218 = vld [vmem:[#allocation9 + $0x3c] sm:$0xff]
        %v2219 = vld [vmem:[#allocation9 + $0x44] sm:$0xf]
        %v2220 = vld [vmem:[#allocation9 + $0x48] sm:$0xff]
        %v2221 = vld [vmem:[#allocation9 + $0x50] sm:$0xf]
        %v2222 = vld [vmem:[#allocation9 + $0x54] sm:$0xff]
        %v2223 = vld [vmem:[#allocation9 + $0x5c] sm:$0xf]
        %v2224 = vld [vmem:[#allocation9 + $0x60] sm:$0xff]
        %v2225 = vld [vmem:[#allocation9 + $0x68] sm:$0xf]
        %v2226 = vld [vmem:[#allocation9 + $0x6c] sm:$0xff]
        %v2227 = vld [vmem:[#allocation9 + $0x74] sm:$0xf]
        %v2228 = vld [vmem:[#allocation9 + $0x78] sm:$0xff]
        %v2229 = vld [vmem:[#allocation9 + $0x80] sm:$0xf]
        %v2230 = vld [vmem:[#allocation9 + $0x84] sm:$0xff]
        %v2231 = vld [vmem:[#allocation9 + $0x8c] sm:$0xf]
        %v2232 = vld [vmem:[#allocation9 + $0x90] sm:$0xff]
        %v2233 = vld [vmem:[#allocation9 + $0x98] sm:$0xf]
        %v2234 = vld [vmem:[#allocation9 + $0x9c] sm:$0xff]
        %v2235 = vld [vmem:[#allocation9 + $0xa4] sm:$0xf]
        %v2236 = vld [vmem:[#allocation9 + $0xa8] sm:$0xff]
        %v2237 = vld [vmem:[#allocation9 + $0xb0] sm:$0xf]
        %v2238 = vld [vmem:[#allocation9 + $0xb4] sm:$0xff]
        %v2239 = vld [vmem:[#allocation9 + $0xbc] sm:$0xf]
        %v2240 = vld [vmem:[#allocation9 + $0xc0] sm:$0xff]
        %v2241 = vld [vmem:[#allocation9 + $0xc8] sm:$0xf]
        %v2242 = vld [vmem:[#allocation9 + $0xcc] sm:$0xff]
        %v2243 = vld [vmem:[#allocation9 + $0xd4] sm:$0xf]
        %v2244 = vld [vmem:[#allocation9 + $0xd8] sm:$0xff]
        %v2245 = vld [vmem:[#allocation9 + $0xe0] sm:$0xf]
        %v2246 = vld [vmem:[#allocation9 + $0xe4] sm:$0xff]
        %v2247 = vld [vmem:[#allocation9 + $0xec] sm:$0xf]
        %v2248 = vld [vmem:[#allocation9 + $0xf0] sm:$0xff]
        %v2249 = vld [vmem:[#allocation9 + $0xf8] sm:$0xf]
        %v2250 = vld [vmem:[#allocation9 + $0xfc] sm:$0xff]
        %v2251 = vld [vmem:[#allocation9 + $0x104] sm:$0xf]
        %v2252 = vld [vmem:[#allocation9 + $0x108] sm:$0xff]
        %v2253 = vld [vmem:[#allocation9 + $0x110] sm:$0xf]
        %v2254 = vld [vmem:[#allocation9 + $0x114] sm:$0xff]
        %v2255 = vld [vmem:[#allocation9 + $0x11c] sm:$0xf]
        %v2256 = vld [vmem:[#allocation9 + $0x120] sm:$0xff]
        %v2257 = vld [vmem:[#allocation9 + $0x128] sm:$0xf]
        %v2258 = vld [vmem:[#allocation9 + $0x12c] sm:$0xff]
        %v2259 = vld [vmem:[#allocation9 + $0x134] sm:$0xf]
        %v2260 = vld [vmem:[#allocation9 + $0x138] sm:$0xff]
        %v2261 = vld [vmem:[#allocation9 + $0x140] sm:$0xf]
        %v2262 = vld [vmem:[#allocation9 + $0x144] sm:$0xff]
        %v2263 = vld [vmem:[#allocation9 + $0x14c] sm:$0xf]
        %v2264 = vld [vmem:[#allocation9 + $0x150] sm:$0xff]
        %v2265 = vld [vmem:[#allocation9 + $0x158] sm:$0xf]
        %v2266 = vld [vmem:[#allocation9 + $0x15c] sm:$0xff]
        %v2267 = vld [vmem:[#allocation9 + $0x164] sm:$0xf]
        %v2268 = vld [vmem:[#allocation9 + $0x168] sm:$0xff]
        %v2269 = vld [vmem:[#allocation9 + $0x170] sm:$0xf]
        %v2270 = vld [vmem:[#allocation9 + $0x174] sm:$0xff]
        %v2271 = vld [vmem:[#allocation9 + $0x17c] sm:$0xf]
        %v2272 = vld [vmem:[#allocation9 + $0x180] sm:$0xff]
        %v2273 = vld [vmem:[#allocation9 + $0x188] sm:$0xf]
        %v2274 = vld [vmem:[#allocation9 + $0x18c] sm:$0xff]
        %v2275 = vld [vmem:[#allocation9 + $0x194] sm:$0xf]
        %v2276 = vld [vmem:[#allocation9 + $0x198] sm:$0xff]
        %v2277 = vld [vmem:[#allocation9 + $0x1a0] sm:$0xf]
        %v2278 = vld [vmem:[#allocation9 + $0x1a4] sm:$0xff]
        %v2279 = vld [vmem:[#allocation9 + $0x1ac] sm:$0xf]
        %v2280 = vld [vmem:[#allocation9 + $0x1b0] sm:$0xff]
        %v2281 = vld [vmem:[#allocation9 + $0x1b8] sm:$0xf]
        %v2282 = vld [vmem:[#allocation9 + $0x1bc] sm:$0xff]
        %v2283 = vld [vmem:[#allocation9 + $0x1c4] sm:$0xf]
        %v2284 = vld [vmem:[#allocation9 + $0x1c8] sm:$0xff]
        %v2285 = vld [vmem:[#allocation9 + $0x1d0] sm:$0xf]
        %v2286 = vld [vmem:[#allocation9 + $0x1d4] sm:$0xff]
        %v2287 = vld [vmem:[#allocation9 + $0x1dc] sm:$0xf]
        %v2288 = vld [vmem:[#allocation9 + $0x1e0] sm:$0xff]
        %v2289 = vld [vmem:[#allocation9 + $0x1e8] sm:$0xf]
        %v2290 = vld [vmem:[#allocation9 + $0x1ec] sm:$0xff]
        %v2291 = vld [vmem:[#allocation9 + $0x1f4] sm:$0xf]
        %v2292 = vld [vmem:[#allocation9 + $0x1f8] sm:$0xff]
        %v2293 = vld [vmem:[#allocation9 + $0x200] sm:$0xf]
        %v2294 = vld [vmem:[#allocation9 + $0x204] sm:$0xff]
        %v2295 = vld [vmem:[#allocation9 + $0x20c] sm:$0xf]
        %v2296 = vld [vmem:[#allocation9 + $0x210] sm:$0xff]
        %v2297 = vld [vmem:[#allocation9 + $0x218] sm:$0xf]
        %v2298 = vld [vmem:[#allocation9 + $0x21c] sm:$0xff]
        %v2299 = vld [vmem:[#allocation9 + $0x224] sm:$0xf]
        %v2300 = vld [vmem:[#allocation9 + $0x228] sm:$0xff]
        %v2301 = vld [vmem:[#allocation9 + $0x230] sm:$0xf]
        %v2302 = vld [vmem:[#allocation9 + $0x234] sm:$0xff]
        %v2303 = vld [vmem:[#allocation9 + $0x23c] sm:$0xf]
        %v2304 = vld [vmem:[#allocation9 + $0x240] sm:$0xff]
        %v2305 = vld [vmem:[#allocation9 + $0x248] sm:$0xf]
        %v2306 = vld [vmem:[#allocation9 + $0x24c] sm:$0xff]
        %v2307 = vld [vmem:[#allocation9 + $0x254] sm:$0xf]
        %v2308 = vld [vmem:[#allocation9 + $0x258] sm:$0xff]
        %v2309 = vld [vmem:[#allocation9 + $0x260] sm:$0xf]
        %v2310 = vld [vmem:[#allocation9 + $0x264] sm:$0xff]
        %v2311 = vld [vmem:[#allocation9 + $0x26c] sm:$0xf]
        %v2312 = vld [vmem:[#allocation9 + $0x270] sm:$0xff]
        %v2313 = vld [vmem:[#allocation9 + $0x278] sm:$0xf]
        %v2314 = vld [vmem:[#allocation9 + $0x27c] sm:$0xff]
        %v2315 = vld [vmem:[#allocation9 + $0x284] sm:$0xf]
        %v2316 = vld [vmem:[#allocation9 + $0x288] sm:$0xff]
        %v2317 = vld [vmem:[#allocation9 + $0x290] sm:$0xf]
        %v2318 = vld [vmem:[#allocation9 + $0x294] sm:$0xff]
        %v2319 = vld [vmem:[#allocation9 + $0x29c] sm:$0xf]
        %s2320 = scalar_lea.vmem [#allocation7], 672
        %v2321 = vld [vmem:[%s2320] sm:$0xff]
        %v2322 = vld [vmem:[%s2320 + $0x8] sm:$0xf]
        %v2323 = vld [vmem:[%s2320 + $0xc] sm:$0xff]
        %v2324 = vld [vmem:[%s2320 + $0x14] sm:$0xf]
        %v2325 = vld [vmem:[%s2320 + $0x18] sm:$0xff]
        %v2326 = vld [vmem:[%s2320 + $0x20] sm:$0xf]
        %v2327 = vld [vmem:[%s2320 + $0x24] sm:$0xff]
        %v2328 = vld [vmem:[%s2320 + $0x2c] sm:$0xf]
        %v2329 = vld [vmem:[%s2320 + $0x30] sm:$0xff]
        %v2330 = vld [vmem:[%s2320 + $0x38] sm:$0xf]
        %v2331 = vld [vmem:[%s2320 + $0x3c] sm:$0xff]
        %v2332 = vld [vmem:[%s2320 + $0x44] sm:$0xf]
        %v2333 = vld [vmem:[%s2320 + $0x48] sm:$0xff]
        %v2334 = vld [vmem:[%s2320 + $0x50] sm:$0xf]
        %v2335 = vld [vmem:[%s2320 + $0x54] sm:$0xff]
        %v2336 = vld [vmem:[%s2320 + $0x5c] sm:$0xf]
        %v2337 = vld [vmem:[%s2320 + $0x60] sm:$0xff]
        %v2338 = vld [vmem:[%s2320 + $0x68] sm:$0xf]
        %v2339 = vld [vmem:[%s2320 + $0x6c] sm:$0xff]
        %v2340 = vld [vmem:[%s2320 + $0x74] sm:$0xf]
        %v2341 = vld [vmem:[%s2320 + $0x78] sm:$0xff]
        %v2342 = vld [vmem:[%s2320 + $0x80] sm:$0xf]
        %v2343 = vld [vmem:[%s2320 + $0x84] sm:$0xff]
        %v2344 = vld [vmem:[%s2320 + $0x8c] sm:$0xf]
        %v2345 = vld [vmem:[%s2320 + $0x90] sm:$0xff]
        %v2346 = vld [vmem:[%s2320 + $0x98] sm:$0xf]
        %v2347 = vld [vmem:[%s2320 + $0x9c] sm:$0xff]
        %v2348 = vld [vmem:[%s2320 + $0xa4] sm:$0xf]
        %v2349 = vld [vmem:[%s2320 + $0xa8] sm:$0xff]
        %v2350 = vld [vmem:[%s2320 + $0xb0] sm:$0xf]
        %v2351 = vld [vmem:[%s2320 + $0xb4] sm:$0xff]
        %v2352 = vld [vmem:[%s2320 + $0xbc] sm:$0xf]
        %v2353 = vld [vmem:[%s2320 + $0xc0] sm:$0xff]
        %v2354 = vld [vmem:[%s2320 + $0xc8] sm:$0xf]
        %v2355 = vld [vmem:[%s2320 + $0xcc] sm:$0xff]
        %v2356 = vld [vmem:[%s2320 + $0xd4] sm:$0xf]
        %v2357 = vld [vmem:[%s2320 + $0xd8] sm:$0xff]
        %v2358 = vld [vmem:[%s2320 + $0xe0] sm:$0xf]
        %v2359 = vld [vmem:[%s2320 + $0xe4] sm:$0xff]
        %v2360 = vld [vmem:[%s2320 + $0xec] sm:$0xf]
        %v2361 = vld [vmem:[%s2320 + $0xf0] sm:$0xff]
        %v2362 = vld [vmem:[%s2320 + $0xf8] sm:$0xf]
        %v2363 = vld [vmem:[%s2320 + $0xfc] sm:$0xff]
        %v2364 = vld [vmem:[%s2320 + $0x104] sm:$0xf]
        %v2365 = vld [vmem:[%s2320 + $0x108] sm:$0xff]
        %v2366 = vld [vmem:[%s2320 + $0x110] sm:$0xf]
        %v2367 = vld [vmem:[%s2320 + $0x114] sm:$0xff]
        %v2368 = vld [vmem:[%s2320 + $0x11c] sm:$0xf]
        %v2369 = vld [vmem:[%s2320 + $0x120] sm:$0xff]
        %v2370 = vld [vmem:[%s2320 + $0x128] sm:$0xf]
        %v2371 = vld [vmem:[%s2320 + $0x12c] sm:$0xff]
        %v2372 = vld [vmem:[%s2320 + $0x134] sm:$0xf]
        %v2373 = vld [vmem:[%s2320 + $0x138] sm:$0xff]
        %v2374 = vld [vmem:[%s2320 + $0x140] sm:$0xf]
        %v2375 = vld [vmem:[%s2320 + $0x144] sm:$0xff]
        %v2376 = vld [vmem:[%s2320 + $0x14c] sm:$0xf]
        %v2377 = vld [vmem:[%s2320 + $0x150] sm:$0xff]
        %v2378 = vld [vmem:[%s2320 + $0x158] sm:$0xf]
        %v2379 = vld [vmem:[%s2320 + $0x15c] sm:$0xff]
        %v2380 = vld [vmem:[%s2320 + $0x164] sm:$0xf]
        %v2381 = vld [vmem:[%s2320 + $0x168] sm:$0xff]
        %v2382 = vld [vmem:[%s2320 + $0x170] sm:$0xf]
        %v2383 = vld [vmem:[%s2320 + $0x174] sm:$0xff]
        %v2384 = vld [vmem:[%s2320 + $0x17c] sm:$0xf]
        %v2385 = vld [vmem:[%s2320 + $0x180] sm:$0xff]
        %v2386 = vld [vmem:[%s2320 + $0x188] sm:$0xf]
        %v2387 = vld [vmem:[%s2320 + $0x18c] sm:$0xff]
        %v2388 = vld [vmem:[%s2320 + $0x194] sm:$0xf]
        %v2389 = vld [vmem:[%s2320 + $0x198] sm:$0xff]
        %v2390 = vld [vmem:[%s2320 + $0x1a0] sm:$0xf]
        %v2391 = vld [vmem:[%s2320 + $0x1a4] sm:$0xff]
        %v2392 = vld [vmem:[%s2320 + $0x1ac] sm:$0xf]
        %v2393 = vld [vmem:[%s2320 + $0x1b0] sm:$0xff]
        %v2394 = vld [vmem:[%s2320 + $0x1b8] sm:$0xf]
        %v2395 = vld [vmem:[%s2320 + $0x1bc] sm:$0xff]
        %v2396 = vld [vmem:[%s2320 + $0x1c4] sm:$0xf]
        %v2397 = vld [vmem:[%s2320 + $0x1c8] sm:$0xff]
        %v2398 = vld [vmem:[%s2320 + $0x1d0] sm:$0xf]
        %v2399 = vld [vmem:[%s2320 + $0x1d4] sm:$0xff]
        %v2400 = vld [vmem:[%s2320 + $0x1dc] sm:$0xf]
        %v2401 = vld [vmem:[%s2320 + $0x1e0] sm:$0xff]
        %v2402 = vld [vmem:[%s2320 + $0x1e8] sm:$0xf]
        %v2403 = vld [vmem:[%s2320 + $0x1ec] sm:$0xff]
        %v2404 = vld [vmem:[%s2320 + $0x1f4] sm:$0xf]
        %v2405 = vld [vmem:[%s2320 + $0x1f8] sm:$0xff]
        %v2406 = vld [vmem:[%s2320 + $0x200] sm:$0xf]
        %v2407 = vld [vmem:[%s2320 + $0x204] sm:$0xff]
        %v2408 = vld [vmem:[%s2320 + $0x20c] sm:$0xf]
        %v2409 = vld [vmem:[%s2320 + $0x210] sm:$0xff]
        %v2410 = vld [vmem:[%s2320 + $0x218] sm:$0xf]
        %v2411 = vld [vmem:[%s2320 + $0x21c] sm:$0xff]
        %v2412 = vld [vmem:[%s2320 + $0x224] sm:$0xf]
        %v2413 = vld [vmem:[%s2320 + $0x228] sm:$0xff]
        %v2414 = vld [vmem:[%s2320 + $0x230] sm:$0xf]
        %v2415 = vld [vmem:[%s2320 + $0x234] sm:$0xff]
        %v2416 = vld [vmem:[%s2320 + $0x23c] sm:$0xf]
        %v2417 = vld [vmem:[%s2320 + $0x240] sm:$0xff]
        %v2418 = vld [vmem:[%s2320 + $0x248] sm:$0xf]
        %v2419 = vld [vmem:[%s2320 + $0x24c] sm:$0xff]
        %v2420 = vld [vmem:[%s2320 + $0x254] sm:$0xf]
        %v2421 = vld [vmem:[%s2320 + $0x258] sm:$0xff]
        %v2422 = vld [vmem:[%s2320 + $0x260] sm:$0xf]
        %v2423 = vld [vmem:[%s2320 + $0x264] sm:$0xff]
        %v2424 = vld [vmem:[%s2320 + $0x26c] sm:$0xf]
        %v2425 = vld [vmem:[%s2320 + $0x270] sm:$0xff]
        %v2426 = vld [vmem:[%s2320 + $0x278] sm:$0xf]
        %v2427 = vld [vmem:[%s2320 + $0x27c] sm:$0xff]
        %v2428 = vld [vmem:[%s2320 + $0x284] sm:$0xf]
        %v2429 = vld [vmem:[%s2320 + $0x288] sm:$0xff]
        %v2430 = vld [vmem:[%s2320 + $0x290] sm:$0xf]
        %v2431 = vld [vmem:[%s2320 + $0x294] sm:$0xff]
        %v2432 = vld [vmem:[%s2320 + $0x29c] sm:$0xf]
        %v2481 = vunpack.c.l.b16 %v2044
        %v2482 = vunpack.c.l.b16 %v2045
        %v2483 = vunpack.c.l.b16 %v2046
        %v2484 = vunpack.c.l.b16 %v2047
        %v2485 = vunpack.c.l.b16 %v2048
        %v2486 = vunpack.c.l.b16 %v2049
        %v2487 = vunpack.c.l.b16 %v2050
        %v2488 = vunpack.c.l.b16 %v2051
        %v2489 = vunpack.c.l.b16 %v2052
        %v2490 = vunpack.c.l.b16 %v2053
        %v2491 = vunpack.c.l.b16 %v2054
        %v2492 = vunpack.c.l.b16 %v2055
        %v2493 = vunpack.c.l.b16 %v2056
        %v2494 = vunpack.c.l.b16 %v2057
        %v2495 = vunpack.c.l.b16 %v2058
        %v2496 = vunpack.c.l.b16 %v2059
        %v2497 = vunpack.c.l.b16 %v2060
        %v2498 = vunpack.c.l.b16 %v2061
        %v2499 = vunpack.c.l.b16 %v2062
        %v2500 = vunpack.c.l.b16 %v2063
        %v2501 = vunpack.c.l.b16 %v2064
        %v2502 = vunpack.c.l.b16 %v2065
        %v2503 = vunpack.c.l.b16 %v2066
        %v2504 = vunpack.c.l.b16 %v2067
        %v2505 = vunpack.c.l.b16 %v2068
        %v2506 = vunpack.c.l.b16 %v2069
        %v2507 = vunpack.c.l.b16 %v2070
        %v2508 = vunpack.c.l.b16 %v2071
        %v2509 = vunpack.c.l.b16 %v2072
        %v2510 = vunpack.c.l.b16 %v2073
        %v2511 = vunpack.c.l.b16 %v2074
        %v2512 = vunpack.c.l.b16 %v2075
        %v2513 = vunpack.c.l.b16 %v2076
        %v2514 = vunpack.c.l.b16 %v2077
        %v2515 = vunpack.c.l.b16 %v2078
        %v2516 = vunpack.c.l.b16 %v2079
        %v2517 = vunpack.c.l.b16 %v2080
        %v2518 = vunpack.c.l.b16 %v2081
        %v2519 = vunpack.c.l.b16 %v2082
        %v2520 = vunpack.c.l.b16 %v2083
        %v2521 = vunpack.c.l.b16 %v2084
        %v2522 = vunpack.c.l.b16 %v2085
        %v2523 = vunpack.c.l.b16 %v2086
        %v2524 = vunpack.c.l.b16 %v2087
        %v2525 = vunpack.c.l.b16 %v2088
        %v2526 = vunpack.c.l.b16 %v2089
        %v2527 = vunpack.c.l.b16 %v2090
        %v2528 = vunpack.c.l.b16 %v2091
        %v2529 = vrot.slane %v2485, 7
        %vm2530 = vcmask 1041409
        %v2531 = vsel %vm2530, %v2529, %v2481
        %v2532 = vrot.slane %v2489, 6
        %vm2533 = vcmask 1042434
        %v2534 = vsel %vm2533, %v2532, %v2531
        %v2535 = vrot.slane %v2493, 5
        %vm2536 = vcmask 1043459
        %v2537 = vsel %vm2536, %v2535, %v2534
        %v2538 = vrot.slane %v2497, 4
        %vm2539 = vcmask 1044484
        %v2540 = vsel %vm2539, %v2538, %v2537
        %v2541 = vrot.slane %v2501, 3
        %vm2542 = vcmask 1045509
        %v2543 = vsel %vm2542, %v2541, %v2540
        %v2544 = vrot.slane %v2505, 2
        %vm2545 = vcmask 1046534
        %v2546 = vsel %vm2545, %v2544, %v2543
        %v2547 = vrot.slane %v2509, 1
        %vm2548 = vcmask 1047559
        %v2549 = vsel %vm2548, %v2547, %v2546
        %v2550 = vrot.slane %v2486, 7
        %v2551 = vsel %vm2530, %v2550, %v2482
        %v2552 = vrot.slane %v2490, 6
        %v2553 = vsel %vm2533, %v2552, %v2551
        %v2554 = vrot.slane %v2494, 5
        %v2555 = vsel %vm2536, %v2554, %v2553
        %v2556 = vrot.slane %v2498, 4
        %v2557 = vsel %vm2539, %v2556, %v2555
        %v2558 = vrot.slane %v2502, 3
        %v2559 = vsel %vm2542, %v2558, %v2557
        %v2560 = vrot.slane %v2506, 2
        %v2561 = vsel %vm2545, %v2560, %v2559
        %v2562 = vrot.slane %v2510, 1
        %v2563 = vsel %vm2548, %v2562, %v2561
        %v2564 = vrot.slane %v2487, 7
        %v2565 = vsel %vm2530, %v2564, %v2483
        %v2566 = vrot.slane %v2491, 6
        %v2567 = vsel %vm2533, %v2566, %v2565
        %v2568 = vrot.slane %v2495, 5
        %v2569 = vsel %vm2536, %v2568, %v2567
        %v2570 = vrot.slane %v2499, 4
        %v2571 = vsel %vm2539, %v2570, %v2569
        %v2572 = vrot.slane %v2503, 3
        %v2573 = vsel %vm2542, %v2572, %v2571
        %v2574 = vrot.slane %v2507, 2
        %v2575 = vsel %vm2545, %v2574, %v2573
        %v2576 = vrot.slane %v2511, 1
        %v2577 = vsel %vm2548, %v2576, %v2575
        %v2578 = vrot.slane %v2488, 7
        %v2579 = vsel %vm2530, %v2578, %v2484
        %v2580 = vrot.slane %v2492, 6
        %v2581 = vsel %vm2533, %v2580, %v2579
        %v2582 = vrot.slane %v2496, 5
        %v2583 = vsel %vm2536, %v2582, %v2581
        %v2584 = vrot.slane %v2500, 4
        %v2585 = vsel %vm2539, %v2584, %v2583
        %v2586 = vrot.slane %v2504, 3
        %v2587 = vsel %vm2542, %v2586, %v2585
        %v2588 = vrot.slane %v2508, 2
        %v2589 = vsel %vm2545, %v2588, %v2587
        %v2590 = vrot.slane %v2512, 1
        %v2591 = vsel %vm2548, %v2590, %v2589
        %v2592 = vrot.slane %v2517, 7
        %v2593 = vsel %vm2530, %v2592, %v2513
        %v2594 = vrot.slane %v2521, 6
        %v2595 = vsel %vm2533, %v2594, %v2593
        %v2596 = vrot.slane %v2525, 5
        %v2597 = vsel %vm2536, %v2596, %v2595
        %v2598 = vrot.slane %v2518, 7
        %v2599 = vsel %vm2530, %v2598, %v2514
        %v2600 = vrot.slane %v2522, 6
        %v2601 = vsel %vm2533, %v2600, %v2599
        %v2602 = vrot.slane %v2526, 5
        %v2603 = vsel %vm2536, %v2602, %v2601
        %v2604 = vrot.slane %v2519, 7
        %v2605 = vsel %vm2530, %v2604, %v2515
        %v2606 = vrot.slane %v2523, 6
        %v2607 = vsel %vm2533, %v2606, %v2605
        %v2608 = vrot.slane %v2527, 5
        %v2609 = vsel %vm2536, %v2608, %v2607
        %v2610 = vrot.slane %v2520, 7
        %v2611 = vsel %vm2530, %v2610, %v2516
        %v2612 = vrot.slane %v2524, 6
        %v2613 = vsel %vm2533, %v2612, %v2611
        %v2614 = vrot.slane %v2528, 5
        %v2615 = vsel %vm2536, %v2614, %v2613
        %v2616 = vpack.c.b16 %v2597, %v2549
        %v2617 = vpack.c.b16 %v2603, %v2563
        %v2618 = vpack.c.b16 %v2609, %v2577
        %v2619 = vpack.c.b16 %v2615, %v2591
        %v2735 = vunpack.c.l.b16 %v2321
        %v2736 = vunpack.c.h.b16 %v2321
        %v2737 = vunpack.c.l.b16 %v2322
        %v2738 = vunpack.c.l.b16 %v2323
        %v2739 = vunpack.c.h.b16 %v2323
        %v2740 = vunpack.c.l.b16 %v2324
        %v2741 = vunpack.c.l.b16 %v2325
        %v2742 = vunpack.c.h.b16 %v2325
        %v2743 = vunpack.c.l.b16 %v2326
        %v2744 = vunpack.c.l.b16 %v2327
        %v2745 = vunpack.c.h.b16 %v2327
        %v2746 = vunpack.c.l.b16 %v2328
        %v2747 = vunpack.c.l.b16 %v2329
        %v2748 = vunpack.c.h.b16 %v2329
        %v2749 = vunpack.c.l.b16 %v2330
        %v2750 = vunpack.c.l.b16 %v2331
        %v2751 = vunpack.c.h.b16 %v2331
        %v2752 = vunpack.c.l.b16 %v2332
        %v2753 = vunpack.c.l.b16 %v2333
        %v2754 = vunpack.c.h.b16 %v2333
        %v2755 = vunpack.c.l.b16 %v2334
        %v2756 = vunpack.c.l.b16 %v2335
        %v2757 = vunpack.c.h.b16 %v2335
        %v2758 = vunpack.c.l.b16 %v2336
        %v2759 = vunpack.c.l.b16 %v2337
        %v2760 = vunpack.c.h.b16 %v2337
        %v2761 = vunpack.c.l.b16 %v2338
        %v2762 = vunpack.c.l.b16 %v2339
        %v2763 = vunpack.c.h.b16 %v2339
        %v2764 = vunpack.c.l.b16 %v2340
        %v2765 = vunpack.c.l.b16 %v2341
        %v2766 = vunpack.c.h.b16 %v2341
        %v2767 = vunpack.c.l.b16 %v2342
        %v2768 = vunpack.c.l.b16 %v2343
        %v2769 = vunpack.c.h.b16 %v2343
        %v2770 = vunpack.c.l.b16 %v2344
        %v2771 = vunpack.c.l.b16 %v2345
        %v2772 = vunpack.c.h.b16 %v2345
        %v2773 = vunpack.c.l.b16 %v2346
        %v2774 = vunpack.c.l.b16 %v2347
        %v2775 = vunpack.c.h.b16 %v2347
        %v2776 = vunpack.c.l.b16 %v2348
        %v2777 = vunpack.c.l.b16 %v2349
        %v2778 = vunpack.c.h.b16 %v2349
        %v2779 = vunpack.c.l.b16 %v2350
        %v2780 = vunpack.c.l.b16 %v2351
        %v2781 = vunpack.c.h.b16 %v2351
        %v2782 = vunpack.c.l.b16 %v2352
        %v2783 = vunpack.c.l.b16 %v2353
        %v2784 = vunpack.c.h.b16 %v2353
        %v2785 = vunpack.c.l.b16 %v2354
        %v2786 = vunpack.c.l.b16 %v2355
        %v2787 = vunpack.c.h.b16 %v2355
        %v2788 = vunpack.c.l.b16 %v2356
        %v2789 = vunpack.c.l.b16 %v2357
        %v2790 = vunpack.c.h.b16 %v2357
        %v2791 = vunpack.c.l.b16 %v2358
        %v2792 = vunpack.c.l.b16 %v2359
        %v2793 = vunpack.c.h.b16 %v2359
        %v2794 = vunpack.c.l.b16 %v2360
        %v2795 = vunpack.c.l.b16 %v2361
        %v2796 = vunpack.c.h.b16 %v2361
        %v2797 = vunpack.c.l.b16 %v2362
        %v2798 = vunpack.c.l.b16 %v2363
        %v2799 = vunpack.c.h.b16 %v2363
        %v2800 = vunpack.c.l.b16 %v2364
        %v2801 = vunpack.c.l.b16 %v2365
        %v2802 = vunpack.c.h.b16 %v2365
        %v2803 = vunpack.c.l.b16 %v2366
        %v2804 = vunpack.c.l.b16 %v2367
        %v2805 = vunpack.c.h.b16 %v2367
        %v2806 = vunpack.c.l.b16 %v2368
        %v2807 = vunpack.c.l.b16 %v2369
        %v2808 = vunpack.c.h.b16 %v2369
        %v2809 = vunpack.c.l.b16 %v2370
        %v2810 = vunpack.c.l.b16 %v2371
        %v2811 = vunpack.c.h.b16 %v2371
        %v2812 = vunpack.c.l.b16 %v2372
        %v2813 = vunpack.c.l.b16 %v2373
        %v2814 = vunpack.c.h.b16 %v2373
        %v2815 = vunpack.c.l.b16 %v2374
        %v2816 = vunpack.c.l.b16 %v2375
        %v2817 = vunpack.c.h.b16 %v2375
        %v2818 = vunpack.c.l.b16 %v2376
        %v2819 = vunpack.c.l.b16 %v2377
        %v2820 = vunpack.c.h.b16 %v2377
        %v2821 = vunpack.c.l.b16 %v2378
        %v2822 = vunpack.c.l.b16 %v2379
        %v2823 = vunpack.c.h.b16 %v2379
        %v2824 = vunpack.c.l.b16 %v2380
        %v2825 = vunpack.c.l.b16 %v2381
        %v2826 = vunpack.c.h.b16 %v2381
        %v2827 = vunpack.c.l.b16 %v2382
        %v2828 = vunpack.c.l.b16 %v2383
        %v2829 = vunpack.c.h.b16 %v2383
        %v2830 = vunpack.c.l.b16 %v2384
        %v2831 = vunpack.c.l.b16 %v2385
        %v2832 = vunpack.c.h.b16 %v2385
        %v2833 = vunpack.c.l.b16 %v2386
        %v2834 = vunpack.c.l.b16 %v2387
        %v2835 = vunpack.c.h.b16 %v2387
        %v2836 = vunpack.c.l.b16 %v2388
        %v2837 = vunpack.c.l.b16 %v2389
        %v2838 = vunpack.c.h.b16 %v2389
        %v2839 = vunpack.c.l.b16 %v2390
        %v2840 = vunpack.c.l.b16 %v2391
        %v2841 = vunpack.c.h.b16 %v2391
        %v2842 = vunpack.c.l.b16 %v2392
        %v2843 = vunpack.c.l.b16 %v2393
        %v2844 = vunpack.c.h.b16 %v2393
        %v2845 = vunpack.c.l.b16 %v2394
        %v2846 = vunpack.c.l.b16 %v2395
        %v2847 = vunpack.c.h.b16 %v2395
        %v2848 = vunpack.c.l.b16 %v2396
        %v2849 = vunpack.c.l.b16 %v2397
        %v2850 = vunpack.c.h.b16 %v2397
        %v2851 = vunpack.c.l.b16 %v2398
        %v2852 = vunpack.c.l.b16 %v2399
        %v2853 = vunpack.c.h.b16 %v2399
        %v2854 = vunpack.c.l.b16 %v2400
        %v2855 = vunpack.c.l.b16 %v2401
        %v2856 = vunpack.c.h.b16 %v2401
        %v2857 = vunpack.c.l.b16 %v2402
        %v2858 = vunpack.c.l.b16 %v2403
        %v2859 = vunpack.c.h.b16 %v2403
        %v2860 = vunpack.c.l.b16 %v2404
        %v2861 = vunpack.c.l.b16 %v2405
        %v2862 = vunpack.c.h.b16 %v2405
        %v2863 = vunpack.c.l.b16 %v2406
        %v2864 = vunpack.c.l.b16 %v2407
        %v2865 = vunpack.c.h.b16 %v2407
        %v2866 = vunpack.c.l.b16 %v2408
        %v2867 = vunpack.c.l.b16 %v2409
        %v2868 = vunpack.c.h.b16 %v2409
        %v2869 = vunpack.c.l.b16 %v2410
        %v2870 = vunpack.c.l.b16 %v2411
        %v2871 = vunpack.c.h.b16 %v2411
        %v2872 = vunpack.c.l.b16 %v2412
        %v2873 = vunpack.c.l.b16 %v2413
        %v2874 = vunpack.c.h.b16 %v2413
        %v2875 = vunpack.c.l.b16 %v2414
        %v2876 = vunpack.c.l.b16 %v2415
        %v2877 = vunpack.c.h.b16 %v2415
        %v2878 = vunpack.c.l.b16 %v2416
        %v2879 = vunpack.c.l.b16 %v2417
        %v2880 = vunpack.c.h.b16 %v2417
        %v2881 = vunpack.c.l.b16 %v2418
        %v2882 = vunpack.c.l.b16 %v2419
        %v2883 = vunpack.c.h.b16 %v2419
        %v2884 = vunpack.c.l.b16 %v2420
        %v2885 = vunpack.c.l.b16 %v2421
        %v2886 = vunpack.c.h.b16 %v2421
        %v2887 = vunpack.c.l.b16 %v2422
        %v2888 = vunpack.c.l.b16 %v2423
        %v2889 = vunpack.c.h.b16 %v2423
        %v2890 = vunpack.c.l.b16 %v2424
        %v2891 = vunpack.c.l.b16 %v2425
        %v2892 = vunpack.c.h.b16 %v2425
        %v2893 = vunpack.c.l.b16 %v2426
        %v2894 = vunpack.c.l.b16 %v2427
        %v2895 = vunpack.c.h.b16 %v2427
        %v2896 = vunpack.c.l.b16 %v2428
        %v2897 = vunpack.c.l.b16 %v2429
        %v2898 = vunpack.c.h.b16 %v2429
        %v2899 = vunpack.c.l.b16 %v2430
        %v2900 = vunpack.c.l.b16 %v2431
        %v2901 = vunpack.c.h.b16 %v2431
        %v2902 = vunpack.c.l.b16 %v2432
        %v2903 = vpack.c.b16 %v2738, %v2735
        %v2904 = vpack.c.b16 %v2739, %v2736
        %v2905 = vpack.c.b16 %v2740, %v2737
        %v2906 = vpack.c.b16 %v2744, %v2741
        %v2907 = vpack.c.b16 %v2745, %v2742
        %v2908 = vpack.c.b16 %v2746, %v2743
        %v2909 = vpack.c.b16 %v2750, %v2747
        %v2910 = vpack.c.b16 %v2751, %v2748
        %v2911 = vpack.c.b16 %v2752, %v2749
        %v2912 = vpack.c.b16 %v2756, %v2753
        %v2913 = vpack.c.b16 %v2757, %v2754
        %v2914 = vpack.c.b16 %v2758, %v2755
        %v2915 = vpack.c.b16 %v2762, %v2759
        %v2916 = vpack.c.b16 %v2763, %v2760
        %v2917 = vpack.c.b16 %v2764, %v2761
        %v2918 = vpack.c.b16 %v2768, %v2765
        %v2919 = vpack.c.b16 %v2769, %v2766
        %v2920 = vpack.c.b16 %v2770, %v2767
        %v2921 = vpack.c.b16 %v2774, %v2771
        %v2922 = vpack.c.b16 %v2775, %v2772
        %v2923 = vpack.c.b16 %v2776, %v2773
        %v2924 = vpack.c.b16 %v2780, %v2777
        %v2925 = vpack.c.b16 %v2781, %v2778
        %v2926 = vpack.c.b16 %v2782, %v2779
        %v2927 = vpack.c.b16 %v2786, %v2783
        %v2928 = vpack.c.b16 %v2787, %v2784
        %v2929 = vpack.c.b16 %v2788, %v2785
        %v2930 = vpack.c.b16 %v2792, %v2789
        %v2931 = vpack.c.b16 %v2793, %v2790
        %v2932 = vpack.c.b16 %v2794, %v2791
        %v2933 = vpack.c.b16 %v2798, %v2795
        %v2934 = vpack.c.b16 %v2799, %v2796
        %v2935 = vpack.c.b16 %v2800, %v2797
        %v2936 = vpack.c.b16 %v2804, %v2801
        %v2937 = vpack.c.b16 %v2805, %v2802
        %v2938 = vpack.c.b16 %v2806, %v2803
        %v2939 = vpack.c.b16 %v2810, %v2807
        %v2940 = vpack.c.b16 %v2811, %v2808
        %v2941 = vpack.c.b16 %v2812, %v2809
        %v2942 = vpack.c.b16 %v2816, %v2813
        %v2943 = vpack.c.b16 %v2817, %v2814
        %v2944 = vpack.c.b16 %v2818, %v2815
        %v2945 = vpack.c.b16 %v2822, %v2819
        %v2946 = vpack.c.b16 %v2823, %v2820
        %v2947 = vpack.c.b16 %v2824, %v2821
        %v2948 = vpack.c.b16 %v2828, %v2825
        %v2949 = vpack.c.b16 %v2829, %v2826
        %v2950 = vpack.c.b16 %v2830, %v2827
        %v2951 = vpack.c.b16 %v2834, %v2831
        %v2952 = vpack.c.b16 %v2835, %v2832
        %v2953 = vpack.c.b16 %v2836, %v2833
        %v2954 = vpack.c.b16 %v2840, %v2837
        %v2955 = vpack.c.b16 %v2841, %v2838
        %v2956 = vpack.c.b16 %v2842, %v2839
        %v2957 = vpack.c.b16 %v2846, %v2843
        %v2958 = vpack.c.b16 %v2847, %v2844
        %v2959 = vpack.c.b16 %v2848, %v2845
        %v2960 = vpack.c.b16 %v2852, %v2849
        %v2961 = vpack.c.b16 %v2853, %v2850
        %v2962 = vpack.c.b16 %v2854, %v2851
        %v2963 = vpack.c.b16 %v2858, %v2855
        %v2964 = vpack.c.b16 %v2859, %v2856
        %v2965 = vpack.c.b16 %v2860, %v2857
        %v2966 = vpack.c.b16 %v2864, %v2861
        %v2967 = vpack.c.b16 %v2865, %v2862
        %v2968 = vpack.c.b16 %v2866, %v2863
        %v2969 = vpack.c.b16 %v2870, %v2867
        %v2970 = vpack.c.b16 %v2871, %v2868
        %v2971 = vpack.c.b16 %v2872, %v2869
        %v2972 = vpack.c.b16 %v2876, %v2873
        %v2973 = vpack.c.b16 %v2877, %v2874
        %v2974 = vpack.c.b16 %v2878, %v2875
        %v2975 = vpack.c.b16 %v2882, %v2879
        %v2976 = vpack.c.b16 %v2883, %v2880
        %v2977 = vpack.c.b16 %v2884, %v2881
        %v2978 = vpack.c.b16 %v2888, %v2885
        %v2979 = vpack.c.b16 %v2889, %v2886
        %v2980 = vpack.c.b16 %v2890, %v2887
        %v2981 = vpack.c.b16 %v2894, %v2891
        %v2982 = vpack.c.b16 %v2895, %v2892
        %v2983 = vpack.c.b16 %v2896, %v2893
        %v2984 = vpack.c.b16 %v2900, %v2897
        %v2985 = vpack.c.b16 %v2901, %v2898
        %v2986 = vpack.c.b16 %v2902, %v2899
        %vm3071 = vcmask 523264
        %v3073 = vsel %vm3071, %v2619, 0
        %3075 = vmatprep.subr.bf16.mxu0 %v2904
        %3076 = vmatpush1.bf16.msra.mxu0 %v2903
        %3077 = vmatprep.subr.bf16.mxu0 %v2907
        %3078 = vmatpush1.bf16.msra.mxu0 %v2906
        %3079 = vmatprep.subr.bf16.mxu0 %v2910
        %3080 = vmatpush1.bf16.msra.mxu0 %v2909
        %3081 = vmatprep.subr.bf16.mxu0 %v2913
        %3082 = vmatpush1.bf16.msra.mxu0 %v2912
        %3083 = vmatprep.subr.bf16.mxu0 %v2916
        %3084 = vmatpush1.bf16.msra.mxu0 %v2915
        %3085 = vmatprep.subr.bf16.mxu0 %v2919
        %3086 = vmatpush1.bf16.msra.mxu0 %v2918
        %3087 = vmatprep.subr.bf16.mxu0 %v2922
        %3088 = vmatpush1.bf16.msra.mxu0 %v2921
        %3089 = vmatprep.subr.bf16.mxu0 %v2925
        %3090 = vmatpush1.bf16.msra.mxu0 %v2924
        %3091 = vmatprep.subr.bf16.mxu0 %v2928
        %3092 = vmatpush1.bf16.msra.mxu0 %v2927
        %3093 = vmatprep.subr.bf16.mxu0 %v2931
        %3094 = vmatpush1.bf16.msra.mxu0 %v2930
        %3095 = vmatprep.subr.bf16.mxu0 %v2934
        %3096 = vmatpush1.bf16.msra.mxu0 %v2933
        %3097 = vmatprep.subr.bf16.mxu0 %v2937
        %3098 = vmatpush1.bf16.msra.mxu0 %v2936
        %3099 = vmatprep.subr.bf16.mxu0 %v2940
        %3100 = vmatpush1.bf16.msra.mxu0 %v2939
        %3101 = vmatprep.subr.bf16.mxu0 %v2943
        %3102 = vmatpush1.bf16.msra.mxu0 %v2942
        %3103 = vmatprep.subr.bf16.mxu0 %v2946
        %3104 = vmatpush1.bf16.msra.mxu0 %v2945
        %3105 = vmatprep.subr.bf16.mxu0 %v2949
        %3106 = vmatpush1.bf16.msra.mxu0 %v2948
        %3107 = vmatprep.mubr.bf16.mxu0 %v2617
        %3108 = vmatmul.mubr.bf16.gmra.mrb[0].mxu0 %v2616
        %v3109 = vpop.f32.mrb[0].mxu0
        %v3110 = vadd.f32 0.0, %v3109
        %v3111 = vpop.f32.mrb[0].mxu0
        %v3112 = vadd.f32 0.0, %v3111
        %v3113 = vpop.f32.mrb[0].mxu0
        %v3114 = vadd.f32 0.0, %v3113
        %v3115 = vpop.f32.mrb[0].mxu0
        %v3116 = vadd.f32 0.0, %v3115
        %3117 = vdwg.mxu0
        %3118 = vmatprep.subr.bf16.mxu0 %v2952
        %3119 = vmatpush1.bf16.msra.mxu0 %v2951
        %3120 = vmatprep.subr.bf16.mxu0 %v2955
        %3121 = vmatpush1.bf16.msra.mxu0 %v2954
        %3122 = vmatprep.subr.bf16.mxu0 %v2958
        %3123 = vmatpush1.bf16.msra.mxu0 %v2957
        %3124 = vmatprep.subr.bf16.mxu0 %v2961
        %3125 = vmatpush1.bf16.msra.mxu0 %v2960
        %3126 = vmatprep.subr.bf16.mxu0 %v2964
        %3127 = vmatpush1.bf16.msra.mxu0 %v2963
        %3128 = vmatprep.subr.bf16.mxu0 %v2967
        %3129 = vmatpush1.bf16.msra.mxu0 %v2966
        %3130 = vmatprep.subr.bf16.mxu0 %v2970
        %3131 = vmatpush1.bf16.msra.mxu0 %v2969
        %3132 = vmatprep.subr.bf16.mxu0 %v2973
        %3133 = vmatpush1.bf16.msra.mxu0 %v2972
        %3134 = vmatprep.subr.bf16.mxu0 %v2976
        %3135 = vmatpush1.bf16.msra.mxu0 %v2975
        %3136 = vmatprep.subr.bf16.mxu0 %v2979
        %3137 = vmatpush1.bf16.msra.mxu0 %v2978
        %3138 = vmatprep.subr.bf16.mxu0 %v2982
        %3139 = vmatpush1.bf16.msra.mxu0 %v2981
        %3140 = vmatprep.subr.bf16.mxu0 %v2985
        %3141 = vmatpush1.bf16.msra.mxu0 %v2984
        %3142 = vmatprep.subr.bf16.mxu0 0
        %3143 = vmatpush1.bf16.msra.mxu0 0
        %3144 = vmatprep.subr.bf16.mxu0 0
        %3145 = vmatpush1.bf16.msra.mxu0 0
        %3146 = vmatprep.subr.bf16.mxu0 0
        %3147 = vmatpush1.bf16.msra.mxu0 0
        %3148 = vmatprep.subr.bf16.mxu0 0
        %3149 = vmatpush1.bf16.msra.mxu0 0
        %3150 = vmatprep.mubr.bf16.mxu0 %v3073
        %3151 = vmatmul.mubr.bf16.gmra.mrb[0].mxu0 %v2618
        %v3152 = vpop.f32.mrb[0].mxu0
        %v3153 = vadd.f32 %v3110, %v3152
        %v3154 = vpop.f32.mrb[0].mxu0
        %v3155 = vadd.f32 %v3112, %v3154
        %v3156 = vpop.f32.mrb[0].mxu0
        %v3157 = vadd.f32 %v3114, %v3156
        %v3158 = vpop.f32.mrb[0].mxu0
        %v3159 = vadd.f32 %v3116, %v3158
        %3160 = vdwg.mxu0
        %3161 = vmatprep.subr.bf16.mxu0 0
        %3162 = vmatpush1.bf16.msra.mxu0 %v2905
        %3163 = vmatprep.subr.bf16.mxu0 0
        %3164 = vmatpush1.bf16.msra.mxu0 %v2908
        %3165 = vmatprep.subr.bf16.mxu0 0
        %3166 = vmatpush1.bf16.msra.mxu0 %v2911
        %3167 = vmatprep.subr.bf16.mxu0 0
        %3168 = vmatpush1.bf16.msra.mxu0 %v2914
        %3169 = vmatprep.subr.bf16.mxu0 0
        %3170 = vmatpush1.bf16.msra.mxu0 %v2917
        %3171 = vmatprep.subr.bf16.mxu0 0
        %3172 = vmatpush1.bf16.msra.mxu0 %v2920
        %3173 = vmatprep.subr.bf16.mxu0 0
        %3174 = vmatpush1.bf16.msra.mxu0 %v2923
        %3175 = vmatprep.subr.bf16.mxu0 0
        %3176 = vmatpush1.bf16.msra.mxu0 %v2926
        %3177 = vmatprep.subr.bf16.mxu0 0
        %3178 = vmatpush1.bf16.msra.mxu0 %v2929
        %3179 = vmatprep.subr.bf16.mxu0 0
        %3180 = vmatpush1.bf16.msra.mxu0 %v2932
        %3181 = vmatprep.subr.bf16.mxu0 0
        %3182 = vmatpush1.bf16.msra.mxu0 %v2935
        %3183 = vmatprep.subr.bf16.mxu0 0
        %3184 = vmatpush1.bf16.msra.mxu0 %v2938
        %3185 = vmatprep.subr.bf16.mxu0 0
        %3186 = vmatpush1.bf16.msra.mxu0 %v2941
        %3187 = vmatprep.subr.bf16.mxu0 0
        %3188 = vmatpush1.bf16.msra.mxu0 %v2944
        %3189 = vmatprep.subr.bf16.mxu0 0
        %3190 = vmatpush1.bf16.msra.mxu0 %v2947
        %3191 = vmatprep.subr.bf16.mxu0 0
        %3192 = vmatpush1.bf16.msra.mxu0 %v2950
        %3193 = vmatprep.mubr.bf16.mxu0 %v2617
        %3194 = vmatmul.mubr.bf16.gmra.mrb[0].mxu0 %v2616
        %v3195 = vpop.f32.mrb[0].mxu0
        %v3196 = vadd.f32 0.0, %v3195
        %v3197 = vpop.f32.mrb[0].mxu0
        %v3198 = vpop.f32.mrb[0].mxu0
        %v3199 = vadd.f32 0.0, %v3198
        %v3200 = vpop.f32.mrb[0].mxu0
        %3201 = vdwg.mxu0
        %3202 = vmatprep.subr.bf16.mxu0 0
        %3203 = vmatpush1.bf16.msra.mxu0 %v2953
        %3204 = vmatprep.subr.bf16.mxu0 0
        %3205 = vmatpush1.bf16.msra.mxu0 %v2956
        %3206 = vmatprep.subr.bf16.mxu0 0
        %3207 = vmatpush1.bf16.msra.mxu0 %v2959
        %3208 = vmatprep.subr.bf16.mxu0 0
        %3209 = vmatpush1.bf16.msra.mxu0 %v2962
        %3210 = vmatprep.subr.bf16.mxu0 0
        %3211 = vmatpush1.bf16.msra.mxu0 %v2965
        %3212 = vmatprep.subr.bf16.mxu0 0
        %3213 = vmatpush1.bf16.msra.mxu0 %v2968
        %3214 = vmatprep.subr.bf16.mxu0 0
        %3215 = vmatpush1.bf16.msra.mxu0 %v2971
        %3216 = vmatprep.subr.bf16.mxu0 0
        %3217 = vmatpush1.bf16.msra.mxu0 %v2974
        %3218 = vmatprep.subr.bf16.mxu0 0
        %3219 = vmatpush1.bf16.msra.mxu0 %v2977
        %3220 = vmatprep.subr.bf16.mxu0 0
        %3221 = vmatpush1.bf16.msra.mxu0 %v2980
        %3222 = vmatprep.subr.bf16.mxu0 0
        %3223 = vmatpush1.bf16.msra.mxu0 %v2983
        %3224 = vmatprep.subr.bf16.mxu0 0
        %3225 = vmatpush1.bf16.msra.mxu0 %v2986
        %3226 = vmatprep.subr.bf16.mxu0 0
        %3227 = vmatpush1.bf16.msra.mxu0 0
        %3228 = vmatprep.subr.bf16.mxu0 0
        %3229 = vmatpush1.bf16.msra.mxu0 0
        %3230 = vmatprep.subr.bf16.mxu0 0
        %3231 = vmatpush1.bf16.msra.mxu0 0
        %3232 = vmatprep.subr.bf16.mxu0 0
        %3233 = vmatpush1.bf16.msra.mxu0 0
        %3234 = vmatprep.mubr.bf16.mxu0 %v3073
        %3235 = vmatmul.mubr.bf16.gmra.mrb[0].mxu0 %v2618
        %v3236 = vpop.f32.mrb[0].mxu0
        %v3237 = vadd.f32 %v3196, %v3236
        %v3238 = vpop.f32.mrb[0].mxu0
        %v3239 = vpop.f32.mrb[0].mxu0
        %v3240 = vadd.f32 %v3199, %v3239
        %v3241 = vpop.f32.mrb[0].mxu0
        %3242 = vdwg.mxu0
        %s3243 = scalar_lea.vmem [#allocation9], 672
        %v3244 = vld [vmem:[%s3243] sm:$0xff]
        %v3245 = vld [vmem:[%s3243 + $0x8] sm:$0xf]
        %v3246 = vld [vmem:[%s3243 + $0xc] sm:$0xff]
        %v3247 = vld [vmem:[%s3243 + $0x14] sm:$0xf]
        %v3248 = vld [vmem:[%s3243 + $0x18] sm:$0xff]
        %v3249 = vld [vmem:[%s3243 + $0x20] sm:$0xf]
        %v3250 = vld [vmem:[%s3243 + $0x24] sm:$0xff]
        %v3251 = vld [vmem:[%s3243 + $0x2c] sm:$0xf]
        %v3252 = vld [vmem:[%s3243 + $0x30] sm:$0xff]
        %v3253 = vld [vmem:[%s3243 + $0x38] sm:$0xf]
        %v3254 = vld [vmem:[%s3243 + $0x3c] sm:$0xff]
        %v3255 = vld [vmem:[%s3243 + $0x44] sm:$0xf]
        %v3256 = vld [vmem:[%s3243 + $0x48] sm:$0xff]
        %v3257 = vld [vmem:[%s3243 + $0x50] sm:$0xf]
        %v3258 = vld [vmem:[%s3243 + $0x54] sm:$0xff]
        %v3259 = vld [vmem:[%s3243 + $0x5c] sm:$0xf]
        %v3260 = vld [vmem:[%s3243 + $0x60] sm:$0xff]
        %v3261 = vld [vmem:[%s3243 + $0x68] sm:$0xf]
        %v3262 = vld [vmem:[%s3243 + $0x6c] sm:$0xff]
        %v3263 = vld [vmem:[%s3243 + $0x74] sm:$0xf]
        %v3264 = vld [vmem:[%s3243 + $0x78] sm:$0xff]
        %v3265 = vld [vmem:[%s3243 + $0x80] sm:$0xf]
        %v3266 = vld [vmem:[%s3243 + $0x84] sm:$0xff]
        %v3267 = vld [vmem:[%s3243 + $0x8c] sm:$0xf]
        %v3268 = vld [vmem:[%s3243 + $0x90] sm:$0xff]
        %v3269 = vld [vmem:[%s3243 + $0x98] sm:$0xf]
        %v3270 = vld [vmem:[%s3243 + $0x9c] sm:$0xff]
        %v3271 = vld [vmem:[%s3243 + $0xa4] sm:$0xf]
        %v3272 = vld [vmem:[%s3243 + $0xa8] sm:$0xff]
        %v3273 = vld [vmem:[%s3243 + $0xb0] sm:$0xf]
        %v3274 = vld [vmem:[%s3243 + $0xb4] sm:$0xff]
        %v3275 = vld [vmem:[%s3243 + $0xbc] sm:$0xf]
        %v3276 = vld [vmem:[%s3243 + $0xc0] sm:$0xff]
        %v3277 = vld [vmem:[%s3243 + $0xc8] sm:$0xf]
        %v3278 = vld [vmem:[%s3243 + $0xcc] sm:$0xff]
        %v3279 = vld [vmem:[%s3243 + $0xd4] sm:$0xf]
        %v3280 = vld [vmem:[%s3243 + $0xd8] sm:$0xff]
        %v3281 = vld [vmem:[%s3243 + $0xe0] sm:$0xf]
        %v3282 = vld [vmem:[%s3243 + $0xe4] sm:$0xff]
        %v3283 = vld [vmem:[%s3243 + $0xec] sm:$0xf]
        %v3284 = vld [vmem:[%s3243 + $0xf0] sm:$0xff]
        %v3285 = vld [vmem:[%s3243 + $0xf8] sm:$0xf]
        %v3286 = vld [vmem:[%s3243 + $0xfc] sm:$0xff]
        %v3287 = vld [vmem:[%s3243 + $0x104] sm:$0xf]
        %v3288 = vld [vmem:[%s3243 + $0x108] sm:$0xff]
        %v3289 = vld [vmem:[%s3243 + $0x110] sm:$0xf]
        %v3290 = vld [vmem:[%s3243 + $0x114] sm:$0xff]
        %v3291 = vld [vmem:[%s3243 + $0x11c] sm:$0xf]
        %v3292 = vld [vmem:[%s3243 + $0x120] sm:$0xff]
        %v3293 = vld [vmem:[%s3243 + $0x128] sm:$0xf]
        %v3294 = vld [vmem:[%s3243 + $0x12c] sm:$0xff]
        %v3295 = vld [vmem:[%s3243 + $0x134] sm:$0xf]
        %v3296 = vld [vmem:[%s3243 + $0x138] sm:$0xff]
        %v3297 = vld [vmem:[%s3243 + $0x140] sm:$0xf]
        %v3298 = vld [vmem:[%s3243 + $0x144] sm:$0xff]
        %v3299 = vld [vmem:[%s3243 + $0x14c] sm:$0xf]
        %v3300 = vld [vmem:[%s3243 + $0x150] sm:$0xff]
        %v3301 = vld [vmem:[%s3243 + $0x158] sm:$0xf]
        %v3302 = vld [vmem:[%s3243 + $0x15c] sm:$0xff]
        %v3303 = vld [vmem:[%s3243 + $0x164] sm:$0xf]
        %v3304 = vld [vmem:[%s3243 + $0x168] sm:$0xff]
        %v3305 = vld [vmem:[%s3243 + $0x170] sm:$0xf]
        %v3306 = vld [vmem:[%s3243 + $0x174] sm:$0xff]
        %v3307 = vld [vmem:[%s3243 + $0x17c] sm:$0xf]
        %v3308 = vld [vmem:[%s3243 + $0x180] sm:$0xff]
        %v3309 = vld [vmem:[%s3243 + $0x188] sm:$0xf]
        %v3310 = vld [vmem:[%s3243 + $0x18c] sm:$0xff]
        %v3311 = vld [vmem:[%s3243 + $0x194] sm:$0xf]
        %v3312 = vld [vmem:[%s3243 + $0x198] sm:$0xff]
        %v3313 = vld [vmem:[%s3243 + $0x1a0] sm:$0xf]
        %v3314 = vld [vmem:[%s3243 + $0x1a4] sm:$0xff]
        %v3315 = vld [vmem:[%s3243 + $0x1ac] sm:$0xf]
        %v3316 = vld [vmem:[%s3243 + $0x1b0] sm:$0xff]
        %v3317 = vld [vmem:[%s3243 + $0x1b8] sm:$0xf]
        %v3318 = vld [vmem:[%s3243 + $0x1bc] sm:$0xff]
        %v3319 = vld [vmem:[%s3243 + $0x1c4] sm:$0xf]
        %v3320 = vld [vmem:[%s3243 + $0x1c8] sm:$0xff]
        %v3321 = vld [vmem:[%s3243 + $0x1d0] sm:$0xf]
        %v3322 = vld [vmem:[%s3243 + $0x1d4] sm:$0xff]
        %v3323 = vld [vmem:[%s3243 + $0x1dc] sm:$0xf]
        %v3324 = vld [vmem:[%s3243 + $0x1e0] sm:$0xff]
        %v3325 = vld [vmem:[%s3243 + $0x1e8] sm:$0xf]
        %v3326 = vld [vmem:[%s3243 + $0x1ec] sm:$0xff]
        %v3327 = vld [vmem:[%s3243 + $0x1f4] sm:$0xf]
        %v3328 = vld [vmem:[%s3243 + $0x1f8] sm:$0xff]
        %v3329 = vld [vmem:[%s3243 + $0x200] sm:$0xf]
        %v3330 = vld [vmem:[%s3243 + $0x204] sm:$0xff]
        %v3331 = vld [vmem:[%s3243 + $0x20c] sm:$0xf]
        %v3332 = vld [vmem:[%s3243 + $0x210] sm:$0xff]
        %v3333 = vld [vmem:[%s3243 + $0x218] sm:$0xf]
        %v3334 = vld [vmem:[%s3243 + $0x21c] sm:$0xff]
        %v3335 = vld [vmem:[%s3243 + $0x224] sm:$0xf]
        %v3336 = vld [vmem:[%s3243 + $0x228] sm:$0xff]
        %v3337 = vld [vmem:[%s3243 + $0x230] sm:$0xf]
        %v3338 = vld [vmem:[%s3243 + $0x234] sm:$0xff]
        %v3339 = vld [vmem:[%s3243 + $0x23c] sm:$0xf]
        %v3340 = vld [vmem:[%s3243 + $0x240] sm:$0xff]
        %v3341 = vld [vmem:[%s3243 + $0x248] sm:$0xf]
        %v3342 = vld [vmem:[%s3243 + $0x24c] sm:$0xff]
        %v3343 = vld [vmem:[%s3243 + $0x254] sm:$0xf]
        %v3344 = vld [vmem:[%s3243 + $0x258] sm:$0xff]
        %v3345 = vld [vmem:[%s3243 + $0x260] sm:$0xf]
        %v3346 = vld [vmem:[%s3243 + $0x264] sm:$0xff]
        %v3347 = vld [vmem:[%s3243 + $0x26c] sm:$0xf]
        %v3348 = vld [vmem:[%s3243 + $0x270] sm:$0xff]
        %v3349 = vld [vmem:[%s3243 + $0x278] sm:$0xf]
        %v3350 = vld [vmem:[%s3243 + $0x27c] sm:$0xff]
        %v3351 = vld [vmem:[%s3243 + $0x284] sm:$0xf]
        %v3352 = vld [vmem:[%s3243 + $0x288] sm:$0xff]
        %v3353 = vld [vmem:[%s3243 + $0x290] sm:$0xf]
        %v3354 = vld [vmem:[%s3243 + $0x294] sm:$0xff]
        %v3355 = vld [vmem:[%s3243 + $0x29c] sm:$0xf]
        %v3468 = vunpack.c.l.b16 %v3244
        %v3469 = vunpack.c.h.b16 %v3244
        %v3470 = vunpack.c.l.b16 %v3245
        %v3471 = vunpack.c.l.b16 %v3246
        %v3472 = vunpack.c.h.b16 %v3246
        %v3473 = vunpack.c.l.b16 %v3247
        %v3474 = vunpack.c.l.b16 %v3248
        %v3475 = vunpack.c.h.b16 %v3248
        %v3476 = vunpack.c.l.b16 %v3249
        %v3477 = vunpack.c.l.b16 %v3250
        %v3478 = vunpack.c.h.b16 %v3250
        %v3479 = vunpack.c.l.b16 %v3251
        %v3480 = vunpack.c.l.b16 %v3252
        %v3481 = vunpack.c.h.b16 %v3252
        %v3482 = vunpack.c.l.b16 %v3253
        %v3483 = vunpack.c.l.b16 %v3254
        %v3484 = vunpack.c.h.b16 %v3254
        %v3485 = vunpack.c.l.b16 %v3255
        %v3486 = vunpack.c.l.b16 %v3256
        %v3487 = vunpack.c.h.b16 %v3256
        %v3488 = vunpack.c.l.b16 %v3257
        %v3489 = vunpack.c.l.b16 %v3258
        %v3490 = vunpack.c.h.b16 %v3258
        %v3491 = vunpack.c.l.b16 %v3259
        %v3492 = vunpack.c.l.b16 %v3260
        %v3493 = vunpack.c.h.b16 %v3260
        %v3494 = vunpack.c.l.b16 %v3261
        %v3495 = vunpack.c.l.b16 %v3262
        %v3496 = vunpack.c.h.b16 %v3262
        %v3497 = vunpack.c.l.b16 %v3263
        %v3498 = vunpack.c.l.b16 %v3264
        %v3499 = vunpack.c.h.b16 %v3264
        %v3500 = vunpack.c.l.b16 %v3265
        %v3501 = vunpack.c.l.b16 %v3266
        %v3502 = vunpack.c.h.b16 %v3266
        %v3503 = vunpack.c.l.b16 %v3267
        %v3504 = vunpack.c.l.b16 %v3268
        %v3505 = vunpack.c.h.b16 %v3268
        %v3506 = vunpack.c.l.b16 %v3269
        %v3507 = vunpack.c.l.b16 %v3270
        %v3508 = vunpack.c.h.b16 %v3270
        %v3509 = vunpack.c.l.b16 %v3271
        %v3510 = vunpack.c.l.b16 %v3272
        %v3511 = vunpack.c.h.b16 %v3272
        %v3512 = vunpack.c.l.b16 %v3273
        %v3513 = vunpack.c.l.b16 %v3274
        %v3514 = vunpack.c.h.b16 %v3274
        %v3515 = vunpack.c.l.b16 %v3275
        %v3516 = vunpack.c.l.b16 %v3276
        %v3517 = vunpack.c.h.b16 %v3276
        %v3518 = vunpack.c.l.b16 %v3277
        %v3519 = vunpack.c.l.b16 %v3278
        %v3520 = vunpack.c.h.b16 %v3278
        %v3521 = vunpack.c.l.b16 %v3279
        %v3522 = vunpack.c.l.b16 %v3280
        %v3523 = vunpack.c.h.b16 %v3280
        %v3524 = vunpack.c.l.b16 %v3281
        %v3525 = vunpack.c.l.b16 %v3282
        %v3526 = vunpack.c.h.b16 %v3282
        %v3527 = vunpack.c.l.b16 %v3283
        %v3528 = vunpack.c.l.b16 %v3284
        %v3529 = vunpack.c.h.b16 %v3284
        %v3530 = vunpack.c.l.b16 %v3285
        %v3531 = vunpack.c.l.b16 %v3286
        %v3532 = vunpack.c.h.b16 %v3286
        %v3533 = vunpack.c.l.b16 %v3287
        %v3534 = vunpack.c.l.b16 %v3288
        %v3535 = vunpack.c.h.b16 %v3288
        %v3536 = vunpack.c.l.b16 %v3289
        %v3537 = vunpack.c.l.b16 %v3290
        %v3538 = vunpack.c.h.b16 %v3290
        %v3539 = vunpack.c.l.b16 %v3291
        %v3540 = vunpack.c.l.b16 %v3292
        %v3541 = vunpack.c.h.b16 %v3292
        %v3542 = vunpack.c.l.b16 %v3293
        %v3543 = vunpack.c.l.b16 %v3294
        %v3544 = vunpack.c.h.b16 %v3294
        %v3545 = vunpack.c.l.b16 %v3295
        %v3546 = vunpack.c.l.b16 %v3296
        %v3547 = vunpack.c.h.b16 %v3296
        %v3548 = vunpack.c.l.b16 %v3297
        %v3549 = vunpack.c.l.b16 %v3298
        %v3550 = vunpack.c.h.b16 %v3298
        %v3551 = vunpack.c.l.b16 %v3299
        %v3552 = vunpack.c.l.b16 %v3300
        %v3553 = vunpack.c.h.b16 %v3300
        %v3554 = vunpack.c.l.b16 %v3301
        %v3555 = vunpack.c.l.b16 %v3302
        %v3556 = vunpack.c.h.b16 %v3302
        %v3557 = vunpack.c.l.b16 %v3303
        %v3558 = vunpack.c.l.b16 %v3304
        %v3559 = vunpack.c.h.b16 %v3304
        %v3560 = vunpack.c.l.b16 %v3305
        %v3561 = vunpack.c.l.b16 %v3306
        %v3562 = vunpack.c.h.b16 %v3306
        %v3563 = vunpack.c.l.b16 %v3307
        %v3564 = vunpack.c.l.b16 %v3308
        %v3565 = vunpack.c.h.b16 %v3308
        %v3566 = vunpack.c.l.b16 %v3309
        %v3567 = vunpack.c.l.b16 %v3310
        %v3568 = vunpack.c.h.b16 %v3310
        %v3569 = vunpack.c.l.b16 %v3311
        %v3570 = vunpack.c.l.b16 %v3312
        %v3571 = vunpack.c.h.b16 %v3312
        %v3572 = vunpack.c.l.b16 %v3313
        %v3573 = vunpack.c.l.b16 %v3314
        %v3574 = vunpack.c.h.b16 %v3314
        %v3575 = vunpack.c.l.b16 %v3315
        %v3576 = vunpack.c.l.b16 %v3316
        %v3577 = vunpack.c.h.b16 %v3316
        %v3578 = vunpack.c.l.b16 %v3317
        %v3579 = vunpack.c.l.b16 %v3318
        %v3580 = vunpack.c.h.b16 %v3318
        %v3581 = vunpack.c.l.b16 %v3319
        %v3582 = vunpack.c.l.b16 %v3320
        %v3583 = vunpack.c.h.b16 %v3320
        %v3584 = vunpack.c.l.b16 %v3321
        %v3585 = vunpack.c.l.b16 %v3322
        %v3586 = vunpack.c.h.b16 %v3322
        %v3587 = vunpack.c.l.b16 %v3323
        %v3588 = vunpack.c.l.b16 %v3324
        %v3589 = vunpack.c.h.b16 %v3324
        %v3590 = vunpack.c.l.b16 %v3325
        %v3591 = vunpack.c.l.b16 %v3326
        %v3592 = vunpack.c.h.b16 %v3326
        %v3593 = vunpack.c.l.b16 %v3327
        %v3594 = vunpack.c.l.b16 %v3328
        %v3595 = vunpack.c.h.b16 %v3328
        %v3596 = vunpack.c.l.b16 %v3329
        %v3597 = vunpack.c.l.b16 %v3330
        %v3598 = vunpack.c.h.b16 %v3330
        %v3599 = vunpack.c.l.b16 %v3331
        %v3600 = vunpack.c.l.b16 %v3332
        %v3601 = vunpack.c.h.b16 %v3332
        %v3602 = vunpack.c.l.b16 %v3333
        %v3603 = vunpack.c.l.b16 %v3334
        %v3604 = vunpack.c.h.b16 %v3334
        %v3605 = vunpack.c.l.b16 %v3335
        %v3606 = vunpack.c.l.b16 %v3336
        %v3607 = vunpack.c.h.b16 %v3336
        %v3608 = vunpack.c.l.b16 %v3337
        %v3609 = vunpack.c.l.b16 %v3338
        %v3610 = vunpack.c.h.b16 %v3338
        %v3611 = vunpack.c.l.b16 %v3339
        %v3612 = vunpack.c.l.b16 %v3340
        %v3613 = vunpack.c.h.b16 %v3340
        %v3614 = vunpack.c.l.b16 %v3341
        %v3615 = vunpack.c.l.b16 %v3342
        %v3616 = vunpack.c.h.b16 %v3342
        %v3617 = vunpack.c.l.b16 %v3343
        %v3618 = vunpack.c.l.b16 %v3344
        %v3619 = vunpack.c.h.b16 %v3344
        %v3620 = vunpack.c.l.b16 %v3345
        %v3621 = vunpack.c.l.b16 %v3346
        %v3622 = vunpack.c.h.b16 %v3346
        %v3623 = vunpack.c.l.b16 %v3347
        %v3624 = vunpack.c.l.b16 %v3348
        %v3625 = vunpack.c.h.b16 %v3348
        %v3626 = vunpack.c.l.b16 %v3349
        %v3627 = vunpack.c.l.b16 %v3350
        %v3628 = vunpack.c.h.b16 %v3350
        %v3629 = vunpack.c.l.b16 %v3351
        %v3630 = vunpack.c.l.b16 %v3352
        %v3631 = vunpack.c.h.b16 %v3352
        %v3632 = vunpack.c.l.b16 %v3353
        %v3633 = vunpack.c.l.b16 %v3354
        %v3634 = vunpack.c.h.b16 %v3354
        %v3635 = vunpack.c.l.b16 %v3355
        %v3636 = vpack.c.b16 %v3471, %v3468
        %v3637 = vpack.c.b16 %v3472, %v3469
        %v3638 = vpack.c.b16 %v3473, %v3470
        %v3639 = vpack.c.b16 %v3477, %v3474
        %v3640 = vpack.c.b16 %v3478, %v3475
        %v3641 = vpack.c.b16 %v3479, %v3476
        %v3642 = vpack.c.b16 %v3483, %v3480
        %v3643 = vpack.c.b16 %v3484, %v3481
        %v3644 = vpack.c.b16 %v3485, %v3482
        %v3645 = vpack.c.b16 %v3489, %v3486
        %v3646 = vpack.c.b16 %v3490, %v3487
        %v3647 = vpack.c.b16 %v3491, %v3488
        %v3648 = vpack.c.b16 %v3495, %v3492
        %v3649 = vpack.c.b16 %v3496, %v3493
        %v3650 = vpack.c.b16 %v3497, %v3494
        %v3651 = vpack.c.b16 %v3501, %v3498
        %v3652 = vpack.c.b16 %v3502, %v3499
        %v3653 = vpack.c.b16 %v3503, %v3500
        %v3654 = vpack.c.b16 %v3507, %v3504
        %v3655 = vpack.c.b16 %v3508, %v3505
        %v3656 = vpack.c.b16 %v3509, %v3506
        %v3657 = vpack.c.b16 %v3513, %v3510
        %v3658 = vpack.c.b16 %v3514, %v3511
        %v3659 = vpack.c.b16 %v3515, %v3512
        %v3660 = vpack.c.b16 %v3519, %v3516
        %v3661 = vpack.c.b16 %v3520, %v3517
        %v3662 = vpack.c.b16 %v3521, %v3518
        %v3663 = vpack.c.b16 %v3525, %v3522
        %v3664 = vpack.c.b16 %v3526, %v3523
        %v3665 = vpack.c.b16 %v3527, %v3524
        %v3666 = vpack.c.b16 %v3531, %v3528
        %v3667 = vpack.c.b16 %v3532, %v3529
        %v3668 = vpack.c.b16 %v3533, %v3530
        %v3669 = vpack.c.b16 %v3537, %v3534
        %v3670 = vpack.c.b16 %v3538, %v3535
        %v3671 = vpack.c.b16 %v3539, %v3536
        %v3672 = vpack.c.b16 %v3543, %v3540
        %v3673 = vpack.c.b16 %v3544, %v3541
        %v3674 = vpack.c.b16 %v3545, %v3542
        %v3675 = vpack.c.b16 %v3549, %v3546
        %v3676 = vpack.c.b16 %v3550, %v3547
        %v3677 = vpack.c.b16 %v3551, %v3548
        %v3678 = vpack.c.b16 %v3555, %v3552
        %v3679 = vpack.c.b16 %v3556, %v3553
        %v3680 = vpack.c.b16 %v3557, %v3554
        %v3681 = vpack.c.b16 %v3561, %v3558
        %v3682 = vpack.c.b16 %v3562, %v3559
        %v3683 = vpack.c.b16 %v3563, %v3560
        %v3684 = vpack.c.b16 %v3567, %v3564
        %v3685 = vpack.c.b16 %v3568, %v3565
        %v3686 = vpack.c.b16 %v3569, %v3566
        %v3687 = vpack.c.b16 %v3573, %v3570
        %v3688 = vpack.c.b16 %v3574, %v3571
        %v3689 = vpack.c.b16 %v3575, %v3572
        %v3690 = vpack.c.b16 %v3579, %v3576
        %v3691 = vpack.c.b16 %v3580, %v3577
        %v3692 = vpack.c.b16 %v3581, %v3578
        %v3693 = vpack.c.b16 %v3585, %v3582
        %v3694 = vpack.c.b16 %v3586, %v3583
        %v3695 = vpack.c.b16 %v3587, %v3584
        %v3696 = vpack.c.b16 %v3591, %v3588
        %v3697 = vpack.c.b16 %v3592, %v3589
        %v3698 = vpack.c.b16 %v3593, %v3590
        %v3699 = vpack.c.b16 %v3597, %v3594
        %v3700 = vpack.c.b16 %v3598, %v3595
        %v3701 = vpack.c.b16 %v3599, %v3596
        %v3702 = vpack.c.b16 %v3603, %v3600
        %v3703 = vpack.c.b16 %v3604, %v3601
        %v3704 = vpack.c.b16 %v3605, %v3602
        %v3705 = vpack.c.b16 %v3609, %v3606
        %v3706 = vpack.c.b16 %v3610, %v3607
        %v3707 = vpack.c.b16 %v3611, %v3608
        %v3708 = vpack.c.b16 %v3615, %v3612
        %v3709 = vpack.c.b16 %v3616, %v3613
        %v3710 = vpack.c.b16 %v3617, %v3614
        %v3711 = vpack.c.b16 %v3621, %v3618
        %v3712 = vpack.c.b16 %v3622, %v3619
        %v3713 = vpack.c.b16 %v3623, %v3620
        %v3714 = vpack.c.b16 %v3627, %v3624
        %v3715 = vpack.c.b16 %v3628, %v3625
        %v3716 = vpack.c.b16 %v3629, %v3626
        %v3717 = vpack.c.b16 %v3633, %v3630
        %v3718 = vpack.c.b16 %v3634, %v3631
        %v3719 = vpack.c.b16 %v3635, %v3632
        %3804 = vmatprep.subr.bf16.mxu0 %v3637
        %3805 = vmatpush1.bf16.msra.mxu0 %v3636
        %3806 = vmatprep.subr.bf16.mxu0 %v3640
        %3807 = vmatpush1.bf16.msra.mxu0 %v3639
        %3808 = vmatprep.subr.bf16.mxu0 %v3643
        %3809 = vmatpush1.bf16.msra.mxu0 %v3642
        %3810 = vmatprep.subr.bf16.mxu0 %v3646
        %3811 = vmatpush1.bf16.msra.mxu0 %v3645
        %3812 = vmatprep.subr.bf16.mxu0 %v3649
        %3813 = vmatpush1.bf16.msra.mxu0 %v3648
        %3814 = vmatprep.subr.bf16.mxu0 %v3652
        %3815 = vmatpush1.bf16.msra.mxu0 %v3651
        %3816 = vmatprep.subr.bf16.mxu0 %v3655
        %3817 = vmatpush1.bf16.msra.mxu0 %v3654
        %3818 = vmatprep.subr.bf16.mxu0 %v3658
        %3819 = vmatpush1.bf16.msra.mxu0 %v3657
        %3820 = vmatprep.subr.bf16.mxu0 %v3661
        %3821 = vmatpush1.bf16.msra.mxu0 %v3660
        %3822 = vmatprep.subr.bf16.mxu0 %v3664
        %3823 = vmatpush1.bf16.msra.mxu0 %v3663
        %3824 = vmatprep.subr.bf16.mxu0 %v3667
        %3825 = vmatpush1.bf16.msra.mxu0 %v3666
        %3826 = vmatprep.subr.bf16.mxu0 %v3670
        %3827 = vmatpush1.bf16.msra.mxu0 %v3669
        %3828 = vmatprep.subr.bf16.mxu0 %v3673
        %3829 = vmatpush1.bf16.msra.mxu0 %v3672
        %3830 = vmatprep.subr.bf16.mxu0 %v3676
        %3831 = vmatpush1.bf16.msra.mxu0 %v3675
        %3832 = vmatprep.subr.bf16.mxu0 %v3679
        %3833 = vmatpush1.bf16.msra.mxu0 %v3678
        %3834 = vmatprep.subr.bf16.mxu0 %v3682
        %3835 = vmatpush1.bf16.msra.mxu0 %v3681
        %3836 = vmatprep.mubr.bf16.mxu0 %v2617
        %3837 = vmatmul.mubr.bf16.gmra.mrb[0].mxu0 %v2616
        %v3838 = vpop.f32.mrb[0].mxu0
        %v3839 = vadd.f32 0.0, %v3838
        %v3840 = vpop.f32.mrb[0].mxu0
        %v3841 = vadd.f32 0.0, %v3840
        %v3842 = vpop.f32.mrb[0].mxu0
        %v3843 = vadd.f32 0.0, %v3842
        %v3844 = vpop.f32.mrb[0].mxu0
        %v3845 = vadd.f32 0.0, %v3844
        %3846 = vdwg.mxu0
        %3847 = vmatprep.subr.bf16.mxu0 %v3685
        %3848 = vmatpush1.bf16.msra.mxu0 %v3684
        %3849 = vmatprep.subr.bf16.mxu0 %v3688
        %3850 = vmatpush1.bf16.msra.mxu0 %v3687
        %3851 = vmatprep.subr.bf16.mxu0 %v3691
        %3852 = vmatpush1.bf16.msra.mxu0 %v3690
        %3853 = vmatprep.subr.bf16.mxu0 %v3694
        %3854 = vmatpush1.bf16.msra.mxu0 %v3693
        %3855 = vmatprep.subr.bf16.mxu0 %v3697
        %3856 = vmatpush1.bf16.msra.mxu0 %v3696
        %3857 = vmatprep.subr.bf16.mxu0 %v3700
        %3858 = vmatpush1.bf16.msra.mxu0 %v3699
        %3859 = vmatprep.subr.bf16.mxu0 %v3703
        %3860 = vmatpush1.bf16.msra.mxu0 %v3702
        %3861 = vmatprep.subr.bf16.mxu0 %v3706
        %3862 = vmatpush1.bf16.msra.mxu0 %v3705
        %3863 = vmatprep.subr.bf16.mxu0 %v3709
        %3864 = vmatpush1.bf16.msra.mxu0 %v3708
        %3865 = vmatprep.subr.bf16.mxu0 %v3712
        %3866 = vmatpush1.bf16.msra.mxu0 %v3711
        %3867 = vmatprep.subr.bf16.mxu0 %v3715
        %3868 = vmatpush1.bf16.msra.mxu0 %v3714
        %3869 = vmatprep.subr.bf16.mxu0 %v3718
        %3870 = vmatpush1.bf16.msra.mxu0 %v3717
        %3871 = vmatprep.subr.bf16.mxu0 0
        %3872 = vmatpush1.bf16.msra.mxu0 0
        %3873 = vmatprep.subr.bf16.mxu0 0
        %3874 = vmatpush1.bf16.msra.mxu0 0
        %3875 = vmatprep.subr.bf16.mxu0 0
        %3876 = vmatpush1.bf16.msra.mxu0 0
        %3877 = vmatprep.subr.bf16.mxu0 0
        %3878 = vmatpush1.bf16.msra.mxu0 0
        %3879 = vmatprep.mubr.bf16.mxu0 %v3073
        %3880 = vmatmul.mubr.bf16.gmra.mrb[0].mxu0 %v2618
        %v3881 = vpop.f32.mrb[0].mxu0
        %v3882 = vadd.f32 %v3839, %v3881
        %v3883 = vpop.f32.mrb[0].mxu0
        %v3884 = vadd.f32 %v3841, %v3883
        %v3885 = vpop.f32.mrb[0].mxu0
        %v3886 = vadd.f32 %v3843, %v3885
        %v3887 = vpop.f32.mrb[0].mxu0
        %v3888 = vadd.f32 %v3845, %v3887
        %3889 = vdwg.mxu0
        %3890 = vmatprep.subr.bf16.mxu0 0
        %3891 = vmatpush1.bf16.msra.mxu0 %v3638
        %3892 = vmatprep.subr.bf16.mxu0 0
        %3893 = vmatpush1.bf16.msra.mxu0 %v3641
        %3894 = vmatprep.subr.bf16.mxu0 0
        %3895 = vmatpush1.bf16.msra.mxu0 %v3644
        %3896 = vmatprep.subr.bf16.mxu0 0
        %3897 = vmatpush1.bf16.msra.mxu0 %v3647
        %3898 = vmatprep.subr.bf16.mxu0 0
        %3899 = vmatpush1.bf16.msra.mxu0 %v3650
        %3900 = vmatprep.subr.bf16.mxu0 0
        %3901 = vmatpush1.bf16.msra.mxu0 %v3653
        %3902 = vmatprep.subr.bf16.mxu0 0
        %3903 = vmatpush1.bf16.msra.mxu0 %v3656
        %3904 = vmatprep.subr.bf16.mxu0 0
        %3905 = vmatpush1.bf16.msra.mxu0 %v3659
        %3906 = vmatprep.subr.bf16.mxu0 0
        %3907 = vmatpush1.bf16.msra.mxu0 %v3662
        %3908 = vmatprep.subr.bf16.mxu0 0
        %3909 = vmatpush1.bf16.msra.mxu0 %v3665
        %3910 = vmatprep.subr.bf16.mxu0 0
        %3911 = vmatpush1.bf16.msra.mxu0 %v3668
        %3912 = vmatprep.subr.bf16.mxu0 0
        %3913 = vmatpush1.bf16.msra.mxu0 %v3671
        %3914 = vmatprep.subr.bf16.mxu0 0
        %3915 = vmatpush1.bf16.msra.mxu0 %v3674
        %3916 = vmatprep.subr.bf16.mxu0 0
        %3917 = vmatpush1.bf16.msra.mxu0 %v3677
        %3918 = vmatprep.subr.bf16.mxu0 0
        %3919 = vmatpush1.bf16.msra.mxu0 %v3680
        %3920 = vmatprep.subr.bf16.mxu0 0
        %3921 = vmatpush1.bf16.msra.mxu0 %v3683
        %3922 = vmatprep.mubr.bf16.mxu0 %v2617
        %3923 = vmatmul.mubr.bf16.gmra.mrb[0].mxu0 %v2616
        %v3924 = vpop.f32.mrb[0].mxu0
        %v3925 = vadd.f32 0.0, %v3924
        %v3926 = vpop.f32.mrb[0].mxu0
        %v3927 = vpop.f32.mrb[0].mxu0
        %v3928 = vadd.f32 0.0, %v3927
        %v3929 = vpop.f32.mrb[0].mxu0
        %3930 = vdwg.mxu0
        %3931 = vmatprep.subr.bf16.mxu0 0
        %3932 = vmatpush1.bf16.msra.mxu0 %v3686
        %3933 = vmatprep.subr.bf16.mxu0 0
        %3934 = vmatpush1.bf16.msra.mxu0 %v3689
        %3935 = vmatprep.subr.bf16.mxu0 0
        %3936 = vmatpush1.bf16.msra.mxu0 %v3692
        %3937 = vmatprep.subr.bf16.mxu0 0
        %3938 = vmatpush1.bf16.msra.mxu0 %v3695
        %3939 = vmatprep.subr.bf16.mxu0 0
        %3940 = vmatpush1.bf16.msra.mxu0 %v3698
        %3941 = vmatprep.subr.bf16.mxu0 0
        %3942 = vmatpush1.bf16.msra.mxu0 %v3701
        %3943 = vmatprep.subr.bf16.mxu0 0
        %3944 = vmatpush1.bf16.msra.mxu0 %v3704
        %3945 = vmatprep.subr.bf16.mxu0 0
        %3946 = vmatpush1.bf16.msra.mxu0 %v3707
        %3947 = vmatprep.subr.bf16.mxu0 0
        %3948 = vmatpush1.bf16.msra.mxu0 %v3710
        %3949 = vmatprep.subr.bf16.mxu0 0
        %3950 = vmatpush1.bf16.msra.mxu0 %v3713
        %3951 = vmatprep.subr.bf16.mxu0 0
        %3952 = vmatpush1.bf16.msra.mxu0 %v3716
        %3953 = vmatprep.subr.bf16.mxu0 0
        %3954 = vmatpush1.bf16.msra.mxu0 %v3719
        %3955 = vmatprep.subr.bf16.mxu0 0
        %3956 = vmatpush1.bf16.msra.mxu0 0
        %3957 = vmatprep.subr.bf16.mxu0 0
        %3958 = vmatpush1.bf16.msra.mxu0 0
        %3959 = vmatprep.subr.bf16.mxu0 0
        %3960 = vmatpush1.bf16.msra.mxu0 0
        %3961 = vmatprep.subr.bf16.mxu0 0
        %3962 = vmatpush1.bf16.msra.mxu0 0
        %3963 = vmatprep.mubr.bf16.mxu0 %v3073
        %3964 = vmatmul.mubr.bf16.gmra.mrb[0].mxu0 %v2618
        %v3965 = vpop.f32.mrb[0].mxu0
        %v3966 = vadd.f32 %v3925, %v3965
        %v3967 = vpop.f32.mrb[0].mxu0
        %v3968 = vpop.f32.mrb[0].mxu0
        %v3969 = vadd.f32 %v3928, %v3968
        %v3970 = vpop.f32.mrb[0].mxu0
        %3971 = vdwg.mxu0
        %v3976 = vunpack.c.l.b16 %v2040
        %v3977 = vunpack.c.l.b16 %v2041
        %v3978 = vunpack.c.l.b16 %v2042
        %v3979 = vunpack.c.l.b16 %v2043
        %v3980 = vrot.slane %v2481, 7
        %v3981 = vsel %vm2530, %v3980, %v3976
        %v3982 = vrot.slane %v2485, 6
        %v3983 = vsel %vm2533, %v3982, %v3981
        %v3984 = vrot.slane %v2489, 5
        %v3985 = vsel %vm2536, %v3984, %v3983
        %v3986 = vrot.slane %v2493, 4
        %v3987 = vsel %vm2539, %v3986, %v3985
        %v3988 = vrot.slane %v2497, 3
        %v3989 = vsel %vm2542, %v3988, %v3987
        %v3990 = vrot.slane %v2501, 2
        %v3991 = vsel %vm2545, %v3990, %v3989
        %v3992 = vrot.slane %v2505, 1
        %v3993 = vsel %vm2548, %v3992, %v3991
        %v3994 = vrot.slane %v2482, 7
        %v3995 = vsel %vm2530, %v3994, %v3977
        %v3996 = vrot.slane %v2486, 6
        %v3997 = vsel %vm2533, %v3996, %v3995
        %v3998 = vrot.slane %v2490, 5
        %v3999 = vsel %vm2536, %v3998, %v3997
        %v4000 = vrot.slane %v2494, 4
        %v4001 = vsel %vm2539, %v4000, %v3999
        %v4002 = vrot.slane %v2498, 3
        %v4003 = vsel %vm2542, %v4002, %v4001
        %v4004 = vrot.slane %v2502, 2
        %v4005 = vsel %vm2545, %v4004, %v4003
        %v4006 = vrot.slane %v2506, 1
        %v4007 = vsel %vm2548, %v4006, %v4005
        %v4008 = vrot.slane %v2483, 7
        %v4009 = vsel %vm2530, %v4008, %v3978
        %v4010 = vrot.slane %v2487, 6
        %v4011 = vsel %vm2533, %v4010, %v4009
        %v4012 = vrot.slane %v2491, 5
        %v4013 = vsel %vm2536, %v4012, %v4011
        %v4014 = vrot.slane %v2495, 4
        %v4015 = vsel %vm2539, %v4014, %v4013
        %v4016 = vrot.slane %v2499, 3
        %v4017 = vsel %vm2542, %v4016, %v4015
        %v4018 = vrot.slane %v2503, 2
        %v4019 = vsel %vm2545, %v4018, %v4017
        %v4020 = vrot.slane %v2507, 1
        %v4021 = vsel %vm2548, %v4020, %v4019
        %v4022 = vrot.slane %v2484, 7
        %v4023 = vsel %vm2530, %v4022, %v3979
        %v4024 = vrot.slane %v2488, 6
        %v4025 = vsel %vm2533, %v4024, %v4023
        %v4026 = vrot.slane %v2492, 5
        %v4027 = vsel %vm2536, %v4026, %v4025
        %v4028 = vrot.slane %v2496, 4
        %v4029 = vsel %vm2539, %v4028, %v4027
        %v4030 = vrot.slane %v2500, 3
        %v4031 = vsel %vm2542, %v4030, %v4029
        %v4032 = vrot.slane %v2504, 2
        %v4033 = vsel %vm2545, %v4032, %v4031
        %v4034 = vrot.slane %v2508, 1
        %v4035 = vsel %vm2548, %v4034, %v4033
        %v4036 = vrot.slane %v2513, 7
        %v4037 = vsel %vm2530, %v4036, %v2509
        %v4038 = vrot.slane %v2517, 6
        %v4039 = vsel %vm2533, %v4038, %v4037
        %v4040 = vrot.slane %v2521, 5
        %v4041 = vsel %vm2536, %v4040, %v4039
        %v4042 = vrot.slane %v2514, 7
        %v4043 = vsel %vm2530, %v4042, %v2510
        %v4044 = vrot.slane %v2518, 6
        %v4045 = vsel %vm2533, %v4044, %v4043
        %v4046 = vrot.slane %v2522, 5
        %v4047 = vsel %vm2536, %v4046, %v4045
        %v4048 = vrot.slane %v2515, 7
        %v4049 = vsel %vm2530, %v4048, %v2511
        %v4050 = vrot.slane %v2519, 6
        %v4051 = vsel %vm2533, %v4050, %v4049
        %v4052 = vrot.slane %v2523, 5
        %v4053 = vsel %vm2536, %v4052, %v4051
        %v4054 = vrot.slane %v2516, 7
        %v4055 = vsel %vm2530, %v4054, %v2512
        %v4056 = vrot.slane %v2520, 6
        %v4057 = vsel %vm2533, %v4056, %v4055
        %v4058 = vrot.slane %v2524, 5
        %v4059 = vsel %vm2536, %v4058, %v4057
        %v4060 = vpack.c.b16 %v4041, %v3993
        %v4061 = vpack.c.b16 %v4047, %v4007
        %v4062 = vpack.c.b16 %v4053, %v4021
        %v4063 = vpack.c.b16 %v4059, %v4035
        %v4179 = vunpack.c.l.b16 %v2096
        %v4180 = vunpack.c.h.b16 %v2096
        %v4181 = vunpack.c.l.b16 %v2097
        %v4182 = vunpack.c.l.b16 %v2098
        %v4183 = vunpack.c.h.b16 %v2098
        %v4184 = vunpack.c.l.b16 %v2099
        %v4185 = vunpack.c.l.b16 %v2100
        %v4186 = vunpack.c.h.b16 %v2100
        %v4187 = vunpack.c.l.b16 %v2101
        %v4188 = vunpack.c.l.b16 %v2102
        %v4189 = vunpack.c.h.b16 %v2102
        %v4190 = vunpack.c.l.b16 %v2103
        %v4191 = vunpack.c.l.b16 %v2104
        %v4192 = vunpack.c.h.b16 %v2104
        %v4193 = vunpack.c.l.b16 %v2105
        %v4194 = vunpack.c.l.b16 %v2106
        %v4195 = vunpack.c.h.b16 %v2106
        %v4196 = vunpack.c.l.b16 %v2107
        %v4197 = vunpack.c.l.b16 %v2108
        %v4198 = vunpack.c.h.b16 %v2108
        %v4199 = vunpack.c.l.b16 %v2109
        %v4200 = vunpack.c.l.b16 %v2110
        %v4201 = vunpack.c.h.b16 %v2110
        %v4202 = vunpack.c.l.b16 %v2111
        %v4203 = vunpack.c.l.b16 %v2112
        %v4204 = vunpack.c.h.b16 %v2112
        %v4205 = vunpack.c.l.b16 %v2113
        %v4206 = vunpack.c.l.b16 %v2114
        %v4207 = vunpack.c.h.b16 %v2114
        %v4208 = vunpack.c.l.b16 %v2115
        %v4209 = vunpack.c.l.b16 %v2116
        %v4210 = vunpack.c.h.b16 %v2116
        %v4211 = vunpack.c.l.b16 %v2117
        %v4212 = vunpack.c.l.b16 %v2118
        %v4213 = vunpack.c.h.b16 %v2118
        %v4214 = vunpack.c.l.b16 %v2119
        %v4215 = vunpack.c.l.b16 %v2120
        %v4216 = vunpack.c.h.b16 %v2120
        %v4217 = vunpack.c.l.b16 %v2121
        %v4218 = vunpack.c.l.b16 %v2122
        %v4219 = vunpack.c.h.b16 %v2122
        %v4220 = vunpack.c.l.b16 %v2123
        %v4221 = vunpack.c.l.b16 %v2124
        %v4222 = vunpack.c.h.b16 %v2124
        %v4223 = vunpack.c.l.b16 %v2125
        %v4224 = vunpack.c.l.b16 %v2126
        %v4225 = vunpack.c.h.b16 %v2126
        %v4226 = vunpack.c.l.b16 %v2127
        %v4227 = vunpack.c.l.b16 %v2128
        %v4228 = vunpack.c.h.b16 %v2128
        %v4229 = vunpack.c.l.b16 %v2129
        %v4230 = vunpack.c.l.b16 %v2130
        %v4231 = vunpack.c.h.b16 %v2130
        %v4232 = vunpack.c.l.b16 %v2131
        %v4233 = vunpack.c.l.b16 %v2132
        %v4234 = vunpack.c.h.b16 %v2132
        %v4235 = vunpack.c.l.b16 %v2133
        %v4236 = vunpack.c.l.b16 %v2134
        %v4237 = vunpack.c.h.b16 %v2134
        %v4238 = vunpack.c.l.b16 %v2135
        %v4239 = vunpack.c.l.b16 %v2136
        %v4240 = vunpack.c.h.b16 %v2136
        %v4241 = vunpack.c.l.b16 %v2137
        %v4242 = vunpack.c.l.b16 %v2138
        %v4243 = vunpack.c.h.b16 %v2138
        %v4244 = vunpack.c.l.b16 %v2139
        %v4245 = vunpack.c.l.b16 %v2140
        %v4246 = vunpack.c.h.b16 %v2140
        %v4247 = vunpack.c.l.b16 %v2141
        %v4248 = vunpack.c.l.b16 %v2142
        %v4249 = vunpack.c.h.b16 %v2142
        %v4250 = vunpack.c.l.b16 %v2143
        %v4251 = vunpack.c.l.b16 %v2144
        %v4252 = vunpack.c.h.b16 %v2144
        %v4253 = vunpack.c.l.b16 %v2145
        %v4254 = vunpack.c.l.b16 %v2146
        %v4255 = vunpack.c.h.b16 %v2146
        %v4256 = vunpack.c.l.b16 %v2147
        %v4257 = vunpack.c.l.b16 %v2148
        %v4258 = vunpack.c.h.b16 %v2148
        %v4259 = vunpack.c.l.b16 %v2149
        %v4260 = vunpack.c.l.b16 %v2150
        %v4261 = vunpack.c.h.b16 %v2150
        %v4262 = vunpack.c.l.b16 %v2151
        %v4263 = vunpack.c.l.b16 %v2152
        %v4264 = vunpack.c.h.b16 %v2152
        %v4265 = vunpack.c.l.b16 %v2153
        %v4266 = vunpack.c.l.b16 %v2154
        %v4267 = vunpack.c.h.b16 %v2154
        %v4268 = vunpack.c.l.b16 %v2155
        %v4269 = vunpack.c.l.b16 %v2156
        %v4270 = vunpack.c.h.b16 %v2156
        %v4271 = vunpack.c.l.b16 %v2157
        %v4272 = vunpack.c.l.b16 %v2158
        %v4273 = vunpack.c.h.b16 %v2158
        %v4274 = vunpack.c.l.b16 %v2159
        %v4275 = vunpack.c.l.b16 %v2160
        %v4276 = vunpack.c.h.b16 %v2160
        %v4277 = vunpack.c.l.b16 %v2161
        %v4278 = vunpack.c.l.b16 %v2162
        %v4279 = vunpack.c.h.b16 %v2162
        %v4280 = vunpack.c.l.b16 %v2163
        %v4281 = vunpack.c.l.b16 %v2164
        %v4282 = vunpack.c.h.b16 %v2164
        %v4283 = vunpack.c.l.b16 %v2165
        %v4284 = vunpack.c.l.b16 %v2166
        %v4285 = vunpack.c.h.b16 %v2166
        %v4286 = vunpack.c.l.b16 %v2167
        %v4287 = vunpack.c.l.b16 %v2168
        %v4288 = vunpack.c.h.b16 %v2168
        %v4289 = vunpack.c.l.b16 %v2169
        %v4290 = vunpack.c.l.b16 %v2170
        %v4291 = vunpack.c.h.b16 %v2170
        %v4292 = vunpack.c.l.b16 %v2171
        %v4293 = vunpack.c.l.b16 %v2172
        %v4294 = vunpack.c.h.b16 %v2172
        %v4295 = vunpack.c.l.b16 %v2173
        %v4296 = vunpack.c.l.b16 %v2174
        %v4297 = vunpack.c.h.b16 %v2174
        %v4298 = vunpack.c.l.b16 %v2175
        %v4299 = vunpack.c.l.b16 %v2176
        %v4300 = vunpack.c.h.b16 %v2176
        %v4301 = vunpack.c.l.b16 %v2177
        %v4302 = vunpack.c.l.b16 %v2178
        %v4303 = vunpack.c.h.b16 %v2178
        %v4304 = vunpack.c.l.b16 %v2179
        %v4305 = vunpack.c.l.b16 %v2180
        %v4306 = vunpack.c.h.b16 %v2180
        %v4307 = vunpack.c.l.b16 %v2181
        %v4308 = vunpack.c.l.b16 %v2182
        %v4309 = vunpack.c.h.b16 %v2182
        %v4310 = vunpack.c.l.b16 %v2183
        %v4311 = vunpack.c.l.b16 %v2184
        %v4312 = vunpack.c.h.b16 %v2184
        %v4313 = vunpack.c.l.b16 %v2185
        %v4314 = vunpack.c.l.b16 %v2186
        %v4315 = vunpack.c.h.b16 %v2186
        %v4316 = vunpack.c.l.b16 %v2187
        %v4317 = vunpack.c.l.b16 %v2188
        %v4318 = vunpack.c.h.b16 %v2188
        %v4319 = vunpack.c.l.b16 %v2189
        %v4320 = vunpack.c.l.b16 %v2190
        %v4321 = vunpack.c.h.b16 %v2190
        %v4322 = vunpack.c.l.b16 %v2191
        %v4323 = vunpack.c.l.b16 %v2192
        %v4324 = vunpack.c.h.b16 %v2192
        %v4325 = vunpack.c.l.b16 %v2193
        %v4326 = vunpack.c.l.b16 %v2194
        %v4327 = vunpack.c.h.b16 %v2194
        %v4328 = vunpack.c.l.b16 %v2195
        %v4329 = vunpack.c.l.b16 %v2196
        %v4330 = vunpack.c.h.b16 %v2196
        %v4331 = vunpack.c.l.b16 %v2197
        %v4332 = vunpack.c.l.b16 %v2198
        %v4333 = vunpack.c.h.b16 %v2198
        %v4334 = vunpack.c.l.b16 %v2199
        %v4335 = vunpack.c.l.b16 %v2200
        %v4336 = vunpack.c.h.b16 %v2200
        %v4337 = vunpack.c.l.b16 %v2201
        %v4338 = vunpack.c.l.b16 %v2202
        %v4339 = vunpack.c.h.b16 %v2202
        %v4340 = vunpack.c.l.b16 %v2203
        %v4341 = vunpack.c.l.b16 %v2204
        %v4342 = vunpack.c.h.b16 %v2204
        %v4343 = vunpack.c.l.b16 %v2205
        %v4344 = vunpack.c.l.b16 %v2206
        %v4345 = vunpack.c.h.b16 %v2206
        %v4346 = vunpack.c.l.b16 %v2207
        %v4347 = vpack.c.b16 %v4182, %v4179
        %v4348 = vpack.c.b16 %v4183, %v4180
        %v4349 = vpack.c.b16 %v4184, %v4181
        %v4350 = vpack.c.b16 %v4188, %v4185
        %v4351 = vpack.c.b16 %v4189, %v4186
        %v4352 = vpack.c.b16 %v4190, %v4187
        %v4353 = vpack.c.b16 %v4194, %v4191
        %v4354 = vpack.c.b16 %v4195, %v4192
        %v4355 = vpack.c.b16 %v4196, %v4193
        %v4356 = vpack.c.b16 %v4200, %v4197
        %v4357 = vpack.c.b16 %v4201, %v4198
        %v4358 = vpack.c.b16 %v4202, %v4199
        %v4359 = vpack.c.b16 %v4206, %v4203
        %v4360 = vpack.c.b16 %v4207, %v4204
        %v4361 = vpack.c.b16 %v4208, %v4205
        %v4362 = vpack.c.b16 %v4212, %v4209
        %v4363 = vpack.c.b16 %v4213, %v4210
        %v4364 = vpack.c.b16 %v4214, %v4211
        %v4365 = vpack.c.b16 %v4218, %v4215
        %v4366 = vpack.c.b16 %v4219, %v4216
        %v4367 = vpack.c.b16 %v4220, %v4217
        %v4368 = vpack.c.b16 %v4224, %v4221
        %v4369 = vpack.c.b16 %v4225, %v4222
        %v4370 = vpack.c.b16 %v4226, %v4223
        %v4371 = vpack.c.b16 %v4230, %v4227
        %v4372 = vpack.c.b16 %v4231, %v4228
        %v4373 = vpack.c.b16 %v4232, %v4229
        %v4374 = vpack.c.b16 %v4236, %v4233
        %v4375 = vpack.c.b16 %v4237, %v4234
        %v4376 = vpack.c.b16 %v4238, %v4235
        %v4377 = vpack.c.b16 %v4242, %v4239
        %v4378 = vpack.c.b16 %v4243, %v4240
        %v4379 = vpack.c.b16 %v4244, %v4241
        %v4380 = vpack.c.b16 %v4248, %v4245
        %v4381 = vpack.c.b16 %v4249, %v4246
        %v4382 = vpack.c.b16 %v4250, %v4247
        %v4383 = vpack.c.b16 %v4254, %v4251
        %v4384 = vpack.c.b16 %v4255, %v4252
        %v4385 = vpack.c.b16 %v4256, %v4253
        %v4386 = vpack.c.b16 %v4260, %v4257
        %v4387 = vpack.c.b16 %v4261, %v4258
        %v4388 = vpack.c.b16 %v4262, %v4259
        %v4389 = vpack.c.b16 %v4266, %v4263
        %v4390 = vpack.c.b16 %v4267, %v4264
        %v4391 = vpack.c.b16 %v4268, %v4265
        %v4392 = vpack.c.b16 %v4272, %v4269
        %v4393 = vpack.c.b16 %v4273, %v4270
        %v4394 = vpack.c.b16 %v4274, %v4271
        %v4395 = vpack.c.b16 %v4278, %v4275
        %v4396 = vpack.c.b16 %v4279, %v4276
        %v4397 = vpack.c.b16 %v4280, %v4277
        %v4398 = vpack.c.b16 %v4284, %v4281
        %v4399 = vpack.c.b16 %v4285, %v4282
        %v4400 = vpack.c.b16 %v4286, %v4283
        %v4401 = vpack.c.b16 %v4290, %v4287
        %v4402 = vpack.c.b16 %v4291, %v4288
        %v4403 = vpack.c.b16 %v4292, %v4289
        %v4404 = vpack.c.b16 %v4296, %v4293
        %v4405 = vpack.c.b16 %v4297, %v4294
        %v4406 = vpack.c.b16 %v4298, %v4295
        %v4407 = vpack.c.b16 %v4302, %v4299
        %v4408 = vpack.c.b16 %v4303, %v4300
        %v4409 = vpack.c.b16 %v4304, %v4301
        %v4410 = vpack.c.b16 %v4308, %v4305
        %v4411 = vpack.c.b16 %v4309, %v4306
        %v4412 = vpack.c.b16 %v4310, %v4307
        %v4413 = vpack.c.b16 %v4314, %v4311
        %v4414 = vpack.c.b16 %v4315, %v4312
        %v4415 = vpack.c.b16 %v4316, %v4313
        %v4416 = vpack.c.b16 %v4320, %v4317
        %v4417 = vpack.c.b16 %v4321, %v4318
        %v4418 = vpack.c.b16 %v4322, %v4319
        %v4419 = vpack.c.b16 %v4326, %v4323
        %v4420 = vpack.c.b16 %v4327, %v4324
        %v4421 = vpack.c.b16 %v4328, %v4325
        %v4422 = vpack.c.b16 %v4332, %v4329
        %v4423 = vpack.c.b16 %v4333, %v4330
        %v4424 = vpack.c.b16 %v4334, %v4331
        %v4425 = vpack.c.b16 %v4338, %v4335
        %v4426 = vpack.c.b16 %v4339, %v4336
        %v4427 = vpack.c.b16 %v4340, %v4337
        %v4428 = vpack.c.b16 %v4344, %v4341
        %v4429 = vpack.c.b16 %v4345, %v4342
        %v4430 = vpack.c.b16 %v4346, %v4343
        %v4516 = vsel %vm3071, %v4063, 0
        %4518 = vmatprep.subr.bf16.mxu0 %v4348
        %4519 = vmatpush1.bf16.msra.mxu0 %v4347
        %4520 = vmatprep.subr.bf16.mxu0 %v4351
        %4521 = vmatpush1.bf16.msra.mxu0 %v4350
        %4522 = vmatprep.subr.bf16.mxu0 %v4354
        %4523 = vmatpush1.bf16.msra.mxu0 %v4353
        %4524 = vmatprep.subr.bf16.mxu0 %v4357
        %4525 = vmatpush1.bf16.msra.mxu0 %v4356
        %4526 = vmatprep.subr.bf16.mxu0 %v4360
        %4527 = vmatpush1.bf16.msra.mxu0 %v4359
        %4528 = vmatprep.subr.bf16.mxu0 %v4363
        %4529 = vmatpush1.bf16.msra.mxu0 %v4362
        %4530 = vmatprep.subr.bf16.mxu0 %v4366
        %4531 = vmatpush1.bf16.msra.mxu0 %v4365
        %4532 = vmatprep.subr.bf16.mxu0 %v4369
        %4533 = vmatpush1.bf16.msra.mxu0 %v4368
        %4534 = vmatprep.subr.bf16.mxu0 %v4372
        %4535 = vmatpush1.bf16.msra.mxu0 %v4371
        %4536 = vmatprep.subr.bf16.mxu0 %v4375
        %4537 = vmatpush1.bf16.msra.mxu0 %v4374
        %4538 = vmatprep.subr.bf16.mxu0 %v4378
        %4539 = vmatpush1.bf16.msra.mxu0 %v4377
        %4540 = vmatprep.subr.bf16.mxu0 %v4381
        %4541 = vmatpush1.bf16.msra.mxu0 %v4380
        %4542 = vmatprep.subr.bf16.mxu0 %v4384
        %4543 = vmatpush1.bf16.msra.mxu0 %v4383
        %4544 = vmatprep.subr.bf16.mxu0 %v4387
        %4545 = vmatpush1.bf16.msra.mxu0 %v4386
        %4546 = vmatprep.subr.bf16.mxu0 %v4390
        %4547 = vmatpush1.bf16.msra.mxu0 %v4389
        %4548 = vmatprep.subr.bf16.mxu0 %v4393
        %4549 = vmatpush1.bf16.msra.mxu0 %v4392
        %4550 = vmatprep.mubr.bf16.mxu0 %v4061
        %4551 = vmatmul.mubr.bf16.gmra.mrb[0].mxu0 %v4060
        %v4552 = vpop.f32.mrb[0].mxu0
        %v4553 = vadd.f32 %v3153, %v4552
        %v4554 = vpop.f32.mrb[0].mxu0
        %v4555 = vadd.f32 %v3155, %v4554
        %v4556 = vpop.f32.mrb[0].mxu0
        %v4557 = vadd.f32 %v3157, %v4556
        %v4558 = vpop.f32.mrb[0].mxu0
        %v4559 = vadd.f32 %v3159, %v4558
        %4560 = vdwg.mxu0
        %4561 = vmatprep.subr.bf16.mxu0 %v4396
        %4562 = vmatpush1.bf16.msra.mxu0 %v4395
        %4563 = vmatprep.subr.bf16.mxu0 %v4399
        %4564 = vmatpush1.bf16.msra.mxu0 %v4398
        %4565 = vmatprep.subr.bf16.mxu0 %v4402
        %4566 = vmatpush1.bf16.msra.mxu0 %v4401
        %4567 = vmatprep.subr.bf16.mxu0 %v4405
        %4568 = vmatpush1.bf16.msra.mxu0 %v4404
        %4569 = vmatprep.subr.bf16.mxu0 %v4408
        %4570 = vmatpush1.bf16.msra.mxu0 %v4407
        %4571 = vmatprep.subr.bf16.mxu0 %v4411
        %4572 = vmatpush1.bf16.msra.mxu0 %v4410
        %4573 = vmatprep.subr.bf16.mxu0 %v4414
        %4574 = vmatpush1.bf16.msra.mxu0 %v4413
        %4575 = vmatprep.subr.bf16.mxu0 %v4417
        %4576 = vmatpush1.bf16.msra.mxu0 %v4416
        %4577 = vmatprep.subr.bf16.mxu0 %v4420
        %4578 = vmatpush1.bf16.msra.mxu0 %v4419
        %4579 = vmatprep.subr.bf16.mxu0 %v4423
        %4580 = vmatpush1.bf16.msra.mxu0 %v4422
        %4581 = vmatprep.subr.bf16.mxu0 %v4426
        %4582 = vmatpush1.bf16.msra.mxu0 %v4425
        %4583 = vmatprep.subr.bf16.mxu0 %v4429
        %4584 = vmatpush1.bf16.msra.mxu0 %v4428
        %4585 = vmatprep.subr.bf16.mxu0 0
        %4586 = vmatpush1.bf16.msra.mxu0 0
        %4587 = vmatprep.subr.bf16.mxu0 0
        %4588 = vmatpush1.bf16.msra.mxu0 0
        %4589 = vmatprep.subr.bf16.mxu0 0
        %4590 = vmatpush1.bf16.msra.mxu0 0
        %4591 = vmatprep.subr.bf16.mxu0 0
        %4592 = vmatpush1.bf16.msra.mxu0 0
        %4593 = vmatprep.mubr.bf16.mxu0 %v4516
        %4594 = vmatmul.mubr.bf16.gmra.mrb[0].mxu0 %v4062
        %v4595 = vpop.f32.mrb[0].mxu0
        %v4596 = vadd.f32 %v4553, %v4595
        %v4597 = vpop.f32.mrb[0].mxu0
        %v4598 = vadd.f32 %v4555, %v4597
        %v4599 = vpop.f32.mrb[0].mxu0
        %v4600 = vadd.f32 %v4557, %v4599
        %v4601 = vpop.f32.mrb[0].mxu0
        %v4602 = vadd.f32 %v4559, %v4601
        %4603 = vdwg.mxu0
        %4604 = vmatprep.subr.bf16.mxu0 0
        %4605 = vmatpush1.bf16.msra.mxu0 %v4349
        %4606 = vmatprep.subr.bf16.mxu0 0
        %4607 = vmatpush1.bf16.msra.mxu0 %v4352
        %4608 = vmatprep.subr.bf16.mxu0 0
        %4609 = vmatpush1.bf16.msra.mxu0 %v4355
        %4610 = vmatprep.subr.bf16.mxu0 0
        %4611 = vmatpush1.bf16.msra.mxu0 %v4358
        %4612 = vmatprep.subr.bf16.mxu0 0
        %4613 = vmatpush1.bf16.msra.mxu0 %v4361
        %4614 = vmatprep.subr.bf16.mxu0 0
        %4615 = vmatpush1.bf16.msra.mxu0 %v4364
        %4616 = vmatprep.subr.bf16.mxu0 0
        %4617 = vmatpush1.bf16.msra.mxu0 %v4367
        %4618 = vmatprep.subr.bf16.mxu0 0
        %4619 = vmatpush1.bf16.msra.mxu0 %v4370
        %4620 = vmatprep.subr.bf16.mxu0 0
        %4621 = vmatpush1.bf16.msra.mxu0 %v4373
        %4622 = vmatprep.subr.bf16.mxu0 0
        %4623 = vmatpush1.bf16.msra.mxu0 %v4376
        %4624 = vmatprep.subr.bf16.mxu0 0
        %4625 = vmatpush1.bf16.msra.mxu0 %v4379
        %4626 = vmatprep.subr.bf16.mxu0 0
        %4627 = vmatpush1.bf16.msra.mxu0 %v4382
        %4628 = vmatprep.subr.bf16.mxu0 0
        %4629 = vmatpush1.bf16.msra.mxu0 %v4385
        %4630 = vmatprep.subr.bf16.mxu0 0
        %4631 = vmatpush1.bf16.msra.mxu0 %v4388
        %4632 = vmatprep.subr.bf16.mxu0 0
        %4633 = vmatpush1.bf16.msra.mxu0 %v4391
        %4634 = vmatprep.subr.bf16.mxu0 0
        %4635 = vmatpush1.bf16.msra.mxu0 %v4394
        %4636 = vmatprep.mubr.bf16.mxu0 %v4061
        %4637 = vmatmul.mubr.bf16.gmra.mrb[0].mxu0 %v4060
        %v4638 = vpop.f32.mrb[0].mxu0
        %v4639 = vadd.f32 %v3237, %v4638
        %v4640 = vpop.f32.mrb[0].mxu0
        %v4641 = vpop.f32.mrb[0].mxu0
        %v4642 = vadd.f32 %v3240, %v4641
        %v4643 = vpop.f32.mrb[0].mxu0
        %4644 = vdwg.mxu0
        %4645 = vmatprep.subr.bf16.mxu0 0
        %4646 = vmatpush1.bf16.msra.mxu0 %v4397
        %4647 = vmatprep.subr.bf16.mxu0 0
        %4648 = vmatpush1.bf16.msra.mxu0 %v4400
        %4649 = vmatprep.subr.bf16.mxu0 0
        %4650 = vmatpush1.bf16.msra.mxu0 %v4403
        %4651 = vmatprep.subr.bf16.mxu0 0
        %4652 = vmatpush1.bf16.msra.mxu0 %v4406
        %4653 = vmatprep.subr.bf16.mxu0 0
        %4654 = vmatpush1.bf16.msra.mxu0 %v4409
        %4655 = vmatprep.subr.bf16.mxu0 0
        %4656 = vmatpush1.bf16.msra.mxu0 %v4412
        %4657 = vmatprep.subr.bf16.mxu0 0
        %4658 = vmatpush1.bf16.msra.mxu0 %v4415
        %4659 = vmatprep.subr.bf16.mxu0 0
        %4660 = vmatpush1.bf16.msra.mxu0 %v4418
        %4661 = vmatprep.subr.bf16.mxu0 0
        %4662 = vmatpush1.bf16.msra.mxu0 %v4421
        %4663 = vmatprep.subr.bf16.mxu0 0
        %4664 = vmatpush1.bf16.msra.mxu0 %v4424
        %4665 = vmatprep.subr.bf16.mxu0 0
        %4666 = vmatpush1.bf16.msra.mxu0 %v4427
        %4667 = vmatprep.subr.bf16.mxu0 0
        %4668 = vmatpush1.bf16.msra.mxu0 %v4430
        %4669 = vmatprep.subr.bf16.mxu0 0
        %4670 = vmatpush1.bf16.msra.mxu0 0
        %4671 = vmatprep.subr.bf16.mxu0 0
        %4672 = vmatpush1.bf16.msra.mxu0 0
        %4673 = vmatprep.subr.bf16.mxu0 0
        %4674 = vmatpush1.bf16.msra.mxu0 0
        %4675 = vmatprep.subr.bf16.mxu0 0
        %4676 = vmatpush1.bf16.msra.mxu0 0
        %4677 = vmatprep.mubr.bf16.mxu0 %v4516
        %4678 = vmatmul.mubr.bf16.gmra.mrb[0].mxu0 %v4062
        %v4679 = vpop.f32.mrb[0].mxu0
        %v4680 = vadd.f32 %v4639, %v4679
        %v4681 = vpop.f32.mrb[0].mxu0
        %v4682 = vpop.f32.mrb[0].mxu0
        %v4683 = vadd.f32 %v4642, %v4682
        %v4684 = vpop.f32.mrb[0].mxu0
        %4685 = vdwg.mxu0
        %v4798 = vunpack.c.l.b16 %v2208
        %v4799 = vunpack.c.h.b16 %v2208
        %v4800 = vunpack.c.l.b16 %v2209
        %v4801 = vunpack.c.l.b16 %v2210
        %v4802 = vunpack.c.h.b16 %v2210
        %v4803 = vunpack.c.l.b16 %v2211
        %v4804 = vunpack.c.l.b16 %v2212
        %v4805 = vunpack.c.h.b16 %v2212
        %v4806 = vunpack.c.l.b16 %v2213
        %v4807 = vunpack.c.l.b16 %v2214
        %v4808 = vunpack.c.h.b16 %v2214
        %v4809 = vunpack.c.l.b16 %v2215
        %v4810 = vunpack.c.l.b16 %v2216
        %v4811 = vunpack.c.h.b16 %v2216
        %v4812 = vunpack.c.l.b16 %v2217
        %v4813 = vunpack.c.l.b16 %v2218
        %v4814 = vunpack.c.h.b16 %v2218
        %v4815 = vunpack.c.l.b16 %v2219
        %v4816 = vunpack.c.l.b16 %v2220
        %v4817 = vunpack.c.h.b16 %v2220
        %v4818 = vunpack.c.l.b16 %v2221
        %v4819 = vunpack.c.l.b16 %v2222
        %v4820 = vunpack.c.h.b16 %v2222
        %v4821 = vunpack.c.l.b16 %v2223
        %v4822 = vunpack.c.l.b16 %v2224
        %v4823 = vunpack.c.h.b16 %v2224
        %v4824 = vunpack.c.l.b16 %v2225
        %v4825 = vunpack.c.l.b16 %v2226
        %v4826 = vunpack.c.h.b16 %v2226
        %v4827 = vunpack.c.l.b16 %v2227
        %v4828 = vunpack.c.l.b16 %v2228
        %v4829 = vunpack.c.h.b16 %v2228
        %v4830 = vunpack.c.l.b16 %v2229
        %v4831 = vunpack.c.l.b16 %v2230
        %v4832 = vunpack.c.h.b16 %v2230
        %v4833 = vunpack.c.l.b16 %v2231
        %v4834 = vunpack.c.l.b16 %v2232
        %v4835 = vunpack.c.h.b16 %v2232
        %v4836 = vunpack.c.l.b16 %v2233
        %v4837 = vunpack.c.l.b16 %v2234
        %v4838 = vunpack.c.h.b16 %v2234
        %v4839 = vunpack.c.l.b16 %v2235
        %v4840 = vunpack.c.l.b16 %v2236
        %v4841 = vunpack.c.h.b16 %v2236
        %v4842 = vunpack.c.l.b16 %v2237
        %v4843 = vunpack.c.l.b16 %v2238
        %v4844 = vunpack.c.h.b16 %v2238
        %v4845 = vunpack.c.l.b16 %v2239
        %v4846 = vunpack.c.l.b16 %v2240
        %v4847 = vunpack.c.h.b16 %v2240
        %v4848 = vunpack.c.l.b16 %v2241
        %v4849 = vunpack.c.l.b16 %v2242
        %v4850 = vunpack.c.h.b16 %v2242
        %v4851 = vunpack.c.l.b16 %v2243
        %v4852 = vunpack.c.l.b16 %v2244
        %v4853 = vunpack.c.h.b16 %v2244
        %v4854 = vunpack.c.l.b16 %v2245
        %v4855 = vunpack.c.l.b16 %v2246
        %v4856 = vunpack.c.h.b16 %v2246
        %v4857 = vunpack.c.l.b16 %v2247
        %v4858 = vunpack.c.l.b16 %v2248
        %v4859 = vunpack.c.h.b16 %v2248
        %v4860 = vunpack.c.l.b16 %v2249
        %v4861 = vunpack.c.l.b16 %v2250
        %v4862 = vunpack.c.h.b16 %v2250
        %v4863 = vunpack.c.l.b16 %v2251
        %v4864 = vunpack.c.l.b16 %v2252
        %v4865 = vunpack.c.h.b16 %v2252
        %v4866 = vunpack.c.l.b16 %v2253
        %v4867 = vunpack.c.l.b16 %v2254
        %v4868 = vunpack.c.h.b16 %v2254
        %v4869 = vunpack.c.l.b16 %v2255
        %v4870 = vunpack.c.l.b16 %v2256
        %v4871 = vunpack.c.h.b16 %v2256
        %v4872 = vunpack.c.l.b16 %v2257
        %v4873 = vunpack.c.l.b16 %v2258
        %v4874 = vunpack.c.h.b16 %v2258
        %v4875 = vunpack.c.l.b16 %v2259
        %v4876 = vunpack.c.l.b16 %v2260
        %v4877 = vunpack.c.h.b16 %v2260
        %v4878 = vunpack.c.l.b16 %v2261
        %v4879 = vunpack.c.l.b16 %v2262
        %v4880 = vunpack.c.h.b16 %v2262
        %v4881 = vunpack.c.l.b16 %v2263
        %v4882 = vunpack.c.l.b16 %v2264
        %v4883 = vunpack.c.h.b16 %v2264
        %v4884 = vunpack.c.l.b16 %v2265
        %v4885 = vunpack.c.l.b16 %v2266
        %v4886 = vunpack.c.h.b16 %v2266
        %v4887 = vunpack.c.l.b16 %v2267
        %v4888 = vunpack.c.l.b16 %v2268
        %v4889 = vunpack.c.h.b16 %v2268
        %v4890 = vunpack.c.l.b16 %v2269
        %v4891 = vunpack.c.l.b16 %v2270
        %v4892 = vunpack.c.h.b16 %v2270
        %v4893 = vunpack.c.l.b16 %v2271
        %v4894 = vunpack.c.l.b16 %v2272
        %v4895 = vunpack.c.h.b16 %v2272
        %v4896 = vunpack.c.l.b16 %v2273
        %v4897 = vunpack.c.l.b16 %v2274
        %v4898 = vunpack.c.h.b16 %v2274
        %v4899 = vunpack.c.l.b16 %v2275
        %v4900 = vunpack.c.l.b16 %v2276
        %v4901 = vunpack.c.h.b16 %v2276
        %v4902 = vunpack.c.l.b16 %v2277
        %v4903 = vunpack.c.l.b16 %v2278
        %v4904 = vunpack.c.h.b16 %v2278
        %v4905 = vunpack.c.l.b16 %v2279
        %v4906 = vunpack.c.l.b16 %v2280
        %v4907 = vunpack.c.h.b16 %v2280
        %v4908 = vunpack.c.l.b16 %v2281
        %v4909 = vunpack.c.l.b16 %v2282
        %v4910 = vunpack.c.h.b16 %v2282
        %v4911 = vunpack.c.l.b16 %v2283
        %v4912 = vunpack.c.l.b16 %v2284
        %v4913 = vunpack.c.h.b16 %v2284
        %v4914 = vunpack.c.l.b16 %v2285
        %v4915 = vunpack.c.l.b16 %v2286
        %v4916 = vunpack.c.h.b16 %v2286
        %v4917 = vunpack.c.l.b16 %v2287
        %v4918 = vunpack.c.l.b16 %v2288
        %v4919 = vunpack.c.h.b16 %v2288
        %v4920 = vunpack.c.l.b16 %v2289
        %v4921 = vunpack.c.l.b16 %v2290
        %v4922 = vunpack.c.h.b16 %v2290
        %v4923 = vunpack.c.l.b16 %v2291
        %v4924 = vunpack.c.l.b16 %v2292
        %v4925 = vunpack.c.h.b16 %v2292
        %v4926 = vunpack.c.l.b16 %v2293
        %v4927 = vunpack.c.l.b16 %v2294
        %v4928 = vunpack.c.h.b16 %v2294
        %v4929 = vunpack.c.l.b16 %v2295
        %v4930 = vunpack.c.l.b16 %v2296
        %v4931 = vunpack.c.h.b16 %v2296
        %v4932 = vunpack.c.l.b16 %v2297
        %v4933 = vunpack.c.l.b16 %v2298
        %v4934 = vunpack.c.h.b16 %v2298
        %v4935 = vunpack.c.l.b16 %v2299
        %v4936 = vunpack.c.l.b16 %v2300
        %v4937 = vunpack.c.h.b16 %v2300
        %v4938 = vunpack.c.l.b16 %v2301
        %v4939 = vunpack.c.l.b16 %v2302
        %v4940 = vunpack.c.h.b16 %v2302
        %v4941 = vunpack.c.l.b16 %v2303
        %v4942 = vunpack.c.l.b16 %v2304
        %v4943 = vunpack.c.h.b16 %v2304
        %v4944 = vunpack.c.l.b16 %v2305
        %v4945 = vunpack.c.l.b16 %v2306
        %v4946 = vunpack.c.h.b16 %v2306
        %v4947 = vunpack.c.l.b16 %v2307
        %v4948 = vunpack.c.l.b16 %v2308
        %v4949 = vunpack.c.h.b16 %v2308
        %v4950 = vunpack.c.l.b16 %v2309
        %v4951 = vunpack.c.l.b16 %v2310
        %v4952 = vunpack.c.h.b16 %v2310
        %v4953 = vunpack.c.l.b16 %v2311
        %v4954 = vunpack.c.l.b16 %v2312
        %v4955 = vunpack.c.h.b16 %v2312
        %v4956 = vunpack.c.l.b16 %v2313
        %v4957 = vunpack.c.l.b16 %v2314
        %v4958 = vunpack.c.h.b16 %v2314
        %v4959 = vunpack.c.l.b16 %v2315
        %v4960 = vunpack.c.l.b16 %v2316
        %v4961 = vunpack.c.h.b16 %v2316
        %v4962 = vunpack.c.l.b16 %v2317
        %v4963 = vunpack.c.l.b16 %v2318
        %v4964 = vunpack.c.h.b16 %v2318
        %v4965 = vunpack.c.l.b16 %v2319
        %v4966 = vpack.c.b16 %v4801, %v4798
        %v4967 = vpack.c.b16 %v4802, %v4799
        %v4968 = vpack.c.b16 %v4803, %v4800
        %v4969 = vpack.c.b16 %v4807, %v4804
        %v4970 = vpack.c.b16 %v4808, %v4805
        %v4971 = vpack.c.b16 %v4809, %v4806
        %v4972 = vpack.c.b16 %v4813, %v4810
        %v4973 = vpack.c.b16 %v4814, %v4811
        %v4974 = vpack.c.b16 %v4815, %v4812
        %v4975 = vpack.c.b16 %v4819, %v4816
        %v4976 = vpack.c.b16 %v4820, %v4817
        %v4977 = vpack.c.b16 %v4821, %v4818
        %v4978 = vpack.c.b16 %v4825, %v4822
        %v4979 = vpack.c.b16 %v4826, %v4823
        %v4980 = vpack.c.b16 %v4827, %v4824
        %v4981 = vpack.c.b16 %v4831, %v4828
        %v4982 = vpack.c.b16 %v4832, %v4829
        %v4983 = vpack.c.b16 %v4833, %v4830
        %v4984 = vpack.c.b16 %v4837, %v4834
        %v4985 = vpack.c.b16 %v4838, %v4835
        %v4986 = vpack.c.b16 %v4839, %v4836
        %v4987 = vpack.c.b16 %v4843, %v4840
        %v4988 = vpack.c.b16 %v4844, %v4841
        %v4989 = vpack.c.b16 %v4845, %v4842
        %v4990 = vpack.c.b16 %v4849, %v4846
        %v4991 = vpack.c.b16 %v4850, %v4847
        %v4992 = vpack.c.b16 %v4851, %v4848
        %v4993 = vpack.c.b16 %v4855, %v4852
        %v4994 = vpack.c.b16 %v4856, %v4853
        %v4995 = vpack.c.b16 %v4857, %v4854
        %v4996 = vpack.c.b16 %v4861, %v4858
        %v4997 = vpack.c.b16 %v4862, %v4859
        %v4998 = vpack.c.b16 %v4863, %v4860
        %v4999 = vpack.c.b16 %v4867, %v4864
        %v5000 = vpack.c.b16 %v4868, %v4865
        %v5001 = vpack.c.b16 %v4869, %v4866
        %v5002 = vpack.c.b16 %v4873, %v4870
        %v5003 = vpack.c.b16 %v4874, %v4871
        %v5004 = vpack.c.b16 %v4875, %v4872
        %v5005 = vpack.c.b16 %v4879, %v4876
        %v5006 = vpack.c.b16 %v4880, %v4877
        %v5007 = vpack.c.b16 %v4881, %v4878
        %v5008 = vpack.c.b16 %v4885, %v4882
        %v5009 = vpack.c.b16 %v4886, %v4883
        %v5010 = vpack.c.b16 %v4887, %v4884
        %v5011 = vpack.c.b16 %v4891, %v4888
        %v5012 = vpack.c.b16 %v4892, %v4889
        %v5013 = vpack.c.b16 %v4893, %v4890
        %v5014 = vpack.c.b16 %v4897, %v4894
        %v5015 = vpack.c.b16 %v4898, %v4895
        %v5016 = vpack.c.b16 %v4899, %v4896
        %v5017 = vpack.c.b16 %v4903, %v4900
        %v5018 = vpack.c.b16 %v4904, %v4901
        %v5019 = vpack.c.b16 %v4905, %v4902
        %v5020 = vpack.c.b16 %v4909, %v4906
        %v5021 = vpack.c.b16 %v4910, %v4907
        %v5022 = vpack.c.b16 %v4911, %v4908
        %v5023 = vpack.c.b16 %v4915, %v4912
        %v5024 = vpack.c.b16 %v4916, %v4913
        %v5025 = vpack.c.b16 %v4917, %v4914
        %v5026 = vpack.c.b16 %v4921, %v4918
        %v5027 = vpack.c.b16 %v4922, %v4919
        %v5028 = vpack.c.b16 %v4923, %v4920
        %v5029 = vpack.c.b16 %v4927, %v4924
        %v5030 = vpack.c.b16 %v4928, %v4925
        %v5031 = vpack.c.b16 %v4929, %v4926
        %v5032 = vpack.c.b16 %v4933, %v4930
        %v5033 = vpack.c.b16 %v4934, %v4931
        %v5034 = vpack.c.b16 %v4935, %v4932
        %v5035 = vpack.c.b16 %v4939, %v4936
        %v5036 = vpack.c.b16 %v4940, %v4937
        %v5037 = vpack.c.b16 %v4941, %v4938
        %v5038 = vpack.c.b16 %v4945, %v4942
        %v5039 = vpack.c.b16 %v4946, %v4943
        %v5040 = vpack.c.b16 %v4947, %v4944
        %v5041 = vpack.c.b16 %v4951, %v4948
        %v5042 = vpack.c.b16 %v4952, %v4949
        %v5043 = vpack.c.b16 %v4953, %v4950
        %v5044 = vpack.c.b16 %v4957, %v4954
        %v5045 = vpack.c.b16 %v4958, %v4955
        %v5046 = vpack.c.b16 %v4959, %v4956
        %v5047 = vpack.c.b16 %v4963, %v4960
        %v5048 = vpack.c.b16 %v4964, %v4961
        %v5049 = vpack.c.b16 %v4965, %v4962
        %5134 = vmatprep.subr.bf16.mxu0 %v4967
        %5135 = vmatpush1.bf16.msra.mxu0 %v4966
        %5136 = vmatprep.subr.bf16.mxu0 %v4970
        %5137 = vmatpush1.bf16.msra.mxu0 %v4969
        %5138 = vmatprep.subr.bf16.mxu0 %v4973
        %5139 = vmatpush1.bf16.msra.mxu0 %v4972
        %5140 = vmatprep.subr.bf16.mxu0 %v4976
        %5141 = vmatpush1.bf16.msra.mxu0 %v4975
        %5142 = vmatprep.subr.bf16.mxu0 %v4979
        %5143 = vmatpush1.bf16.msra.mxu0 %v4978
        %5144 = vmatprep.subr.bf16.mxu0 %v4982
        %5145 = vmatpush1.bf16.msra.mxu0 %v4981
        %5146 = vmatprep.subr.bf16.mxu0 %v4985
        %5147 = vmatpush1.bf16.msra.mxu0 %v4984
        %5148 = vmatprep.subr.bf16.mxu0 %v4988
        %5149 = vmatpush1.bf16.msra.mxu0 %v4987
        %5150 = vmatprep.subr.bf16.mxu0 %v4991
        %5151 = vmatpush1.bf16.msra.mxu0 %v4990
        %5152 = vmatprep.subr.bf16.mxu0 %v4994
        %5153 = vmatpush1.bf16.msra.mxu0 %v4993
        %5154 = vmatprep.subr.bf16.mxu0 %v4997
        %5155 = vmatpush1.bf16.msra.mxu0 %v4996
        %5156 = vmatprep.subr.bf16.mxu0 %v5000
        %5157 = vmatpush1.bf16.msra.mxu0 %v4999
        %5158 = vmatprep.subr.bf16.mxu0 %v5003
        %5159 = vmatpush1.bf16.msra.mxu0 %v5002
        %5160 = vmatprep.subr.bf16.mxu0 %v5006
        %5161 = vmatpush1.bf16.msra.mxu0 %v5005
        %5162 = vmatprep.subr.bf16.mxu0 %v5009
        %5163 = vmatpush1.bf16.msra.mxu0 %v5008
        %5164 = vmatprep.subr.bf16.mxu0 %v5012
        %5165 = vmatpush1.bf16.msra.mxu0 %v5011
        %5166 = vmatprep.mubr.bf16.mxu0 %v4061
        %5167 = vmatmul.mubr.bf16.gmra.mrb[0].mxu0 %v4060
        %v5168 = vpop.f32.mrb[0].mxu0
        %v5169 = vadd.f32 %v3882, %v5168
        %v5170 = vpop.f32.mrb[0].mxu0
        %v5171 = vadd.f32 %v3884, %v5170
        %v5172 = vpop.f32.mrb[0].mxu0
        %v5173 = vadd.f32 %v3886, %v5172
        %v5174 = vpop.f32.mrb[0].mxu0
        %v5175 = vadd.f32 %v3888, %v5174
        %5176 = vdwg.mxu0
        %5177 = vmatprep.subr.bf16.mxu0 %v5015
        %5178 = vmatpush1.bf16.msra.mxu0 %v5014
        %5179 = vmatprep.subr.bf16.mxu0 %v5018
        %5180 = vmatpush1.bf16.msra.mxu0 %v5017
        %5181 = vmatprep.subr.bf16.mxu0 %v5021
        %5182 = vmatpush1.bf16.msra.mxu0 %v5020
        %5183 = vmatprep.subr.bf16.mxu0 %v5024
        %5184 = vmatpush1.bf16.msra.mxu0 %v5023
        %5185 = vmatprep.subr.bf16.mxu0 %v5027
        %5186 = vmatpush1.bf16.msra.mxu0 %v5026
        %5187 = vmatprep.subr.bf16.mxu0 %v5030
        %5188 = vmatpush1.bf16.msra.mxu0 %v5029
        %5189 = vmatprep.subr.bf16.mxu0 %v5033
        %5190 = vmatpush1.bf16.msra.mxu0 %v5032
        %5191 = vmatprep.subr.bf16.mxu0 %v5036
        %5192 = vmatpush1.bf16.msra.mxu0 %v5035
        %5193 = vmatprep.subr.bf16.mxu0 %v5039
        %5194 = vmatpush1.bf16.msra.mxu0 %v5038
        %5195 = vmatprep.subr.bf16.mxu0 %v5042
        %5196 = vmatpush1.bf16.msra.mxu0 %v5041
        %5197 = vmatprep.subr.bf16.mxu0 %v5045
        %5198 = vmatpush1.bf16.msra.mxu0 %v5044
        %5199 = vmatprep.subr.bf16.mxu0 %v5048
        %5200 = vmatpush1.bf16.msra.mxu0 %v5047
        %5201 = vmatprep.subr.bf16.mxu0 0
        %5202 = vmatpush1.bf16.msra.mxu0 0
        %5203 = vmatprep.subr.bf16.mxu0 0
        %5204 = vmatpush1.bf16.msra.mxu0 0
        %5205 = vmatprep.subr.bf16.mxu0 0
        %5206 = vmatpush1.bf16.msra.mxu0 0
        %5207 = vmatprep.subr.bf16.mxu0 0
        %5208 = vmatpush1.bf16.msra.mxu0 0
        %5209 = vmatprep.mubr.bf16.mxu0 %v4516
        %5210 = vmatmul.mubr.bf16.gmra.mrb[0].mxu0 %v4062
        %v5211 = vpop.f32.mrb[0].mxu0
        %v5212 = vadd.f32 %v5169, %v5211
        %v5213 = vpop.f32.mrb[0].mxu0
        %v5214 = vadd.f32 %v5171, %v5213
        %v5215 = vpop.f32.mrb[0].mxu0
        %v5216 = vadd.f32 %v5173, %v5215
        %v5217 = vpop.f32.mrb[0].mxu0
        %v5218 = vadd.f32 %v5175, %v5217
        %5219 = vdwg.mxu0
        %5220 = vmatprep.subr.bf16.mxu0 0
        %5221 = vmatpush1.bf16.msra.mxu0 %v4968
        %5222 = vmatprep.subr.bf16.mxu0 0
        %5223 = vmatpush1.bf16.msra.mxu0 %v4971
        %5224 = vmatprep.subr.bf16.mxu0 0
        %5225 = vmatpush1.bf16.msra.mxu0 %v4974
        %5226 = vmatprep.subr.bf16.mxu0 0
        %5227 = vmatpush1.bf16.msra.mxu0 %v4977
        %5228 = vmatprep.subr.bf16.mxu0 0
        %5229 = vmatpush1.bf16.msra.mxu0 %v4980
        %5230 = vmatprep.subr.bf16.mxu0 0
        %5231 = vmatpush1.bf16.msra.mxu0 %v4983
        %5232 = vmatprep.subr.bf16.mxu0 0
        %5233 = vmatpush1.bf16.msra.mxu0 %v4986
        %5234 = vmatprep.subr.bf16.mxu0 0
        %5235 = vmatpush1.bf16.msra.mxu0 %v4989
        %5236 = vmatprep.subr.bf16.mxu0 0
        %5237 = vmatpush1.bf16.msra.mxu0 %v4992
        %5238 = vmatprep.subr.bf16.mxu0 0
        %5239 = vmatpush1.bf16.msra.mxu0 %v4995
        %5240 = vmatprep.subr.bf16.mxu0 0
        %5241 = vmatpush1.bf16.msra.mxu0 %v4998
        %5242 = vmatprep.subr.bf16.mxu0 0
        %5243 = vmatpush1.bf16.msra.mxu0 %v5001
        %5244 = vmatprep.subr.bf16.mxu0 0
        %5245 = vmatpush1.bf16.msra.mxu0 %v5004
        %5246 = vmatprep.subr.bf16.mxu0 0
        %5247 = vmatpush1.bf16.msra.mxu0 %v5007
        %5248 = vmatprep.subr.bf16.mxu0 0
        %5249 = vmatpush1.bf16.msra.mxu0 %v5010
        %5250 = vmatprep.subr.bf16.mxu0 0
        %5251 = vmatpush1.bf16.msra.mxu0 %v5013
        %5252 = vmatprep.mubr.bf16.mxu0 %v4061
        %5253 = vmatmul.mubr.bf16.gmra.mrb[0].mxu0 %v4060
        %v5254 = vpop.f32.mrb[0].mxu0
        %v5255 = vadd.f32 %v3966, %v5254
        %v5256 = vpop.f32.mrb[0].mxu0
        %v5257 = vpop.f32.mrb[0].mxu0
        %v5258 = vadd.f32 %v3969, %v5257
        %v5259 = vpop.f32.mrb[0].mxu0
        %5260 = vdwg.mxu0
        %5261 = vmatprep.subr.bf16.mxu0 0
        %5262 = vmatpush1.bf16.msra.mxu0 %v5016
        %5263 = vmatprep.subr.bf16.mxu0 0
        %5264 = vmatpush1.bf16.msra.mxu0 %v5019
        %5265 = vmatprep.subr.bf16.mxu0 0
        %5266 = vmatpush1.bf16.msra.mxu0 %v5022
        %5267 = vmatprep.subr.bf16.mxu0 0
        %5268 = vmatpush1.bf16.msra.mxu0 %v5025
        %5269 = vmatprep.subr.bf16.mxu0 0
        %5270 = vmatpush1.bf16.msra.mxu0 %v5028
        %5271 = vmatprep.subr.bf16.mxu0 0
        %5272 = vmatpush1.bf16.msra.mxu0 %v5031
        %5273 = vmatprep.subr.bf16.mxu0 0
        %5274 = vmatpush1.bf16.msra.mxu0 %v5034
        %5275 = vmatprep.subr.bf16.mxu0 0
        %5276 = vmatpush1.bf16.msra.mxu0 %v5037
        %5277 = vmatprep.subr.bf16.mxu0 0
        %5278 = vmatpush1.bf16.msra.mxu0 %v5040
        %5279 = vmatprep.subr.bf16.mxu0 0
        %5280 = vmatpush1.bf16.msra.mxu0 %v5043
        %5281 = vmatprep.subr.bf16.mxu0 0
        %5282 = vmatpush1.bf16.msra.mxu0 %v5046
        %5283 = vmatprep.subr.bf16.mxu0 0
        %5284 = vmatpush1.bf16.msra.mxu0 %v5049
        %5285 = vmatprep.subr.bf16.mxu0 0
        %5286 = vmatpush1.bf16.msra.mxu0 0
        %5287 = vmatprep.subr.bf16.mxu0 0
        %5288 = vmatpush1.bf16.msra.mxu0 0
        %5289 = vmatprep.subr.bf16.mxu0 0
        %5290 = vmatpush1.bf16.msra.mxu0 0
        %5291 = vmatprep.subr.bf16.mxu0 0
        %5292 = vmatpush1.bf16.msra.mxu0 0
        %5293 = vmatprep.mubr.bf16.mxu0 %v4516
        %5294 = vmatmul.mubr.bf16.gmra.mrb[0].mxu0 %v4062
        %v5295 = vpop.f32.mrb[0].mxu0
        %v5296 = vadd.f32 %v5255, %v5295
        %v5297 = vpop.f32.mrb[0].mxu0
        %v5298 = vpop.f32.mrb[0].mxu0
        %v5299 = vadd.f32 %v5258, %v5298
        %v5300 = vpop.f32.mrb[0].mxu0
        %5301 = vdwg.mxu0
        %s5302 = scalar_lea.vmem [#allocation7], 1344
        %v5303 = vld [vmem:[%s5302] sm:$0xff]
        %v5304 = vld [vmem:[%s5302 + $0x8] sm:$0xf]
        %v5305 = vld [vmem:[%s5302 + $0xc] sm:$0xff]
        %v5306 = vld [vmem:[%s5302 + $0x14] sm:$0xf]
        %v5307 = vld [vmem:[%s5302 + $0x18] sm:$0xff]
        %v5308 = vld [vmem:[%s5302 + $0x20] sm:$0xf]
        %v5309 = vld [vmem:[%s5302 + $0x24] sm:$0xff]
        %v5310 = vld [vmem:[%s5302 + $0x2c] sm:$0xf]
        %v5311 = vld [vmem:[%s5302 + $0x30] sm:$0xff]
        %v5312 = vld [vmem:[%s5302 + $0x38] sm:$0xf]
        %v5313 = vld [vmem:[%s5302 + $0x3c] sm:$0xff]
        %v5314 = vld [vmem:[%s5302 + $0x44] sm:$0xf]
        %v5315 = vld [vmem:[%s5302 + $0x48] sm:$0xff]
        %v5316 = vld [vmem:[%s5302 + $0x50] sm:$0xf]
        %v5317 = vld [vmem:[%s5302 + $0x54] sm:$0xff]
        %v5318 = vld [vmem:[%s5302 + $0x5c] sm:$0xf]
        %v5319 = vld [vmem:[%s5302 + $0x60] sm:$0xff]
        %v5320 = vld [vmem:[%s5302 + $0x68] sm:$0xf]
        %v5321 = vld [vmem:[%s5302 + $0x6c] sm:$0xff]
        %v5322 = vld [vmem:[%s5302 + $0x74] sm:$0xf]
        %v5323 = vld [vmem:[%s5302 + $0x78] sm:$0xff]
        %v5324 = vld [vmem:[%s5302 + $0x80] sm:$0xf]
        %v5325 = vld [vmem:[%s5302 + $0x84] sm:$0xff]
        %v5326 = vld [vmem:[%s5302 + $0x8c] sm:$0xf]
        %v5327 = vld [vmem:[%s5302 + $0x90] sm:$0xff]
        %v5328 = vld [vmem:[%s5302 + $0x98] sm:$0xf]
        %v5329 = vld [vmem:[%s5302 + $0x9c] sm:$0xff]
        %v5330 = vld [vmem:[%s5302 + $0xa4] sm:$0xf]
        %v5331 = vld [vmem:[%s5302 + $0xa8] sm:$0xff]
        %v5332 = vld [vmem:[%s5302 + $0xb0] sm:$0xf]
        %v5333 = vld [vmem:[%s5302 + $0xb4] sm:$0xff]
        %v5334 = vld [vmem:[%s5302 + $0xbc] sm:$0xf]
        %v5335 = vld [vmem:[%s5302 + $0xc0] sm:$0xff]
        %v5336 = vld [vmem:[%s5302 + $0xc8] sm:$0xf]
        %v5337 = vld [vmem:[%s5302 + $0xcc] sm:$0xff]
        %v5338 = vld [vmem:[%s5302 + $0xd4] sm:$0xf]
        %v5339 = vld [vmem:[%s5302 + $0xd8] sm:$0xff]
        %v5340 = vld [vmem:[%s5302 + $0xe0] sm:$0xf]
        %v5341 = vld [vmem:[%s5302 + $0xe4] sm:$0xff]
        %v5342 = vld [vmem:[%s5302 + $0xec] sm:$0xf]
        %v5343 = vld [vmem:[%s5302 + $0xf0] sm:$0xff]
        %v5344 = vld [vmem:[%s5302 + $0xf8] sm:$0xf]
        %v5345 = vld [vmem:[%s5302 + $0xfc] sm:$0xff]
        %v5346 = vld [vmem:[%s5302 + $0x104] sm:$0xf]
        %v5347 = vld [vmem:[%s5302 + $0x108] sm:$0xff]
        %v5348 = vld [vmem:[%s5302 + $0x110] sm:$0xf]
        %v5349 = vld [vmem:[%s5302 + $0x114] sm:$0xff]
        %v5350 = vld [vmem:[%s5302 + $0x11c] sm:$0xf]
        %v5351 = vld [vmem:[%s5302 + $0x120] sm:$0xff]
        %v5352 = vld [vmem:[%s5302 + $0x128] sm:$0xf]
        %v5353 = vld [vmem:[%s5302 + $0x12c] sm:$0xff]
        %v5354 = vld [vmem:[%s5302 + $0x134] sm:$0xf]
        %v5355 = vld [vmem:[%s5302 + $0x138] sm:$0xff]
        %v5356 = vld [vmem:[%s5302 + $0x140] sm:$0xf]
        %v5357 = vld [vmem:[%s5302 + $0x144] sm:$0xff]
        %v5358 = vld [vmem:[%s5302 + $0x14c] sm:$0xf]
        %v5359 = vld [vmem:[%s5302 + $0x150] sm:$0xff]
        %v5360 = vld [vmem:[%s5302 + $0x158] sm:$0xf]
        %v5361 = vld [vmem:[%s5302 + $0x15c] sm:$0xff]
        %v5362 = vld [vmem:[%s5302 + $0x164] sm:$0xf]
        %v5363 = vld [vmem:[%s5302 + $0x168] sm:$0xff]
        %v5364 = vld [vmem:[%s5302 + $0x170] sm:$0xf]
        %v5365 = vld [vmem:[%s5302 + $0x174] sm:$0xff]
        %v5366 = vld [vmem:[%s5302 + $0x17c] sm:$0xf]
        %v5367 = vld [vmem:[%s5302 + $0x180] sm:$0xff]
        %v5368 = vld [vmem:[%s5302 + $0x188] sm:$0xf]
        %v5369 = vld [vmem:[%s5302 + $0x18c] sm:$0xff]
        %v5370 = vld [vmem:[%s5302 + $0x194] sm:$0xf]
        %v5371 = vld [vmem:[%s5302 + $0x198] sm:$0xff]
        %v5372 = vld [vmem:[%s5302 + $0x1a0] sm:$0xf]
        %v5373 = vld [vmem:[%s5302 + $0x1a4] sm:$0xff]
        %v5374 = vld [vmem:[%s5302 + $0x1ac] sm:$0xf]
        %v5375 = vld [vmem:[%s5302 + $0x1b0] sm:$0xff]
        %v5376 = vld [vmem:[%s5302 + $0x1b8] sm:$0xf]
        %v5377 = vld [vmem:[%s5302 + $0x1bc] sm:$0xff]
        %v5378 = vld [vmem:[%s5302 + $0x1c4] sm:$0xf]
        %v5379 = vld [vmem:[%s5302 + $0x1c8] sm:$0xff]
        %v5380 = vld [vmem:[%s5302 + $0x1d0] sm:$0xf]
        %v5381 = vld [vmem:[%s5302 + $0x1d4] sm:$0xff]
        %v5382 = vld [vmem:[%s5302 + $0x1dc] sm:$0xf]
        %v5383 = vld [vmem:[%s5302 + $0x1e0] sm:$0xff]
        %v5384 = vld [vmem:[%s5302 + $0x1e8] sm:$0xf]
        %v5385 = vld [vmem:[%s5302 + $0x1ec] sm:$0xff]
        %v5386 = vld [vmem:[%s5302 + $0x1f4] sm:$0xf]
        %v5387 = vld [vmem:[%s5302 + $0x1f8] sm:$0xff]
        %v5388 = vld [vmem:[%s5302 + $0x200] sm:$0xf]
        %v5389 = vld [vmem:[%s5302 + $0x204] sm:$0xff]
        %v5390 = vld [vmem:[%s5302 + $0x20c] sm:$0xf]
        %v5391 = vld [vmem:[%s5302 + $0x210] sm:$0xff]
        %v5392 = vld [vmem:[%s5302 + $0x218] sm:$0xf]
        %v5393 = vld [vmem:[%s5302 + $0x21c] sm:$0xff]
        %v5394 = vld [vmem:[%s5302 + $0x224] sm:$0xf]
        %v5395 = vld [vmem:[%s5302 + $0x228] sm:$0xff]
        %v5396 = vld [vmem:[%s5302 + $0x230] sm:$0xf]
        %v5397 = vld [vmem:[%s5302 + $0x234] sm:$0xff]
        %v5398 = vld [vmem:[%s5302 + $0x23c] sm:$0xf]
        %v5399 = vld [vmem:[%s5302 + $0x240] sm:$0xff]
        %v5400 = vld [vmem:[%s5302 + $0x248] sm:$0xf]
        %v5401 = vld [vmem:[%s5302 + $0x24c] sm:$0xff]
        %v5402 = vld [vmem:[%s5302 + $0x254] sm:$0xf]
        %v5403 = vld [vmem:[%s5302 + $0x258] sm:$0xff]
        %v5404 = vld [vmem:[%s5302 + $0x260] sm:$0xf]
        %v5405 = vld [vmem:[%s5302 + $0x264] sm:$0xff]
        %v5406 = vld [vmem:[%s5302 + $0x26c] sm:$0xf]
        %v5407 = vld [vmem:[%s5302 + $0x270] sm:$0xff]
        %v5408 = vld [vmem:[%s5302 + $0x278] sm:$0xf]
        %v5409 = vld [vmem:[%s5302 + $0x27c] sm:$0xff]
        %v5410 = vld [vmem:[%s5302 + $0x284] sm:$0xf]
        %v5411 = vld [vmem:[%s5302 + $0x288] sm:$0xff]
        %v5412 = vld [vmem:[%s5302 + $0x290] sm:$0xf]
        %v5413 = vld [vmem:[%s5302 + $0x294] sm:$0xff]
        %v5414 = vld [vmem:[%s5302 + $0x29c] sm:$0xf]
        %v5419 = vunpack.c.l.b16 %v2092
        %v5420 = vunpack.c.l.b16 %v2093
        %v5421 = vunpack.c.l.b16 %v2094
        %v5422 = vunpack.c.l.b16 %v2095
        %v5423 = vrot.slane %v2489, 7
        %v5424 = vsel %vm2530, %v5423, %v2485
        %v5425 = vrot.slane %v2493, 6
        %v5426 = vsel %vm2533, %v5425, %v5424
        %v5427 = vrot.slane %v2497, 5
        %v5428 = vsel %vm2536, %v5427, %v5426
        %v5429 = vrot.slane %v2501, 4
        %v5430 = vsel %vm2539, %v5429, %v5428
        %v5431 = vrot.slane %v2505, 3
        %v5432 = vsel %vm2542, %v5431, %v5430
        %v5433 = vrot.slane %v2509, 2
        %v5434 = vsel %vm2545, %v5433, %v5432
        %v5435 = vrot.slane %v2513, 1
        %v5436 = vsel %vm2548, %v5435, %v5434
        %v5437 = vrot.slane %v2490, 7
        %v5438 = vsel %vm2530, %v5437, %v2486
        %v5439 = vrot.slane %v2494, 6
        %v5440 = vsel %vm2533, %v5439, %v5438
        %v5441 = vrot.slane %v2498, 5
        %v5442 = vsel %vm2536, %v5441, %v5440
        %v5443 = vrot.slane %v2502, 4
        %v5444 = vsel %vm2539, %v5443, %v5442
        %v5445 = vrot.slane %v2506, 3
        %v5446 = vsel %vm2542, %v5445, %v5444
        %v5447 = vrot.slane %v2510, 2
        %v5448 = vsel %vm2545, %v5447, %v5446
        %v5449 = vrot.slane %v2514, 1
        %v5450 = vsel %vm2548, %v5449, %v5448
        %v5451 = vrot.slane %v2491, 7
        %v5452 = vsel %vm2530, %v5451, %v2487
        %v5453 = vrot.slane %v2495, 6
        %v5454 = vsel %vm2533, %v5453, %v5452
        %v5455 = vrot.slane %v2499, 5
        %v5456 = vsel %vm2536, %v5455, %v5454
        %v5457 = vrot.slane %v2503, 4
        %v5458 = vsel %vm2539, %v5457, %v5456
        %v5459 = vrot.slane %v2507, 3
        %v5460 = vsel %vm2542, %v5459, %v5458
        %v5461 = vrot.slane %v2511, 2
        %v5462 = vsel %vm2545, %v5461, %v5460
        %v5463 = vrot.slane %v2515, 1
        %v5464 = vsel %vm2548, %v5463, %v5462
        %v5465 = vrot.slane %v2492, 7
        %v5466 = vsel %vm2530, %v5465, %v2488
        %v5467 = vrot.slane %v2496, 6
        %v5468 = vsel %vm2533, %v5467, %v5466
        %v5469 = vrot.slane %v2500, 5
        %v5470 = vsel %vm2536, %v5469, %v5468
        %v5471 = vrot.slane %v2504, 4
        %v5472 = vsel %vm2539, %v5471, %v5470
        %v5473 = vrot.slane %v2508, 3
        %v5474 = vsel %vm2542, %v5473, %v5472
        %v5475 = vrot.slane %v2512, 2
        %v5476 = vsel %vm2545, %v5475, %v5474
        %v5477 = vrot.slane %v2516, 1
        %v5478 = vsel %vm2548, %v5477, %v5476
        %v5479 = vrot.slane %v2521, 7
        %v5480 = vsel %vm2530, %v5479, %v2517
        %v5481 = vrot.slane %v2525, 6
        %v5482 = vsel %vm2533, %v5481, %v5480
        %v5483 = vrot.slane %v5419, 5
        %v5484 = vsel %vm2536, %v5483, %v5482
        %v5485 = vrot.slane %v2522, 7
        %v5486 = vsel %vm2530, %v5485, %v2518
        %v5487 = vrot.slane %v2526, 6
        %v5488 = vsel %vm2533, %v5487, %v5486
        %v5489 = vrot.slane %v5420, 5
        %v5490 = vsel %vm2536, %v5489, %v5488
        %v5491 = vrot.slane %v2523, 7
        %v5492 = vsel %vm2530, %v5491, %v2519
        %v5493 = vrot.slane %v2527, 6
        %v5494 = vsel %vm2533, %v5493, %v5492
        %v5495 = vrot.slane %v5421, 5
        %v5496 = vsel %vm2536, %v5495, %v5494
        %v5497 = vrot.slane %v2524, 7
        %v5498 = vsel %vm2530, %v5497, %v2520
        %v5499 = vrot.slane %v2528, 6
        %v5500 = vsel %vm2533, %v5499, %v5498
        %v5501 = vrot.slane %v5422, 5
        %v5502 = vsel %vm2536, %v5501, %v5500
        %v5503 = vpack.c.b16 %v5484, %v5436
        %v5504 = vpack.c.b16 %v5490, %v5450
        %v5505 = vpack.c.b16 %v5496, %v5464
        %v5506 = vpack.c.b16 %v5502, %v5478
        %v5622 = vunpack.c.l.b16 %v5303
        %v5623 = vunpack.c.h.b16 %v5303
        %v5624 = vunpack.c.l.b16 %v5304
        %v5625 = vunpack.c.l.b16 %v5305
        %v5626 = vunpack.c.h.b16 %v5305
        %v5627 = vunpack.c.l.b16 %v5306
        %v5628 = vunpack.c.l.b16 %v5307
        %v5629 = vunpack.c.h.b16 %v5307
        %v5630 = vunpack.c.l.b16 %v5308
        %v5631 = vunpack.c.l.b16 %v5309
        %v5632 = vunpack.c.h.b16 %v5309
        %v5633 = vunpack.c.l.b16 %v5310
        %v5634 = vunpack.c.l.b16 %v5311
        %v5635 = vunpack.c.h.b16 %v5311
        %v5636 = vunpack.c.l.b16 %v5312
        %v5637 = vunpack.c.l.b16 %v5313
        %v5638 = vunpack.c.h.b16 %v5313
        %v5639 = vunpack.c.l.b16 %v5314
        %v5640 = vunpack.c.l.b16 %v5315
        %v5641 = vunpack.c.h.b16 %v5315
        %v5642 = vunpack.c.l.b16 %v5316
        %v5643 = vunpack.c.l.b16 %v5317
        %v5644 = vunpack.c.h.b16 %v5317
        %v5645 = vunpack.c.l.b16 %v5318
        %v5646 = vunpack.c.l.b16 %v5319
        %v5647 = vunpack.c.h.b16 %v5319
        %v5648 = vunpack.c.l.b16 %v5320
        %v5649 = vunpack.c.l.b16 %v5321
        %v5650 = vunpack.c.h.b16 %v5321
        %v5651 = vunpack.c.l.b16 %v5322
        %v5652 = vunpack.c.l.b16 %v5323
        %v5653 = vunpack.c.h.b16 %v5323
        %v5654 = vunpack.c.l.b16 %v5324
        %v5655 = vunpack.c.l.b16 %v5325
        %v5656 = vunpack.c.h.b16 %v5325
        %v5657 = vunpack.c.l.b16 %v5326
        %v5658 = vunpack.c.l.b16 %v5327
        %v5659 = vunpack.c.h.b16 %v5327
        %v5660 = vunpack.c.l.b16 %v5328
        %v5661 = vunpack.c.l.b16 %v5329
        %v5662 = vunpack.c.h.b16 %v5329
        %v5663 = vunpack.c.l.b16 %v5330
        %v5664 = vunpack.c.l.b16 %v5331
        %v5665 = vunpack.c.h.b16 %v5331
        %v5666 = vunpack.c.l.b16 %v5332
        %v5667 = vunpack.c.l.b16 %v5333
        %v5668 = vunpack.c.h.b16 %v5333
        %v5669 = vunpack.c.l.b16 %v5334
        %v5670 = vunpack.c.l.b16 %v5335
        %v5671 = vunpack.c.h.b16 %v5335
        %v5672 = vunpack.c.l.b16 %v5336
        %v5673 = vunpack.c.l.b16 %v5337
        %v5674 = vunpack.c.h.b16 %v5337
        %v5675 = vunpack.c.l.b16 %v5338
        %v5676 = vunpack.c.l.b16 %v5339
        %v5677 = vunpack.c.h.b16 %v5339
        %v5678 = vunpack.c.l.b16 %v5340
        %v5679 = vunpack.c.l.b16 %v5341
        %v5680 = vunpack.c.h.b16 %v5341
        %v5681 = vunpack.c.l.b16 %v5342
        %v5682 = vunpack.c.l.b16 %v5343
        %v5683 = vunpack.c.h.b16 %v5343
        %v5684 = vunpack.c.l.b16 %v5344
        %v5685 = vunpack.c.l.b16 %v5345
        %v5686 = vunpack.c.h.b16 %v5345
        %v5687 = vunpack.c.l.b16 %v5346
        %v5688 = vunpack.c.l.b16 %v5347
        %v5689 = vunpack.c.h.b16 %v5347
        %v5690 = vunpack.c.l.b16 %v5348
        %v5691 = vunpack.c.l.b16 %v5349
        %v5692 = vunpack.c.h.b16 %v5349
        %v5693 = vunpack.c.l.b16 %v5350
        %v5694 = vunpack.c.l.b16 %v5351
        %v5695 = vunpack.c.h.b16 %v5351
        %v5696 = vunpack.c.l.b16 %v5352
        %v5697 = vunpack.c.l.b16 %v5353
        %v5698 = vunpack.c.h.b16 %v5353
        %v5699 = vunpack.c.l.b16 %v5354
        %v5700 = vunpack.c.l.b16 %v5355
        %v5701 = vunpack.c.h.b16 %v5355
        %v5702 = vunpack.c.l.b16 %v5356
        %v5703 = vunpack.c.l.b16 %v5357
        %v5704 = vunpack.c.h.b16 %v5357
        %v5705 = vunpack.c.l.b16 %v5358
        %v5706 = vunpack.c.l.b16 %v5359
        %v5707 = vunpack.c.h.b16 %v5359
        %v5708 = vunpack.c.l.b16 %v5360
        %v5709 = vunpack.c.l.b16 %v5361
        %v5710 = vunpack.c.h.b16 %v5361
        %v5711 = vunpack.c.l.b16 %v5362
        %v5712 = vunpack.c.l.b16 %v5363
        %v5713 = vunpack.c.h.b16 %v5363
        %v5714 = vunpack.c.l.b16 %v5364
        %v5715 = vunpack.c.l.b16 %v5365
        %v5716 = vunpack.c.h.b16 %v5365
        %v5717 = vunpack.c.l.b16 %v5366
        %v5718 = vunpack.c.l.b16 %v5367
        %v5719 = vunpack.c.h.b16 %v5367
        %v5720 = vunpack.c.l.b16 %v5368
        %v5721 = vunpack.c.l.b16 %v5369
        %v5722 = vunpack.c.h.b16 %v5369
        %v5723 = vunpack.c.l.b16 %v5370
        %v5724 = vunpack.c.l.b16 %v5371
        %v5725 = vunpack.c.h.b16 %v5371
        %v5726 = vunpack.c.l.b16 %v5372
        %v5727 = vunpack.c.l.b16 %v5373
        %v5728 = vunpack.c.h.b16 %v5373
        %v5729 = vunpack.c.l.b16 %v5374
        %v5730 = vunpack.c.l.b16 %v5375
        %v5731 = vunpack.c.h.b16 %v5375
        %v5732 = vunpack.c.l.b16 %v5376
        %v5733 = vunpack.c.l.b16 %v5377
        %v5734 = vunpack.c.h.b16 %v5377
        %v5735 = vunpack.c.l.b16 %v5378
        %v5736 = vunpack.c.l.b16 %v5379
        %v5737 = vunpack.c.h.b16 %v5379
        %v5738 = vunpack.c.l.b16 %v5380
        %v5739 = vunpack.c.l.b16 %v5381
        %v5740 = vunpack.c.h.b16 %v5381
        %v5741 = vunpack.c.l.b16 %v5382
        %v5742 = vunpack.c.l.b16 %v5383
        %v5743 = vunpack.c.h.b16 %v5383
        %v5744 = vunpack.c.l.b16 %v5384
        %v5745 = vunpack.c.l.b16 %v5385
        %v5746 = vunpack.c.h.b16 %v5385
        %v5747 = vunpack.c.l.b16 %v5386
        %v5748 = vunpack.c.l.b16 %v5387
        %v5749 = vunpack.c.h.b16 %v5387
        %v5750 = vunpack.c.l.b16 %v5388
        %v5751 = vunpack.c.l.b16 %v5389
        %v5752 = vunpack.c.h.b16 %v5389
        %v5753 = vunpack.c.l.b16 %v5390
        %v5754 = vunpack.c.l.b16 %v5391
        %v5755 = vunpack.c.h.b16 %v5391
        %v5756 = vunpack.c.l.b16 %v5392
        %v5757 = vunpack.c.l.b16 %v5393
        %v5758 = vunpack.c.h.b16 %v5393
        %v5759 = vunpack.c.l.b16 %v5394
        %v5760 = vunpack.c.l.b16 %v5395
        %v5761 = vunpack.c.h.b16 %v5395
        %v5762 = vunpack.c.l.b16 %v5396
        %v5763 = vunpack.c.l.b16 %v5397
        %v5764 = vunpack.c.h.b16 %v5397
        %v5765 = vunpack.c.l.b16 %v5398
        %v5766 = vunpack.c.l.b16 %v5399
        %v5767 = vunpack.c.h.b16 %v5399
        %v5768 = vunpack.c.l.b16 %v5400
        %v5769 = vunpack.c.l.b16 %v5401
        %v5770 = vunpack.c.h.b16 %v5401
        %v5771 = vunpack.c.l.b16 %v5402
        %v5772 = vunpack.c.l.b16 %v5403
        %v5773 = vunpack.c.h.b16 %v5403
        %v5774 = vunpack.c.l.b16 %v5404
        %v5775 = vunpack.c.l.b16 %v5405
        %v5776 = vunpack.c.h.b16 %v5405
        %v5777 = vunpack.c.l.b16 %v5406
        %v5778 = vunpack.c.l.b16 %v5407
        %v5779 = vunpack.c.h.b16 %v5407
        %v5780 = vunpack.c.l.b16 %v5408
        %v5781 = vunpack.c.l.b16 %v5409
        %v5782 = vunpack.c.h.b16 %v5409
        %v5783 = vunpack.c.l.b16 %v5410
        %v5784 = vunpack.c.l.b16 %v5411
        %v5785 = vunpack.c.h.b16 %v5411
        %v5786 = vunpack.c.l.b16 %v5412
        %v5787 = vunpack.c.l.b16 %v5413
        %v5788 = vunpack.c.h.b16 %v5413
        %v5789 = vunpack.c.l.b16 %v5414
        %v5790 = vpack.c.b16 %v5625, %v5622
        %v5791 = vpack.c.b16 %v5626, %v5623
        %v5792 = vpack.c.b16 %v5627, %v5624
        %v5793 = vpack.c.b16 %v5631, %v5628
        %v5794 = vpack.c.b16 %v5632, %v5629
        %v5795 = vpack.c.b16 %v5633, %v5630
        %v5796 = vpack.c.b16 %v5637, %v5634
        %v5797 = vpack.c.b16 %v5638, %v5635
        %v5798 = vpack.c.b16 %v5639, %v5636
        %v5799 = vpack.c.b16 %v5643, %v5640
        %v5800 = vpack.c.b16 %v5644, %v5641
        %v5801 = vpack.c.b16 %v5645, %v5642
        %v5802 = vpack.c.b16 %v5649, %v5646
        %v5803 = vpack.c.b16 %v5650, %v5647
        %v5804 = vpack.c.b16 %v5651, %v5648
        %v5805 = vpack.c.b16 %v5655, %v5652
        %v5806 = vpack.c.b16 %v5656, %v5653
        %v5807 = vpack.c.b16 %v5657, %v5654
        %v5808 = vpack.c.b16 %v5661, %v5658
        %v5809 = vpack.c.b16 %v5662, %v5659
        %v5810 = vpack.c.b16 %v5663, %v5660
        %v5811 = vpack.c.b16 %v5667, %v5664
        %v5812 = vpack.c.b16 %v5668, %v5665
        %v5813 = vpack.c.b16 %v5669, %v5666
        %v5814 = vpack.c.b16 %v5673, %v5670
        %v5815 = vpack.c.b16 %v5674, %v5671
        %v5816 = vpack.c.b16 %v5675, %v5672
        %v5817 = vpack.c.b16 %v5679, %v5676
        %v5818 = vpack.c.b16 %v5680, %v5677
        %v5819 = vpack.c.b16 %v5681, %v5678
        %v5820 = vpack.c.b16 %v5685, %v5682
        %v5821 = vpack.c.b16 %v5686, %v5683
        %v5822 = vpack.c.b16 %v5687, %v5684
        %v5823 = vpack.c.b16 %v5691, %v5688
        %v5824 = vpack.c.b16 %v5692, %v5689
        %v5825 = vpack.c.b16 %v5693, %v5690
        %v5826 = vpack.c.b16 %v5697, %v5694
        %v5827 = vpack.c.b16 %v5698, %v5695
        %v5828 = vpack.c.b16 %v5699, %v5696
        %v5829 = vpack.c.b16 %v5703, %v5700
        %v5830 = vpack.c.b16 %v5704, %v5701
        %v5831 = vpack.c.b16 %v5705, %v5702
        %v5832 = vpack.c.b16 %v5709, %v5706
        %v5833 = vpack.c.b16 %v5710, %v5707
        %v5834 = vpack.c.b16 %v5711, %v5708
        %v5835 = vpack.c.b16 %v5715, %v5712
        %v5836 = vpack.c.b16 %v5716, %v5713
        %v5837 = vpack.c.b16 %v5717, %v5714
        %v5838 = vpack.c.b16 %v5721, %v5718
        %v5839 = vpack.c.b16 %v5722, %v5719
        %v5840 = vpack.c.b16 %v5723, %v5720
        %v5841 = vpack.c.b16 %v5727, %v5724
        %v5842 = vpack.c.b16 %v5728, %v5725
        %v5843 = vpack.c.b16 %v5729, %v5726
        %v5844 = vpack.c.b16 %v5733, %v5730
        %v5845 = vpack.c.b16 %v5734, %v5731
        %v5846 = vpack.c.b16 %v5735, %v5732
        %v5847 = vpack.c.b16 %v5739, %v5736
        %v5848 = vpack.c.b16 %v5740, %v5737
        %v5849 = vpack.c.b16 %v5741, %v5738
        %v5850 = vpack.c.b16 %v5745, %v5742
        %v5851 = vpack.c.b16 %v5746, %v5743
        %v5852 = vpack.c.b16 %v5747, %v5744
        %v5853 = vpack.c.b16 %v5751, %v5748
        %v5854 = vpack.c.b16 %v5752, %v5749
        %v5855 = vpack.c.b16 %v5753, %v5750
        %v5856 = vpack.c.b16 %v5757, %v5754
        %v5857 = vpack.c.b16 %v5758, %v5755
        %v5858 = vpack.c.b16 %v5759, %v5756
        %v5859 = vpack.c.b16 %v5763, %v5760
        %v5860 = vpack.c.b16 %v5764, %v5761
        %v5861 = vpack.c.b16 %v5765, %v5762
        %v5862 = vpack.c.b16 %v5769, %v5766
        %v5863 = vpack.c.b16 %v5770, %v5767
        %v5864 = vpack.c.b16 %v5771, %v5768
        %v5865 = vpack.c.b16 %v5775, %v5772
        %v5866 = vpack.c.b16 %v5776, %v5773
        %v5867 = vpack.c.b16 %v5777, %v5774
        %v5868 = vpack.c.b16 %v5781, %v5778
        %v5869 = vpack.c.b16 %v5782, %v5779
        %v5870 = vpack.c.b16 %v5783, %v5780
        %v5871 = vpack.c.b16 %v5787, %v5784
        %v5872 = vpack.c.b16 %v5788, %v5785
        %v5873 = vpack.c.b16 %v5789, %v5786
        %v5959 = vsel %vm3071, %v5506, 0
        %5961 = vmatprep.subr.bf16.mxu0 %v5791
        %5962 = vmatpush1.bf16.msra.mxu0 %v5790
        %5963 = vmatprep.subr.bf16.mxu0 %v5794
        %5964 = vmatpush1.bf16.msra.mxu0 %v5793
        %5965 = vmatprep.subr.bf16.mxu0 %v5797
        %5966 = vmatpush1.bf16.msra.mxu0 %v5796
        %5967 = vmatprep.subr.bf16.mxu0 %v5800
        %5968 = vmatpush1.bf16.msra.mxu0 %v5799
        %5969 = vmatprep.subr.bf16.mxu0 %v5803
        %5970 = vmatpush1.bf16.msra.mxu0 %v5802
        %5971 = vmatprep.subr.bf16.mxu0 %v5806
        %5972 = vmatpush1.bf16.msra.mxu0 %v5805
        %5973 = vmatprep.subr.bf16.mxu0 %v5809
        %5974 = vmatpush1.bf16.msra.mxu0 %v5808
        %5975 = vmatprep.subr.bf16.mxu0 %v5812
        %5976 = vmatpush1.bf16.msra.mxu0 %v5811
        %5977 = vmatprep.subr.bf16.mxu0 %v5815
        %5978 = vmatpush1.bf16.msra.mxu0 %v5814
        %5979 = vmatprep.subr.bf16.mxu0 %v5818
        %5980 = vmatpush1.bf16.msra.mxu0 %v5817
        %5981 = vmatprep.subr.bf16.mxu0 %v5821
        %5982 = vmatpush1.bf16.msra.mxu0 %v5820
        %5983 = vmatprep.subr.bf16.mxu0 %v5824
        %5984 = vmatpush1.bf16.msra.mxu0 %v5823
        %5985 = vmatprep.subr.bf16.mxu0 %v5827
        %5986 = vmatpush1.bf16.msra.mxu0 %v5826
        %5987 = vmatprep.subr.bf16.mxu0 %v5830
        %5988 = vmatpush1.bf16.msra.mxu0 %v5829
        %5989 = vmatprep.subr.bf16.mxu0 %v5833
        %5990 = vmatpush1.bf16.msra.mxu0 %v5832
        %5991 = vmatprep.subr.bf16.mxu0 %v5836
        %5992 = vmatpush1.bf16.msra.mxu0 %v5835
        %5993 = vmatprep.mubr.bf16.mxu0 %v5504
        %5994 = vmatmul.mubr.bf16.gmra.mrb[0].mxu0 %v5503
        %v5995 = vpop.f32.mrb[0].mxu0
        %v5996 = vadd.f32 0.0, %v5995
        %v5997 = vpop.f32.mrb[0].mxu0
        %v5998 = vadd.f32 0.0, %v5997
        %v5999 = vpop.f32.mrb[0].mxu0
        %v6000 = vadd.f32 0.0, %v5999
        %v6001 = vpop.f32.mrb[0].mxu0
        %v6002 = vadd.f32 0.0, %v6001
        %6003 = vdwg.mxu0
        %6004 = vmatprep.subr.bf16.mxu0 %v5839
        %6005 = vmatpush1.bf16.msra.mxu0 %v5838
        %6006 = vmatprep.subr.bf16.mxu0 %v5842
        %6007 = vmatpush1.bf16.msra.mxu0 %v5841
        %6008 = vmatprep.subr.bf16.mxu0 %v5845
        %6009 = vmatpush1.bf16.msra.mxu0 %v5844
        %6010 = vmatprep.subr.bf16.mxu0 %v5848
        %6011 = vmatpush1.bf16.msra.mxu0 %v5847
        %6012 = vmatprep.subr.bf16.mxu0 %v5851
        %6013 = vmatpush1.bf16.msra.mxu0 %v5850
        %6014 = vmatprep.subr.bf16.mxu0 %v5854
        %6015 = vmatpush1.bf16.msra.mxu0 %v5853
        %6016 = vmatprep.subr.bf16.mxu0 %v5857
        %6017 = vmatpush1.bf16.msra.mxu0 %v5856
        %6018 = vmatprep.subr.bf16.mxu0 %v5860
        %6019 = vmatpush1.bf16.msra.mxu0 %v5859
        %6020 = vmatprep.subr.bf16.mxu0 %v5863
        %6021 = vmatpush1.bf16.msra.mxu0 %v5862
        %6022 = vmatprep.subr.bf16.mxu0 %v5866
        %6023 = vmatpush1.bf16.msra.mxu0 %v5865
        %6024 = vmatprep.subr.bf16.mxu0 %v5869
        %6025 = vmatpush1.bf16.msra.mxu0 %v5868
        %6026 = vmatprep.subr.bf16.mxu0 %v5872
        %6027 = vmatpush1.bf16.msra.mxu0 %v5871
        %6028 = vmatprep.subr.bf16.mxu0 0
        %6029 = vmatpush1.bf16.msra.mxu0 0
        %6030 = vmatprep.subr.bf16.mxu0 0
        %6031 = vmatpush1.bf16.msra.mxu0 0
        %6032 = vmatprep.subr.bf16.mxu0 0
        %6033 = vmatpush1.bf16.msra.mxu0 0
        %6034 = vmatprep.subr.bf16.mxu0 0
        %6035 = vmatpush1.bf16.msra.mxu0 0
        %6036 = vmatprep.mubr.bf16.mxu0 %v5959
        %6037 = vmatmul.mubr.bf16.gmra.mrb[0].mxu0 %v5505
        %v6038 = vpop.f32.mrb[0].mxu0
        %v6039 = vadd.f32 %v5996, %v6038
        %v6040 = vpop.f32.mrb[0].mxu0
        %v6041 = vadd.f32 %v5998, %v6040
        %v6042 = vpop.f32.mrb[0].mxu0
        %v6043 = vadd.f32 %v6000, %v6042
        %v6044 = vpop.f32.mrb[0].mxu0
        %v6045 = vadd.f32 %v6002, %v6044
        %6046 = vdwg.mxu0
        %6047 = vmatprep.subr.bf16.mxu0 0
        %6048 = vmatpush1.bf16.msra.mxu0 %v5792
        %6049 = vmatprep.subr.bf16.mxu0 0
        %6050 = vmatpush1.bf16.msra.mxu0 %v5795
        %6051 = vmatprep.subr.bf16.mxu0 0
        %6052 = vmatpush1.bf16.msra.mxu0 %v5798
        %6053 = vmatprep.subr.bf16.mxu0 0
        %6054 = vmatpush1.bf16.msra.mxu0 %v5801
        %6055 = vmatprep.subr.bf16.mxu0 0
        %6056 = vmatpush1.bf16.msra.mxu0 %v5804
        %6057 = vmatprep.subr.bf16.mxu0 0
        %6058 = vmatpush1.bf16.msra.mxu0 %v5807
        %6059 = vmatprep.subr.bf16.mxu0 0
        %6060 = vmatpush1.bf16.msra.mxu0 %v5810
        %6061 = vmatprep.subr.bf16.mxu0 0
        %6062 = vmatpush1.bf16.msra.mxu0 %v5813
        %6063 = vmatprep.subr.bf16.mxu0 0
        %6064 = vmatpush1.bf16.msra.mxu0 %v5816
        %6065 = vmatprep.subr.bf16.mxu0 0
        %6066 = vmatpush1.bf16.msra.mxu0 %v5819
        %6067 = vmatprep.subr.bf16.mxu0 0
        %6068 = vmatpush1.bf16.msra.mxu0 %v5822
        %6069 = vmatprep.subr.bf16.mxu0 0
        %6070 = vmatpush1.bf16.msra.mxu0 %v5825
        %6071 = vmatprep.subr.bf16.mxu0 0
        %6072 = vmatpush1.bf16.msra.mxu0 %v5828
        %6073 = vmatprep.subr.bf16.mxu0 0
        %6074 = vmatpush1.bf16.msra.mxu0 %v5831
        %6075 = vmatprep.subr.bf16.mxu0 0
        %6076 = vmatpush1.bf16.msra.mxu0 %v5834
        %6077 = vmatprep.subr.bf16.mxu0 0
        %6078 = vmatpush1.bf16.msra.mxu0 %v5837
        %6079 = vmatprep.mubr.bf16.mxu0 %v5504
        %6080 = vmatmul.mubr.bf16.gmra.mrb[0].mxu0 %v5503
        %v6081 = vpop.f32.mrb[0].mxu0
        %v6082 = vadd.f32 0.0, %v6081
        %v6083 = vpop.f32.mrb[0].mxu0
        %v6084 = vpop.f32.mrb[0].mxu0
        %v6085 = vadd.f32 0.0, %v6084
        %v6086 = vpop.f32.mrb[0].mxu0
        %6087 = vdwg.mxu0
        %6088 = vmatprep.subr.bf16.mxu0 0
        %6089 = vmatpush1.bf16.msra.mxu0 %v5840
        %6090 = vmatprep.subr.bf16.mxu0 0
        %6091 = vmatpush1.bf16.msra.mxu0 %v5843
        %6092 = vmatprep.subr.bf16.mxu0 0
        %6093 = vmatpush1.bf16.msra.mxu0 %v5846
        %6094 = vmatprep.subr.bf16.mxu0 0
        %6095 = vmatpush1.bf16.msra.mxu0 %v5849
        %6096 = vmatprep.subr.bf16.mxu0 0
        %6097 = vmatpush1.bf16.msra.mxu0 %v5852
        %6098 = vmatprep.subr.bf16.mxu0 0
        %6099 = vmatpush1.bf16.msra.mxu0 %v5855
        %6100 = vmatprep.subr.bf16.mxu0 0
        %6101 = vmatpush1.bf16.msra.mxu0 %v5858
        %6102 = vmatprep.subr.bf16.mxu0 0
        %6103 = vmatpush1.bf16.msra.mxu0 %v5861
        %6104 = vmatprep.subr.bf16.mxu0 0
        %6105 = vmatpush1.bf16.msra.mxu0 %v5864
        %6106 = vmatprep.subr.bf16.mxu0 0
        %6107 = vmatpush1.bf16.msra.mxu0 %v5867
        %6108 = vmatprep.subr.bf16.mxu0 0
        %6109 = vmatpush1.bf16.msra.mxu0 %v5870
        %6110 = vmatprep.subr.bf16.mxu0 0
        %6111 = vmatpush1.bf16.msra.mxu0 %v5873
        %6112 = vmatprep.subr.bf16.mxu0 0
        %6113 = vmatpush1.bf16.msra.mxu0 0
        %6114 = vmatprep.subr.bf16.mxu0 0
        %6115 = vmatpush1.bf16.msra.mxu0 0
        %6116 = vmatprep.subr.bf16.mxu0 0
        %6117 = vmatpush1.bf16.msra.mxu0 0
        %6118 = vmatprep.subr.bf16.mxu0 0
        %6119 = vmatpush1.bf16.msra.mxu0 0
        %6120 = vmatprep.mubr.bf16.mxu0 %v5959
        %6121 = vmatmul.mubr.bf16.gmra.mrb[0].mxu0 %v5505
        %v6122 = vpop.f32.mrb[0].mxu0
        %v6123 = vadd.f32 %v6082, %v6122
        %v6124 = vpop.f32.mrb[0].mxu0
        %v6125 = vpop.f32.mrb[0].mxu0
        %v6126 = vadd.f32 %v6085, %v6125
        %v6127 = vpop.f32.mrb[0].mxu0
        %6128 = vdwg.mxu0
        %s6129 = scalar_lea.vmem [#allocation9], 1344
        %v6130 = vld [vmem:[%s6129] sm:$0xff]
        %v6131 = vld [vmem:[%s6129 + $0x8] sm:$0xf]
        %v6132 = vld [vmem:[%s6129 + $0xc] sm:$0xff]
        %v6133 = vld [vmem:[%s6129 + $0x14] sm:$0xf]
        %v6134 = vld [vmem:[%s6129 + $0x18] sm:$0xff]
        %v6135 = vld [vmem:[%s6129 + $0x20] sm:$0xf]
        %v6136 = vld [vmem:[%s6129 + $0x24] sm:$0xff]
        %v6137 = vld [vmem:[%s6129 + $0x2c] sm:$0xf]
        %v6138 = vld [vmem:[%s6129 + $0x30] sm:$0xff]
        %v6139 = vld [vmem:[%s6129 + $0x38] sm:$0xf]
        %v6140 = vld [vmem:[%s6129 + $0x3c] sm:$0xff]
        %v6141 = vld [vmem:[%s6129 + $0x44] sm:$0xf]
        %v6142 = vld [vmem:[%s6129 + $0x48] sm:$0xff]
        %v6143 = vld [vmem:[%s6129 + $0x50] sm:$0xf]
        %v6144 = vld [vmem:[%s6129 + $0x54] sm:$0xff]
        %v6145 = vld [vmem:[%s6129 + $0x5c] sm:$0xf]
        %v6146 = vld [vmem:[%s6129 + $0x60] sm:$0xff]
        %v6147 = vld [vmem:[%s6129 + $0x68] sm:$0xf]
        %v6148 = vld [vmem:[%s6129 + $0x6c] sm:$0xff]
        %v6149 = vld [vmem:[%s6129 + $0x74] sm:$0xf]
        %v6150 = vld [vmem:[%s6129 + $0x78] sm:$0xff]
        %v6151 = vld [vmem:[%s6129 + $0x80] sm:$0xf]
        %v6152 = vld [vmem:[%s6129 + $0x84] sm:$0xff]
        %v6153 = vld [vmem:[%s6129 + $0x8c] sm:$0xf]
        %v6154 = vld [vmem:[%s6129 + $0x90] sm:$0xff]
        %v6155 = vld [vmem:[%s6129 + $0x98] sm:$0xf]
        %v6156 = vld [vmem:[%s6129 + $0x9c] sm:$0xff]
        %v6157 = vld [vmem:[%s6129 + $0xa4] sm:$0xf]
        %v6158 = vld [vmem:[%s6129 + $0xa8] sm:$0xff]
        %v6159 = vld [vmem:[%s6129 + $0xb0] sm:$0xf]
        %v6160 = vld [vmem:[%s6129 + $0xb4] sm:$0xff]
        %v6161 = vld [vmem:[%s6129 + $0xbc] sm:$0xf]
        %v6162 = vld [vmem:[%s6129 + $0xc0] sm:$0xff]
        %v6163 = vld [vmem:[%s6129 + $0xc8] sm:$0xf]
        %v6164 = vld [vmem:[%s6129 + $0xcc] sm:$0xff]
        %v6165 = vld [vmem:[%s6129 + $0xd4] sm:$0xf]
        %v6166 = vld [vmem:[%s6129 + $0xd8] sm:$0xff]
        %v6167 = vld [vmem:[%s6129 + $0xe0] sm:$0xf]
        %v6168 = vld [vmem:[%s6129 + $0xe4] sm:$0xff]
        %v6169 = vld [vmem:[%s6129 + $0xec] sm:$0xf]
        %v6170 = vld [vmem:[%s6129 + $0xf0] sm:$0xff]
        %v6171 = vld [vmem:[%s6129 + $0xf8] sm:$0xf]
        %v6172 = vld [vmem:[%s6129 + $0xfc] sm:$0xff]
        %v6173 = vld [vmem:[%s6129 + $0x104] sm:$0xf]
        %v6174 = vld [vmem:[%s6129 + $0x108] sm:$0xff]
        %v6175 = vld [vmem:[%s6129 + $0x110] sm:$0xf]
        %v6176 = vld [vmem:[%s6129 + $0x114] sm:$0xff]
        %v6177 = vld [vmem:[%s6129 + $0x11c] sm:$0xf]
        %v6178 = vld [vmem:[%s6129 + $0x120] sm:$0xff]
        %v6179 = vld [vmem:[%s6129 + $0x128] sm:$0xf]
        %v6180 = vld [vmem:[%s6129 + $0x12c] sm:$0xff]
        %v6181 = vld [vmem:[%s6129 + $0x134] sm:$0xf]
        %v6182 = vld [vmem:[%s6129 + $0x138] sm:$0xff]
        %v6183 = vld [vmem:[%s6129 + $0x140] sm:$0xf]
        %v6184 = vld [vmem:[%s6129 + $0x144] sm:$0xff]
        %v6185 = vld [vmem:[%s6129 + $0x14c] sm:$0xf]
        %v6186 = vld [vmem:[%s6129 + $0x150] sm:$0xff]
        %v6187 = vld [vmem:[%s6129 + $0x158] sm:$0xf]
        %v6188 = vld [vmem:[%s6129 + $0x15c] sm:$0xff]
        %v6189 = vld [vmem:[%s6129 + $0x164] sm:$0xf]
        %v6190 = vld [vmem:[%s6129 + $0x168] sm:$0xff]
        %v6191 = vld [vmem:[%s6129 + $0x170] sm:$0xf]
        %v6192 = vld [vmem:[%s6129 + $0x174] sm:$0xff]
        %v6193 = vld [vmem:[%s6129 + $0x17c] sm:$0xf]
        %v6194 = vld [vmem:[%s6129 + $0x180] sm:$0xff]
        %v6195 = vld [vmem:[%s6129 + $0x188] sm:$0xf]
        %v6196 = vld [vmem:[%s6129 + $0x18c] sm:$0xff]
        %v6197 = vld [vmem:[%s6129 + $0x194] sm:$0xf]
        %v6198 = vld [vmem:[%s6129 + $0x198] sm:$0xff]
        %v6199 = vld [vmem:[%s6129 + $0x1a0] sm:$0xf]
        %v6200 = vld [vmem:[%s6129 + $0x1a4] sm:$0xff]
        %v6201 = vld [vmem:[%s6129 + $0x1ac] sm:$0xf]
        %v6202 = vld [vmem:[%s6129 + $0x1b0] sm:$0xff]
        %v6203 = vld [vmem:[%s6129 + $0x1b8] sm:$0xf]
        %v6204 = vld [vmem:[%s6129 + $0x1bc] sm:$0xff]
        %v6205 = vld [vmem:[%s6129 + $0x1c4] sm:$0xf]
        %v6206 = vld [vmem:[%s6129 + $0x1c8] sm:$0xff]
        %v6207 = vld [vmem:[%s6129 + $0x1d0] sm:$0xf]
        %v6208 = vld [vmem:[%s6129 + $0x1d4] sm:$0xff]
        %v6209 = vld [vmem:[%s6129 + $0x1dc] sm:$0xf]
        %v6210 = vld [vmem:[%s6129 + $0x1e0] sm:$0xff]
        %v6211 = vld [vmem:[%s6129 + $0x1e8] sm:$0xf]
        %v6212 = vld [vmem:[%s6129 + $0x1ec] sm:$0xff]
        %v6213 = vld [vmem:[%s6129 + $0x1f4] sm:$0xf]
        %v6214 = vld [vmem:[%s6129 + $0x1f8] sm:$0xff]
        %v6215 = vld [vmem:[%s6129 + $0x200] sm:$0xf]
        %v6216 = vld [vmem:[%s6129 + $0x204] sm:$0xff]
        %v6217 = vld [vmem:[%s6129 + $0x20c] sm:$0xf]
        %v6218 = vld [vmem:[%s6129 + $0x210] sm:$0xff]
        %v6219 = vld [vmem:[%s6129 + $0x218] sm:$0xf]
        %v6220 = vld [vmem:[%s6129 + $0x21c] sm:$0xff]
        %v6221 = vld [vmem:[%s6129 + $0x224] sm:$0xf]
        %v6222 = vld [vmem:[%s6129 + $0x228] sm:$0xff]
        %v6223 = vld [vmem:[%s6129 + $0x230] sm:$0xf]
        %v6224 = vld [vmem:[%s6129 + $0x234] sm:$0xff]
        %v6225 = vld [vmem:[%s6129 + $0x23c] sm:$0xf]
        %v6226 = vld [vmem:[%s6129 + $0x240] sm:$0xff]
        %v6227 = vld [vmem:[%s6129 + $0x248] sm:$0xf]
        %v6228 = vld [vmem:[%s6129 + $0x24c] sm:$0xff]
        %v6229 = vld [vmem:[%s6129 + $0x254] sm:$0xf]
        %v6230 = vld [vmem:[%s6129 + $0x258] sm:$0xff]
        %v6231 = vld [vmem:[%s6129 + $0x260] sm:$0xf]
        %v6232 = vld [vmem:[%s6129 + $0x264] sm:$0xff]
        %v6233 = vld [vmem:[%s6129 + $0x26c] sm:$0xf]
        %v6234 = vld [vmem:[%s6129 + $0x270] sm:$0xff]
        %v6235 = vld [vmem:[%s6129 + $0x278] sm:$0xf]
        %v6236 = vld [vmem:[%s6129 + $0x27c] sm:$0xff]
        %v6237 = vld [vmem:[%s6129 + $0x284] sm:$0xf]
        %v6238 = vld [vmem:[%s6129 + $0x288] sm:$0xff]
        %v6239 = vld [vmem:[%s6129 + $0x290] sm:$0xf]
        %v6240 = vld [vmem:[%s6129 + $0x294] sm:$0xff]
        %v6241 = vld [vmem:[%s6129 + $0x29c] sm:$0xf]
        %v6354 = vunpack.c.l.b16 %v6130
        %v6355 = vunpack.c.h.b16 %v6130
        %v6356 = vunpack.c.l.b16 %v6131
        %v6357 = vunpack.c.l.b16 %v6132
        %v6358 = vunpack.c.h.b16 %v6132
        %v6359 = vunpack.c.l.b16 %v6133
        %v6360 = vunpack.c.l.b16 %v6134
        %v6361 = vunpack.c.h.b16 %v6134
        %v6362 = vunpack.c.l.b16 %v6135
        %v6363 = vunpack.c.l.b16 %v6136
        %v6364 = vunpack.c.h.b16 %v6136
        %v6365 = vunpack.c.l.b16 %v6137
        %v6366 = vunpack.c.l.b16 %v6138
        %v6367 = vunpack.c.h.b16 %v6138
        %v6368 = vunpack.c.l.b16 %v6139
        %v6369 = vunpack.c.l.b16 %v6140
        %v6370 = vunpack.c.h.b16 %v6140
        %v6371 = vunpack.c.l.b16 %v6141
        %v6372 = vunpack.c.l.b16 %v6142
        %v6373 = vunpack.c.h.b16 %v6142
        %v6374 = vunpack.c.l.b16 %v6143
        %v6375 = vunpack.c.l.b16 %v6144
        %v6376 = vunpack.c.h.b16 %v6144
        %v6377 = vunpack.c.l.b16 %v6145
        %v6378 = vunpack.c.l.b16 %v6146
        %v6379 = vunpack.c.h.b16 %v6146
        %v6380 = vunpack.c.l.b16 %v6147
        %v6381 = vunpack.c.l.b16 %v6148
        %v6382 = vunpack.c.h.b16 %v6148
        %v6383 = vunpack.c.l.b16 %v6149
        %v6384 = vunpack.c.l.b16 %v6150
        %v6385 = vunpack.c.h.b16 %v6150
        %v6386 = vunpack.c.l.b16 %v6151
        %v6387 = vunpack.c.l.b16 %v6152
        %v6388 = vunpack.c.h.b16 %v6152
        %v6389 = vunpack.c.l.b16 %v6153
        %v6390 = vunpack.c.l.b16 %v6154
        %v6391 = vunpack.c.h.b16 %v6154
        %v6392 = vunpack.c.l.b16 %v6155
        %v6393 = vunpack.c.l.b16 %v6156
        %v6394 = vunpack.c.h.b16 %v6156
        %v6395 = vunpack.c.l.b16 %v6157
        %v6396 = vunpack.c.l.b16 %v6158
        %v6397 = vunpack.c.h.b16 %v6158
        %v6398 = vunpack.c.l.b16 %v6159
        %v6399 = vunpack.c.l.b16 %v6160
        %v6400 = vunpack.c.h.b16 %v6160
        %v6401 = vunpack.c.l.b16 %v6161
        %v6402 = vunpack.c.l.b16 %v6162
        %v6403 = vunpack.c.h.b16 %v6162
        %v6404 = vunpack.c.l.b16 %v6163
        %v6405 = vunpack.c.l.b16 %v6164
        %v6406 = vunpack.c.h.b16 %v6164
        %v6407 = vunpack.c.l.b16 %v6165
        %v6408 = vunpack.c.l.b16 %v6166
        %v6409 = vunpack.c.h.b16 %v6166
        %v6410 = vunpack.c.l.b16 %v6167
        %v6411 = vunpack.c.l.b16 %v6168
        %v6412 = vunpack.c.h.b16 %v6168
        %v6413 = vunpack.c.l.b16 %v6169
        %v6414 = vunpack.c.l.b16 %v6170
        %v6415 = vunpack.c.h.b16 %v6170
        %v6416 = vunpack.c.l.b16 %v6171
        %v6417 = vunpack.c.l.b16 %v6172
        %v6418 = vunpack.c.h.b16 %v6172
        %v6419 = vunpack.c.l.b16 %v6173
        %v6420 = vunpack.c.l.b16 %v6174
        %v6421 = vunpack.c.h.b16 %v6174
        %v6422 = vunpack.c.l.b16 %v6175
        %v6423 = vunpack.c.l.b16 %v6176
        %v6424 = vunpack.c.h.b16 %v6176
        %v6425 = vunpack.c.l.b16 %v6177
        %v6426 = vunpack.c.l.b16 %v6178
        %v6427 = vunpack.c.h.b16 %v6178
        %v6428 = vunpack.c.l.b16 %v6179
        %v6429 = vunpack.c.l.b16 %v6180
        %v6430 = vunpack.c.h.b16 %v6180
        %v6431 = vunpack.c.l.b16 %v6181
        %v6432 = vunpack.c.l.b16 %v6182
        %v6433 = vunpack.c.h.b16 %v6182
        %v6434 = vunpack.c.l.b16 %v6183
        %v6435 = vunpack.c.l.b16 %v6184
        %v6436 = vunpack.c.h.b16 %v6184
        %v6437 = vunpack.c.l.b16 %v6185
        %v6438 = vunpack.c.l.b16 %v6186
        %v6439 = vunpack.c.h.b16 %v6186
        %v6440 = vunpack.c.l.b16 %v6187
        %v6441 = vunpack.c.l.b16 %v6188
        %v6442 = vunpack.c.h.b16 %v6188
        %v6443 = vunpack.c.l.b16 %v6189
        %v6444 = vunpack.c.l.b16 %v6190
        %v6445 = vunpack.c.h.b16 %v6190
        %v6446 = vunpack.c.l.b16 %v6191
        %v6447 = vunpack.c.l.b16 %v6192
        %v6448 = vunpack.c.h.b16 %v6192
        %v6449 = vunpack.c.l.b16 %v6193
        %v6450 = vunpack.c.l.b16 %v6194
        %v6451 = vunpack.c.h.b16 %v6194
        %v6452 = vunpack.c.l.b16 %v6195
        %v6453 = vunpack.c.l.b16 %v6196
        %v6454 = vunpack.c.h.b16 %v6196
        %v6455 = vunpack.c.l.b16 %v6197
        %v6456 = vunpack.c.l.b16 %v6198
        %v6457 = vunpack.c.h.b16 %v6198
        %v6458 = vunpack.c.l.b16 %v6199
        %v6459 = vunpack.c.l.b16 %v6200
        %v6460 = vunpack.c.h.b16 %v6200
        %v6461 = vunpack.c.l.b16 %v6201
        %v6462 = vunpack.c.l.b16 %v6202
        %v6463 = vunpack.c.h.b16 %v6202
        %v6464 = vunpack.c.l.b16 %v6203
        %v6465 = vunpack.c.l.b16 %v6204
        %v6466 = vunpack.c.h.b16 %v6204
        %v6467 = vunpack.c.l.b16 %v6205
        %v6468 = vunpack.c.l.b16 %v6206
        %v6469 = vunpack.c.h.b16 %v6206
        %v6470 = vunpack.c.l.b16 %v6207
        %v6471 = vunpack.c.l.b16 %v6208
        %v6472 = vunpack.c.h.b16 %v6208
        %v6473 = vunpack.c.l.b16 %v6209
        %v6474 = vunpack.c.l.b16 %v6210
        %v6475 = vunpack.c.h.b16 %v6210
        %v6476 = vunpack.c.l.b16 %v6211
        %v6477 = vunpack.c.l.b16 %v6212
        %v6478 = vunpack.c.h.b16 %v6212
        %v6479 = vunpack.c.l.b16 %v6213
        %v6480 = vunpack.c.l.b16 %v6214
        %v6481 = vunpack.c.h.b16 %v6214
        %v6482 = vunpack.c.l.b16 %v6215
        %v6483 = vunpack.c.l.b16 %v6216
        %v6484 = vunpack.c.h.b16 %v6216
        %v6485 = vunpack.c.l.b16 %v6217
        %v6486 = vunpack.c.l.b16 %v6218
        %v6487 = vunpack.c.h.b16 %v6218
        %v6488 = vunpack.c.l.b16 %v6219
        %v6489 = vunpack.c.l.b16 %v6220
        %v6490 = vunpack.c.h.b16 %v6220
        %v6491 = vunpack.c.l.b16 %v6221
        %v6492 = vunpack.c.l.b16 %v6222
        %v6493 = vunpack.c.h.b16 %v6222
        %v6494 = vunpack.c.l.b16 %v6223
        %v6495 = vunpack.c.l.b16 %v6224
        %v6496 = vunpack.c.h.b16 %v6224
        %v6497 = vunpack.c.l.b16 %v6225
        %v6498 = vunpack.c.l.b16 %v6226
        %v6499 = vunpack.c.h.b16 %v6226
        %v6500 = vunpack.c.l.b16 %v6227
        %v6501 = vunpack.c.l.b16 %v6228
        %v6502 = vunpack.c.h.b16 %v6228
        %v6503 = vunpack.c.l.b16 %v6229
        %v6504 = vunpack.c.l.b16 %v6230
        %v6505 = vunpack.c.h.b16 %v6230
        %v6506 = vunpack.c.l.b16 %v6231
        %v6507 = vunpack.c.l.b16 %v6232
        %v6508 = vunpack.c.h.b16 %v6232
        %v6509 = vunpack.c.l.b16 %v6233
        %v6510 = vunpack.c.l.b16 %v6234
        %v6511 = vunpack.c.h.b16 %v6234
        %v6512 = vunpack.c.l.b16 %v6235
        %v6513 = vunpack.c.l.b16 %v6236
        %v6514 = vunpack.c.h.b16 %v6236
        %v6515 = vunpack.c.l.b16 %v6237
        %v6516 = vunpack.c.l.b16 %v6238
        %v6517 = vunpack.c.h.b16 %v6238
        %v6518 = vunpack.c.l.b16 %v6239
        %v6519 = vunpack.c.l.b16 %v6240
        %v6520 = vunpack.c.h.b16 %v6240
        %v6521 = vunpack.c.l.b16 %v6241
        %v6522 = vpack.c.b16 %v6357, %v6354
        %v6523 = vpack.c.b16 %v6358, %v6355
        %v6524 = vpack.c.b16 %v6359, %v6356
        %v6525 = vpack.c.b16 %v6363, %v6360
        %v6526 = vpack.c.b16 %v6364, %v6361
        %v6527 = vpack.c.b16 %v6365, %v6362
        %v6528 = vpack.c.b16 %v6369, %v6366
        %v6529 = vpack.c.b16 %v6370, %v6367
        %v6530 = vpack.c.b16 %v6371, %v6368
        %v6531 = vpack.c.b16 %v6375, %v6372
        %v6532 = vpack.c.b16 %v6376, %v6373
        %v6533 = vpack.c.b16 %v6377, %v6374
        %v6534 = vpack.c.b16 %v6381, %v6378
        %v6535 = vpack.c.b16 %v6382, %v6379
        %v6536 = vpack.c.b16 %v6383, %v6380
        %v6537 = vpack.c.b16 %v6387, %v6384
        %v6538 = vpack.c.b16 %v6388, %v6385
        %v6539 = vpack.c.b16 %v6389, %v6386
        %v6540 = vpack.c.b16 %v6393, %v6390
        %v6541 = vpack.c.b16 %v6394, %v6391
        %v6542 = vpack.c.b16 %v6395, %v6392
        %v6543 = vpack.c.b16 %v6399, %v6396
        %v6544 = vpack.c.b16 %v6400, %v6397
        %v6545 = vpack.c.b16 %v6401, %v6398
        %v6546 = vpack.c.b16 %v6405, %v6402
        %v6547 = vpack.c.b16 %v6406, %v6403
        %v6548 = vpack.c.b16 %v6407, %v6404
        %v6549 = vpack.c.b16 %v6411, %v6408
        %v6550 = vpack.c.b16 %v6412, %v6409
        %v6551 = vpack.c.b16 %v6413, %v6410
        %v6552 = vpack.c.b16 %v6417, %v6414
        %v6553 = vpack.c.b16 %v6418, %v6415
        %v6554 = vpack.c.b16 %v6419, %v6416
        %v6555 = vpack.c.b16 %v6423, %v6420
        %v6556 = vpack.c.b16 %v6424, %v6421
        %v6557 = vpack.c.b16 %v6425, %v6422
        %v6558 = vpack.c.b16 %v6429, %v6426
        %v6559 = vpack.c.b16 %v6430, %v6427
        %v6560 = vpack.c.b16 %v6431, %v6428
        %v6561 = vpack.c.b16 %v6435, %v6432
        %v6562 = vpack.c.b16 %v6436, %v6433
        %v6563 = vpack.c.b16 %v6437, %v6434
        %v6564 = vpack.c.b16 %v6441, %v6438
        %v6565 = vpack.c.b16 %v6442, %v6439
        %v6566 = vpack.c.b16 %v6443, %v6440
        %v6567 = vpack.c.b16 %v6447, %v6444
        %v6568 = vpack.c.b16 %v6448, %v6445
        %v6569 = vpack.c.b16 %v6449, %v6446
        %v6570 = vpack.c.b16 %v6453, %v6450
        %v6571 = vpack.c.b16 %v6454, %v6451
        %v6572 = vpack.c.b16 %v6455, %v6452
        %v6573 = vpack.c.b16 %v6459, %v6456
        %v6574 = vpack.c.b16 %v6460, %v6457
        %v6575 = vpack.c.b16 %v6461, %v6458
        %v6576 = vpack.c.b16 %v6465, %v6462
        %v6577 = vpack.c.b16 %v6466, %v6463
        %v6578 = vpack.c.b16 %v6467, %v6464
        %v6579 = vpack.c.b16 %v6471, %v6468
        %v6580 = vpack.c.b16 %v6472, %v6469
        %v6581 = vpack.c.b16 %v6473, %v6470
        %v6582 = vpack.c.b16 %v6477, %v6474
        %v6583 = vpack.c.b16 %v6478, %v6475
        %v6584 = vpack.c.b16 %v6479, %v6476
        %v6585 = vpack.c.b16 %v6483, %v6480
        %v6586 = vpack.c.b16 %v6484, %v6481
        %v6587 = vpack.c.b16 %v6485, %v6482
        %v6588 = vpack.c.b16 %v6489, %v6486
        %v6589 = vpack.c.b16 %v6490, %v6487
        %v6590 = vpack.c.b16 %v6491, %v6488
        %v6591 = vpack.c.b16 %v6495, %v6492
        %v6592 = vpack.c.b16 %v6496, %v6493
        %v6593 = vpack.c.b16 %v6497, %v6494
        %v6594 = vpack.c.b16 %v6501, %v6498
        %v6595 = vpack.c.b16 %v6502, %v6499
        %v6596 = vpack.c.b16 %v6503, %v6500
        %v6597 = vpack.c.b16 %v6507, %v6504
        %v6598 = vpack.c.b16 %v6508, %v6505
        %v6599 = vpack.c.b16 %v6509, %v6506
        %v6600 = vpack.c.b16 %v6513, %v6510
        %v6601 = vpack.c.b16 %v6514, %v6511
        %v6602 = vpack.c.b16 %v6515, %v6512
        %v6603 = vpack.c.b16 %v6519, %v6516
        %v6604 = vpack.c.b16 %v6520, %v6517
        %v6605 = vpack.c.b16 %v6521, %v6518
        %6690 = vmatprep.subr.bf16.mxu0 %v6523
        %6691 = vmatpush1.bf16.msra.mxu0 %v6522
        %6692 = vmatprep.subr.bf16.mxu0 %v6526
        %6693 = vmatpush1.bf16.msra.mxu0 %v6525
        %6694 = vmatprep.subr.bf16.mxu0 %v6529
        %6695 = vmatpush1.bf16.msra.mxu0 %v6528
        %6696 = vmatprep.subr.bf16.mxu0 %v6532
        %6697 = vmatpush1.bf16.msra.mxu0 %v6531
        %6698 = vmatprep.subr.bf16.mxu0 %v6535
        %6699 = vmatpush1.bf16.msra.mxu0 %v6534
        %6700 = vmatprep.subr.bf16.mxu0 %v6538
        %6701 = vmatpush1.bf16.msra.mxu0 %v6537
        %6702 = vmatprep.subr.bf16.mxu0 %v6541
        %6703 = vmatpush1.bf16.msra.mxu0 %v6540
        %6704 = vmatprep.subr.bf16.mxu0 %v6544
        %6705 = vmatpush1.bf16.msra.mxu0 %v6543
        %6706 = vmatprep.subr.bf16.mxu0 %v6547
        %6707 = vmatpush1.bf16.msra.mxu0 %v6546
        %6708 = vmatprep.subr.bf16.mxu0 %v6550
        %6709 = vmatpush1.bf16.msra.mxu0 %v6549
        %6710 = vmatprep.subr.bf16.mxu0 %v6553
        %6711 = vmatpush1.bf16.msra.mxu0 %v6552
        %6712 = vmatprep.subr.bf16.mxu0 %v6556
        %6713 = vmatpush1.bf16.msra.mxu0 %v6555
        %6714 = vmatprep.subr.bf16.mxu0 %v6559
        %6715 = vmatpush1.bf16.msra.mxu0 %v6558
        %6716 = vmatprep.subr.bf16.mxu0 %v6562
        %6717 = vmatpush1.bf16.msra.mxu0 %v6561
        %6718 = vmatprep.subr.bf16.mxu0 %v6565
        %6719 = vmatpush1.bf16.msra.mxu0 %v6564
        %6720 = vmatprep.subr.bf16.mxu0 %v6568
        %6721 = vmatpush1.bf16.msra.mxu0 %v6567
        %6722 = vmatprep.mubr.bf16.mxu0 %v5504
        %6723 = vmatmul.mubr.bf16.gmra.mrb[0].mxu0 %v5503
        %v6724 = vpop.f32.mrb[0].mxu0
        %v6725 = vadd.f32 0.0, %v6724
        %v6726 = vpop.f32.mrb[0].mxu0
        %v6727 = vadd.f32 0.0, %v6726
        %v6728 = vpop.f32.mrb[0].mxu0
        %v6729 = vadd.f32 0.0, %v6728
        %v6730 = vpop.f32.mrb[0].mxu0
        %v6731 = vadd.f32 0.0, %v6730
        %6732 = vdwg.mxu0
        %6733 = vmatprep.subr.bf16.mxu0 %v6571
        %6734 = vmatpush1.bf16.msra.mxu0 %v6570
        %6735 = vmatprep.subr.bf16.mxu0 %v6574
        %6736 = vmatpush1.bf16.msra.mxu0 %v6573
        %6737 = vmatprep.subr.bf16.mxu0 %v6577
        %6738 = vmatpush1.bf16.msra.mxu0 %v6576
        %6739 = vmatprep.subr.bf16.mxu0 %v6580
        %6740 = vmatpush1.bf16.msra.mxu0 %v6579
        %6741 = vmatprep.subr.bf16.mxu0 %v6583
        %6742 = vmatpush1.bf16.msra.mxu0 %v6582
        %6743 = vmatprep.subr.bf16.mxu0 %v6586
        %6744 = vmatpush1.bf16.msra.mxu0 %v6585
        %6745 = vmatprep.subr.bf16.mxu0 %v6589
        %6746 = vmatpush1.bf16.msra.mxu0 %v6588
        %6747 = vmatprep.subr.bf16.mxu0 %v6592
        %6748 = vmatpush1.bf16.msra.mxu0 %v6591
        %6749 = vmatprep.subr.bf16.mxu0 %v6595
        %6750 = vmatpush1.bf16.msra.mxu0 %v6594
        %6751 = vmatprep.subr.bf16.mxu0 %v6598
        %6752 = vmatpush1.bf16.msra.mxu0 %v6597
        %6753 = vmatprep.subr.bf16.mxu0 %v6601
        %6754 = vmatpush1.bf16.msra.mxu0 %v6600
        %6755 = vmatprep.subr.bf16.mxu0 %v6604
        %6756 = vmatpush1.bf16.msra.mxu0 %v6603
        %6757 = vmatprep.subr.bf16.mxu0 0
        %6758 = vmatpush1.bf16.msra.mxu0 0
        %6759 = vmatprep.subr.bf16.mxu0 0
        %6760 = vmatpush1.bf16.msra.mxu0 0
        %6761 = vmatprep.subr.bf16.mxu0 0
        %6762 = vmatpush1.bf16.msra.mxu0 0
        %6763 = vmatprep.subr.bf16.mxu0 0
        %6764 = vmatpush1.bf16.msra.mxu0 0
        %6765 = vmatprep.mubr.bf16.mxu0 %v5959
        %6766 = vmatmul.mubr.bf16.gmra.mrb[0].mxu0 %v5505
        %v6767 = vpop.f32.mrb[0].mxu0
        %v6768 = vadd.f32 %v6725, %v6767
        %v6769 = vpop.f32.mrb[0].mxu0
        %v6770 = vadd.f32 %v6727, %v6769
        %v6771 = vpop.f32.mrb[0].mxu0
        %v6772 = vadd.f32 %v6729, %v6771
        %v6773 = vpop.f32.mrb[0].mxu0
        %v6774 = vadd.f32 %v6731, %v6773
        %6775 = vdwg.mxu0
        %6776 = vmatprep.subr.bf16.mxu0 0
        %6777 = vmatpush1.bf16.msra.mxu0 %v6524
        %6778 = vmatprep.subr.bf16.mxu0 0
        %6779 = vmatpush1.bf16.msra.mxu0 %v6527
        %6780 = vmatprep.subr.bf16.mxu0 0
        %6781 = vmatpush1.bf16.msra.mxu0 %v6530
        %6782 = vmatprep.subr.bf16.mxu0 0
        %6783 = vmatpush1.bf16.msra.mxu0 %v6533
        %6784 = vmatprep.subr.bf16.mxu0 0
        %6785 = vmatpush1.bf16.msra.mxu0 %v6536
        %6786 = vmatprep.subr.bf16.mxu0 0
        %6787 = vmatpush1.bf16.msra.mxu0 %v6539
        %6788 = vmatprep.subr.bf16.mxu0 0
        %6789 = vmatpush1.bf16.msra.mxu0 %v6542
        %6790 = vmatprep.subr.bf16.mxu0 0
        %6791 = vmatpush1.bf16.msra.mxu0 %v6545
        %6792 = vmatprep.subr.bf16.mxu0 0
        %6793 = vmatpush1.bf16.msra.mxu0 %v6548
        %6794 = vmatprep.subr.bf16.mxu0 0
        %6795 = vmatpush1.bf16.msra.mxu0 %v6551
        %6796 = vmatprep.subr.bf16.mxu0 0
        %6797 = vmatpush1.bf16.msra.mxu0 %v6554
        %6798 = vmatprep.subr.bf16.mxu0 0
        %6799 = vmatpush1.bf16.msra.mxu0 %v6557
        %6800 = vmatprep.subr.bf16.mxu0 0
        %6801 = vmatpush1.bf16.msra.mxu0 %v6560
        %6802 = vmatprep.subr.bf16.mxu0 0
        %6803 = vmatpush1.bf16.msra.mxu0 %v6563
        %6804 = vmatprep.subr.bf16.mxu0 0
        %6805 = vmatpush1.bf16.msra.mxu0 %v6566
        %6806 = vmatprep.subr.bf16.mxu0 0
        %6807 = vmatpush1.bf16.msra.mxu0 %v6569
        %6808 = vmatprep.mubr.bf16.mxu0 %v5504
        %6809 = vmatmul.mubr.bf16.gmra.mrb[0].mxu0 %v5503
        %v6810 = vpop.f32.mrb[0].mxu0
        %v6811 = vadd.f32 0.0, %v6810
        %v6812 = vpop.f32.mrb[0].mxu0
        %v6813 = vpop.f32.mrb[0].mxu0
        %v6814 = vadd.f32 0.0, %v6813
        %v6815 = vpop.f32.mrb[0].mxu0
        %6816 = vdwg.mxu0
        %6817 = vmatprep.subr.bf16.mxu0 0
        %6818 = vmatpush1.bf16.msra.mxu0 %v6572
        %6819 = vmatprep.subr.bf16.mxu0 0
        %6820 = vmatpush1.bf16.msra.mxu0 %v6575
        %6821 = vmatprep.subr.bf16.mxu0 0
        %6822 = vmatpush1.bf16.msra.mxu0 %v6578
        %6823 = vmatprep.subr.bf16.mxu0 0
        %6824 = vmatpush1.bf16.msra.mxu0 %v6581
        %6825 = vmatprep.subr.bf16.mxu0 0
        %6826 = vmatpush1.bf16.msra.mxu0 %v6584
        %6827 = vmatprep.subr.bf16.mxu0 0
        %6828 = vmatpush1.bf16.msra.mxu0 %v6587
        %6829 = vmatprep.subr.bf16.mxu0 0
        %6830 = vmatpush1.bf16.msra.mxu0 %v6590
        %6831 = vmatprep.subr.bf16.mxu0 0
        %6832 = vmatpush1.bf16.msra.mxu0 %v6593
        %6833 = vmatprep.subr.bf16.mxu0 0
        %6834 = vmatpush1.bf16.msra.mxu0 %v6596
        %6835 = vmatprep.subr.bf16.mxu0 0
        %6836 = vmatpush1.bf16.msra.mxu0 %v6599
        %6837 = vmatprep.subr.bf16.mxu0 0
        %6838 = vmatpush1.bf16.msra.mxu0 %v6602
        %6839 = vmatprep.subr.bf16.mxu0 0
        %6840 = vmatpush1.bf16.msra.mxu0 %v6605
        %6841 = vmatprep.subr.bf16.mxu0 0
        %6842 = vmatpush1.bf16.msra.mxu0 0
        %6843 = vmatprep.subr.bf16.mxu0 0
        %6844 = vmatpush1.bf16.msra.mxu0 0
        %6845 = vmatprep.subr.bf16.mxu0 0
        %6846 = vmatpush1.bf16.msra.mxu0 0
        %6847 = vmatprep.subr.bf16.mxu0 0
        %6848 = vmatpush1.bf16.msra.mxu0 0
        %6849 = vmatprep.mubr.bf16.mxu0 %v5959
        %6850 = vmatmul.mubr.bf16.gmra.mrb[0].mxu0 %v5505
        %v6851 = vpop.f32.mrb[0].mxu0
        %v6852 = vadd.f32 %v6811, %v6851
        %v6853 = vpop.f32.mrb[0].mxu0
        %v6854 = vpop.f32.mrb[0].mxu0
        %v6855 = vadd.f32 %v6814, %v6854
        %v6856 = vpop.f32.mrb[0].mxu0
        %6857 = vdwg.mxu0
        %v6858 = vadd.f32 %v4596, %v6039
        %v6859 = vadd.f32 %v4598, %v6041
        %v6860 = vadd.f32 %v4680, %v6123
        %v6861 = vadd.f32 %v4600, %v6043
        %v6862 = vadd.f32 %v4602, %v6045
        %v6863 = vadd.f32 %v4683, %v6126
        %v6864 = vadd.f32 %v5212, %v6768
        %v6865 = vadd.f32 %v5214, %v6770
        %v6866 = vadd.f32 %v5296, %v6852
        %v6867 = vadd.f32 %v5216, %v6772
        %v6868 = vadd.f32 %v5218, %v6774
        %v6869 = vadd.f32 %v5299, %v6855
        %v6870 = vmax.f32 %v6858, %v6864
        %v6871 = vmax.f32 %v6859, %v6865
        %v6872 = vmax.f32 %v6860, %v6866
        %v6873 = vmax.f32 %v6861, %v6867
        %v6874 = vmax.f32 %v6862, %v6868
        %v6875 = vmax.f32 %v6863, %v6869
        %v6882 = vcombine.low %v6870, %v6871
        %v6883 = vcombine.high %v6870, %v6871
        %v6884 = vcombine.high %v6872, %v6872
        %v6886 = vunpack.c.l.s4 1983009808
        %v6887 = vunpack.c.0.s8 %v6886
        %v6888 = vlaneseq
        %v6889 = vshrl.u32 %v6888, 7
        %v6890 = vsub.s32 %v6887, %v6889
        %v6891 = vrot.slane %v6882, %v6890
        %v6893 = vunpack.c.l.s4 1983009808
        %v6894 = vunpack.c.0.s8 %v6893
        %v6895 = vlaneseq
        %v6896 = vshrl.u32 %v6895, 7
        %v6897 = vsub.s32 %v6894, %v6896
        %v6898 = vrot.slane %v6883, %v6897
        %v6900 = vunpack.c.l.s4 1983009808
        %v6901 = vunpack.c.0.s8 %v6900
        %v6902 = vlaneseq
        %v6903 = vshrl.u32 %v6902, 7
        %v6904 = vsub.s32 %v6901, %v6903
        %v6905 = vrot.slane %v6872, %v6904
        %v6907 = vunpack.c.l.s4 1983009808
        %v6908 = vunpack.c.0.s8 %v6907
        %v6909 = vlaneseq
        %v6910 = vshrl.u32 %v6909, 7
        %v6911 = vsub.s32 %v6908, %v6910
        %v6912 = vrot.slane %v6884, %v6911
        %v6913 = vcombine.low %v6891, %v6905
        %v6914 = vcombine.high %v6891, %v6905
        %v6915 = vcombine.low %v6898, %v6912
        %v6916 = vcombine.high %v6898, %v6912
        %v6917 = vcombine.low %v6873, %v6874
        %v6919 = vunpack.c.l.s4 1983009808
        %v6920 = vunpack.c.0.s8 %v6919
        %v6921 = vlaneseq
        %v6922 = vshrl.u32 %v6921, 7
        %v6923 = vsub.s32 %v6920, %v6922
        %v6924 = vrot.slane %v6917, %v6923
        %v6926 = vunpack.c.l.s4 1983009808
        %v6927 = vunpack.c.0.s8 %v6926
        %v6928 = vlaneseq
        %v6929 = vshrl.u32 %v6928, 7
        %v6930 = vsub.s32 %v6927, %v6929
        %v6931 = vrot.slane %v6875, %v6930
        %v6932 = vcombine.low %v6924, %v6931
        %v6933 = vcombine.high %v6924, %v6931
        %v6940 = vrot.slane %v6913, 7
        %v6941 = vrot.slane %v6940, 2
        %v6942 = vrot.slane %v6914, 7
        %v6943 = vrot.slane %v6942, 2
        %v6944 = vrot.slane %v6915, 7
        %v6945 = vrot.slane %v6944, 2
        %v6946 = vrot.slane %v6916, 7
        %v6947 = vrot.slane %v6946, 2
        %v6948 = vrot.slane %v6932, 7
        %v6949 = vrot.slane %v6948, 2
        %v6950 = vrot.slane %v6933, 7
        %v6951 = vrot.slane %v6950, 2
        %v6958 = vmax.f32 %v6913, %v6941
        %v6959 = vmax.f32 %v6914, %v6943
        %v6960 = vmax.f32 %v6915, %v6945
        %v6961 = vmax.f32 %v6916, %v6947
        %v6962 = vmax.f32 %v6932, %v6949
        %v6963 = vmax.f32 %v6933, %v6951
        %v6964 = vld [vmem:[#allocation10] sm:$0x7]
        %v6966 = vlaneseq
        %v6967 = vshrl.u32 %v6966, 7
        %v6968 = vsub.s32 0, %v6967
        %v6969 = vrot.slane %v6964, %v6968
        %v6970 = vlaneseq
        %v6971 = vshrl.u32 %v6970, 7
        %v6972 = vsub.s32 1, %v6971
        %v6973 = vrot.slane %v6964, %v6972
        %v6974 = vlaneseq
        %v6975 = vshrl.u32 %v6974, 7
        %v6976 = vsub.s32 2, %v6975
        %v6977 = vrot.slane %v6964, %v6976
        %v6978 = vcombine.low %v6969, %v6973
        %v6979 = vcombine.high %v6969, %v6973
        %v6980 = vcombine.high %v6977, %v6977
        %v6982 = vunpack.c.l.s4 1983009808
        %v6983 = vunpack.c.0.s8 %v6982
        %v6984 = vlaneseq
        %v6985 = vshrl.u32 %v6984, 7
        %v6986 = vsub.s32 %v6983, %v6985
        %v6987 = vrot.slane %v6978, %v6986
        %v6989 = vunpack.c.l.s4 1983009808
        %v6990 = vunpack.c.0.s8 %v6989
        %v6991 = vlaneseq
        %v6992 = vshrl.u32 %v6991, 7
        %v6993 = vsub.s32 %v6990, %v6992
        %v6994 = vrot.slane %v6979, %v6993
        %v6996 = vunpack.c.l.s4 1983009808
        %v6997 = vunpack.c.0.s8 %v6996
        %v6998 = vlaneseq
        %v6999 = vshrl.u32 %v6998, 7
        %v7000 = vsub.s32 %v6997, %v6999
        %v7001 = vrot.slane %v6977, %v7000
        %v7003 = vunpack.c.l.s4 1983009808
        %v7004 = vunpack.c.0.s8 %v7003
        %v7005 = vlaneseq
        %v7006 = vshrl.u32 %v7005, 7
        %v7007 = vsub.s32 %v7004, %v7006
        %v7008 = vrot.slane %v6980, %v7007
        %v7009 = vcombine.low %v6987, %v7001
        %v7010 = vcombine.high %v6987, %v7001
        %v7011 = vcombine.low %v6994, %v7008
        %v7012 = vrot.slane %v7009, 1
        %v7013 = vrot.slane %v7010, 1
        %v7014 = vrot.slane %v7011, 1
        %v7021 = vadd.f32 %v6958, %v7009
        %v7022 = vadd.f32 %v6959, %v7012
        %v7023 = vadd.f32 %v6960, %v7010
        %v7024 = vadd.f32 %v6961, %v7013
        %v7025 = vadd.f32 %v6962, %v7011
        %v7026 = vadd.f32 %v6963, %v7014
        %v7027 = vmax.f32 %v7021, 0.0
        %v7028 = vmax.f32 %v7022, 0.0
        %v7029 = vmax.f32 %v7023, 0.0
        %v7030 = vmax.f32 %v7024, 0.0
        %v7031 = vmax.f32 %v7025, 0.0
        %v7032 = vmax.f32 %v7026, 0.0
        %v7039 = vlaneseq
        %v7040 = vshrl.u32 %v7039, 7
        %v7041 = vsub.s32 0, %v7040
        %v7042 = vrot.slane %v7027, %v7041
        %v7043 = vlaneseq
        %v7044 = vshrl.u32 %v7043, 7
        %v7045 = vsub.s32 2, %v7044
        %v7046 = vrot.slane %v7027, %v7045
        %v7047 = vlaneseq
        %v7048 = vshrl.u32 %v7047, 7
        %v7049 = vsub.s32 4, %v7048
        %v7050 = vrot.slane %v7027, %v7049
        %v7051 = vlaneseq
        %v7052 = vshrl.u32 %v7051, 7
        %v7053 = vsub.s32 0, %v7052
        %v7054 = vrot.slane %v7028, %v7053
        %v7055 = vlaneseq
        %v7056 = vshrl.u32 %v7055, 7
        %v7057 = vsub.s32 2, %v7056
        %v7058 = vrot.slane %v7028, %v7057
        %v7059 = vlaneseq
        %v7060 = vshrl.u32 %v7059, 7
        %v7061 = vsub.s32 4, %v7060
        %v7062 = vrot.slane %v7028, %v7061
        %v7063 = vlaneseq
        %v7064 = vshrl.u32 %v7063, 7
        %v7065 = vsub.s32 0, %v7064
        %v7066 = vrot.slane %v7029, %v7065
        %v7067 = vlaneseq
        %v7068 = vshrl.u32 %v7067, 7
        %v7069 = vsub.s32 2, %v7068
        %v7070 = vrot.slane %v7029, %v7069
        %v7071 = vlaneseq
        %v7072 = vshrl.u32 %v7071, 7
        %v7073 = vsub.s32 4, %v7072
        %v7074 = vrot.slane %v7029, %v7073
        %v7075 = vlaneseq
        %v7076 = vshrl.u32 %v7075, 7
        %v7077 = vsub.s32 0, %v7076
        %v7078 = vrot.slane %v7030, %v7077
        %v7079 = vlaneseq
        %v7080 = vshrl.u32 %v7079, 7
        %v7081 = vsub.s32 2, %v7080
        %v7082 = vrot.slane %v7030, %v7081
        %v7083 = vlaneseq
        %v7084 = vshrl.u32 %v7083, 7
        %v7085 = vsub.s32 4, %v7084
        %v7086 = vrot.slane %v7030, %v7085
        %v7087 = vlaneseq
        %v7088 = vshrl.u32 %v7087, 7
        %v7089 = vsub.s32 0, %v7088
        %v7090 = vrot.slane %v7031, %v7089
        %v7091 = vlaneseq
        %v7092 = vshrl.u32 %v7091, 7
        %v7093 = vsub.s32 2, %v7092
        %v7094 = vrot.slane %v7031, %v7093
        %v7095 = vlaneseq
        %v7096 = vshrl.u32 %v7095, 7
        %v7097 = vsub.s32 4, %v7096
        %v7098 = vrot.slane %v7031, %v7097
        %v7099 = vlaneseq
        %v7100 = vshrl.u32 %v7099, 7
        %v7101 = vsub.s32 0, %v7100
        %v7102 = vrot.slane %v7032, %v7101
        %v7103 = vlaneseq
        %v7104 = vshrl.u32 %v7103, 7
        %v7105 = vsub.s32 2, %v7104
        %v7106 = vrot.slane %v7032, %v7105
        %v7107 = vlaneseq
        %v7108 = vshrl.u32 %v7107, 7
        %v7109 = vsub.s32 4, %v7108
        %v7110 = vrot.slane %v7032, %v7109
        %v7129 = vpack.c.bf16 %v7042, %v7042
        %v7130 = vpack.c.bf16 %v7046, %v7046
        %v7131 = vpack.c.bf16 %v7050, %v7050
        %v7132 = vpack.c.bf16 %v7054, %v7054
        %v7133 = vpack.c.bf16 %v7058, %v7058
        %v7134 = vpack.c.bf16 %v7062, %v7062
        %v7135 = vpack.c.bf16 %v7066, %v7066
        %v7136 = vpack.c.bf16 %v7070, %v7070
        %v7137 = vpack.c.bf16 %v7074, %v7074
        %v7138 = vpack.c.bf16 %v7078, %v7078
        %v7139 = vpack.c.bf16 %v7082, %v7082
        %v7140 = vpack.c.bf16 %v7086, %v7086
        %v7141 = vpack.c.bf16 %v7090, %v7090
        %v7142 = vpack.c.bf16 %v7094, %v7094
        %v7143 = vpack.c.bf16 %v7098, %v7098
        %v7144 = vpack.c.bf16 %v7102, %v7102
        %v7145 = vpack.c.bf16 %v7106, %v7106
        %v7146 = vpack.c.bf16 %v7110, %v7110
        %v7165 = vunpack.c.l.b16 %v7129
        %v7166 = vunpack.c.l.b16 %v7130
        %v7167 = vunpack.c.l.b16 %v7131
        %v7168 = vunpack.c.l.b16 %v7132
        %v7169 = vunpack.c.l.b16 %v7133
        %v7170 = vunpack.c.l.b16 %v7134
        %v7171 = vunpack.c.l.b16 %v7135
        %v7172 = vunpack.c.l.b16 %v7136
        %v7173 = vunpack.c.l.b16 %v7137
        %v7174 = vunpack.c.l.b16 %v7138
        %v7175 = vunpack.c.l.b16 %v7139
        %v7176 = vunpack.c.l.b16 %v7140
        %v7177 = vunpack.c.l.b16 %v7141
        %v7178 = vunpack.c.l.b16 %v7142
        %v7179 = vunpack.c.l.b16 %v7143
        %v7180 = vunpack.c.l.b16 %v7144
        %v7181 = vunpack.c.l.b16 %v7145
        %v7182 = vunpack.c.l.b16 %v7146
        %v7183 = vpack.c.b16 %v7166, %v7165
        %v7184 = vpack.c.b16 %v7167, %v7167
        %v7185 = vpack.c.b16 %v7169, %v7168
        %v7186 = vpack.c.b16 %v7170, %v7170
        %v7187 = vpack.c.b16 %v7172, %v7171
        %v7188 = vpack.c.b16 %v7173, %v7173
        %v7189 = vpack.c.b16 %v7175, %v7174
        %v7190 = vpack.c.b16 %v7176, %v7176
        %v7191 = vpack.c.b16 %v7178, %v7177
        %v7192 = vpack.c.b16 %v7179, %v7179
        %v7193 = vpack.c.b16 %v7181, %v7180
        %v7194 = vpack.c.b16 %v7182, %v7182
        %v7195 = vunpack.c.l.b16 %v7183
        %v7196 = vunpack.c.h.b16 %v7183
        %v7197 = vunpack.c.l.b16 %v7184
        %v7198 = vunpack.c.l.b16 %v7185
        %v7199 = vunpack.c.h.b16 %v7185
        %v7200 = vunpack.c.l.b16 %v7186
        %v7201 = vunpack.c.l.b16 %v7187
        %v7202 = vunpack.c.h.b16 %v7187
        %v7203 = vunpack.c.l.b16 %v7188
        %v7204 = vunpack.c.l.b16 %v7189
        %v7205 = vunpack.c.h.b16 %v7189
        %v7206 = vunpack.c.l.b16 %v7190
        %v7207 = vunpack.c.l.b16 %v7191
        %v7208 = vunpack.c.h.b16 %v7191
        %v7209 = vunpack.c.l.b16 %v7192
        %v7210 = vunpack.c.l.b16 %v7193
        %v7211 = vunpack.c.h.b16 %v7193
        %v7212 = vunpack.c.l.b16 %v7194
        %v7213 = vrot.slane %v7198, 7
        %v7214 = vsel %vm2530, %v7213, %v7195
        %v7215 = vrot.slane %v7201, 6
        %v7216 = vsel %vm2533, %v7215, %v7214
        %v7217 = vrot.slane %v7204, 5
        %v7218 = vsel %vm2536, %v7217, %v7216
        %v7219 = vrot.slane %v7207, 4
        %v7220 = vsel %vm2539, %v7219, %v7218
        %v7221 = vrot.slane %v7210, 3
        %v7222 = vsel %vm2542, %v7221, %v7220
        %v7223 = vrot.slane %v7199, 7
        %v7224 = vsel %vm2530, %v7223, %v7196
        %v7225 = vrot.slane %v7202, 6
        %v7226 = vsel %vm2533, %v7225, %v7224
        %v7227 = vrot.slane %v7205, 5
        %v7228 = vsel %vm2536, %v7227, %v7226
        %v7229 = vrot.slane %v7208, 4
        %v7230 = vsel %vm2539, %v7229, %v7228
        %v7231 = vrot.slane %v7211, 3
        %v7232 = vsel %vm2542, %v7231, %v7230
        %v7233 = vrot.slane %v7200, 7
        %v7234 = vsel %vm2530, %v7233, %v7197
        %v7235 = vrot.slane %v7203, 6
        %v7236 = vsel %vm2533, %v7235, %v7234
        %v7237 = vrot.slane %v7206, 5
        %v7238 = vsel %vm2536, %v7237, %v7236
        %v7239 = vrot.slane %v7209, 4
        %v7240 = vsel %vm2539, %v7239, %v7238
        %v7241 = vrot.slane %v7212, 3
        %v7242 = vsel %vm2542, %v7241, %v7240
        %v7243 = vpack.c.b16 %v7232, %v7222
        %v7244 = vpack.c.b16 %v7242, %v7242
        %7247 = vst [vmem:[%s362] sm:$0x77] %v7243
        %7248 = vst [vmem:[%s362 + $0x8] sm:$0x7] %v7244
        %p7249 = scmp.lt.s32.totalorder %s22, 1
        %s7250 = scalar_select %p7249, %s22, 1
        %s7251 = smul.addr %s7250, 3
        %s7252 = smul.addr %s7251, 4
        %s7253 = scalar_lea.vmem %s7, %s7252
        // Predicated region
        $region73: #{cnn_forward.2} parent=47 // pred_check
          %p7254 = pneg %p192
        $region74: #{cnn_forward.2} parent=47 // pred_check_branch
          %7256 = sbr.rel (%p7254) target = $region76
        $region75: #{cnn_forward.2} parent=47 // pred_region
          _
        $region76: #{cnn_forward.2} parent=47 // pred_fallthru
          _
      $region48: #{cnn_forward.2} parent=5 // pred_fallthru
        _
      %p7257 = scmp.le.s32.totalorder 2, %s17
      // Predicated region
      $region77: #{cnn_forward.2} parent=5 // pred_check
        %p7258 = pneg %p7257
      $region78: #{cnn_forward.2} parent=5 // pred_check_branch
        %7260 = sbr.rel (%p7258) target = $region80
      $region79: #{cnn_forward.2} parent=5 // pred_region
        %s7261 = ssub.s32 %s17, 2
        // Predicated region
        $region81: #{cnn_forward.2} parent=79 // pred_check
          %p7262 = pneg %p198
        $region82: #{cnn_forward.2} parent=79 // pred_check_branch
          %7264 = sbr.rel (%p7262) target = $region84
        $region83: #{cnn_forward.2} parent=79 // pred_region
          %p7265 = scmp.lt.s32.totalorder %s23, 1
          %s7266 = scalar_select %p7265, %s23, 1
          %s7267 = smul.addr %s7266, 3
          %s7268 = smul.addr %s7267, 4
          %s7269 = scalar_lea.vmem %s7, %s7268
        $region84: #{cnn_forward.2} parent=79 // pred_fallthru
          _
      $region80: #{cnn_forward.2} parent=5 // pred_fallthru
        _
    $region6: #{cnn_forward.2} parent=1 // loop_footer
      %s21 = sadd.s32 1, %s17
    $region7: #{cnn_forward.2} parent=1 // loop_footer_branch
      %16 = sbr.rel target = $region3
    $region8: #{cnn_forward.2} parent=1 // loop_exit
      _
    %7270 = vsyncpa [#allocation3], 1
    %s7271 = scalar_lea.sflag [#allocation3], 1
    %7272 = vsyncpa %s7271, 1
    %7273 = vsyncpa [#allocation5], 1
    %7274 = vsyncpa [#allocation8], 1
    %7275 = vsyncpa [#allocation11], 1

</llo_original>
